<compile_context>
chip_gen: v7x
topology: tpu7x:2x2x1
jax: 0.10.0
libtpu: 0.0.40
codegen_flags: <defaults>
</compile_context>

<pallas_src>
import jax
import jax.numpy as jnp
from jax.experimental import pallas as pl
from jax.experimental.pallas import tpu as pltpu

LANES = 128
CHUNK_ROWS = 512                  # in-kernel sub-chunk: f32 temporaries stay ~256 KiB
TARGET_STEP_BYTES = 4 << 20       # both inputs, one buffer, native dtype (~8 MiB dbl-buffered)
SMALL_TOTAL = 1 << 16             # below this, a fused XLA reduction beats the kernel launch


def _cdiv(a, b):
    return -(-a // b)


def _num_tensorcores():
    """Best-effort TensorCores-per-chip; None if unknown."""
    try:
        info = pltpu.get_tpu_info()
        for name in ("num_cores", "core_count", "num_tensorcores", "tensorcore_count"):
            v = getattr(info, name, None)
            if isinstance(v, int) and v >= 1:
                return v
    except Exception:
        pass
    try:
        d = jax.devices()[0]
        for name in ("num_cores", "core_count"):
            v = getattr(d, name, None)
            if isinstance(v, int) and v >= 1:
                return v
    except Exception:
        pass
    return None


def _make_kernel(rows, block_rows, chunk_sizes, n_inner, n_blocks,
                 partial_last, has_phantom):
    """rows        : number of valid 128-lane rows in the kernel input
       block_rows  : rows per grid step (multiple of 8)
       chunk_sizes : static sub-chunk row counts covering block_rows
       partial_last: last real block has < block_rows valid rows
       has_phantom : 2-core split produced grid steps past the last real block
    """

    def fold(x, nrows):
        # (nrows,128) -> (8,128) partial sums: sublane-aligned VPU adds only,
        # no per-step cross-lane (XLU) reduction.
        return jnp.sum(x.reshape(nrows // 8, 8, LANES), axis=0)

    def kernel(yp_ref, yt_ref, acc_ref):
        i = pl.program_id(1)

        @pl.when(i == 0)
        def _():
            acc_ref[...] = jnp.zeros_like(acc_ref)

        def accumulate(masked, gblk):
            s_t = jnp.zeros((8, LANES), jnp.float32)
            s_pt = jnp.zeros((8, LANES), jnp.float32)
            s_p = jnp.zeros((8, LANES), jnp.float32)
            off = 0
            for sz in chunk_sizes:                      # static unrolled chunk loop
                p = jax.nn.sigmoid(yp_ref[pl.ds(off, sz), :].astype(jnp.float32))
                t = yt_ref[pl.ds(off, sz), :].astype(jnp.float32)
                if masked:
                    # Row-granularity mask (lane tail never reaches the kernel).
                    ridx = jax.lax.broadcasted_iota(jnp.int32, (sz, LANES), 0)
                    valid = (gblk * block_rows + (off + ridx)) < rows
                    p = jnp.where(valid, p, 0.0)
                    t = jnp.where(valid, t, 0.0)
                s_t = s_t + fold(t, sz)                 # sum(y_true)
                s_pt = s_pt + fold(p * t, sz)           # ctp
                s_p = s_p + fold(p, sz)                 # sum(sigmoid(y_pred))
                off += sz
            acc_ref[0, 0] += s_t
            acc_ref[0, 1] += s_pt
            acc_ref[0, 2] += s_p

        if not partial_last and not has_phantom:
            # Steady state: every block is fully valid -> mask-free fast path.
            accumulate(False, None)
        else:
            gblk = pl.program_id(0) * n_inner + i
            last = n_blocks - 1

            @pl.when(gblk < last)
            def _():
                accumulate(False, gblk)                 # mask-free steady state

            @pl.when(gblk == last)
            def _():
                accumulate(partial_last, gblk)          # only the edge block pays the mask
            # gblk > last: phantom block of the 2-core split -- its (clamped,
            # redundant) DMA is re-read but the accumulate is skipped entirely.

    return kernel


def _finalize(y_true_count, ctp, y_pred_sum, beta, smooth):
    cfp = y_pred_sum - ctp                              # sum(p*(1-t)) == sum(p) - ctp
    beta_sq = beta * beta
    c_precision = ctp / (ctp + cfp + smooth)
    c_recall = ctp / (y_true_count + smooth)
    fbeta = (1.0 + beta_sq) * (c_precision * c_recall) / (
        beta_sq * c_precision + c_recall + smooth)
    # PyTorch's data-dependent early return -> branch-free select.  The module
    # compares the *post-sigmoid* prediction sum to zero; matched here exactly.
    return jnp.where((y_true_count == 0.0) & (y_pred_sum == 0.0), 0.0, 1.0 - fbeta)


def fbeta_loss(y_pred, y_true, beta: float = 0.5, smooth: float = 1e-6,
               _force_cores=None):
    """Pallas-TPU implementation of FBetaLoss.forward (logits in, scalar loss out)."""
    assert beta > 0 and smooth > 0
    total = y_pred.size
    assert y_true.size == total

    # Tiny inputs: pallas_call fixed cost dominates -> fused XLA reduction.
    if total < SMALL_TOTAL and _force_cores is None:
        p = jax.nn.sigmoid(y_pred.astype(jnp.float32))
        t = y_true.astype(jnp.float32)
        return _finalize(jnp.sum(t), jnp.sum(p * t), jnp.sum(p), beta, smooth)

    flat_p = y_pred.reshape(-1)
    flat_t = y_true.reshape(-1)

    rows = total // LANES                 # full 128-lane rows streamed by the kernel
    tail = total - rows * LANES           # <128-element remainder, reduced in the wrapper

    if tail:
        # No O(N) jnp.pad: the aligned prefix goes to the kernel.  (The prefix
        # slice may still materialize under XLA, but only on non-128-aligned
        # inputs; the aligned path below is a copy-free reshape.)
        yp2 = flat_p[: rows * LANES].reshape(rows, LANES)
        yt2 = flat_t[: rows * LANES].reshape(rows, LANES)
    else:
        yp2 = flat_p.reshape(rows, LANES)
        yt2 = flat_t.reshape(rows, LANES)

    # Block rows scaled by native itemsize: ~4 MiB of input per grid step
    # regardless of the dtype mix (f32 -> 4096 rows, bf16+f32 -> 5120, bf16 -> 8192).
    bytes_per_row = LANES * (yp2.dtype.itemsize + yt2.dtype.itemsize)
    target_rows = max(CHUNK_ROWS,
                      (TARGET_STEP_BYTES // bytes_per_row) // CHUNK_ROWS * CHUNK_ROWS)
    block_rows = max(8, (min(target_rows, rows) // 8) * 8)

    chunk_sizes = []
    r = block_rows
    while r > 0:
        s = min(CHUNK_ROWS, r)
        chunk_sizes.append(s)
        r -= s

    n_blocks = _cdiv(rows, block_rows)
    if _force_cores is not None:
        n_cores = min(_force_cores, n_blocks)
    else:
        cores_hw = _num_tensorcores()
        want_split = (cores_hw is None) or (cores_hw >= 2)   # generation-aware when known
        n_cores = 2 if (want_split and n_blocks >= 2) else 1
    n_inner = _cdiv(n_blocks, n_cores)

    partial_last = (rows % block_rows) != 0
    has_phantom = (n_cores * n_inner) > n_blocks

    last_block = n_blocks - 1
    if has_phantom:
        # Phantom grid steps of the core split re-read the last real block; their
        # contribution is skipped in-kernel.
        row_map = lambda c, i: (jnp.minimum(c * n_inner + i, last_block), 0)
    else:
        row_map = lambda c, i: (c * n_inner + i, 0)

    acc = pl.pallas_call(
        _make_kernel(rows, block_rows, tuple(chunk_sizes), n_inner, n_blocks,
                     partial_last, has_phantom),
        out_shape=jax.ShapeDtypeStruct((n_cores, 3, 8, LANES), jnp.float32),
        grid=(n_cores, n_inner),
        in_specs=[
            pl.BlockSpec((block_rows, LANES), row_map),
            pl.BlockSpec((block_rows, LANES), row_map),
        ],
        # Same output block across the inner (reduction) axis -> VMEM-resident accumulator.
        out_specs=pl.BlockSpec((1, 3, 8, LANES), lambda c, i: (c, 0, 0, 0)),
        compiler_params=pltpu.CompilerParams(
            # TODO(synk): on v7x verify both TensorCores are active in the trace;
            # if not, switch the leading size-2 axis to pltpu.CORE_PARALLEL.
            dimension_semantics=("parallel", "arbitrary"),
            vmem_limit_bytes=32 * 1024 * 1024,
        ),
    )(yp2, yt2)

    sums = jnp.sum(acc, axis=(0, 2, 3))          # (3,) tiny epilogue reduce
    y_true_count, ctp, y_pred_sum = sums[0], sums[1], sums[2]

    if tail:
        # <128-element lane tail: tiny pure-JAX reduction instead of padding.
        tp = jax.nn.sigmoid(flat_p[rows * LANES:].astype(jnp.float32))
        tt = flat_t[rows * LANES:].astype(jnp.float32)
        y_true_count = y_true_count + jnp.sum(tt)
        ctp = ctp + jnp.sum(tp * tt)
        y_pred_sum = y_pred_sum + jnp.sum(tp)

    # TODO(synk): for >~1e9-element inputs, consider pairwise accumulation of the
    # (8,128) partials to tighten f32 error in ctp/cfp.
    return _finalize(y_true_count, ctp, y_pred_sum, beta, smooth)


def _fbeta_loss_ref(y_pred, y_true, beta=0.5, smooth=1e-6):
    p = jax.nn.sigmoid(y_pred.astype(jnp.float32))
    t = y_true.astype(jnp.float32)
    y_true_count = t.sum()
    ctp = (p * t).sum()
    cfp = (p * (1.0 - t)).sum()
    bsq = beta * beta
    c_precision = ctp / (ctp + cfp + smooth)
    c_recall = ctp / (y_true_count + smooth)
    fbeta = (1 + bsq) * (c_precision * c_recall) / (bsq * c_precision + c_recall + smooth)
    return jnp.where((y_true_count == 0) & (p.sum() == 0), 0.0, 1.0 - fbeta)


if __name__ == "__main__":
    key = jax.random.PRNGKey(0)
    k1, k2, k3, k4, k5, k6, k7, k8 = jax.random.split(key, 8)

    def check(name, yp, yt, rtol, atol, **kw):
        got = jax.block_until_ready(fbeta_loss(yp, yt, beta=0.5, smooth=1e-6, **kw))
        ref = jax.block_until_ready(_fbeta_loss_ref(yp, yt, beta=0.5, smooth=1e-6))
        assert jnp.allclose(got, ref, rtol=rtol, atol=atol), (name, got, ref)

    # (a) Primary small NCHW case (2,4,16,16): pure-JAX fast path.
    yp = jax.random.normal(k1, (2, 4, 16, 16), dtype=jnp.float32)
    yt = (jax.random.uniform(k2, (2, 4, 16, 16)) > 0.5).astype(jnp.float32)
    check("small", yp, yt, 1e-5, 1e-5)

    # (b) Lane-aligned, native bf16 logits + f32 mask: 2-block split, enlarged
    #     bf16 blocks, mask-free steady-state kernel path.
    yp = jax.random.normal(k3, (2, 4, 1280, 128), dtype=jnp.bfloat16)
    yt = (jax.random.uniform(k4, (2, 4, 1280, 128)) > 0.5).astype(jnp.float32)
    check("bf16_aligned", yp, yt, 2e-4, 2e-4)

    # (c) Ragged element count (not a multiple of 128): no-pad prefix slice,
    #     wrapper tail reduction and the gated last-block mask.
    yp = jax.random.normal(k5, (3, 5, 160, 129), dtype=jnp.float32)
    yt = (jax.random.uniform(k6, (3, 5, 160, 129)) > 0.5).astype(jnp.float32)
    check("ragged", yp, yt, 2e-4, 2e-4)

    # (d) Odd block count with forced 2-way split: phantom-block skip +
    #     last-block mask paths are compiled and verified.
    yp = jax.random.normal(k7, (2, 4, 1200, 128), dtype=jnp.float32)
    yt = (jax.random.uniform(k8, (2, 4, 1200, 128)) > 0.5).astype(jnp.float32)
    check("odd_blocks_forced_split", yp, yt, 2e-4, 2e-4, _force_cores=2)

    print("KERNEL_OK")
</pallas_src>

<mosaic_0001>
module attributes {stable_mosaic.version = 11 : i64} {
  func.func @kernel(%arg0: i32, %arg1: i32, %arg2: memref<5120x128xbf16, #tpu.memory_space<vmem>>, %arg3: memref<5120x128xf32, #tpu.memory_space<vmem>>, %arg4: memref<1x3x8x128xf32, #tpu.memory_space<vmem>>) attributes {dimension_semantics = [#tpu.dimension_semantics<parallel>, #tpu.dimension_semantics<arbitrary>], iteration_bounds = array<i64: 2, 1>, scalar_prefetch = 0 : i64, scratch_operands = 0 : i64, tpu.core_type = #tpu.core_type<tc>, window_params = [{transform_indices = @transform_0, window_bounds = array<i64: 5120, 128>}, {transform_indices = @transform_1, window_bounds = array<i64: 5120, 128>}, {transform_indices = @transform_2, window_bounds = array<i64: 1, 3, 8, 128>}]} {
    %c0_i32 = arith.constant 0 : i32
    %0 = arith.cmpi eq, %arg1, %c0_i32 : i32
    %1 = arith.extui %0 : i1 to i32
    %c0_i32_0 = arith.constant 0 : i32
    %2 = arith.cmpi ne, %1, %c0_i32_0 : i32
    scf.if %2 {
      %cst_95 = arith.constant 0.000000e+00 : f32
      %204 = vector.broadcast %cst_95 : f32 to vector<1x3x8x128xf32>
      %c0_96 = arith.constant 0 : index
      %c0_97 = arith.constant 0 : index
      %c0_98 = arith.constant 0 : index
      %c0_99 = arith.constant 0 : index
      %205 = vector.load %arg4[%c0_96, %c0_97, %c0_98, %c0_99] : memref<1x3x8x128xf32, #tpu.memory_space<vmem>>, vector<1x3x8x128xf32>
      tpu.vector_store %arg4[%c0_96, %c0_97, %c0_98, %c0_99], %204 {strides = array<i32>} : memref<1x3x8x128xf32, #tpu.memory_space<vmem>>, vector<1x3x8x128xf32>,
    } else {
    }
    %cst = arith.constant 0.000000e+00 : f32
    %3 = vector.broadcast %cst : f32 to vector<8x128xf32>
    %cst_1 = arith.constant 0.000000e+00 : f32
    %4 = vector.broadcast %cst_1 : f32 to vector<8x128xf32>
    %cst_2 = arith.constant 0.000000e+00 : f32
    %5 = vector.broadcast %cst_2 : f32 to vector<8x128xf32>
    %c0 = arith.constant 0 : index
    %c0_3 = arith.constant 0 : index
    %6 = vector.load %arg2[%c0, %c0_3] : memref<5120x128xbf16, #tpu.memory_space<vmem>>, vector<512x128xbf16>
    %7 = arith.extf %6 : vector<512x128xbf16> to vector<512x128xf32>
    %8 = arith.negf %7 : vector<512x128xf32>
    %9 = math.exp %8 : vector<512x128xf32>
    %cst_4 = arith.constant 1.000000e+00 : f32
    %10 = vector.broadcast %cst_4 : f32 to vector<512x128xf32>
    %11 = arith.addf %10, %9 : vector<512x128xf32>
    %12 = arith.divf %10, %11 : vector<512x128xf32>
    %c0_5 = arith.constant 0 : index
    %c0_6 = arith.constant 0 : index
    %13 = vector.load %arg3[%c0_5, %c0_6] : memref<5120x128xf32, #tpu.memory_space<vmem>>, vector<512x128xf32>
    %14 = vector.shape_cast %13 : vector<512x128xf32> to vector<64x8x128xf32>
    %cst_7 = arith.constant dense<0.000000e+00> : vector<8x128xf32>
    %15 = vector.multi_reduction <add>, %14, %cst_7 [0] : vector<64x8x128xf32> to vector<8x128xf32>
    %16 = arith.addf %3, %15 : vector<8x128xf32>
    %17 = arith.mulf %12, %13 : vector<512x128xf32>
    %18 = vector.shape_cast %17 : vector<512x128xf32> to vector<64x8x128xf32>
    %cst_8 = arith.constant dense<0.000000e+00> : vector<8x128xf32>
    %19 = vector.multi_reduction <add>, %18, %cst_8 [0] : vector<64x8x128xf32> to vector<8x128xf32>
    %20 = arith.addf %4, %19 : vector<8x128xf32>
    %21 = vector.shape_cast %12 : vector<512x128xf32> to vector<64x8x128xf32>
    %cst_9 = arith.constant dense<0.000000e+00> : vector<8x128xf32>
    %22 = vector.multi_reduction <add>, %21, %cst_9 [0] : vector<64x8x128xf32> to vector<8x128xf32>
    %23 = arith.addf %5, %22 : vector<8x128xf32>
    %c512 = arith.constant 512 : index
    %c0_10 = arith.constant 0 : index
    %24 = vector.load %arg2[%c512, %c0_10] : memref<5120x128xbf16, #tpu.memory_space<vmem>>, vector<512x128xbf16>
    %25 = arith.extf %24 : vector<512x128xbf16> to vector<512x128xf32>
    %26 = arith.negf %25 : vector<512x128xf32>
    %27 = math.exp %26 : vector<512x128xf32>
    %cst_11 = arith.constant 1.000000e+00 : f32
    %28 = vector.broadcast %cst_11 : f32 to vector<512x128xf32>
    %29 = arith.addf %28, %27 : vector<512x128xf32>
    %30 = arith.divf %28, %29 : vector<512x128xf32>
    %c512_12 = arith.constant 512 : index
    %c0_13 = arith.constant 0 : index
    %31 = vector.load %arg3[%c512_12, %c0_13] : memref<5120x128xf32, #tpu.memory_space<vmem>>, vector<512x128xf32>
    %32 = vector.shape_cast %31 : vector<512x128xf32> to vector<64x8x128xf32>
    %cst_14 = arith.constant dense<0.000000e+00> : vector<8x128xf32>
    %33 = vector.multi_reduction <add>, %32, %cst_14 [0] : vector<64x8x128xf32> to vector<8x128xf32>
    %34 = arith.addf %16, %33 : vector<8x128xf32>
    %35 = arith.mulf %30, %31 : vector<512x128xf32>
    %36 = vector.shape_cast %35 : vector<512x128xf32> to vector<64x8x128xf32>
    %cst_15 = arith.constant dense<0.000000e+00> : vector<8x128xf32>
    %37 = vector.multi_reduction <add>, %36, %cst_15 [0] : vector<64x8x128xf32> to vector<8x128xf32>
    %38 = arith.addf %20, %37 : vector<8x128xf32>
    %39 = vector.shape_cast %30 : vector<512x128xf32> to vector<64x8x128xf32>
    %cst_16 = arith.constant dense<0.000000e+00> : vector<8x128xf32>
    %40 = vector.multi_reduction <add>, %39, %cst_16 [0] : vector<64x8x128xf32> to vector<8x128xf32>
    %41 = arith.addf %23, %40 : vector<8x128xf32>
    %c1024 = arith.constant 1024 : index
    %c0_17 = arith.constant 0 : index
    %42 = vector.load %arg2[%c1024, %c0_17] : memref<5120x128xbf16, #tpu.memory_space<vmem>>, vector<512x128xbf16>
    %43 = arith.extf %42 : vector<512x128xbf16> to vector<512x128xf32>
    %44 = arith.negf %43 : vector<512x128xf32>
    %45 = math.exp %44 : vector<512x128xf32>
    %cst_18 = arith.constant 1.000000e+00 : f32
    %46 = vector.broadcast %cst_18 : f32 to vector<512x128xf32>
    %47 = arith.addf %46, %45 : vector<512x128xf32>
    %48 = arith.divf %46, %47 : vector<512x128xf32>
    %c1024_19 = arith.constant 1024 : index
    %c0_20 = arith.constant 0 : index
    %49 = vector.load %arg3[%c1024_19, %c0_20] : memref<5120x128xf32, #tpu.memory_space<vmem>>, vector<512x128xf32>
    %50 = vector.shape_cast %49 : vector<512x128xf32> to vector<64x8x128xf32>
    %cst_21 = arith.constant dense<0.000000e+00> : vector<8x128xf32>
    %51 = vector.multi_reduction <add>, %50, %cst_21 [0] : vector<64x8x128xf32> to vector<8x128xf32>
    %52 = arith.addf %34, %51 : vector<8x128xf32>
    %53 = arith.mulf %48, %49 : vector<512x128xf32>
    %54 = vector.shape_cast %53 : vector<512x128xf32> to vector<64x8x128xf32>
    %cst_22 = arith.constant dense<0.000000e+00> : vector<8x128xf32>
    %55 = vector.multi_reduction <add>, %54, %cst_22 [0] : vector<64x8x128xf32> to vector<8x128xf32>
    %56 = arith.addf %38, %55 : vector<8x128xf32>
    %57 = vector.shape_cast %48 : vector<512x128xf32> to vector<64x8x128xf32>
    %cst_23 = arith.constant dense<0.000000e+00> : vector<8x128xf32>
    %58 = vector.multi_reduction <add>, %57, %cst_23 [0] : vector<64x8x128xf32> to vector<8x128xf32>
    %59 = arith.addf %41, %58 : vector<8x128xf32>
    %c1536 = arith.constant 1536 : index
    %c0_24 = arith.constant 0 : index
    %60 = vector.load %arg2[%c1536, %c0_24] : memref<5120x128xbf16, #tpu.memory_space<vmem>>, vector<512x128xbf16>
    %61 = arith.extf %60 : vector<512x128xbf16> to vector<512x128xf32>
    %62 = arith.negf %61 : vector<512x128xf32>
    %63 = math.exp %62 : vector<512x128xf32>
    %cst_25 = arith.constant 1.000000e+00 : f32
    %64 = vector.broadcast %cst_25 : f32 to vector<512x128xf32>
    %65 = arith.addf %64, %63 : vector<512x128xf32>
    %66 = arith.divf %64, %65 : vector<512x128xf32>
    %c1536_26 = arith.constant 1536 : index
    %c0_27 = arith.constant 0 : index
    %67 = vector.load %arg3[%c1536_26, %c0_27] : memref<5120x128xf32, #tpu.memory_space<vmem>>, vector<512x128xf32>
    %68 = vector.shape_cast %67 : vector<512x128xf32> to vector<64x8x128xf32>
    %cst_28 = arith.constant dense<0.000000e+00> : vector<8x128xf32>
    %69 = vector.multi_reduction <add>, %68, %cst_28 [0] : vector<64x8x128xf32> to vector<8x128xf32>
    %70 = arith.addf %52, %69 : vector<8x128xf32>
    %71 = arith.mulf %66, %67 : vector<512x128xf32>
    %72 = vector.shape_cast %71 : vector<512x128xf32> to vector<64x8x128xf32>
    %cst_29 = arith.constant dense<0.000000e+00> : vector<8x128xf32>
    %73 = vector.multi_reduction <add>, %72, %cst_29 [0] : vector<64x8x128xf32> to vector<8x128xf32>
    %74 = arith.addf %56, %73 : vector<8x128xf32>
    %75 = vector.shape_cast %66 : vector<512x128xf32> to vector<64x8x128xf32>
    %cst_30 = arith.constant dense<0.000000e+00> : vector<8x128xf32>
    %76 = vector.multi_reduction <add>, %75, %cst_30 [0] : vector<64x8x128xf32> to vector<8x128xf32>
    %77 = arith.addf %59, %76 : vector<8x128xf32>
    %c2048 = arith.constant 2048 : index
    %c0_31 = arith.constant 0 : index
    %78 = vector.load %arg2[%c2048, %c0_31] : memref<5120x128xbf16, #tpu.memory_space<vmem>>, vector<512x128xbf16>
    %79 = arith.extf %78 : vector<512x128xbf16> to vector<512x128xf32>
    %80 = arith.negf %79 : vector<512x128xf32>
    %81 = math.exp %80 : vector<512x128xf32>
    %cst_32 = arith.constant 1.000000e+00 : f32
    %82 = vector.broadcast %cst_32 : f32 to vector<512x128xf32>
    %83 = arith.addf %82, %81 : vector<512x128xf32>
    %84 = arith.divf %82, %83 : vector<512x128xf32>
    %c2048_33 = arith.constant 2048 : index
    %c0_34 = arith.constant 0 : index
    %85 = vector.load %arg3[%c2048_33, %c0_34] : memref<5120x128xf32, #tpu.memory_space<vmem>>, vector<512x128xf32>
    %86 = vector.shape_cast %85 : vector<512x128xf32> to vector<64x8x128xf32>
    %cst_35 = arith.constant dense<0.000000e+00> : vector<8x128xf32>
    %87 = vector.multi_reduction <add>, %86, %cst_35 [0] : vector<64x8x128xf32> to vector<8x128xf32>
    %88 = arith.addf %70, %87 : vector<8x128xf32>
    %89 = arith.mulf %84, %85 : vector<512x128xf32>
    %90 = vector.shape_cast %89 : vector<512x128xf32> to vector<64x8x128xf32>
    %cst_36 = arith.constant dense<0.000000e+00> : vector<8x128xf32>
    %91 = vector.multi_reduction <add>, %90, %cst_36 [0] : vector<64x8x128xf32> to vector<8x128xf32>
    %92 = arith.addf %74, %91 : vector<8x128xf32>
    %93 = vector.shape_cast %84 : vector<512x128xf32> to vector<64x8x128xf32>
    %cst_37 = arith.constant dense<0.000000e+00> : vector<8x128xf32>
    %94 = vector.multi_reduction <add>, %93, %cst_37 [0] : vector<64x8x128xf32> to vector<8x128xf32>
    %95 = arith.addf %77, %94 : vector<8x128xf32>
    %c2560 = arith.constant 2560 : index
    %c0_38 = arith.constant 0 : index
    %96 = vector.load %arg2[%c2560, %c0_38] : memref<5120x128xbf16, #tpu.memory_space<vmem>>, vector<512x128xbf16>
    %97 = arith.extf %96 : vector<512x128xbf16> to vector<512x128xf32>
    %98 = arith.negf %97 : vector<512x128xf32>
    %99 = math.exp %98 : vector<512x128xf32>
    %cst_39 = arith.constant 1.000000e+00 : f32
    %100 = vector.broadcast %cst_39 : f32 to vector<512x128xf32>
    %101 = arith.addf %100, %99 : vector<512x128xf32>
    %102 = arith.divf %100, %101 : vector<512x128xf32>
    %c2560_40 = arith.constant 2560 : index
    %c0_41 = arith.constant 0 : index
    %103 = vector.load %arg3[%c2560_40, %c0_41] : memref<5120x128xf32, #tpu.memory_space<vmem>>, vector<512x128xf32>
    %104 = vector.shape_cast %103 : vector<512x128xf32> to vector<64x8x128xf32>
    %cst_42 = arith.constant dense<0.000000e+00> : vector<8x128xf32>
    %105 = vector.multi_reduction <add>, %104, %cst_42 [0] : vector<64x8x128xf32> to vector<8x128xf32>
    %106 = arith.addf %88, %105 : vector<8x128xf32>
    %107 = arith.mulf %102, %103 : vector<512x128xf32>
    %108 = vector.shape_cast %107 : vector<512x128xf32> to vector<64x8x128xf32>
    %cst_43 = arith.constant dense<0.000000e+00> : vector<8x128xf32>
    %109 = vector.multi_reduction <add>, %108, %cst_43 [0] : vector<64x8x128xf32> to vector<8x128xf32>
    %110 = arith.addf %92, %109 : vector<8x128xf32>
    %111 = vector.shape_cast %102 : vector<512x128xf32> to vector<64x8x128xf32>
    %cst_44 = arith.constant dense<0.000000e+00> : vector<8x128xf32>
    %112 = vector.multi_reduction <add>, %111, %cst_44 [0] : vector<64x8x128xf32> to vector<8x128xf32>
    %113 = arith.addf %95, %112 : vector<8x128xf32>
    %c3072 = arith.constant 3072 : index
    %c0_45 = arith.constant 0 : index
    %114 = vector.load %arg2[%c3072, %c0_45] : memref<5120x128xbf16, #tpu.memory_space<vmem>>, vector<512x128xbf16>
    %115 = arith.extf %114 : vector<512x128xbf16> to vector<512x128xf32>
    %116 = arith.negf %115 : vector<512x128xf32>
    %117 = math.exp %116 : vector<512x128xf32>
    %cst_46 = arith.constant 1.000000e+00 : f32
    %118 = vector.broadcast %cst_46 : f32 to vector<512x128xf32>
    %119 = arith.addf %118, %117 : vector<512x128xf32>
    %120 = arith.divf %118, %119 : vector<512x128xf32>
    %c3072_47 = arith.constant 3072 : index
    %c0_48 = arith.constant 0 : index
    %121 = vector.load %arg3[%c3072_47, %c0_48] : memref<5120x128xf32, #tpu.memory_space<vmem>>, vector<512x128xf32>
    %122 = vector.shape_cast %121 : vector<512x128xf32> to vector<64x8x128xf32>
    %cst_49 = arith.constant dense<0.000000e+00> : vector<8x128xf32>
    %123 = vector.multi_reduction <add>, %122, %cst_49 [0] : vector<64x8x128xf32> to vector<8x128xf32>
    %124 = arith.addf %106, %123 : vector<8x128xf32>
    %125 = arith.mulf %120, %121 : vector<512x128xf32>
    %126 = vector.shape_cast %125 : vector<512x128xf32> to vector<64x8x128xf32>
    %cst_50 = arith.constant dense<0.000000e+00> : vector<8x128xf32>
    %127 = vector.multi_reduction <add>, %126, %cst_50 [0] : vector<64x8x128xf32> to vector<8x128xf32>
    %128 = arith.addf %110, %127 : vector<8x128xf32>
    %129 = vector.shape_cast %120 : vector<512x128xf32> to vector<64x8x128xf32>
    %cst_51 = arith.constant dense<0.000000e+00> : vector<8x128xf32>
    %130 = vector.multi_reduction <add>, %129, %cst_51 [0] : vector<64x8x128xf32> to vector<8x128xf32>
    %131 = arith.addf %113, %130 : vector<8x128xf32>
    %c3584 = arith.constant 3584 : index
    %c0_52 = arith.constant 0 : index
    %132 = vector.load %arg2[%c3584, %c0_52] : memref<5120x128xbf16, #tpu.memory_space<vmem>>, vector<512x128xbf16>
    %133 = arith.extf %132 : vector<512x128xbf16> to vector<512x128xf32>
    %134 = arith.negf %133 : vector<512x128xf32>
    %135 = math.exp %134 : vector<512x128xf32>
    %cst_53 = arith.constant 1.000000e+00 : f32
    %136 = vector.broadcast %cst_53 : f32 to vector<512x128xf32>
    %137 = arith.addf %136, %135 : vector<512x128xf32>
    %138 = arith.divf %136, %137 : vector<512x128xf32>
    %c3584_54 = arith.constant 3584 : index
    %c0_55 = arith.constant 0 : index
    %139 = vector.load %arg3[%c3584_54, %c0_55] : memref<5120x128xf32, #tpu.memory_space<vmem>>, vector<512x128xf32>
    %140 = vector.shape_cast %139 : vector<512x128xf32> to vector<64x8x128xf32>
    %cst_56 = arith.constant dense<0.000000e+00> : vector<8x128xf32>
    %141 = vector.multi_reduction <add>, %140, %cst_56 [0] : vector<64x8x128xf32> to vector<8x128xf32>
    %142 = arith.addf %124, %141 : vector<8x128xf32>
    %143 = arith.mulf %138, %139 : vector<512x128xf32>
    %144 = vector.shape_cast %143 : vector<512x128xf32> to vector<64x8x128xf32>
    %cst_57 = arith.constant dense<0.000000e+00> : vector<8x128xf32>
    %145 = vector.multi_reduction <add>, %144, %cst_57 [0] : vector<64x8x128xf32> to vector<8x128xf32>
    %146 = arith.addf %128, %145 : vector<8x128xf32>
    %147 = vector.shape_cast %138 : vector<512x128xf32> to vector<64x8x128xf32>
    %cst_58 = arith.constant dense<0.000000e+00> : vector<8x128xf32>
    %148 = vector.multi_reduction <add>, %147, %cst_58 [0] : vector<64x8x128xf32> to vector<8x128xf32>
    %149 = arith.addf %131, %148 : vector<8x128xf32>
    %c4096 = arith.constant 4096 : index
    %c0_59 = arith.constant 0 : index
    %150 = vector.load %arg2[%c4096, %c0_59] : memref<5120x128xbf16, #tpu.memory_space<vmem>>, vector<512x128xbf16>
    %151 = arith.extf %150 : vector<512x128xbf16> to vector<512x128xf32>
    %152 = arith.negf %151 : vector<512x128xf32>
    %153 = math.exp %152 : vector<512x128xf32>
    %cst_60 = arith.constant 1.000000e+00 : f32
    %154 = vector.broadcast %cst_60 : f32 to vector<512x128xf32>
    %155 = arith.addf %154, %153 : vector<512x128xf32>
    %156 = arith.divf %154, %155 : vector<512x128xf32>
    %c4096_61 = arith.constant 4096 : index
    %c0_62 = arith.constant 0 : index
    %157 = vector.load %arg3[%c4096_61, %c0_62] : memref<5120x128xf32, #tpu.memory_space<vmem>>, vector<512x128xf32>
    %158 = vector.shape_cast %157 : vector<512x128xf32> to vector<64x8x128xf32>
    %cst_63 = arith.constant dense<0.000000e+00> : vector<8x128xf32>
    %159 = vector.multi_reduction <add>, %158, %cst_63 [0] : vector<64x8x128xf32> to vector<8x128xf32>
    %160 = arith.addf %142, %159 : vector<8x128xf32>
    %161 = arith.mulf %156, %157 : vector<512x128xf32>
    %162 = vector.shape_cast %161 : vector<512x128xf32> to vector<64x8x128xf32>
    %cst_64 = arith.constant dense<0.000000e+00> : vector<8x128xf32>
    %163 = vector.multi_reduction <add>, %162, %cst_64 [0] : vector<64x8x128xf32> to vector<8x128xf32>
    %164 = arith.addf %146, %163 : vector<8x128xf32>
    %165 = vector.shape_cast %156 : vector<512x128xf32> to vector<64x8x128xf32>
    %cst_65 = arith.constant dense<0.000000e+00> : vector<8x128xf32>
    %166 = vector.multi_reduction <add>, %165, %cst_65 [0] : vector<64x8x128xf32> to vector<8x128xf32>
    %167 = arith.addf %149, %166 : vector<8x128xf32>
    %c4608 = arith.constant 4608 : index
    %c0_66 = arith.constant 0 : index
    %168 = vector.load %arg2[%c4608, %c0_66] : memref<5120x128xbf16, #tpu.memory_space<vmem>>, vector<512x128xbf16>
    %169 = arith.extf %168 : vector<512x128xbf16> to vector<512x128xf32>
    %170 = arith.negf %169 : vector<512x128xf32>
    %171 = math.exp %170 : vector<512x128xf32>
    %cst_67 = arith.constant 1.000000e+00 : f32
    %172 = vector.broadcast %cst_67 : f32 to vector<512x128xf32>
    %173 = arith.addf %172, %171 : vector<512x128xf32>
    %174 = arith.divf %172, %173 : vector<512x128xf32>
    %c4608_68 = arith.constant 4608 : index
    %c0_69 = arith.constant 0 : index
    %175 = vector.load %arg3[%c4608_68, %c0_69] : memref<5120x128xf32, #tpu.memory_space<vmem>>, vector<512x128xf32>
    %176 = vector.shape_cast %175 : vector<512x128xf32> to vector<64x8x128xf32>
    %cst_70 = arith.constant dense<0.000000e+00> : vector<8x128xf32>
    %177 = vector.multi_reduction <add>, %176, %cst_70 [0] : vector<64x8x128xf32> to vector<8x128xf32>
    %178 = arith.addf %160, %177 : vector<8x128xf32>
    %179 = arith.mulf %174, %175 : vector<512x128xf32>
    %180 = vector.shape_cast %179 : vector<512x128xf32> to vector<64x8x128xf32>
    %cst_71 = arith.constant dense<0.000000e+00> : vector<8x128xf32>
    %181 = vector.multi_reduction <add>, %180, %cst_71 [0] : vector<64x8x128xf32> to vector<8x128xf32>
    %182 = arith.addf %164, %181 : vector<8x128xf32>
    %183 = vector.shape_cast %174 : vector<512x128xf32> to vector<64x8x128xf32>
    %cst_72 = arith.constant dense<0.000000e+00> : vector<8x128xf32>
    %184 = vector.multi_reduction <add>, %183, %cst_72 [0] : vector<64x8x128xf32> to vector<8x128xf32>
    %185 = arith.addf %167, %184 : vector<8x128xf32>
    %c0_73 = arith.constant 0 : index
    %c0_74 = arith.constant 0 : index
    %c0_75 = arith.constant 0 : index
    %c0_76 = arith.constant 0 : index
    %186 = vector.load %arg4[%c0_73, %c0_74, %c0_75, %c0_76] : memref<1x3x8x128xf32, #tpu.memory_space<vmem>>, vector<1x1x8x128xf32>
    %187 = vector.shape_cast %186 : vector<1x1x8x128xf32> to vector<8x128xf32>
    %188 = arith.addf %187, %178 : vector<8x128xf32>
    %c0_77 = arith.constant 0 : index
    %c0_78 = arith.constant 0 : index
    %c0_79 = arith.constant 0 : index
    %c0_80 = arith.constant 0 : index
    %189 = vector.load %arg4[%c0_77, %c0_78, %c0_79, %c0_80] : memref<1x3x8x128xf32, #tpu.memory_space<vmem>>, vector<1x1x8x128xf32>
    %190 = vector.shape_cast %189 : vector<1x1x8x128xf32> to vector<8x128xf32>
    %191 = vector.shape_cast %188 : vector<8x128xf32> to vector<1x1x8x128xf32>
    tpu.vector_store %arg4[%c0_77, %c0_78, %c0_79, %c0_80], %191 {strides = array<i32>} : memref<1x3x8x128xf32, #tpu.memory_space<vmem>>, vector<1x1x8x128xf32>,
    %c0_81 = arith.constant 0 : index
    %c1 = arith.constant 1 : index
    %c0_82 = arith.constant 0 : index
    %c0_83 = arith.constant 0 : index
    %192 = vector.load %arg4[%c0_81, %c1, %c0_82, %c0_83] : memref<1x3x8x128xf32, #tpu.memory_space<vmem>>, vector<1x1x8x128xf32>
    %193 = vector.shape_cast %192 : vector<1x1x8x128xf32> to vector<8x128xf32>
    %194 = arith.addf %193, %182 : vector<8x128xf32>
    %c0_84 = arith.constant 0 : index
    %c1_85 = arith.constant 1 : index
    %c0_86 = arith.constant 0 : index
    %c0_87 = arith.constant 0 : index
    %195 = vector.load %arg4[%c0_84, %c1_85, %c0_86, %c0_87] : memref<1x3x8x128xf32, #tpu.memory_space<vmem>>, vector<1x1x8x128xf32>
    %196 = vector.shape_cast %195 : vector<1x1x8x128xf32> to vector<8x128xf32>
    %197 = vector.shape_cast %194 : vector<8x128xf32> to vector<1x1x8x128xf32>
    tpu.vector_store %arg4[%c0_84, %c1_85, %c0_86, %c0_87], %197 {strides = array<i32>} : memref<1x3x8x128xf32, #tpu.memory_space<vmem>>, vector<1x1x8x128xf32>,
    %c0_88 = arith.constant 0 : index
    %c2 = arith.constant 2 : index
    %c0_89 = arith.constant 0 : index
    %c0_90 = arith.constant 0 : index
    %198 = vector.load %arg4[%c0_88, %c2, %c0_89, %c0_90] : memref<1x3x8x128xf32, #tpu.memory_space<vmem>>, vector<1x1x8x128xf32>
    %199 = vector.shape_cast %198 : vector<1x1x8x128xf32> to vector<8x128xf32>
    %200 = arith.addf %199, %185 : vector<8x128xf32>
    %c0_91 = arith.constant 0 : index
    %c2_92 = arith.constant 2 : index
    %c0_93 = arith.constant 0 : index
    %c0_94 = arith.constant 0 : index
    %201 = vector.load %arg4[%c0_91, %c2_92, %c0_93, %c0_94] : memref<1x3x8x128xf32, #tpu.memory_space<vmem>>, vector<1x1x8x128xf32>
    %202 = vector.shape_cast %201 : vector<1x1x8x128xf32> to vector<8x128xf32>
    %203 = vector.shape_cast %200 : vector<8x128xf32> to vector<1x1x8x128xf32>
    tpu.vector_store %arg4[%c0_91, %c2_92, %c0_93, %c0_94], %203 {strides = array<i32>} : memref<1x3x8x128xf32, #tpu.memory_space<vmem>>, vector<1x1x8x128xf32>,
    return
  }
  func.func @transform_0(%arg0: i32, %arg1: i32) -> (i32, i32) {
    %c1_i32 = arith.constant 1 : i32
    %0 = arith.muli %arg0, %c1_i32 : i32
    %1 = arith.addi %0, %arg1 : i32
    %c0_i32 = arith.constant 0 : i32
    %c0_i32_0 = arith.constant 0 : i32
    return %1, %c0_i32 : i32, i32
  }
  func.func @transform_1(%arg0: i32, %arg1: i32) -> (i32, i32) {
    %c1_i32 = arith.constant 1 : i32
    %0 = arith.muli %arg0, %c1_i32 : i32
    %1 = arith.addi %0, %arg1 : i32
    %c0_i32 = arith.constant 0 : i32
    %c0_i32_0 = arith.constant 0 : i32
    return %1, %c0_i32 : i32, i32
  }
  func.func @transform_2(%arg0: i32, %arg1: i32) -> (i32, i32, i32, i32) {
    %c0_i32 = arith.constant 0 : i32
    %c0_i32_0 = arith.constant 0 : i32
    %c0_i32_1 = arith.constant 0 : i32
    %c0_i32_2 = arith.constant 0 : i32
    return %arg0, %c0_i32, %c0_i32_0, %c0_i32_1 : i32, i32, i32, i32
  }
}

</mosaic_0001>

<llo_original>
// kernel: tpu_custom_call.1
$region0: #{tpu_custom_call.1}
  #allocation0 [shape = 'u32[]', space=smem, size = 0x4, offset = 0x4, fixed_abs, tag = 'smem constant byte address 0x4 - core index']
  #allocation1 [shape = 'u32[144,128]{1,0:T(1,128)}', space=vmem, size = 0x12000, scoped, tag = 'internal scratch']
  %s0 = inlined_call_operand.hbm [shape: bf16[10240,128], index: 0, kind: input, shape index: {}]
  %s1 = inlined_call_operand.hbm [shape: f32[10240,128], index: 1, kind: input, shape index: {}]
  %s2 = inlined_call_operand.hbm [shape: f32[2,3,8,128], index: 2, kind: output, shape index: {}]
  %s3 = sld [smem:[#allocation0]]
  $region53: #{tpu_custom_call.1} parent=0
    _
  %s5 = ssub.s32 1, %s3
  %s6 = scalar_select 0, %s5, %s3
  $region1: #{tpu_custom_call.1} parent=0
    #allocation2 [shape = 'u8[2621440]{0}', space=vmem, size = 0x280000, scoped, tag = 'input window, operand 0']
    #allocation3 [shape = 's32[2]{0}', space=sflag, size = 0x8, scoped, tag = 'scoped memory for tpu_custom_call.1']
    #allocation4 [shape = 's32[2]{0}', space=sflag, size = 0x8, scoped, tag = 'scoped memory for tpu_custom_call.1']
    #allocation5 [shape = 'u8[5242880]{0}', space=vmem, size = 0x500000, scoped, tag = 'input window, operand 1']
    #allocation6 [shape = 's32[2]{0}', space=sflag, size = 0x8, scoped, tag = 'scoped memory for tpu_custom_call.1']
    #allocation7 [shape = 'u8[24576]{0}', space=vmem, size = 0x6000, scoped, tag = 'output window, operand 0']
    %7 = vsyncpa [#allocation3], 0
    %s8 = scalar_lea.sflag [#allocation3], 1
    %9 = vsyncpa %s8, 0
    %10 = vsyncpa [#allocation6], 0
    %s11 = scalar_lea.sflag [#allocation6], 1
    %12 = vsyncpa %s11, 0
    %13 = vsyncpa [#allocation4], 0
    %s14 = scalar_lea.sflag [#allocation4], 1
    %15 = vsyncpa %s14, 0
    loop: start=0, step=1, limit=4
    $region2: #{tpu_custom_call.1} parent=1 // loop_pre_header
      _
    $region3: #{tpu_custom_call.1} parent=1 // loop_header
      %s17 = sphi 0, %s21
      %p18 = scmp.ge.s32.totalorder %s17, 4
      %s24 = sphi 0, %s36
      %s25 = sphi 0, %s32
      %s26 = sphi 0, %s24
      %s27 = sphi 0, %s25
      %s28 = sphi 0, %s26
      %s29 = sphi 0, %s27
      %s41 = sphi 0, %s43
      %s44 = sphi 0, %s41
      %s45 = sphi 0, %s44
      %s61 = sphi 0, %s45
      %s69 = sphi 0, %s71
      %s72 = sphi 0, %s69
      %s73 = sphi 0, %s72
      %s89 = sphi 0, %s73
      %s95 = sphi 0, %s97
      %s98 = sphi 0, %s95
      %s99 = sphi 0, %s98
      %s115 = sphi 0, %s99
    $region4: #{tpu_custom_call.1} parent=1 // loop_header_branch
      %20 = sbr.rel (%p18) target = $region8
    $region5: #{tpu_custom_call.1} parent=1 // loop_body
      %s22 = ssub.s32 %s17, 1
      %s23 = ssub.s32 %s17, 2
      %s30 = sadd.s32 1, %s25
      %p31 = scmp.ge.s32.totalorder %s30, 1
      %s32 = scalar_select %p31, 0, %s30
      %s33 = sadd.s32 1, %s24
      %s34 = scalar_select %p31, %s33, %s24
      %p35 = scmp.ge.s32.totalorder %s34, 2
      %s36 = scalar_select %p35, 0, %s34
      %s37 = sadd.s32 %s24, %s25
      %s38 = sadd.s32 %s36, %s32
      %s39 = ssub.s32 %s37, %s38
      %p40 = scmp.eq.s32.totalorder %s39, 0
      %s42 = sadd.s32 %s41, 1
      %s43 = scalar_select %p40, %s41, %s42
      %p46 = pneg %p40
      %p47 = scmp.eq.s32.totalorder %s17, 1
      %p48 = por %p46, %p47
      %p49 = scmp.ne.s32.totalorder %s41, %s44
      %p50 = scmp.eq.s32.totalorder %s17, 0
      %p51 = por %p49, %p50
      %p52 = scmp.ne.s32.totalorder %s41, %s44
      %p53 = scmp.eq.s32.totalorder %s22, 1
      %p54 = por %p52, %p53
      %p55 = scmp.ne.s32.totalorder %s44, %s45
      %p56 = scmp.eq.s32.totalorder %s22, 0
      %p57 = por %p55, %p56
      %p58 = scmp.ne.s32.totalorder %s44, %s45
      %p59 = scmp.eq.s32.totalorder %s23, 1
      %p60 = por %p58, %p59
      %p62 = scmp.ne.s32.totalorder %s45, %s61
      %p63 = scmp.eq.s32.totalorder %s23, 0
      %p64 = por %p62, %p63
      %s65 = sadd.s32 %s24, %s25
      %s66 = sadd.s32 %s36, %s32
      %s67 = ssub.s32 %s65, %s66
      %p68 = scmp.eq.s32.totalorder %s67, 0
      %s70 = sadd.s32 %s69, 1
      %s71 = scalar_select %p68, %s69, %s70
      %p74 = pneg %p68
      %p75 = scmp.eq.s32.totalorder %s17, 1
      %p76 = por %p74, %p75
      %p77 = scmp.ne.s32.totalorder %s69, %s72
      %p78 = scmp.eq.s32.totalorder %s17, 0
      %p79 = por %p77, %p78
      %p80 = scmp.ne.s32.totalorder %s69, %s72
      %p81 = scmp.eq.s32.totalorder %s22, 1
      %p82 = por %p80, %p81
      %p83 = scmp.ne.s32.totalorder %s72, %s73
      %p84 = scmp.eq.s32.totalorder %s22, 0
      %p85 = por %p83, %p84
      %p86 = scmp.ne.s32.totalorder %s72, %s73
      %p87 = scmp.eq.s32.totalorder %s23, 1
      %p88 = por %p86, %p87
      %p90 = scmp.ne.s32.totalorder %s73, %s89
      %p91 = scmp.eq.s32.totalorder %s23, 0
      %p92 = por %p90, %p91
      %s93 = ssub.s32 %s24, %s36
      %p94 = scmp.eq.s32.totalorder %s93, 0
      %s96 = sadd.s32 %s95, 1
      %s97 = scalar_select %p94, %s95, %s96
      %p100 = pneg %p94
      %p101 = scmp.eq.s32.totalorder %s17, 1
      %p102 = por %p100, %p101
      %p103 = scmp.ne.s32.totalorder %s95, %s98
      %p104 = scmp.eq.s32.totalorder %s17, 0
      %p105 = por %p103, %p104
      %p106 = scmp.ne.s32.totalorder %s95, %s98
      %p107 = scmp.eq.s32.totalorder %s22, 1
      %p108 = por %p106, %p107
      %p109 = scmp.ne.s32.totalorder %s98, %s99
      %p110 = scmp.eq.s32.totalorder %s22, 0
      %p111 = por %p109, %p110
      %p112 = scmp.ne.s32.totalorder %s98, %s99
      %p113 = scmp.eq.s32.totalorder %s23, 1
      %p114 = por %p112, %p113
      %p116 = scmp.ne.s32.totalorder %s99, %s115
      %p117 = scmp.eq.s32.totalorder %s23, 0
      %p118 = por %p116, %p117
      %p119 = scmp.le.s32.totalorder 1, %s17
      %p120 = scmp.lt.s32.totalorder %s17, 3
      %p121 = pnand %p119, %p120
      %p122 = pneg %p121
      // Predicated region
      $region9: #{tpu_custom_call.1} parent=5 // pred_check
        _
      $region10: #{tpu_custom_call.1} parent=5 // pred_check_branch
        %124 = sbr.rel (%p121) target = $region12
      $region11: #{tpu_custom_call.1} parent=5 // pred_region
        %s125 = ssub.s32 %s17, 1
      $region12: #{tpu_custom_call.1} parent=5 // pred_fallthru
        _
      %p126 = scmp.lt.s32.totalorder %s17, 2
      // Predicated region
      $region13: #{tpu_custom_call.1} parent=5 // pred_check
        %p127 = pneg %p126
      $region14: #{tpu_custom_call.1} parent=5 // pred_check_branch
        %129 = sbr.rel (%p127) target = $region16
      $region15: #{tpu_custom_call.1} parent=5 // pred_region
        // Predicated region
        $region17: #{tpu_custom_call.1} parent=15 // pred_check
          %p130 = pneg %p51
        $region18: #{tpu_custom_call.1} parent=15 // pred_check_branch
          %132 = sbr.rel (%p130) target = $region20
        $region19: #{tpu_custom_call.1} parent=15 // pred_region
          %s133 = sand.u32 %s41, 1
          %s134 = scalar_lea.sflag [#allocation3], %s133
          %s135 = sand.u32 %s41, 1
          %s136 = smul.addr %s135, 2560
          %s137 = scalar_lea.vmem [#allocation2], %s136
          %s138 = sadd.s32 %s24, %s25
          %s139 = smul.u32 640, %s138
          %s141 = ssub.s32 40960, 40960
          %142 = vsyncadd %s134, %s141
          %s143 = smul.addr %s139, 64
          %s144 = scalar_lea.hbm %s0, %s143
          %s145 = sshll.u32 %s137, 4
          %s146 = int_to_ptr.vmem [resolvable:$true] %s145
          %151 = dma.hbm_to_vmem [thread:$0]  %s144, 40960, %s146, %s134, 64, 64, 4
        $region20: #{tpu_custom_call.1} parent=15 // pred_fallthru
          _
        // Predicated region
        $region21: #{tpu_custom_call.1} parent=15 // pred_check
          %p152 = pneg %p79
        $region22: #{tpu_custom_call.1} parent=15 // pred_check_branch
          %154 = sbr.rel (%p152) target = $region24
        $region23: #{tpu_custom_call.1} parent=15 // pred_region
          %s155 = sand.u32 %s69, 1
          %s156 = scalar_lea.sflag [#allocation6], %s155
          %s157 = sand.u32 %s69, 1
          %s158 = smul.addr %s157, 5120
          %s159 = scalar_lea.vmem [#allocation5], %s158
          %s160 = sadd.s32 %s24, %s25
          %s161 = smul.u32 640, %s160
          %s163 = ssub.s32 81920, 81920
          %164 = vsyncadd %s156, %s163
          %s165 = smul.addr %s161, 128
          %s166 = scalar_lea.hbm %s1, %s165
          %s167 = sshll.u32 %s159, 4
          %s168 = int_to_ptr.vmem [resolvable:$true] %s167
          %173 = dma.hbm_to_vmem [thread:$0]  %s166, 81920, %s168, %s156, 128, 128, 8
        $region24: #{tpu_custom_call.1} parent=15 // pred_fallthru
          _
      $region16: #{tpu_custom_call.1} parent=5 // pred_fallthru
        _
      %p174 = scmp.le.s32.totalorder 1, %s17
      %p175 = scmp.lt.s32.totalorder %s17, 3
      %p176 = pnand %p174, %p175
      %p177 = pneg %p176
      // Predicated region
      $region25: #{tpu_custom_call.1} parent=5 // pred_check
        _
      $region26: #{tpu_custom_call.1} parent=5 // pred_check_branch
        %179 = sbr.rel (%p176) target = $region28
      $region27: #{tpu_custom_call.1} parent=5 // pred_region
        %s180 = ssub.s32 %s17, 1
        %s181 = sand.u32 %s44, 1
        %s182 = scalar_lea.sflag [#allocation3], %s181
        %s183 = sand.u32 %s44, 1
        %s184 = smul.addr %s183, 2560
        %s185 = scalar_lea.vmem [#allocation2], %s184
        // Predicated region
        $region29: #{tpu_custom_call.1} parent=27 // pred_check
          %p186 = pneg %p57
        $region30: #{tpu_custom_call.1} parent=27 // pred_check_branch
          %188 = sbr.rel (%p186) target = $region32
        $region31: #{tpu_custom_call.1} parent=27 // pred_region
          %189 = dma.done %s182, 40960
        $region32: #{tpu_custom_call.1} parent=27 // pred_fallthru
          _
        %s190 = sand.u32 %s72, 1
        %s191 = scalar_lea.sflag [#allocation6], %s190
        %s192 = sand.u32 %s72, 1
        %s193 = smul.addr %s192, 5120
        %s194 = scalar_lea.vmem [#allocation5], %s193
        // Predicated region
        $region33: #{tpu_custom_call.1} parent=27 // pred_check
          %p195 = pneg %p85
        $region34: #{tpu_custom_call.1} parent=27 // pred_check_branch
          %197 = sbr.rel (%p195) target = $region36
        $region35: #{tpu_custom_call.1} parent=27 // pred_region
          %198 = dma.done %s191, 81920
        $region36: #{tpu_custom_call.1} parent=27 // pred_fallthru
          _
        %s199 = sand.u32 %s44, 1
        %s200 = scalar_lea.sflag [#allocation3], %s199
        %s201 = sand.u32 %s44, 1
        %s202 = smul.addr %s201, 2560
        %s203 = scalar_lea.vmem [#allocation2], %s202
        %p204 = pneg %p57
        %p205 = pneg %p54
        %s206 = sand.u32 %s72, 1
        %s207 = scalar_lea.sflag [#allocation6], %s206
        %s208 = sand.u32 %s72, 1
        %s209 = smul.addr %s208, 5120
        %s210 = scalar_lea.vmem [#allocation5], %s209
        %p211 = pneg %p85
        %p212 = pneg %p82
        %p213 = pneg %p111
        %p214 = pneg %p108
        %s215 = sand.u32 %s98, 1
        %s216 = scalar_lea.sflag [#allocation4], %s215
        %s217 = sand.u32 %s98, 1
        %s218 = smul.addr %s217, 24
        %s219 = scalar_lea.vmem [#allocation7], %s218
        %s220 = sadd.s32 %s26, %s27
        %s221 = smul.u32 640, %s220
        %s222 = sadd.s32 %s26, %s27
        %s223 = smul.u32 640, %s222
        %p224 = scmp.eq.s32.totalorder %s27, 0
        // Predicated region
        $region37: #{tpu_custom_call.1} parent=27 // pred_check
          %p225 = pneg %p224
        $region38: #{tpu_custom_call.1} parent=27 // pred_check_branch
          %227 = sbr.rel (%p225) target = $region40
        $region39: #{tpu_custom_call.1} parent=27 // pred_region
          %228 = vst [vmem:[%s219] sm:$0xff] 0.0
          %229 = vst [vmem:[%s219 + $0x8] sm:$0xff] 0.0
          %230 = vst [vmem:[%s219 + $0x10] sm:$0xff] 0.0
        $region40: #{tpu_custom_call.1} parent=27 // pred_fallthru
          _
        %v231 = vld [vmem:[%s185] sm:$0xf]
        %v232 = vld [vmem:[%s185 + $0x4] sm:$0xf]
        %v233 = vld [vmem:[%s185 + $0x8] sm:$0xf]
        %v234 = vld [vmem:[%s185 + $0xc] sm:$0xf]
        %v235 = vld [vmem:[%s185 + $0x10] sm:$0xf]
        %v236 = vld [vmem:[%s185 + $0x14] sm:$0xf]
        %v237 = vld [vmem:[%s185 + $0x18] sm:$0xf]
        %v238 = vld [vmem:[%s185 + $0x1c] sm:$0xf]
        %v239 = vld [vmem:[%s185 + $0x20] sm:$0xf]
        %v240 = vld [vmem:[%s185 + $0x24] sm:$0xf]
        %v241 = vld [vmem:[%s185 + $0x28] sm:$0xf]
        %v242 = vld [vmem:[%s185 + $0x2c] sm:$0xf]
        %v243 = vld [vmem:[%s185 + $0x30] sm:$0xf]
        %v244 = vld [vmem:[%s185 + $0x34] sm:$0xf]
        %v245 = vld [vmem:[%s185 + $0x38] sm:$0xf]
        %v246 = vld [vmem:[%s185 + $0x3c] sm:$0xf]
        %v247 = vld [vmem:[%s185 + $0x40] sm:$0xf]
        %v248 = vld [vmem:[%s185 + $0x44] sm:$0xf]
        %v249 = vld [vmem:[%s185 + $0x48] sm:$0xf]
        %v250 = vld [vmem:[%s185 + $0x4c] sm:$0xf]
        %v251 = vld [vmem:[%s185 + $0x50] sm:$0xf]
        %v252 = vld [vmem:[%s185 + $0x54] sm:$0xf]
        %v253 = vld [vmem:[%s185 + $0x58] sm:$0xf]
        %v254 = vld [vmem:[%s185 + $0x5c] sm:$0xf]
        %v255 = vld [vmem:[%s185 + $0x60] sm:$0xf]
        %v256 = vld [vmem:[%s185 + $0x64] sm:$0xf]
        %v257 = vld [vmem:[%s185 + $0x68] sm:$0xf]
        %v258 = vld [vmem:[%s185 + $0x6c] sm:$0xf]
        %v259 = vld [vmem:[%s185 + $0x70] sm:$0xf]
        %v260 = vld [vmem:[%s185 + $0x74] sm:$0xf]
        %v261 = vld [vmem:[%s185 + $0x78] sm:$0xf]
        %v262 = vld [vmem:[%s185 + $0x7c] sm:$0xf]
        %v263 = vld [vmem:[%s185 + $0x80] sm:$0xf]
        %v264 = vld [vmem:[%s185 + $0x84] sm:$0xf]
        %v265 = vld [vmem:[%s185 + $0x88] sm:$0xf]
        %v266 = vld [vmem:[%s185 + $0x8c] sm:$0xf]
        %v267 = vld [vmem:[%s185 + $0x90] sm:$0xf]
        %v268 = vld [vmem:[%s185 + $0x94] sm:$0xf]
        %v269 = vld [vmem:[%s185 + $0x98] sm:$0xf]
        %v270 = vld [vmem:[%s185 + $0x9c] sm:$0xf]
        %v271 = vld [vmem:[%s185 + $0xa0] sm:$0xf]
        %v272 = vld [vmem:[%s185 + $0xa4] sm:$0xf]
        %v273 = vld [vmem:[%s185 + $0xa8] sm:$0xf]
        %v274 = vld [vmem:[%s185 + $0xac] sm:$0xf]
        %v275 = vld [vmem:[%s185 + $0xb0] sm:$0xf]
        %v276 = vld [vmem:[%s185 + $0xb4] sm:$0xf]
        %v277 = vld [vmem:[%s185 + $0xb8] sm:$0xf]
        %v278 = vld [vmem:[%s185 + $0xbc] sm:$0xf]
        %v279 = vld [vmem:[%s185 + $0xc0] sm:$0xf]
        %v280 = vld [vmem:[%s185 + $0xc4] sm:$0xf]
        %v281 = vld [vmem:[%s185 + $0xc8] sm:$0xf]
        %v282 = vld [vmem:[%s185 + $0xcc] sm:$0xf]
        %v283 = vld [vmem:[%s185 + $0xd0] sm:$0xf]
        %v284 = vld [vmem:[%s185 + $0xd4] sm:$0xf]
        %v285 = vld [vmem:[%s185 + $0xd8] sm:$0xf]
        %v286 = vld [vmem:[%s185 + $0xdc] sm:$0xf]
        %v287 = vld [vmem:[%s185 + $0xe0] sm:$0xf]
        %v288 = vld [vmem:[%s185 + $0xe4] sm:$0xf]
        %v289 = vld [vmem:[%s185 + $0xe8] sm:$0xf]
        %v290 = vld [vmem:[%s185 + $0xec] sm:$0xf]
        %v291 = vld [vmem:[%s185 + $0xf0] sm:$0xf]
        %v292 = vld [vmem:[%s185 + $0xf4] sm:$0xf]
        %v293 = vld [vmem:[%s185 + $0xf8] sm:$0xf]
        %v294 = vld [vmem:[%s185 + $0xfc] sm:$0xf]
        %v295 = vunpack.c.l.bf16 %v231
        %v296 = vunpack.c.l.bf16 %v232
        %v297 = vunpack.c.l.bf16 %v233
        %v298 = vunpack.c.l.bf16 %v234
        %v299 = vunpack.c.l.bf16 %v235
        %v300 = vunpack.c.l.bf16 %v236
        %v301 = vunpack.c.l.bf16 %v237
        %v302 = vunpack.c.l.bf16 %v238
        %v303 = vunpack.c.l.bf16 %v239
        %v304 = vunpack.c.l.bf16 %v240
        %v305 = vunpack.c.l.bf16 %v241
        %v306 = vunpack.c.l.bf16 %v242
        %v307 = vunpack.c.l.bf16 %v243
        %v308 = vunpack.c.l.bf16 %v244
        %v309 = vunpack.c.l.bf16 %v245
        %v310 = vunpack.c.l.bf16 %v246
        %v311 = vunpack.c.l.bf16 %v247
        %v312 = vunpack.c.l.bf16 %v248
        %v313 = vunpack.c.l.bf16 %v249
        %v314 = vunpack.c.l.bf16 %v250
        %v315 = vunpack.c.l.bf16 %v251
        %v316 = vunpack.c.l.bf16 %v252
        %v317 = vunpack.c.l.bf16 %v253
        %v318 = vunpack.c.l.bf16 %v254
        %v319 = vunpack.c.l.bf16 %v255
        %v320 = vunpack.c.l.bf16 %v256
        %v321 = vunpack.c.l.bf16 %v257
        %v322 = vunpack.c.l.bf16 %v258
        %v323 = vunpack.c.l.bf16 %v259
        %v324 = vunpack.c.l.bf16 %v260
        %v325 = vunpack.c.l.bf16 %v261
        %v326 = vunpack.c.l.bf16 %v262
        %v327 = vunpack.c.l.bf16 %v263
        %v328 = vunpack.c.l.bf16 %v264
        %v329 = vunpack.c.l.bf16 %v265
        %v330 = vunpack.c.l.bf16 %v266
        %v331 = vunpack.c.l.bf16 %v267
        %v332 = vunpack.c.l.bf16 %v268
        %v333 = vunpack.c.l.bf16 %v269
        %v334 = vunpack.c.l.bf16 %v270
        %v335 = vunpack.c.l.bf16 %v271
        %v336 = vunpack.c.l.bf16 %v272
        %v337 = vunpack.c.l.bf16 %v273
        %v338 = vunpack.c.l.bf16 %v274
        %v339 = vunpack.c.l.bf16 %v275
        %v340 = vunpack.c.l.bf16 %v276
        %v341 = vunpack.c.l.bf16 %v277
        %v342 = vunpack.c.l.bf16 %v278
        %v343 = vunpack.c.l.bf16 %v279
        %v344 = vunpack.c.l.bf16 %v280
        %v345 = vunpack.c.l.bf16 %v281
        %v346 = vunpack.c.l.bf16 %v282
        %v347 = vunpack.c.l.bf16 %v283
        %v348 = vunpack.c.l.bf16 %v284
        %v349 = vunpack.c.l.bf16 %v285
        %v350 = vunpack.c.l.bf16 %v286
        %v351 = vunpack.c.l.bf16 %v287
        %v352 = vunpack.c.l.bf16 %v288
        %v353 = vunpack.c.l.bf16 %v289
        %v354 = vunpack.c.l.bf16 %v290
        %v355 = vunpack.c.l.bf16 %v291
        %v356 = vunpack.c.l.bf16 %v292
        %v357 = vunpack.c.l.bf16 %v293
        %v358 = vunpack.c.l.bf16 %v294
        %v359 = vxor.u32 %v295, 2147483648
        %v360 = vxor.u32 %v296, 2147483648
        %v361 = vxor.u32 %v297, 2147483648
        %v362 = vxor.u32 %v298, 2147483648
        %v363 = vxor.u32 %v299, 2147483648
        %v364 = vxor.u32 %v300, 2147483648
        %v365 = vxor.u32 %v301, 2147483648
        %v366 = vxor.u32 %v302, 2147483648
        %v367 = vxor.u32 %v303, 2147483648
        %v368 = vxor.u32 %v304, 2147483648
        %v369 = vxor.u32 %v305, 2147483648
        %v370 = vxor.u32 %v306, 2147483648
        %v371 = vxor.u32 %v307, 2147483648
        %v372 = vxor.u32 %v308, 2147483648
        %v373 = vxor.u32 %v309, 2147483648
        %v374 = vxor.u32 %v310, 2147483648
        %v375 = vxor.u32 %v311, 2147483648
        %v376 = vxor.u32 %v312, 2147483648
        %v377 = vxor.u32 %v313, 2147483648
        %v378 = vxor.u32 %v314, 2147483648
        %v379 = vxor.u32 %v315, 2147483648
        %v380 = vxor.u32 %v316, 2147483648
        %v381 = vxor.u32 %v317, 2147483648
        %v382 = vxor.u32 %v318, 2147483648
        %v383 = vxor.u32 %v319, 2147483648
        %v384 = vxor.u32 %v320, 2147483648
        %v385 = vxor.u32 %v321, 2147483648
        %v386 = vxor.u32 %v322, 2147483648
        %v387 = vxor.u32 %v323, 2147483648
        %v388 = vxor.u32 %v324, 2147483648
        %v389 = vxor.u32 %v325, 2147483648
        %v390 = vxor.u32 %v326, 2147483648
        %v391 = vxor.u32 %v327, 2147483648
        %v392 = vxor.u32 %v328, 2147483648
        %v393 = vxor.u32 %v329, 2147483648
        %v394 = vxor.u32 %v330, 2147483648
        %v395 = vxor.u32 %v331, 2147483648
        %v396 = vxor.u32 %v332, 2147483648
        %v397 = vxor.u32 %v333, 2147483648
        %v398 = vxor.u32 %v334, 2147483648
        %v399 = vxor.u32 %v335, 2147483648
        %v400 = vxor.u32 %v336, 2147483648
        %v401 = vxor.u32 %v337, 2147483648
        %v402 = vxor.u32 %v338, 2147483648
        %v403 = vxor.u32 %v339, 2147483648
        %v404 = vxor.u32 %v340, 2147483648
        %v405 = vxor.u32 %v341, 2147483648
        %v406 = vxor.u32 %v342, 2147483648
        %v407 = vxor.u32 %v343, 2147483648
        %v408 = vxor.u32 %v344, 2147483648
        %v409 = vxor.u32 %v345, 2147483648
        %v410 = vxor.u32 %v346, 2147483648
        %v411 = vxor.u32 %v347, 2147483648
        %v412 = vxor.u32 %v348, 2147483648
        %v413 = vxor.u32 %v349, 2147483648
        %v414 = vxor.u32 %v350, 2147483648
        %v415 = vxor.u32 %v351, 2147483648
        %v416 = vxor.u32 %v352, 2147483648
        %v417 = vxor.u32 %v353, 2147483648
        %v418 = vxor.u32 %v354, 2147483648
        %v419 = vxor.u32 %v355, 2147483648
        %v420 = vxor.u32 %v356, 2147483648
        %v421 = vxor.u32 %v357, 2147483648
        %v422 = vxor.u32 %v358, 2147483648
        %v423 = vmul.f32 %v359, 1.442695
        %v424 = vpow.pop %v423
        %v425 = vmul.f32 %v360, 1.442695
        %v426 = vpow.pop %v425
        %v427 = vmul.f32 %v361, 1.442695
        %v428 = vpow.pop %v427
        %v429 = vmul.f32 %v362, 1.442695
        %v430 = vpow.pop %v429
        %v431 = vmul.f32 %v363, 1.442695
        %v432 = vpow.pop %v431
        %v433 = vmul.f32 %v364, 1.442695
        %v434 = vpow.pop %v433
        %v435 = vmul.f32 %v365, 1.442695
        %v436 = vpow.pop %v435
        %v437 = vmul.f32 %v366, 1.442695
        %v438 = vpow.pop %v437
        %v439 = vmul.f32 %v367, 1.442695
        %v440 = vpow.pop %v439
        %v441 = vmul.f32 %v368, 1.442695
        %v442 = vpow.pop %v441
        %v443 = vmul.f32 %v369, 1.442695
        %v444 = vpow.pop %v443
        %v445 = vmul.f32 %v370, 1.442695
        %v446 = vpow.pop %v445
        %v447 = vmul.f32 %v371, 1.442695
        %v448 = vpow.pop %v447
        %v449 = vmul.f32 %v372, 1.442695
        %v450 = vpow.pop %v449
        %v451 = vmul.f32 %v373, 1.442695
        %v452 = vpow.pop %v451
        %v453 = vmul.f32 %v374, 1.442695
        %v454 = vpow.pop %v453
        %v455 = vmul.f32 %v375, 1.442695
        %v456 = vpow.pop %v455
        %v457 = vmul.f32 %v376, 1.442695
        %v458 = vpow.pop %v457
        %v459 = vmul.f32 %v377, 1.442695
        %v460 = vpow.pop %v459
        %v461 = vmul.f32 %v378, 1.442695
        %v462 = vpow.pop %v461
        %v463 = vmul.f32 %v379, 1.442695
        %v464 = vpow.pop %v463
        %v465 = vmul.f32 %v380, 1.442695
        %v466 = vpow.pop %v465
        %v467 = vmul.f32 %v381, 1.442695
        %v468 = vpow.pop %v467
        %v469 = vmul.f32 %v382, 1.442695
        %v470 = vpow.pop %v469
        %v471 = vmul.f32 %v383, 1.442695
        %v472 = vpow.pop %v471
        %v473 = vmul.f32 %v384, 1.442695
        %v474 = vpow.pop %v473
        %v475 = vmul.f32 %v385, 1.442695
        %v476 = vpow.pop %v475
        %v477 = vmul.f32 %v386, 1.442695
        %v478 = vpow.pop %v477
        %v479 = vmul.f32 %v387, 1.442695
        %v480 = vpow.pop %v479
        %v481 = vmul.f32 %v388, 1.442695
        %v482 = vpow.pop %v481
        %v483 = vmul.f32 %v389, 1.442695
        %v484 = vpow.pop %v483
        %v485 = vmul.f32 %v390, 1.442695
        %v486 = vpow.pop %v485
        %v487 = vmul.f32 %v391, 1.442695
        %v488 = vpow.pop %v487
        %v489 = vmul.f32 %v392, 1.442695
        %v490 = vpow.pop %v489
        %v491 = vmul.f32 %v393, 1.442695
        %v492 = vpow.pop %v491
        %v493 = vmul.f32 %v394, 1.442695
        %v494 = vpow.pop %v493
        %v495 = vmul.f32 %v395, 1.442695
        %v496 = vpow.pop %v495
        %v497 = vmul.f32 %v396, 1.442695
        %v498 = vpow.pop %v497
        %v499 = vmul.f32 %v397, 1.442695
        %v500 = vpow.pop %v499
        %v501 = vmul.f32 %v398, 1.442695
        %v502 = vpow.pop %v501
        %v503 = vmul.f32 %v399, 1.442695
        %v504 = vpow.pop %v503
        %v505 = vmul.f32 %v400, 1.442695
        %v506 = vpow.pop %v505
        %v507 = vmul.f32 %v401, 1.442695
        %v508 = vpow.pop %v507
        %v509 = vmul.f32 %v402, 1.442695
        %v510 = vpow.pop %v509
        %v511 = vmul.f32 %v403, 1.442695
        %v512 = vpow.pop %v511
        %v513 = vmul.f32 %v404, 1.442695
        %v514 = vpow.pop %v513
        %v515 = vmul.f32 %v405, 1.442695
        %v516 = vpow.pop %v515
        %v517 = vmul.f32 %v406, 1.442695
        %v518 = vpow.pop %v517
        %v519 = vmul.f32 %v407, 1.442695
        %v520 = vpow.pop %v519
        %v521 = vmul.f32 %v408, 1.442695
        %v522 = vpow.pop %v521
        %v523 = vmul.f32 %v409, 1.442695
        %v524 = vpow.pop %v523
        %v525 = vmul.f32 %v410, 1.442695
        %v526 = vpow.pop %v525
        %v527 = vmul.f32 %v411, 1.442695
        %v528 = vpow.pop %v527
        %v529 = vmul.f32 %v412, 1.442695
        %v530 = vpow.pop %v529
        %v531 = vmul.f32 %v413, 1.442695
        %v532 = vpow.pop %v531
        %v533 = vmul.f32 %v414, 1.442695
        %v534 = vpow.pop %v533
        %v535 = vmul.f32 %v415, 1.442695
        %v536 = vpow.pop %v535
        %v537 = vmul.f32 %v416, 1.442695
        %v538 = vpow.pop %v537
        %v539 = vmul.f32 %v417, 1.442695
        %v540 = vpow.pop %v539
        %v541 = vmul.f32 %v418, 1.442695
        %v542 = vpow.pop %v541
        %v543 = vmul.f32 %v419, 1.442695
        %v544 = vpow.pop %v543
        %v545 = vmul.f32 %v420, 1.442695
        %v546 = vpow.pop %v545
        %v547 = vmul.f32 %v421, 1.442695
        %v548 = vpow.pop %v547
        %v549 = vmul.f32 %v422, 1.442695
        %v550 = vpow.pop %v549
        %v551 = vadd.f32 %v424, 1.0
        %v552 = vadd.f32 %v426, 1.0
        %v553 = vadd.f32 %v428, 1.0
        %v554 = vadd.f32 %v430, 1.0
        %v555 = vadd.f32 %v432, 1.0
        %v556 = vadd.f32 %v434, 1.0
        %v557 = vadd.f32 %v436, 1.0
        %v558 = vadd.f32 %v438, 1.0
        %v559 = vadd.f32 %v440, 1.0
        %v560 = vadd.f32 %v442, 1.0
        %v561 = vadd.f32 %v444, 1.0
        %v562 = vadd.f32 %v446, 1.0
        %v563 = vadd.f32 %v448, 1.0
        %v564 = vadd.f32 %v450, 1.0
        %v565 = vadd.f32 %v452, 1.0
        %v566 = vadd.f32 %v454, 1.0
        %v567 = vadd.f32 %v456, 1.0
        %v568 = vadd.f32 %v458, 1.0
        %v569 = vadd.f32 %v460, 1.0
        %v570 = vadd.f32 %v462, 1.0
        %v571 = vadd.f32 %v464, 1.0
        %v572 = vadd.f32 %v466, 1.0
        %v573 = vadd.f32 %v468, 1.0
        %v574 = vadd.f32 %v470, 1.0
        %v575 = vadd.f32 %v472, 1.0
        %v576 = vadd.f32 %v474, 1.0
        %v577 = vadd.f32 %v476, 1.0
        %v578 = vadd.f32 %v478, 1.0
        %v579 = vadd.f32 %v480, 1.0
        %v580 = vadd.f32 %v482, 1.0
        %v581 = vadd.f32 %v484, 1.0
        %v582 = vadd.f32 %v486, 1.0
        %v583 = vadd.f32 %v488, 1.0
        %v584 = vadd.f32 %v490, 1.0
        %v585 = vadd.f32 %v492, 1.0
        %v586 = vadd.f32 %v494, 1.0
        %v587 = vadd.f32 %v496, 1.0
        %v588 = vadd.f32 %v498, 1.0
        %v589 = vadd.f32 %v500, 1.0
        %v590 = vadd.f32 %v502, 1.0
        %v591 = vadd.f32 %v504, 1.0
        %v592 = vadd.f32 %v506, 1.0
        %v593 = vadd.f32 %v508, 1.0
        %v594 = vadd.f32 %v510, 1.0
        %v595 = vadd.f32 %v512, 1.0
        %v596 = vadd.f32 %v514, 1.0
        %v597 = vadd.f32 %v516, 1.0
        %v598 = vadd.f32 %v518, 1.0
        %v599 = vadd.f32 %v520, 1.0
        %v600 = vadd.f32 %v522, 1.0
        %v601 = vadd.f32 %v524, 1.0
        %v602 = vadd.f32 %v526, 1.0
        %v603 = vadd.f32 %v528, 1.0
        %v604 = vadd.f32 %v530, 1.0
        %v605 = vadd.f32 %v532, 1.0
        %v606 = vadd.f32 %v534, 1.0
        %v607 = vadd.f32 %v536, 1.0
        %v608 = vadd.f32 %v538, 1.0
        %v609 = vadd.f32 %v540, 1.0
        %v610 = vadd.f32 %v542, 1.0
        %v611 = vadd.f32 %v544, 1.0
        %v612 = vadd.f32 %v546, 1.0
        %v613 = vadd.f32 %v548, 1.0
        %v614 = vadd.f32 %v550, 1.0
        %v615 = vrcp.pop %v551
        %v616 = vmul.f32 1.0, %v615
        %v617 = vrcp.pop %v552
        %v618 = vmul.f32 1.0, %v617
        %v619 = vrcp.pop %v553
        %v620 = vmul.f32 1.0, %v619
        %v621 = vrcp.pop %v554
        %v622 = vmul.f32 1.0, %v621
        %v623 = vrcp.pop %v555
        %v624 = vmul.f32 1.0, %v623
        %v625 = vrcp.pop %v556
        %v626 = vmul.f32 1.0, %v625
        %v627 = vrcp.pop %v557
        %v628 = vmul.f32 1.0, %v627
        %v629 = vrcp.pop %v558
        %v630 = vmul.f32 1.0, %v629
        %v631 = vrcp.pop %v559
        %v632 = vmul.f32 1.0, %v631
        %v633 = vrcp.pop %v560
        %v634 = vmul.f32 1.0, %v633
        %v635 = vrcp.pop %v561
        %v636 = vmul.f32 1.0, %v635
        %v637 = vrcp.pop %v562
        %v638 = vmul.f32 1.0, %v637
        %v639 = vrcp.pop %v563
        %v640 = vmul.f32 1.0, %v639
        %v641 = vrcp.pop %v564
        %v642 = vmul.f32 1.0, %v641
        %v643 = vrcp.pop %v565
        %v644 = vmul.f32 1.0, %v643
        %v645 = vrcp.pop %v566
        %v646 = vmul.f32 1.0, %v645
        %v647 = vrcp.pop %v567
        %v648 = vmul.f32 1.0, %v647
        %v649 = vrcp.pop %v568
        %v650 = vmul.f32 1.0, %v649
        %v651 = vrcp.pop %v569
        %v652 = vmul.f32 1.0, %v651
        %v653 = vrcp.pop %v570
        %v654 = vmul.f32 1.0, %v653
        %v655 = vrcp.pop %v571
        %v656 = vmul.f32 1.0, %v655
        %v657 = vrcp.pop %v572
        %v658 = vmul.f32 1.0, %v657
        %v659 = vrcp.pop %v573
        %v660 = vmul.f32 1.0, %v659
        %v661 = vrcp.pop %v574
        %v662 = vmul.f32 1.0, %v661
        %v663 = vrcp.pop %v575
        %v664 = vmul.f32 1.0, %v663
        %v665 = vrcp.pop %v576
        %v666 = vmul.f32 1.0, %v665
        %v667 = vrcp.pop %v577
        %v668 = vmul.f32 1.0, %v667
        %v669 = vrcp.pop %v578
        %v670 = vmul.f32 1.0, %v669
        %v671 = vrcp.pop %v579
        %v672 = vmul.f32 1.0, %v671
        %v673 = vrcp.pop %v580
        %v674 = vmul.f32 1.0, %v673
        %v675 = vrcp.pop %v581
        %v676 = vmul.f32 1.0, %v675
        %v677 = vrcp.pop %v582
        %v678 = vmul.f32 1.0, %v677
        %v679 = vrcp.pop %v583
        %v680 = vmul.f32 1.0, %v679
        %v681 = vrcp.pop %v584
        %v682 = vmul.f32 1.0, %v681
        %v683 = vrcp.pop %v585
        %v684 = vmul.f32 1.0, %v683
        %v685 = vrcp.pop %v586
        %v686 = vmul.f32 1.0, %v685
        %v687 = vrcp.pop %v587
        %v688 = vmul.f32 1.0, %v687
        %v689 = vrcp.pop %v588
        %v690 = vmul.f32 1.0, %v689
        %v691 = vrcp.pop %v589
        %v692 = vmul.f32 1.0, %v691
        %v693 = vrcp.pop %v590
        %v694 = vmul.f32 1.0, %v693
        %v695 = vrcp.pop %v591
        %v696 = vmul.f32 1.0, %v695
        %v697 = vrcp.pop %v592
        %v698 = vmul.f32 1.0, %v697
        %v699 = vrcp.pop %v593
        %v700 = vmul.f32 1.0, %v699
        %v701 = vrcp.pop %v594
        %v702 = vmul.f32 1.0, %v701
        %v703 = vrcp.pop %v595
        %v704 = vmul.f32 1.0, %v703
        %v705 = vrcp.pop %v596
        %v706 = vmul.f32 1.0, %v705
        %v707 = vrcp.pop %v597
        %v708 = vmul.f32 1.0, %v707
        %v709 = vrcp.pop %v598
        %v710 = vmul.f32 1.0, %v709
        %v711 = vrcp.pop %v599
        %v712 = vmul.f32 1.0, %v711
        %v713 = vrcp.pop %v600
        %v714 = vmul.f32 1.0, %v713
        %v715 = vrcp.pop %v601
        %v716 = vmul.f32 1.0, %v715
        %v717 = vrcp.pop %v602
        %v718 = vmul.f32 1.0, %v717
        %v719 = vrcp.pop %v603
        %v720 = vmul.f32 1.0, %v719
        %v721 = vrcp.pop %v604
        %v722 = vmul.f32 1.0, %v721
        %v723 = vrcp.pop %v605
        %v724 = vmul.f32 1.0, %v723
        %v725 = vrcp.pop %v606
        %v726 = vmul.f32 1.0, %v725
        %v727 = vrcp.pop %v607
        %v728 = vmul.f32 1.0, %v727
        %v729 = vrcp.pop %v608
        %v730 = vmul.f32 1.0, %v729
        %v731 = vrcp.pop %v609
        %v732 = vmul.f32 1.0, %v731
        %v733 = vrcp.pop %v610
        %v734 = vmul.f32 1.0, %v733
        %v735 = vrcp.pop %v611
        %v736 = vmul.f32 1.0, %v735
        %v737 = vrcp.pop %v612
        %v738 = vmul.f32 1.0, %v737
        %v739 = vrcp.pop %v613
        %v740 = vmul.f32 1.0, %v739
        %v741 = vrcp.pop %v614
        %v742 = vmul.f32 1.0, %v741
        %v743 = vld [vmem:[%s194] sm:$0xff]
        %v744 = vld [vmem:[%s194 + $0x8] sm:$0xff]
        %v745 = vld [vmem:[%s194 + $0x10] sm:$0xff]
        %v746 = vld [vmem:[%s194 + $0x18] sm:$0xff]
        %v747 = vld [vmem:[%s194 + $0x20] sm:$0xff]
        %v748 = vld [vmem:[%s194 + $0x28] sm:$0xff]
        %v749 = vld [vmem:[%s194 + $0x30] sm:$0xff]
        %v750 = vld [vmem:[%s194 + $0x38] sm:$0xff]
        %v751 = vld [vmem:[%s194 + $0x40] sm:$0xff]
        %v752 = vld [vmem:[%s194 + $0x48] sm:$0xff]
        %v753 = vld [vmem:[%s194 + $0x50] sm:$0xff]
        %v754 = vld [vmem:[%s194 + $0x58] sm:$0xff]
        %v755 = vld [vmem:[%s194 + $0x60] sm:$0xff]
        %v756 = vld [vmem:[%s194 + $0x68] sm:$0xff]
        %v757 = vld [vmem:[%s194 + $0x70] sm:$0xff]
        %v758 = vld [vmem:[%s194 + $0x78] sm:$0xff]
        %v759 = vld [vmem:[%s194 + $0x80] sm:$0xff]
        %v760 = vld [vmem:[%s194 + $0x88] sm:$0xff]
        %v761 = vld [vmem:[%s194 + $0x90] sm:$0xff]
        %v762 = vld [vmem:[%s194 + $0x98] sm:$0xff]
        %v763 = vld [vmem:[%s194 + $0xa0] sm:$0xff]
        %v764 = vld [vmem:[%s194 + $0xa8] sm:$0xff]
        %v765 = vld [vmem:[%s194 + $0xb0] sm:$0xff]
        %v766 = vld [vmem:[%s194 + $0xb8] sm:$0xff]
        %v767 = vld [vmem:[%s194 + $0xc0] sm:$0xff]
        %v768 = vld [vmem:[%s194 + $0xc8] sm:$0xff]
        %v769 = vld [vmem:[%s194 + $0xd0] sm:$0xff]
        %v770 = vld [vmem:[%s194 + $0xd8] sm:$0xff]
        %v771 = vld [vmem:[%s194 + $0xe0] sm:$0xff]
        %v772 = vld [vmem:[%s194 + $0xe8] sm:$0xff]
        %v773 = vld [vmem:[%s194 + $0xf0] sm:$0xff]
        %v774 = vld [vmem:[%s194 + $0xf8] sm:$0xff]
        %v775 = vld [vmem:[%s194 + $0x100] sm:$0xff]
        %v776 = vld [vmem:[%s194 + $0x108] sm:$0xff]
        %v777 = vld [vmem:[%s194 + $0x110] sm:$0xff]
        %v778 = vld [vmem:[%s194 + $0x118] sm:$0xff]
        %v779 = vld [vmem:[%s194 + $0x120] sm:$0xff]
        %v780 = vld [vmem:[%s194 + $0x128] sm:$0xff]
        %v781 = vld [vmem:[%s194 + $0x130] sm:$0xff]
        %v782 = vld [vmem:[%s194 + $0x138] sm:$0xff]
        %v783 = vld [vmem:[%s194 + $0x140] sm:$0xff]
        %v784 = vld [vmem:[%s194 + $0x148] sm:$0xff]
        %v785 = vld [vmem:[%s194 + $0x150] sm:$0xff]
        %v786 = vld [vmem:[%s194 + $0x158] sm:$0xff]
        %v787 = vld [vmem:[%s194 + $0x160] sm:$0xff]
        %v788 = vld [vmem:[%s194 + $0x168] sm:$0xff]
        %v789 = vld [vmem:[%s194 + $0x170] sm:$0xff]
        %v790 = vld [vmem:[%s194 + $0x178] sm:$0xff]
        %v791 = vld [vmem:[%s194 + $0x180] sm:$0xff]
        %v792 = vld [vmem:[%s194 + $0x188] sm:$0xff]
        %v793 = vld [vmem:[%s194 + $0x190] sm:$0xff]
        %v794 = vld [vmem:[%s194 + $0x198] sm:$0xff]
        %v795 = vld [vmem:[%s194 + $0x1a0] sm:$0xff]
        %v796 = vld [vmem:[%s194 + $0x1a8] sm:$0xff]
        %v797 = vld [vmem:[%s194 + $0x1b0] sm:$0xff]
        %v798 = vld [vmem:[%s194 + $0x1b8] sm:$0xff]
        %v799 = vld [vmem:[%s194 + $0x1c0] sm:$0xff]
        %v800 = vld [vmem:[%s194 + $0x1c8] sm:$0xff]
        %v801 = vld [vmem:[%s194 + $0x1d0] sm:$0xff]
        %v802 = vld [vmem:[%s194 + $0x1d8] sm:$0xff]
        %v803 = vld [vmem:[%s194 + $0x1e0] sm:$0xff]
        %v804 = vld [vmem:[%s194 + $0x1e8] sm:$0xff]
        %v805 = vld [vmem:[%s194 + $0x1f0] sm:$0xff]
        %v806 = vld [vmem:[%s194 + $0x1f8] sm:$0xff]
        %v807 = vadd.f32 %v743, %v744
        %v808 = vadd.f32 %v807, %v745
        %v809 = vadd.f32 %v808, %v746
        %v810 = vadd.f32 %v809, %v747
        %v811 = vadd.f32 %v810, %v748
        %v812 = vadd.f32 %v811, %v749
        %v813 = vadd.f32 %v812, %v750
        %v814 = vadd.f32 %v813, %v751
        %v815 = vadd.f32 %v814, %v752
        %v816 = vadd.f32 %v815, %v753
        %v817 = vadd.f32 %v816, %v754
        %v818 = vadd.f32 %v817, %v755
        %v819 = vadd.f32 %v818, %v756
        %v820 = vadd.f32 %v819, %v757
        %v821 = vadd.f32 %v820, %v758
        %v822 = vadd.f32 %v821, %v759
        %v823 = vadd.f32 %v822, %v760
        %v824 = vadd.f32 %v823, %v761
        %v825 = vadd.f32 %v824, %v762
        %v826 = vadd.f32 %v825, %v763
        %v827 = vadd.f32 %v826, %v764
        %v828 = vadd.f32 %v827, %v765
        %v829 = vadd.f32 %v828, %v766
        %v830 = vadd.f32 %v829, %v767
        %v831 = vadd.f32 %v830, %v768
        %v832 = vadd.f32 %v831, %v769
        %v833 = vadd.f32 %v832, %v770
        %v834 = vadd.f32 %v833, %v771
        %v835 = vadd.f32 %v834, %v772
        %v836 = vadd.f32 %v835, %v773
        %v837 = vadd.f32 %v836, %v774
        %v838 = vadd.f32 %v837, %v775
        %v839 = vadd.f32 %v838, %v776
        %v840 = vadd.f32 %v839, %v777
        %v841 = vadd.f32 %v840, %v778
        %v842 = vadd.f32 %v841, %v779
        %v843 = vadd.f32 %v842, %v780
        %v844 = vadd.f32 %v843, %v781
        %v845 = vadd.f32 %v844, %v782
        %v846 = vadd.f32 %v845, %v783
        %v847 = vadd.f32 %v846, %v784
        %v848 = vadd.f32 %v847, %v785
        %v849 = vadd.f32 %v848, %v786
        %v850 = vadd.f32 %v849, %v787
        %v851 = vadd.f32 %v850, %v788
        %v852 = vadd.f32 %v851, %v789
        %v853 = vadd.f32 %v852, %v790
        %v854 = vadd.f32 %v853, %v791
        %v855 = vadd.f32 %v854, %v792
        %v856 = vadd.f32 %v855, %v793
        %v857 = vadd.f32 %v856, %v794
        %v858 = vadd.f32 %v857, %v795
        %v859 = vadd.f32 %v858, %v796
        %v860 = vadd.f32 %v859, %v797
        %v861 = vadd.f32 %v860, %v798
        %v862 = vadd.f32 %v861, %v799
        %v863 = vadd.f32 %v862, %v800
        %v864 = vadd.f32 %v863, %v801
        %v865 = vadd.f32 %v864, %v802
        %v866 = vadd.f32 %v865, %v803
        %v867 = vadd.f32 %v866, %v804
        %v868 = vadd.f32 %v867, %v805
        %v869 = vadd.f32 %v868, %v806
        %v870 = vadd.f32 %v869, 0.0
        %v871 = vmul.f32 %v616, %v743
        %v872 = vmul.f32 %v618, %v744
        %v873 = vmul.f32 %v620, %v745
        %v874 = vmul.f32 %v622, %v746
        %v875 = vmul.f32 %v624, %v747
        %v876 = vmul.f32 %v626, %v748
        %v877 = vmul.f32 %v628, %v749
        %v878 = vmul.f32 %v630, %v750
        %v879 = vmul.f32 %v632, %v751
        %v880 = vmul.f32 %v634, %v752
        %v881 = vmul.f32 %v636, %v753
        %v882 = vmul.f32 %v638, %v754
        %v883 = vmul.f32 %v640, %v755
        %v884 = vmul.f32 %v642, %v756
        %v885 = vmul.f32 %v644, %v757
        %v886 = vmul.f32 %v646, %v758
        %v887 = vmul.f32 %v648, %v759
        %v888 = vmul.f32 %v650, %v760
        %v889 = vmul.f32 %v652, %v761
        %v890 = vmul.f32 %v654, %v762
        %v891 = vmul.f32 %v656, %v763
        %v892 = vmul.f32 %v658, %v764
        %v893 = vmul.f32 %v660, %v765
        %v894 = vmul.f32 %v662, %v766
        %v895 = vmul.f32 %v664, %v767
        %v896 = vmul.f32 %v666, %v768
        %v897 = vmul.f32 %v668, %v769
        %v898 = vmul.f32 %v670, %v770
        %v899 = vmul.f32 %v672, %v771
        %v900 = vmul.f32 %v674, %v772
        %v901 = vmul.f32 %v676, %v773
        %v902 = vmul.f32 %v678, %v774
        %v903 = vmul.f32 %v680, %v775
        %v904 = vmul.f32 %v682, %v776
        %v905 = vmul.f32 %v684, %v777
        %v906 = vmul.f32 %v686, %v778
        %v907 = vmul.f32 %v688, %v779
        %v908 = vmul.f32 %v690, %v780
        %v909 = vmul.f32 %v692, %v781
        %v910 = vmul.f32 %v694, %v782
        %v911 = vmul.f32 %v696, %v783
        %v912 = vmul.f32 %v698, %v784
        %v913 = vmul.f32 %v700, %v785
        %v914 = vmul.f32 %v702, %v786
        %v915 = vmul.f32 %v704, %v787
        %v916 = vmul.f32 %v706, %v788
        %v917 = vmul.f32 %v708, %v789
        %v918 = vmul.f32 %v710, %v790
        %v919 = vmul.f32 %v712, %v791
        %v920 = vmul.f32 %v714, %v792
        %v921 = vmul.f32 %v716, %v793
        %v922 = vmul.f32 %v718, %v794
        %v923 = vmul.f32 %v720, %v795
        %v924 = vmul.f32 %v722, %v796
        %v925 = vmul.f32 %v724, %v797
        %v926 = vmul.f32 %v726, %v798
        %v927 = vmul.f32 %v728, %v799
        %v928 = vmul.f32 %v730, %v800
        %v929 = vmul.f32 %v732, %v801
        %v930 = vmul.f32 %v734, %v802
        %v931 = vmul.f32 %v736, %v803
        %v932 = vmul.f32 %v738, %v804
        %v933 = vmul.f32 %v740, %v805
        %v934 = vmul.f32 %v742, %v806
        %v935 = vadd.f32 %v871, %v872
        %v936 = vadd.f32 %v935, %v873
        %v937 = vadd.f32 %v936, %v874
        %v938 = vadd.f32 %v937, %v875
        %v939 = vadd.f32 %v938, %v876
        %v940 = vadd.f32 %v939, %v877
        %v941 = vadd.f32 %v940, %v878
        %v942 = vadd.f32 %v941, %v879
        %v943 = vadd.f32 %v942, %v880
        %v944 = vadd.f32 %v943, %v881
        %v945 = vadd.f32 %v944, %v882
        %v946 = vadd.f32 %v945, %v883
        %v947 = vadd.f32 %v946, %v884
        %v948 = vadd.f32 %v947, %v885
        %v949 = vadd.f32 %v948, %v886
        %v950 = vadd.f32 %v949, %v887
        %v951 = vadd.f32 %v950, %v888
        %v952 = vadd.f32 %v951, %v889
        %v953 = vadd.f32 %v952, %v890
        %v954 = vadd.f32 %v953, %v891
        %v955 = vadd.f32 %v954, %v892
        %v956 = vadd.f32 %v955, %v893
        %v957 = vadd.f32 %v956, %v894
        %v958 = vadd.f32 %v957, %v895
        %v959 = vadd.f32 %v958, %v896
        %v960 = vadd.f32 %v959, %v897
        %v961 = vadd.f32 %v960, %v898
        %v962 = vadd.f32 %v961, %v899
        %v963 = vadd.f32 %v962, %v900
        %v964 = vadd.f32 %v963, %v901
        %v965 = vadd.f32 %v964, %v902
        %v966 = vadd.f32 %v965, %v903
        %v967 = vadd.f32 %v966, %v904
        %v968 = vadd.f32 %v967, %v905
        %v969 = vadd.f32 %v968, %v906
        %v970 = vadd.f32 %v969, %v907
        %v971 = vadd.f32 %v970, %v908
        %v972 = vadd.f32 %v971, %v909
        %v973 = vadd.f32 %v972, %v910
        %v974 = vadd.f32 %v973, %v911
        %v975 = vadd.f32 %v974, %v912
        %v976 = vadd.f32 %v975, %v913
        %v977 = vadd.f32 %v976, %v914
        %v978 = vadd.f32 %v977, %v915
        %v979 = vadd.f32 %v978, %v916
        %v980 = vadd.f32 %v979, %v917
        %v981 = vadd.f32 %v980, %v918
        %v982 = vadd.f32 %v981, %v919
        %v983 = vadd.f32 %v982, %v920
        %v984 = vadd.f32 %v983, %v921
        %v985 = vadd.f32 %v984, %v922
        %v986 = vadd.f32 %v985, %v923
        %v987 = vadd.f32 %v986, %v924
        %v988 = vadd.f32 %v987, %v925
        %v989 = vadd.f32 %v988, %v926
        %v990 = vadd.f32 %v989, %v927
        %v991 = vadd.f32 %v990, %v928
        %v992 = vadd.f32 %v991, %v929
        %v993 = vadd.f32 %v992, %v930
        %v994 = vadd.f32 %v993, %v931
        %v995 = vadd.f32 %v994, %v932
        %v996 = vadd.f32 %v995, %v933
        %v997 = vadd.f32 %v996, %v934
        %v998 = vadd.f32 %v997, 0.0
        %v999 = vadd.f32 %v616, %v618
        %v1000 = vadd.f32 %v999, %v620
        %v1001 = vadd.f32 %v1000, %v622
        %v1002 = vadd.f32 %v1001, %v624
        %v1003 = vadd.f32 %v1002, %v626
        %v1004 = vadd.f32 %v1003, %v628
        %v1005 = vadd.f32 %v1004, %v630
        %v1006 = vadd.f32 %v1005, %v632
        %v1007 = vadd.f32 %v1006, %v634
        %v1008 = vadd.f32 %v1007, %v636
        %v1009 = vadd.f32 %v1008, %v638
        %v1010 = vadd.f32 %v1009, %v640
        %v1011 = vadd.f32 %v1010, %v642
        %v1012 = vadd.f32 %v1011, %v644
        %v1013 = vadd.f32 %v1012, %v646
        %v1014 = vadd.f32 %v1013, %v648
        %v1015 = vadd.f32 %v1014, %v650
        %v1016 = vadd.f32 %v1015, %v652
        %v1017 = vadd.f32 %v1016, %v654
        %v1018 = vadd.f32 %v1017, %v656
        %v1019 = vadd.f32 %v1018, %v658
        %v1020 = vadd.f32 %v1019, %v660
        %v1021 = vadd.f32 %v1020, %v662
        %v1022 = vadd.f32 %v1021, %v664
        %v1023 = vadd.f32 %v1022, %v666
        %v1024 = vadd.f32 %v1023, %v668
        %v1025 = vadd.f32 %v1024, %v670
        %v1026 = vadd.f32 %v1025, %v672
        %v1027 = vadd.f32 %v1026, %v674
        %v1028 = vadd.f32 %v1027, %v676
        %v1029 = vadd.f32 %v1028, %v678
        %v1030 = vadd.f32 %v1029, %v680
        %v1031 = vadd.f32 %v1030, %v682
        %v1032 = vadd.f32 %v1031, %v684
        %v1033 = vadd.f32 %v1032, %v686
        %v1034 = vadd.f32 %v1033, %v688
        %v1035 = vadd.f32 %v1034, %v690
        %v1036 = vadd.f32 %v1035, %v692
        %v1037 = vadd.f32 %v1036, %v694
        %v1038 = vadd.f32 %v1037, %v696
        %v1039 = vadd.f32 %v1038, %v698
        %v1040 = vadd.f32 %v1039, %v700
        %v1041 = vadd.f32 %v1040, %v702
        %v1042 = vadd.f32 %v1041, %v704
        %v1043 = vadd.f32 %v1042, %v706
        %v1044 = vadd.f32 %v1043, %v708
        %v1045 = vadd.f32 %v1044, %v710
        %v1046 = vadd.f32 %v1045, %v712
        %v1047 = vadd.f32 %v1046, %v714
        %v1048 = vadd.f32 %v1047, %v716
        %v1049 = vadd.f32 %v1048, %v718
        %v1050 = vadd.f32 %v1049, %v720
        %v1051 = vadd.f32 %v1050, %v722
        %v1052 = vadd.f32 %v1051, %v724
        %v1053 = vadd.f32 %v1052, %v726
        %v1054 = vadd.f32 %v1053, %v728
        %v1055 = vadd.f32 %v1054, %v730
        %v1056 = vadd.f32 %v1055, %v732
        %v1057 = vadd.f32 %v1056, %v734
        %v1058 = vadd.f32 %v1057, %v736
        %v1059 = vadd.f32 %v1058, %v738
        %v1060 = vadd.f32 %v1059, %v740
        %v1061 = vadd.f32 %v1060, %v742
        %v1062 = vadd.f32 %v1061, 0.0
        %v1063 = vld [vmem:[%s185 + $0x100] sm:$0xf]
        %v1064 = vld [vmem:[%s185 + $0x104] sm:$0xf]
        %v1065 = vld [vmem:[%s185 + $0x108] sm:$0xf]
        %v1066 = vld [vmem:[%s185 + $0x10c] sm:$0xf]
        %v1067 = vld [vmem:[%s185 + $0x110] sm:$0xf]
        %v1068 = vld [vmem:[%s185 + $0x114] sm:$0xf]
        %v1069 = vld [vmem:[%s185 + $0x118] sm:$0xf]
        %v1070 = vld [vmem:[%s185 + $0x11c] sm:$0xf]
        %v1071 = vld [vmem:[%s185 + $0x120] sm:$0xf]
        %v1072 = vld [vmem:[%s185 + $0x124] sm:$0xf]
        %v1073 = vld [vmem:[%s185 + $0x128] sm:$0xf]
        %v1074 = vld [vmem:[%s185 + $0x12c] sm:$0xf]
        %v1075 = vld [vmem:[%s185 + $0x130] sm:$0xf]
        %v1076 = vld [vmem:[%s185 + $0x134] sm:$0xf]
        %v1077 = vld [vmem:[%s185 + $0x138] sm:$0xf]
        %v1078 = vld [vmem:[%s185 + $0x13c] sm:$0xf]
        %v1079 = vld [vmem:[%s185 + $0x140] sm:$0xf]
        %v1080 = vld [vmem:[%s185 + $0x144] sm:$0xf]
        %v1081 = vld [vmem:[%s185 + $0x148] sm:$0xf]
        %v1082 = vld [vmem:[%s185 + $0x14c] sm:$0xf]
        %v1083 = vld [vmem:[%s185 + $0x150] sm:$0xf]
        %v1084 = vld [vmem:[%s185 + $0x154] sm:$0xf]
        %v1085 = vld [vmem:[%s185 + $0x158] sm:$0xf]
        %v1086 = vld [vmem:[%s185 + $0x15c] sm:$0xf]
        %v1087 = vld [vmem:[%s185 + $0x160] sm:$0xf]
        %v1088 = vld [vmem:[%s185 + $0x164] sm:$0xf]
        %v1089 = vld [vmem:[%s185 + $0x168] sm:$0xf]
        %v1090 = vld [vmem:[%s185 + $0x16c] sm:$0xf]
        %v1091 = vld [vmem:[%s185 + $0x170] sm:$0xf]
        %v1092 = vld [vmem:[%s185 + $0x174] sm:$0xf]
        %v1093 = vld [vmem:[%s185 + $0x178] sm:$0xf]
        %v1094 = vld [vmem:[%s185 + $0x17c] sm:$0xf]
        %v1095 = vld [vmem:[%s185 + $0x180] sm:$0xf]
        %v1096 = vld [vmem:[%s185 + $0x184] sm:$0xf]
        %v1097 = vld [vmem:[%s185 + $0x188] sm:$0xf]
        %v1098 = vld [vmem:[%s185 + $0x18c] sm:$0xf]
        %v1099 = vld [vmem:[%s185 + $0x190] sm:$0xf]
        %v1100 = vld [vmem:[%s185 + $0x194] sm:$0xf]
        %v1101 = vld [vmem:[%s185 + $0x198] sm:$0xf]
        %v1102 = vld [vmem:[%s185 + $0x19c] sm:$0xf]
        %v1103 = vld [vmem:[%s185 + $0x1a0] sm:$0xf]
        %v1104 = vld [vmem:[%s185 + $0x1a4] sm:$0xf]
        %v1105 = vld [vmem:[%s185 + $0x1a8] sm:$0xf]
        %v1106 = vld [vmem:[%s185 + $0x1ac] sm:$0xf]
        %v1107 = vld [vmem:[%s185 + $0x1b0] sm:$0xf]
        %v1108 = vld [vmem:[%s185 + $0x1b4] sm:$0xf]
        %v1109 = vld [vmem:[%s185 + $0x1b8] sm:$0xf]
        %v1110 = vld [vmem:[%s185 + $0x1bc] sm:$0xf]
        %v1111 = vld [vmem:[%s185 + $0x1c0] sm:$0xf]
        %v1112 = vld [vmem:[%s185 + $0x1c4] sm:$0xf]
        %v1113 = vld [vmem:[%s185 + $0x1c8] sm:$0xf]
        %v1114 = vld [vmem:[%s185 + $0x1cc] sm:$0xf]
        %v1115 = vld [vmem:[%s185 + $0x1d0] sm:$0xf]
        %v1116 = vld [vmem:[%s185 + $0x1d4] sm:$0xf]
        %v1117 = vld [vmem:[%s185 + $0x1d8] sm:$0xf]
        %v1118 = vld [vmem:[%s185 + $0x1dc] sm:$0xf]
        %v1119 = vld [vmem:[%s185 + $0x1e0] sm:$0xf]
        %v1120 = vld [vmem:[%s185 + $0x1e4] sm:$0xf]
        %v1121 = vld [vmem:[%s185 + $0x1e8] sm:$0xf]
        %v1122 = vld [vmem:[%s185 + $0x1ec] sm:$0xf]
        %v1123 = vld [vmem:[%s185 + $0x1f0] sm:$0xf]
        %v1124 = vld [vmem:[%s185 + $0x1f4] sm:$0xf]
        %v1125 = vld [vmem:[%s185 + $0x1f8] sm:$0xf]
        %v1126 = vld [vmem:[%s185 + $0x1fc] sm:$0xf]
        %v1127 = vunpack.c.l.bf16 %v1063
        %v1128 = vunpack.c.l.bf16 %v1064
        %v1129 = vunpack.c.l.bf16 %v1065
        %v1130 = vunpack.c.l.bf16 %v1066
        %v1131 = vunpack.c.l.bf16 %v1067
        %v1132 = vunpack.c.l.bf16 %v1068
        %v1133 = vunpack.c.l.bf16 %v1069
        %v1134 = vunpack.c.l.bf16 %v1070
        %v1135 = vunpack.c.l.bf16 %v1071
        %v1136 = vunpack.c.l.bf16 %v1072
        %v1137 = vunpack.c.l.bf16 %v1073
        %v1138 = vunpack.c.l.bf16 %v1074
        %v1139 = vunpack.c.l.bf16 %v1075
        %v1140 = vunpack.c.l.bf16 %v1076
        %v1141 = vunpack.c.l.bf16 %v1077
        %v1142 = vunpack.c.l.bf16 %v1078
        %v1143 = vunpack.c.l.bf16 %v1079
        %v1144 = vunpack.c.l.bf16 %v1080
        %v1145 = vunpack.c.l.bf16 %v1081
        %v1146 = vunpack.c.l.bf16 %v1082
        %v1147 = vunpack.c.l.bf16 %v1083
        %v1148 = vunpack.c.l.bf16 %v1084
        %v1149 = vunpack.c.l.bf16 %v1085
        %v1150 = vunpack.c.l.bf16 %v1086
        %v1151 = vunpack.c.l.bf16 %v1087
        %v1152 = vunpack.c.l.bf16 %v1088
        %v1153 = vunpack.c.l.bf16 %v1089
        %v1154 = vunpack.c.l.bf16 %v1090
        %v1155 = vunpack.c.l.bf16 %v1091
        %v1156 = vunpack.c.l.bf16 %v1092
        %v1157 = vunpack.c.l.bf16 %v1093
        %v1158 = vunpack.c.l.bf16 %v1094
        %v1159 = vunpack.c.l.bf16 %v1095
        %v1160 = vunpack.c.l.bf16 %v1096
        %v1161 = vunpack.c.l.bf16 %v1097
        %v1162 = vunpack.c.l.bf16 %v1098
        %v1163 = vunpack.c.l.bf16 %v1099
        %v1164 = vunpack.c.l.bf16 %v1100
        %v1165 = vunpack.c.l.bf16 %v1101
        %v1166 = vunpack.c.l.bf16 %v1102
        %v1167 = vunpack.c.l.bf16 %v1103
        %v1168 = vunpack.c.l.bf16 %v1104
        %v1169 = vunpack.c.l.bf16 %v1105
        %v1170 = vunpack.c.l.bf16 %v1106
        %v1171 = vunpack.c.l.bf16 %v1107
        %v1172 = vunpack.c.l.bf16 %v1108
        %v1173 = vunpack.c.l.bf16 %v1109
        %v1174 = vunpack.c.l.bf16 %v1110
        %v1175 = vunpack.c.l.bf16 %v1111
        %v1176 = vunpack.c.l.bf16 %v1112
        %v1177 = vunpack.c.l.bf16 %v1113
        %v1178 = vunpack.c.l.bf16 %v1114
        %v1179 = vunpack.c.l.bf16 %v1115
        %v1180 = vunpack.c.l.bf16 %v1116
        %v1181 = vunpack.c.l.bf16 %v1117
        %v1182 = vunpack.c.l.bf16 %v1118
        %v1183 = vunpack.c.l.bf16 %v1119
        %v1184 = vunpack.c.l.bf16 %v1120
        %v1185 = vunpack.c.l.bf16 %v1121
        %v1186 = vunpack.c.l.bf16 %v1122
        %v1187 = vunpack.c.l.bf16 %v1123
        %v1188 = vunpack.c.l.bf16 %v1124
        %v1189 = vunpack.c.l.bf16 %v1125
        %v1190 = vunpack.c.l.bf16 %v1126
        %v1191 = vxor.u32 %v1127, 2147483648
        %v1192 = vxor.u32 %v1128, 2147483648
        %v1193 = vxor.u32 %v1129, 2147483648
        %v1194 = vxor.u32 %v1130, 2147483648
        %v1195 = vxor.u32 %v1131, 2147483648
        %v1196 = vxor.u32 %v1132, 2147483648
        %v1197 = vxor.u32 %v1133, 2147483648
        %v1198 = vxor.u32 %v1134, 2147483648
        %v1199 = vxor.u32 %v1135, 2147483648
        %v1200 = vxor.u32 %v1136, 2147483648
        %v1201 = vxor.u32 %v1137, 2147483648
        %v1202 = vxor.u32 %v1138, 2147483648
        %v1203 = vxor.u32 %v1139, 2147483648
        %v1204 = vxor.u32 %v1140, 2147483648
        %v1205 = vxor.u32 %v1141, 2147483648
        %v1206 = vxor.u32 %v1142, 2147483648
        %v1207 = vxor.u32 %v1143, 2147483648
        %v1208 = vxor.u32 %v1144, 2147483648
        %v1209 = vxor.u32 %v1145, 2147483648
        %v1210 = vxor.u32 %v1146, 2147483648
        %v1211 = vxor.u32 %v1147, 2147483648
        %v1212 = vxor.u32 %v1148, 2147483648
        %v1213 = vxor.u32 %v1149, 2147483648
        %v1214 = vxor.u32 %v1150, 2147483648
        %v1215 = vxor.u32 %v1151, 2147483648
        %v1216 = vxor.u32 %v1152, 2147483648
        %v1217 = vxor.u32 %v1153, 2147483648
        %v1218 = vxor.u32 %v1154, 2147483648
        %v1219 = vxor.u32 %v1155, 2147483648
        %v1220 = vxor.u32 %v1156, 2147483648
        %v1221 = vxor.u32 %v1157, 2147483648
        %v1222 = vxor.u32 %v1158, 2147483648
        %v1223 = vxor.u32 %v1159, 2147483648
        %v1224 = vxor.u32 %v1160, 2147483648
        %v1225 = vxor.u32 %v1161, 2147483648
        %v1226 = vxor.u32 %v1162, 2147483648
        %v1227 = vxor.u32 %v1163, 2147483648
        %v1228 = vxor.u32 %v1164, 2147483648
        %v1229 = vxor.u32 %v1165, 2147483648
        %v1230 = vxor.u32 %v1166, 2147483648
        %v1231 = vxor.u32 %v1167, 2147483648
        %v1232 = vxor.u32 %v1168, 2147483648
        %v1233 = vxor.u32 %v1169, 2147483648
        %v1234 = vxor.u32 %v1170, 2147483648
        %v1235 = vxor.u32 %v1171, 2147483648
        %v1236 = vxor.u32 %v1172, 2147483648
        %v1237 = vxor.u32 %v1173, 2147483648
        %v1238 = vxor.u32 %v1174, 2147483648
        %v1239 = vxor.u32 %v1175, 2147483648
        %v1240 = vxor.u32 %v1176, 2147483648
        %v1241 = vxor.u32 %v1177, 2147483648
        %v1242 = vxor.u32 %v1178, 2147483648
        %v1243 = vxor.u32 %v1179, 2147483648
        %v1244 = vxor.u32 %v1180, 2147483648
        %v1245 = vxor.u32 %v1181, 2147483648
        %v1246 = vxor.u32 %v1182, 2147483648
        %v1247 = vxor.u32 %v1183, 2147483648
        %v1248 = vxor.u32 %v1184, 2147483648
        %v1249 = vxor.u32 %v1185, 2147483648
        %v1250 = vxor.u32 %v1186, 2147483648
        %v1251 = vxor.u32 %v1187, 2147483648
        %v1252 = vxor.u32 %v1188, 2147483648
        %v1253 = vxor.u32 %v1189, 2147483648
        %v1254 = vxor.u32 %v1190, 2147483648
        %v1255 = vmul.f32 %v1191, 1.442695
        %v1256 = vpow.pop %v1255
        %v1257 = vmul.f32 %v1192, 1.442695
        %v1258 = vpow.pop %v1257
        %v1259 = vmul.f32 %v1193, 1.442695
        %v1260 = vpow.pop %v1259
        %v1261 = vmul.f32 %v1194, 1.442695
        %v1262 = vpow.pop %v1261
        %v1263 = vmul.f32 %v1195, 1.442695
        %v1264 = vpow.pop %v1263
        %v1265 = vmul.f32 %v1196, 1.442695
        %v1266 = vpow.pop %v1265
        %v1267 = vmul.f32 %v1197, 1.442695
        %v1268 = vpow.pop %v1267
        %v1269 = vmul.f32 %v1198, 1.442695
        %v1270 = vpow.pop %v1269
        %v1271 = vmul.f32 %v1199, 1.442695
        %v1272 = vpow.pop %v1271
        %v1273 = vmul.f32 %v1200, 1.442695
        %v1274 = vpow.pop %v1273
        %v1275 = vmul.f32 %v1201, 1.442695
        %v1276 = vpow.pop %v1275
        %v1277 = vmul.f32 %v1202, 1.442695
        %v1278 = vpow.pop %v1277
        %v1279 = vmul.f32 %v1203, 1.442695
        %v1280 = vpow.pop %v1279
        %v1281 = vmul.f32 %v1204, 1.442695
        %v1282 = vpow.pop %v1281
        %v1283 = vmul.f32 %v1205, 1.442695
        %v1284 = vpow.pop %v1283
        %v1285 = vmul.f32 %v1206, 1.442695
        %v1286 = vpow.pop %v1285
        %v1287 = vmul.f32 %v1207, 1.442695
        %v1288 = vpow.pop %v1287
        %v1289 = vmul.f32 %v1208, 1.442695
        %v1290 = vpow.pop %v1289
        %v1291 = vmul.f32 %v1209, 1.442695
        %v1292 = vpow.pop %v1291
        %v1293 = vmul.f32 %v1210, 1.442695
        %v1294 = vpow.pop %v1293
        %v1295 = vmul.f32 %v1211, 1.442695
        %v1296 = vpow.pop %v1295
        %v1297 = vmul.f32 %v1212, 1.442695
        %v1298 = vpow.pop %v1297
        %v1299 = vmul.f32 %v1213, 1.442695
        %v1300 = vpow.pop %v1299
        %v1301 = vmul.f32 %v1214, 1.442695
        %v1302 = vpow.pop %v1301
        %v1303 = vmul.f32 %v1215, 1.442695
        %v1304 = vpow.pop %v1303
        %v1305 = vmul.f32 %v1216, 1.442695
        %v1306 = vpow.pop %v1305
        %v1307 = vmul.f32 %v1217, 1.442695
        %v1308 = vpow.pop %v1307
        %v1309 = vmul.f32 %v1218, 1.442695
        %v1310 = vpow.pop %v1309
        %v1311 = vmul.f32 %v1219, 1.442695
        %v1312 = vpow.pop %v1311
        %v1313 = vmul.f32 %v1220, 1.442695
        %v1314 = vpow.pop %v1313
        %v1315 = vmul.f32 %v1221, 1.442695
        %v1316 = vpow.pop %v1315
        %v1317 = vmul.f32 %v1222, 1.442695
        %v1318 = vpow.pop %v1317
        %v1319 = vmul.f32 %v1223, 1.442695
        %v1320 = vpow.pop %v1319
        %v1321 = vmul.f32 %v1224, 1.442695
        %v1322 = vpow.pop %v1321
        %v1323 = vmul.f32 %v1225, 1.442695
        %v1324 = vpow.pop %v1323
        %v1325 = vmul.f32 %v1226, 1.442695
        %v1326 = vpow.pop %v1325
        %v1327 = vmul.f32 %v1227, 1.442695
        %v1328 = vpow.pop %v1327
        %v1329 = vmul.f32 %v1228, 1.442695
        %v1330 = vpow.pop %v1329
        %v1331 = vmul.f32 %v1229, 1.442695
        %v1332 = vpow.pop %v1331
        %v1333 = vmul.f32 %v1230, 1.442695
        %v1334 = vpow.pop %v1333
        %v1335 = vmul.f32 %v1231, 1.442695
        %v1336 = vpow.pop %v1335
        %v1337 = vmul.f32 %v1232, 1.442695
        %v1338 = vpow.pop %v1337
        %v1339 = vmul.f32 %v1233, 1.442695
        %v1340 = vpow.pop %v1339
        %v1341 = vmul.f32 %v1234, 1.442695
        %v1342 = vpow.pop %v1341
        %v1343 = vmul.f32 %v1235, 1.442695
        %v1344 = vpow.pop %v1343
        %v1345 = vmul.f32 %v1236, 1.442695
        %v1346 = vpow.pop %v1345
        %v1347 = vmul.f32 %v1237, 1.442695
        %v1348 = vpow.pop %v1347
        %v1349 = vmul.f32 %v1238, 1.442695
        %v1350 = vpow.pop %v1349
        %v1351 = vmul.f32 %v1239, 1.442695
        %v1352 = vpow.pop %v1351
        %v1353 = vmul.f32 %v1240, 1.442695
        %v1354 = vpow.pop %v1353
        %v1355 = vmul.f32 %v1241, 1.442695
        %v1356 = vpow.pop %v1355
        %v1357 = vmul.f32 %v1242, 1.442695
        %v1358 = vpow.pop %v1357
        %v1359 = vmul.f32 %v1243, 1.442695
        %v1360 = vpow.pop %v1359
        %v1361 = vmul.f32 %v1244, 1.442695
        %v1362 = vpow.pop %v1361
        %v1363 = vmul.f32 %v1245, 1.442695
        %v1364 = vpow.pop %v1363
        %v1365 = vmul.f32 %v1246, 1.442695
        %v1366 = vpow.pop %v1365
        %v1367 = vmul.f32 %v1247, 1.442695
        %v1368 = vpow.pop %v1367
        %v1369 = vmul.f32 %v1248, 1.442695
        %v1370 = vpow.pop %v1369
        %v1371 = vmul.f32 %v1249, 1.442695
        %v1372 = vpow.pop %v1371
        %v1373 = vmul.f32 %v1250, 1.442695
        %v1374 = vpow.pop %v1373
        %v1375 = vmul.f32 %v1251, 1.442695
        %v1376 = vpow.pop %v1375
        %v1377 = vmul.f32 %v1252, 1.442695
        %v1378 = vpow.pop %v1377
        %v1379 = vmul.f32 %v1253, 1.442695
        %v1380 = vpow.pop %v1379
        %v1381 = vmul.f32 %v1254, 1.442695
        %v1382 = vpow.pop %v1381
        %v1383 = vadd.f32 %v1256, 1.0
        %v1384 = vadd.f32 %v1258, 1.0
        %v1385 = vadd.f32 %v1260, 1.0
        %v1386 = vadd.f32 %v1262, 1.0
        %v1387 = vadd.f32 %v1264, 1.0
        %v1388 = vadd.f32 %v1266, 1.0
        %v1389 = vadd.f32 %v1268, 1.0
        %v1390 = vadd.f32 %v1270, 1.0
        %v1391 = vadd.f32 %v1272, 1.0
        %v1392 = vadd.f32 %v1274, 1.0
        %v1393 = vadd.f32 %v1276, 1.0
        %v1394 = vadd.f32 %v1278, 1.0
        %v1395 = vadd.f32 %v1280, 1.0
        %v1396 = vadd.f32 %v1282, 1.0
        %v1397 = vadd.f32 %v1284, 1.0
        %v1398 = vadd.f32 %v1286, 1.0
        %v1399 = vadd.f32 %v1288, 1.0
        %v1400 = vadd.f32 %v1290, 1.0
        %v1401 = vadd.f32 %v1292, 1.0
        %v1402 = vadd.f32 %v1294, 1.0
        %v1403 = vadd.f32 %v1296, 1.0
        %v1404 = vadd.f32 %v1298, 1.0
        %v1405 = vadd.f32 %v1300, 1.0
        %v1406 = vadd.f32 %v1302, 1.0
        %v1407 = vadd.f32 %v1304, 1.0
        %v1408 = vadd.f32 %v1306, 1.0
        %v1409 = vadd.f32 %v1308, 1.0
        %v1410 = vadd.f32 %v1310, 1.0
        %v1411 = vadd.f32 %v1312, 1.0
        %v1412 = vadd.f32 %v1314, 1.0
        %v1413 = vadd.f32 %v1316, 1.0
        %v1414 = vadd.f32 %v1318, 1.0
        %v1415 = vadd.f32 %v1320, 1.0
        %v1416 = vadd.f32 %v1322, 1.0
        %v1417 = vadd.f32 %v1324, 1.0
        %v1418 = vadd.f32 %v1326, 1.0
        %v1419 = vadd.f32 %v1328, 1.0
        %v1420 = vadd.f32 %v1330, 1.0
        %v1421 = vadd.f32 %v1332, 1.0
        %v1422 = vadd.f32 %v1334, 1.0
        %v1423 = vadd.f32 %v1336, 1.0
        %v1424 = vadd.f32 %v1338, 1.0
        %v1425 = vadd.f32 %v1340, 1.0
        %v1426 = vadd.f32 %v1342, 1.0
        %v1427 = vadd.f32 %v1344, 1.0
        %v1428 = vadd.f32 %v1346, 1.0
        %v1429 = vadd.f32 %v1348, 1.0
        %v1430 = vadd.f32 %v1350, 1.0
        %v1431 = vadd.f32 %v1352, 1.0
        %v1432 = vadd.f32 %v1354, 1.0
        %v1433 = vadd.f32 %v1356, 1.0
        %v1434 = vadd.f32 %v1358, 1.0
        %v1435 = vadd.f32 %v1360, 1.0
        %v1436 = vadd.f32 %v1362, 1.0
        %v1437 = vadd.f32 %v1364, 1.0
        %v1438 = vadd.f32 %v1366, 1.0
        %v1439 = vadd.f32 %v1368, 1.0
        %v1440 = vadd.f32 %v1370, 1.0
        %v1441 = vadd.f32 %v1372, 1.0
        %v1442 = vadd.f32 %v1374, 1.0
        %v1443 = vadd.f32 %v1376, 1.0
        %v1444 = vadd.f32 %v1378, 1.0
        %v1445 = vadd.f32 %v1380, 1.0
        %v1446 = vadd.f32 %v1382, 1.0
        %v1447 = vrcp.pop %v1383
        %v1448 = vmul.f32 1.0, %v1447
        %v1449 = vrcp.pop %v1384
        %v1450 = vmul.f32 1.0, %v1449
        %v1451 = vrcp.pop %v1385
        %v1452 = vmul.f32 1.0, %v1451
        %v1453 = vrcp.pop %v1386
        %v1454 = vmul.f32 1.0, %v1453
        %v1455 = vrcp.pop %v1387
        %v1456 = vmul.f32 1.0, %v1455
        %v1457 = vrcp.pop %v1388
        %v1458 = vmul.f32 1.0, %v1457
        %v1459 = vrcp.pop %v1389
        %v1460 = vmul.f32 1.0, %v1459
        %v1461 = vrcp.pop %v1390
        %v1462 = vmul.f32 1.0, %v1461
        %v1463 = vrcp.pop %v1391
        %v1464 = vmul.f32 1.0, %v1463
        %v1465 = vrcp.pop %v1392
        %v1466 = vmul.f32 1.0, %v1465
        %v1467 = vrcp.pop %v1393
        %v1468 = vmul.f32 1.0, %v1467
        %v1469 = vrcp.pop %v1394
        %v1470 = vmul.f32 1.0, %v1469
        %v1471 = vrcp.pop %v1395
        %v1472 = vmul.f32 1.0, %v1471
        %v1473 = vrcp.pop %v1396
        %v1474 = vmul.f32 1.0, %v1473
        %v1475 = vrcp.pop %v1397
        %v1476 = vmul.f32 1.0, %v1475
        %v1477 = vrcp.pop %v1398
        %v1478 = vmul.f32 1.0, %v1477
        %v1479 = vrcp.pop %v1399
        %v1480 = vmul.f32 1.0, %v1479
        %v1481 = vrcp.pop %v1400
        %v1482 = vmul.f32 1.0, %v1481
        %v1483 = vrcp.pop %v1401
        %v1484 = vmul.f32 1.0, %v1483
        %v1485 = vrcp.pop %v1402
        %v1486 = vmul.f32 1.0, %v1485
        %v1487 = vrcp.pop %v1403
        %v1488 = vmul.f32 1.0, %v1487
        %v1489 = vrcp.pop %v1404
        %v1490 = vmul.f32 1.0, %v1489
        %v1491 = vrcp.pop %v1405
        %v1492 = vmul.f32 1.0, %v1491
        %v1493 = vrcp.pop %v1406
        %v1494 = vmul.f32 1.0, %v1493
        %v1495 = vrcp.pop %v1407
        %v1496 = vmul.f32 1.0, %v1495
        %v1497 = vrcp.pop %v1408
        %v1498 = vmul.f32 1.0, %v1497
        %v1499 = vrcp.pop %v1409
        %v1500 = vmul.f32 1.0, %v1499
        %v1501 = vrcp.pop %v1410
        %v1502 = vmul.f32 1.0, %v1501
        %v1503 = vrcp.pop %v1411
        %v1504 = vmul.f32 1.0, %v1503
        %v1505 = vrcp.pop %v1412
        %v1506 = vmul.f32 1.0, %v1505
        %v1507 = vrcp.pop %v1413
        %v1508 = vmul.f32 1.0, %v1507
        %v1509 = vrcp.pop %v1414
        %v1510 = vmul.f32 1.0, %v1509
        %v1511 = vrcp.pop %v1415
        %v1512 = vmul.f32 1.0, %v1511
        %v1513 = vrcp.pop %v1416
        %v1514 = vmul.f32 1.0, %v1513
        %v1515 = vrcp.pop %v1417
        %v1516 = vmul.f32 1.0, %v1515
        %v1517 = vrcp.pop %v1418
        %v1518 = vmul.f32 1.0, %v1517
        %v1519 = vrcp.pop %v1419
        %v1520 = vmul.f32 1.0, %v1519
        %v1521 = vrcp.pop %v1420
        %v1522 = vmul.f32 1.0, %v1521
        %v1523 = vrcp.pop %v1421
        %v1524 = vmul.f32 1.0, %v1523
        %v1525 = vrcp.pop %v1422
        %v1526 = vmul.f32 1.0, %v1525
        %v1527 = vrcp.pop %v1423
        %v1528 = vmul.f32 1.0, %v1527
        %v1529 = vrcp.pop %v1424
        %v1530 = vmul.f32 1.0, %v1529
        %v1531 = vrcp.pop %v1425
        %v1532 = vmul.f32 1.0, %v1531
        %v1533 = vrcp.pop %v1426
        %v1534 = vmul.f32 1.0, %v1533
        %v1535 = vrcp.pop %v1427
        %v1536 = vmul.f32 1.0, %v1535
        %v1537 = vrcp.pop %v1428
        %v1538 = vmul.f32 1.0, %v1537
        %v1539 = vrcp.pop %v1429
        %v1540 = vmul.f32 1.0, %v1539
        %v1541 = vrcp.pop %v1430
        %v1542 = vmul.f32 1.0, %v1541
        %v1543 = vrcp.pop %v1431
        %v1544 = vmul.f32 1.0, %v1543
        %v1545 = vrcp.pop %v1432
        %v1546 = vmul.f32 1.0, %v1545
        %v1547 = vrcp.pop %v1433
        %v1548 = vmul.f32 1.0, %v1547
        %v1549 = vrcp.pop %v1434
        %v1550 = vmul.f32 1.0, %v1549
        %v1551 = vrcp.pop %v1435
        %v1552 = vmul.f32 1.0, %v1551
        %v1553 = vrcp.pop %v1436
        %v1554 = vmul.f32 1.0, %v1553
        %v1555 = vrcp.pop %v1437
        %v1556 = vmul.f32 1.0, %v1555
        %v1557 = vrcp.pop %v1438
        %v1558 = vmul.f32 1.0, %v1557
        %v1559 = vrcp.pop %v1439
        %v1560 = vmul.f32 1.0, %v1559
        %v1561 = vrcp.pop %v1440
        %v1562 = vmul.f32 1.0, %v1561
        %v1563 = vrcp.pop %v1441
        %v1564 = vmul.f32 1.0, %v1563
        %v1565 = vrcp.pop %v1442
        %v1566 = vmul.f32 1.0, %v1565
        %v1567 = vrcp.pop %v1443
        %v1568 = vmul.f32 1.0, %v1567
        %v1569 = vrcp.pop %v1444
        %v1570 = vmul.f32 1.0, %v1569
        %v1571 = vrcp.pop %v1445
        %v1572 = vmul.f32 1.0, %v1571
        %v1573 = vrcp.pop %v1446
        %v1574 = vmul.f32 1.0, %v1573
        %v1575 = vld [vmem:[%s194 + $0x200] sm:$0xff]
        %v1576 = vld [vmem:[%s194 + $0x208] sm:$0xff]
        %v1577 = vld [vmem:[%s194 + $0x210] sm:$0xff]
        %v1578 = vld [vmem:[%s194 + $0x218] sm:$0xff]
        %v1579 = vld [vmem:[%s194 + $0x220] sm:$0xff]
        %v1580 = vld [vmem:[%s194 + $0x228] sm:$0xff]
        %v1581 = vld [vmem:[%s194 + $0x230] sm:$0xff]
        %v1582 = vld [vmem:[%s194 + $0x238] sm:$0xff]
        %v1583 = vld [vmem:[%s194 + $0x240] sm:$0xff]
        %v1584 = vld [vmem:[%s194 + $0x248] sm:$0xff]
        %v1585 = vld [vmem:[%s194 + $0x250] sm:$0xff]
        %v1586 = vld [vmem:[%s194 + $0x258] sm:$0xff]
        %v1587 = vld [vmem:[%s194 + $0x260] sm:$0xff]
        %v1588 = vld [vmem:[%s194 + $0x268] sm:$0xff]
        %v1589 = vld [vmem:[%s194 + $0x270] sm:$0xff]
        %v1590 = vld [vmem:[%s194 + $0x278] sm:$0xff]
        %v1591 = vld [vmem:[%s194 + $0x280] sm:$0xff]
        %v1592 = vld [vmem:[%s194 + $0x288] sm:$0xff]
        %v1593 = vld [vmem:[%s194 + $0x290] sm:$0xff]
        %v1594 = vld [vmem:[%s194 + $0x298] sm:$0xff]
        %v1595 = vld [vmem:[%s194 + $0x2a0] sm:$0xff]
        %v1596 = vld [vmem:[%s194 + $0x2a8] sm:$0xff]
        %v1597 = vld [vmem:[%s194 + $0x2b0] sm:$0xff]
        %v1598 = vld [vmem:[%s194 + $0x2b8] sm:$0xff]
        %v1599 = vld [vmem:[%s194 + $0x2c0] sm:$0xff]
        %v1600 = vld [vmem:[%s194 + $0x2c8] sm:$0xff]
        %v1601 = vld [vmem:[%s194 + $0x2d0] sm:$0xff]
        %v1602 = vld [vmem:[%s194 + $0x2d8] sm:$0xff]
        %v1603 = vld [vmem:[%s194 + $0x2e0] sm:$0xff]
        %v1604 = vld [vmem:[%s194 + $0x2e8] sm:$0xff]
        %v1605 = vld [vmem:[%s194 + $0x2f0] sm:$0xff]
        %v1606 = vld [vmem:[%s194 + $0x2f8] sm:$0xff]
        %v1607 = vld [vmem:[%s194 + $0x300] sm:$0xff]
        %v1608 = vld [vmem:[%s194 + $0x308] sm:$0xff]
        %v1609 = vld [vmem:[%s194 + $0x310] sm:$0xff]
        %v1610 = vld [vmem:[%s194 + $0x318] sm:$0xff]
        %v1611 = vld [vmem:[%s194 + $0x320] sm:$0xff]
        %v1612 = vld [vmem:[%s194 + $0x328] sm:$0xff]
        %v1613 = vld [vmem:[%s194 + $0x330] sm:$0xff]
        %v1614 = vld [vmem:[%s194 + $0x338] sm:$0xff]
        %v1615 = vld [vmem:[%s194 + $0x340] sm:$0xff]
        %v1616 = vld [vmem:[%s194 + $0x348] sm:$0xff]
        %v1617 = vld [vmem:[%s194 + $0x350] sm:$0xff]
        %v1618 = vld [vmem:[%s194 + $0x358] sm:$0xff]
        %v1619 = vld [vmem:[%s194 + $0x360] sm:$0xff]
        %v1620 = vld [vmem:[%s194 + $0x368] sm:$0xff]
        %v1621 = vld [vmem:[%s194 + $0x370] sm:$0xff]
        %v1622 = vld [vmem:[%s194 + $0x378] sm:$0xff]
        %v1623 = vld [vmem:[%s194 + $0x380] sm:$0xff]
        %v1624 = vld [vmem:[%s194 + $0x388] sm:$0xff]
        %v1625 = vld [vmem:[%s194 + $0x390] sm:$0xff]
        %v1626 = vld [vmem:[%s194 + $0x398] sm:$0xff]
        %v1627 = vld [vmem:[%s194 + $0x3a0] sm:$0xff]
        %v1628 = vld [vmem:[%s194 + $0x3a8] sm:$0xff]
        %v1629 = vld [vmem:[%s194 + $0x3b0] sm:$0xff]
        %v1630 = vld [vmem:[%s194 + $0x3b8] sm:$0xff]
        %v1631 = vld [vmem:[%s194 + $0x3c0] sm:$0xff]
        %v1632 = vld [vmem:[%s194 + $0x3c8] sm:$0xff]
        %v1633 = vld [vmem:[%s194 + $0x3d0] sm:$0xff]
        %v1634 = vld [vmem:[%s194 + $0x3d8] sm:$0xff]
        %v1635 = vld [vmem:[%s194 + $0x3e0] sm:$0xff]
        %v1636 = vld [vmem:[%s194 + $0x3e8] sm:$0xff]
        %v1637 = vld [vmem:[%s194 + $0x3f0] sm:$0xff]
        %v1638 = vld [vmem:[%s194 + $0x3f8] sm:$0xff]
        %v1639 = vadd.f32 %v1575, %v1576
        %v1640 = vadd.f32 %v1639, %v1577
        %v1641 = vadd.f32 %v1640, %v1578
        %v1642 = vadd.f32 %v1641, %v1579
        %v1643 = vadd.f32 %v1642, %v1580
        %v1644 = vadd.f32 %v1643, %v1581
        %v1645 = vadd.f32 %v1644, %v1582
        %v1646 = vadd.f32 %v1645, %v1583
        %v1647 = vadd.f32 %v1646, %v1584
        %v1648 = vadd.f32 %v1647, %v1585
        %v1649 = vadd.f32 %v1648, %v1586
        %v1650 = vadd.f32 %v1649, %v1587
        %v1651 = vadd.f32 %v1650, %v1588
        %v1652 = vadd.f32 %v1651, %v1589
        %v1653 = vadd.f32 %v1652, %v1590
        %v1654 = vadd.f32 %v1653, %v1591
        %v1655 = vadd.f32 %v1654, %v1592
        %v1656 = vadd.f32 %v1655, %v1593
        %v1657 = vadd.f32 %v1656, %v1594
        %v1658 = vadd.f32 %v1657, %v1595
        %v1659 = vadd.f32 %v1658, %v1596
        %v1660 = vadd.f32 %v1659, %v1597
        %v1661 = vadd.f32 %v1660, %v1598
        %v1662 = vadd.f32 %v1661, %v1599
        %v1663 = vadd.f32 %v1662, %v1600
        %v1664 = vadd.f32 %v1663, %v1601
        %v1665 = vadd.f32 %v1664, %v1602
        %v1666 = vadd.f32 %v1665, %v1603
        %v1667 = vadd.f32 %v1666, %v1604
        %v1668 = vadd.f32 %v1667, %v1605
        %v1669 = vadd.f32 %v1668, %v1606
        %v1670 = vadd.f32 %v1669, %v1607
        %v1671 = vadd.f32 %v1670, %v1608
        %v1672 = vadd.f32 %v1671, %v1609
        %v1673 = vadd.f32 %v1672, %v1610
        %v1674 = vadd.f32 %v1673, %v1611
        %v1675 = vadd.f32 %v1674, %v1612
        %v1676 = vadd.f32 %v1675, %v1613
        %v1677 = vadd.f32 %v1676, %v1614
        %v1678 = vadd.f32 %v1677, %v1615
        %v1679 = vadd.f32 %v1678, %v1616
        %v1680 = vadd.f32 %v1679, %v1617
        %v1681 = vadd.f32 %v1680, %v1618
        %v1682 = vadd.f32 %v1681, %v1619
        %v1683 = vadd.f32 %v1682, %v1620
        %v1684 = vadd.f32 %v1683, %v1621
        %v1685 = vadd.f32 %v1684, %v1622
        %v1686 = vadd.f32 %v1685, %v1623
        %v1687 = vadd.f32 %v1686, %v1624
        %v1688 = vadd.f32 %v1687, %v1625
        %v1689 = vadd.f32 %v1688, %v1626
        %v1690 = vadd.f32 %v1689, %v1627
        %v1691 = vadd.f32 %v1690, %v1628
        %v1692 = vadd.f32 %v1691, %v1629
        %v1693 = vadd.f32 %v1692, %v1630
        %v1694 = vadd.f32 %v1693, %v1631
        %v1695 = vadd.f32 %v1694, %v1632
        %v1696 = vadd.f32 %v1695, %v1633
        %v1697 = vadd.f32 %v1696, %v1634
        %v1698 = vadd.f32 %v1697, %v1635
        %v1699 = vadd.f32 %v1698, %v1636
        %v1700 = vadd.f32 %v1699, %v1637
        %v1701 = vadd.f32 %v1700, %v1638
        %v1702 = vadd.f32 %v870, %v1701
        %v1703 = vmul.f32 %v1448, %v1575
        %v1704 = vmul.f32 %v1450, %v1576
        %v1705 = vmul.f32 %v1452, %v1577
        %v1706 = vmul.f32 %v1454, %v1578
        %v1707 = vmul.f32 %v1456, %v1579
        %v1708 = vmul.f32 %v1458, %v1580
        %v1709 = vmul.f32 %v1460, %v1581
        %v1710 = vmul.f32 %v1462, %v1582
        %v1711 = vmul.f32 %v1464, %v1583
        %v1712 = vmul.f32 %v1466, %v1584
        %v1713 = vmul.f32 %v1468, %v1585
        %v1714 = vmul.f32 %v1470, %v1586
        %v1715 = vmul.f32 %v1472, %v1587
        %v1716 = vmul.f32 %v1474, %v1588
        %v1717 = vmul.f32 %v1476, %v1589
        %v1718 = vmul.f32 %v1478, %v1590
        %v1719 = vmul.f32 %v1480, %v1591
        %v1720 = vmul.f32 %v1482, %v1592
        %v1721 = vmul.f32 %v1484, %v1593
        %v1722 = vmul.f32 %v1486, %v1594
        %v1723 = vmul.f32 %v1488, %v1595
        %v1724 = vmul.f32 %v1490, %v1596
        %v1725 = vmul.f32 %v1492, %v1597
        %v1726 = vmul.f32 %v1494, %v1598
        %v1727 = vmul.f32 %v1496, %v1599
        %v1728 = vmul.f32 %v1498, %v1600
        %v1729 = vmul.f32 %v1500, %v1601
        %v1730 = vmul.f32 %v1502, %v1602
        %v1731 = vmul.f32 %v1504, %v1603
        %v1732 = vmul.f32 %v1506, %v1604
        %v1733 = vmul.f32 %v1508, %v1605
        %v1734 = vmul.f32 %v1510, %v1606
        %v1735 = vmul.f32 %v1512, %v1607
        %v1736 = vmul.f32 %v1514, %v1608
        %v1737 = vmul.f32 %v1516, %v1609
        %v1738 = vmul.f32 %v1518, %v1610
        %v1739 = vmul.f32 %v1520, %v1611
        %v1740 = vmul.f32 %v1522, %v1612
        %v1741 = vmul.f32 %v1524, %v1613
        %v1742 = vmul.f32 %v1526, %v1614
        %v1743 = vmul.f32 %v1528, %v1615
        %v1744 = vmul.f32 %v1530, %v1616
        %v1745 = vmul.f32 %v1532, %v1617
        %v1746 = vmul.f32 %v1534, %v1618
        %v1747 = vmul.f32 %v1536, %v1619
        %v1748 = vmul.f32 %v1538, %v1620
        %v1749 = vmul.f32 %v1540, %v1621
        %v1750 = vmul.f32 %v1542, %v1622
        %v1751 = vmul.f32 %v1544, %v1623
        %v1752 = vmul.f32 %v1546, %v1624
        %v1753 = vmul.f32 %v1548, %v1625
        %v1754 = vmul.f32 %v1550, %v1626
        %v1755 = vmul.f32 %v1552, %v1627
        %v1756 = vmul.f32 %v1554, %v1628
        %v1757 = vmul.f32 %v1556, %v1629
        %v1758 = vmul.f32 %v1558, %v1630
        %v1759 = vmul.f32 %v1560, %v1631
        %v1760 = vmul.f32 %v1562, %v1632
        %v1761 = vmul.f32 %v1564, %v1633
        %v1762 = vmul.f32 %v1566, %v1634
        %v1763 = vmul.f32 %v1568, %v1635
        %v1764 = vmul.f32 %v1570, %v1636
        %v1765 = vmul.f32 %v1572, %v1637
        %v1766 = vmul.f32 %v1574, %v1638
        %v1767 = vadd.f32 %v1703, %v1704
        %v1768 = vadd.f32 %v1767, %v1705
        %v1769 = vadd.f32 %v1768, %v1706
        %v1770 = vadd.f32 %v1769, %v1707
        %v1771 = vadd.f32 %v1770, %v1708
        %v1772 = vadd.f32 %v1771, %v1709
        %v1773 = vadd.f32 %v1772, %v1710
        %v1774 = vadd.f32 %v1773, %v1711
        %v1775 = vadd.f32 %v1774, %v1712
        %v1776 = vadd.f32 %v1775, %v1713
        %v1777 = vadd.f32 %v1776, %v1714
        %v1778 = vadd.f32 %v1777, %v1715
        %v1779 = vadd.f32 %v1778, %v1716
        %v1780 = vadd.f32 %v1779, %v1717
        %v1781 = vadd.f32 %v1780, %v1718
        %v1782 = vadd.f32 %v1781, %v1719
        %v1783 = vadd.f32 %v1782, %v1720
        %v1784 = vadd.f32 %v1783, %v1721
        %v1785 = vadd.f32 %v1784, %v1722
        %v1786 = vadd.f32 %v1785, %v1723
        %v1787 = vadd.f32 %v1786, %v1724
        %v1788 = vadd.f32 %v1787, %v1725
        %v1789 = vadd.f32 %v1788, %v1726
        %v1790 = vadd.f32 %v1789, %v1727
        %v1791 = vadd.f32 %v1790, %v1728
        %v1792 = vadd.f32 %v1791, %v1729
        %v1793 = vadd.f32 %v1792, %v1730
        %v1794 = vadd.f32 %v1793, %v1731
        %v1795 = vadd.f32 %v1794, %v1732
        %v1796 = vadd.f32 %v1795, %v1733
        %v1797 = vadd.f32 %v1796, %v1734
        %v1798 = vadd.f32 %v1797, %v1735
        %v1799 = vadd.f32 %v1798, %v1736
        %v1800 = vadd.f32 %v1799, %v1737
        %v1801 = vadd.f32 %v1800, %v1738
        %v1802 = vadd.f32 %v1801, %v1739
        %v1803 = vadd.f32 %v1802, %v1740
        %v1804 = vadd.f32 %v1803, %v1741
        %v1805 = vadd.f32 %v1804, %v1742
        %v1806 = vadd.f32 %v1805, %v1743
        %v1807 = vadd.f32 %v1806, %v1744
        %v1808 = vadd.f32 %v1807, %v1745
        %v1809 = vadd.f32 %v1808, %v1746
        %v1810 = vadd.f32 %v1809, %v1747
        %v1811 = vadd.f32 %v1810, %v1748
        %v1812 = vadd.f32 %v1811, %v1749
        %v1813 = vadd.f32 %v1812, %v1750
        %v1814 = vadd.f32 %v1813, %v1751
        %v1815 = vadd.f32 %v1814, %v1752
        %v1816 = vadd.f32 %v1815, %v1753
        %v1817 = vadd.f32 %v1816, %v1754
        %v1818 = vadd.f32 %v1817, %v1755
        %v1819 = vadd.f32 %v1818, %v1756
        %v1820 = vadd.f32 %v1819, %v1757
        %v1821 = vadd.f32 %v1820, %v1758
        %v1822 = vadd.f32 %v1821, %v1759
        %v1823 = vadd.f32 %v1822, %v1760
        %v1824 = vadd.f32 %v1823, %v1761
        %v1825 = vadd.f32 %v1824, %v1762
        %v1826 = vadd.f32 %v1825, %v1763
        %v1827 = vadd.f32 %v1826, %v1764
        %v1828 = vadd.f32 %v1827, %v1765
        %v1829 = vadd.f32 %v1828, %v1766
        %v1830 = vadd.f32 %v998, %v1829
        %v1831 = vadd.f32 %v1448, %v1450
        %v1832 = vadd.f32 %v1831, %v1452
        %v1833 = vadd.f32 %v1832, %v1454
        %v1834 = vadd.f32 %v1833, %v1456
        %v1835 = vadd.f32 %v1834, %v1458
        %v1836 = vadd.f32 %v1835, %v1460
        %v1837 = vadd.f32 %v1836, %v1462
        %v1838 = vadd.f32 %v1837, %v1464
        %v1839 = vadd.f32 %v1838, %v1466
        %v1840 = vadd.f32 %v1839, %v1468
        %v1841 = vadd.f32 %v1840, %v1470
        %v1842 = vadd.f32 %v1841, %v1472
        %v1843 = vadd.f32 %v1842, %v1474
        %v1844 = vadd.f32 %v1843, %v1476
        %v1845 = vadd.f32 %v1844, %v1478
        %v1846 = vadd.f32 %v1845, %v1480
        %v1847 = vadd.f32 %v1846, %v1482
        %v1848 = vadd.f32 %v1847, %v1484
        %v1849 = vadd.f32 %v1848, %v1486
        %v1850 = vadd.f32 %v1849, %v1488
        %v1851 = vadd.f32 %v1850, %v1490
        %v1852 = vadd.f32 %v1851, %v1492
        %v1853 = vadd.f32 %v1852, %v1494
        %v1854 = vadd.f32 %v1853, %v1496
        %v1855 = vadd.f32 %v1854, %v1498
        %v1856 = vadd.f32 %v1855, %v1500
        %v1857 = vadd.f32 %v1856, %v1502
        %v1858 = vadd.f32 %v1857, %v1504
        %v1859 = vadd.f32 %v1858, %v1506
        %v1860 = vadd.f32 %v1859, %v1508
        %v1861 = vadd.f32 %v1860, %v1510
        %v1862 = vadd.f32 %v1861, %v1512
        %v1863 = vadd.f32 %v1862, %v1514
        %v1864 = vadd.f32 %v1863, %v1516
        %v1865 = vadd.f32 %v1864, %v1518
        %v1866 = vadd.f32 %v1865, %v1520
        %v1867 = vadd.f32 %v1866, %v1522
        %v1868 = vadd.f32 %v1867, %v1524
        %v1869 = vadd.f32 %v1868, %v1526
        %v1870 = vadd.f32 %v1869, %v1528
        %v1871 = vadd.f32 %v1870, %v1530
        %v1872 = vadd.f32 %v1871, %v1532
        %v1873 = vadd.f32 %v1872, %v1534
        %v1874 = vadd.f32 %v1873, %v1536
        %v1875 = vadd.f32 %v1874, %v1538
        %v1876 = vadd.f32 %v1875, %v1540
        %v1877 = vadd.f32 %v1876, %v1542
        %v1878 = vadd.f32 %v1877, %v1544
        %v1879 = vadd.f32 %v1878, %v1546
        %v1880 = vadd.f32 %v1879, %v1548
        %v1881 = vadd.f32 %v1880, %v1550
        %v1882 = vadd.f32 %v1881, %v1552
        %v1883 = vadd.f32 %v1882, %v1554
        %v1884 = vadd.f32 %v1883, %v1556
        %v1885 = vadd.f32 %v1884, %v1558
        %v1886 = vadd.f32 %v1885, %v1560
        %v1887 = vadd.f32 %v1886, %v1562
        %v1888 = vadd.f32 %v1887, %v1564
        %v1889 = vadd.f32 %v1888, %v1566
        %v1890 = vadd.f32 %v1889, %v1568
        %v1891 = vadd.f32 %v1890, %v1570
        %v1892 = vadd.f32 %v1891, %v1572
        %v1893 = vadd.f32 %v1892, %v1574
        %v1894 = vadd.f32 %v1062, %v1893
        %v1895 = vld [vmem:[%s185 + $0x200] sm:$0xf]
        %v1896 = vld [vmem:[%s185 + $0x204] sm:$0xf]
        %v1897 = vld [vmem:[%s185 + $0x208] sm:$0xf]
        %v1898 = vld [vmem:[%s185 + $0x20c] sm:$0xf]
        %v1899 = vld [vmem:[%s185 + $0x210] sm:$0xf]
        %v1900 = vld [vmem:[%s185 + $0x214] sm:$0xf]
        %v1901 = vld [vmem:[%s185 + $0x218] sm:$0xf]
        %v1902 = vld [vmem:[%s185 + $0x21c] sm:$0xf]
        %v1903 = vld [vmem:[%s185 + $0x220] sm:$0xf]
        %v1904 = vld [vmem:[%s185 + $0x224] sm:$0xf]
        %v1905 = vld [vmem:[%s185 + $0x228] sm:$0xf]
        %v1906 = vld [vmem:[%s185 + $0x22c] sm:$0xf]
        %v1907 = vld [vmem:[%s185 + $0x230] sm:$0xf]
        %v1908 = vld [vmem:[%s185 + $0x234] sm:$0xf]
        %v1909 = vld [vmem:[%s185 + $0x238] sm:$0xf]
        %v1910 = vld [vmem:[%s185 + $0x23c] sm:$0xf]
        %v1911 = vld [vmem:[%s185 + $0x240] sm:$0xf]
        %v1912 = vld [vmem:[%s185 + $0x244] sm:$0xf]
        %v1913 = vld [vmem:[%s185 + $0x248] sm:$0xf]
        %v1914 = vld [vmem:[%s185 + $0x24c] sm:$0xf]
        %v1915 = vld [vmem:[%s185 + $0x250] sm:$0xf]
        %v1916 = vld [vmem:[%s185 + $0x254] sm:$0xf]
        %v1917 = vld [vmem:[%s185 + $0x258] sm:$0xf]
        %v1918 = vld [vmem:[%s185 + $0x25c] sm:$0xf]
        %v1919 = vld [vmem:[%s185 + $0x260] sm:$0xf]
        %v1920 = vld [vmem:[%s185 + $0x264] sm:$0xf]
        %v1921 = vld [vmem:[%s185 + $0x268] sm:$0xf]
        %v1922 = vld [vmem:[%s185 + $0x26c] sm:$0xf]
        %v1923 = vld [vmem:[%s185 + $0x270] sm:$0xf]
        %v1924 = vld [vmem:[%s185 + $0x274] sm:$0xf]
        %v1925 = vld [vmem:[%s185 + $0x278] sm:$0xf]
        %v1926 = vld [vmem:[%s185 + $0x27c] sm:$0xf]
        %v1927 = vld [vmem:[%s185 + $0x280] sm:$0xf]
        %v1928 = vld [vmem:[%s185 + $0x284] sm:$0xf]
        %v1929 = vld [vmem:[%s185 + $0x288] sm:$0xf]
        %v1930 = vld [vmem:[%s185 + $0x28c] sm:$0xf]
        %v1931 = vld [vmem:[%s185 + $0x290] sm:$0xf]
        %v1932 = vld [vmem:[%s185 + $0x294] sm:$0xf]
        %v1933 = vld [vmem:[%s185 + $0x298] sm:$0xf]
        %v1934 = vld [vmem:[%s185 + $0x29c] sm:$0xf]
        %v1935 = vld [vmem:[%s185 + $0x2a0] sm:$0xf]
        %v1936 = vld [vmem:[%s185 + $0x2a4] sm:$0xf]
        %v1937 = vld [vmem:[%s185 + $0x2a8] sm:$0xf]
        %v1938 = vld [vmem:[%s185 + $0x2ac] sm:$0xf]
        %v1939 = vld [vmem:[%s185 + $0x2b0] sm:$0xf]
        %v1940 = vld [vmem:[%s185 + $0x2b4] sm:$0xf]
        %v1941 = vld [vmem:[%s185 + $0x2b8] sm:$0xf]
        %v1942 = vld [vmem:[%s185 + $0x2bc] sm:$0xf]
        %v1943 = vld [vmem:[%s185 + $0x2c0] sm:$0xf]
        %v1944 = vld [vmem:[%s185 + $0x2c4] sm:$0xf]
        %v1945 = vld [vmem:[%s185 + $0x2c8] sm:$0xf]
        %v1946 = vld [vmem:[%s185 + $0x2cc] sm:$0xf]
        %v1947 = vld [vmem:[%s185 + $0x2d0] sm:$0xf]
        %v1948 = vld [vmem:[%s185 + $0x2d4] sm:$0xf]
        %v1949 = vld [vmem:[%s185 + $0x2d8] sm:$0xf]
        %v1950 = vld [vmem:[%s185 + $0x2dc] sm:$0xf]
        %v1951 = vld [vmem:[%s185 + $0x2e0] sm:$0xf]
        %v1952 = vld [vmem:[%s185 + $0x2e4] sm:$0xf]
        %v1953 = vld [vmem:[%s185 + $0x2e8] sm:$0xf]
        %v1954 = vld [vmem:[%s185 + $0x2ec] sm:$0xf]
        %v1955 = vld [vmem:[%s185 + $0x2f0] sm:$0xf]
        %v1956 = vld [vmem:[%s185 + $0x2f4] sm:$0xf]
        %v1957 = vld [vmem:[%s185 + $0x2f8] sm:$0xf]
        %v1958 = vld [vmem:[%s185 + $0x2fc] sm:$0xf]
        %v1959 = vunpack.c.l.bf16 %v1895
        %v1960 = vunpack.c.l.bf16 %v1896
        %v1961 = vunpack.c.l.bf16 %v1897
        %v1962 = vunpack.c.l.bf16 %v1898
        %v1963 = vunpack.c.l.bf16 %v1899
        %v1964 = vunpack.c.l.bf16 %v1900
        %v1965 = vunpack.c.l.bf16 %v1901
        %v1966 = vunpack.c.l.bf16 %v1902
        %v1967 = vunpack.c.l.bf16 %v1903
        %v1968 = vunpack.c.l.bf16 %v1904
        %v1969 = vunpack.c.l.bf16 %v1905
        %v1970 = vunpack.c.l.bf16 %v1906
        %v1971 = vunpack.c.l.bf16 %v1907
        %v1972 = vunpack.c.l.bf16 %v1908
        %v1973 = vunpack.c.l.bf16 %v1909
        %v1974 = vunpack.c.l.bf16 %v1910
        %v1975 = vunpack.c.l.bf16 %v1911
        %v1976 = vunpack.c.l.bf16 %v1912
        %v1977 = vunpack.c.l.bf16 %v1913
        %v1978 = vunpack.c.l.bf16 %v1914
        %v1979 = vunpack.c.l.bf16 %v1915
        %v1980 = vunpack.c.l.bf16 %v1916
        %v1981 = vunpack.c.l.bf16 %v1917
        %v1982 = vunpack.c.l.bf16 %v1918
        %v1983 = vunpack.c.l.bf16 %v1919
        %v1984 = vunpack.c.l.bf16 %v1920
        %v1985 = vunpack.c.l.bf16 %v1921
        %v1986 = vunpack.c.l.bf16 %v1922
        %v1987 = vunpack.c.l.bf16 %v1923
        %v1988 = vunpack.c.l.bf16 %v1924
        %v1989 = vunpack.c.l.bf16 %v1925
        %v1990 = vunpack.c.l.bf16 %v1926
        %v1991 = vunpack.c.l.bf16 %v1927
        %v1992 = vunpack.c.l.bf16 %v1928
        %v1993 = vunpack.c.l.bf16 %v1929
        %v1994 = vunpack.c.l.bf16 %v1930
        %v1995 = vunpack.c.l.bf16 %v1931
        %v1996 = vunpack.c.l.bf16 %v1932
        %v1997 = vunpack.c.l.bf16 %v1933
        %v1998 = vunpack.c.l.bf16 %v1934
        %v1999 = vunpack.c.l.bf16 %v1935
        %v2000 = vunpack.c.l.bf16 %v1936
        %v2001 = vunpack.c.l.bf16 %v1937
        %v2002 = vunpack.c.l.bf16 %v1938
        %v2003 = vunpack.c.l.bf16 %v1939
        %v2004 = vunpack.c.l.bf16 %v1940
        %v2005 = vunpack.c.l.bf16 %v1941
        %v2006 = vunpack.c.l.bf16 %v1942
        %v2007 = vunpack.c.l.bf16 %v1943
        %v2008 = vunpack.c.l.bf16 %v1944
        %v2009 = vunpack.c.l.bf16 %v1945
        %v2010 = vunpack.c.l.bf16 %v1946
        %v2011 = vunpack.c.l.bf16 %v1947
        %v2012 = vunpack.c.l.bf16 %v1948
        %v2013 = vunpack.c.l.bf16 %v1949
        %v2014 = vunpack.c.l.bf16 %v1950
        %v2015 = vunpack.c.l.bf16 %v1951
        %v2016 = vunpack.c.l.bf16 %v1952
        %v2017 = vunpack.c.l.bf16 %v1953
        %v2018 = vunpack.c.l.bf16 %v1954
        %v2019 = vunpack.c.l.bf16 %v1955
        %v2020 = vunpack.c.l.bf16 %v1956
        %v2021 = vunpack.c.l.bf16 %v1957
        %v2022 = vunpack.c.l.bf16 %v1958
        %v2023 = vxor.u32 %v1959, 2147483648
        %v2024 = vxor.u32 %v1960, 2147483648
        %v2025 = vxor.u32 %v1961, 2147483648
        %v2026 = vxor.u32 %v1962, 2147483648
        %v2027 = vxor.u32 %v1963, 2147483648
        %v2028 = vxor.u32 %v1964, 2147483648
        %v2029 = vxor.u32 %v1965, 2147483648
        %v2030 = vxor.u32 %v1966, 2147483648
        %v2031 = vxor.u32 %v1967, 2147483648
        %v2032 = vxor.u32 %v1968, 2147483648
        %v2033 = vxor.u32 %v1969, 2147483648
        %v2034 = vxor.u32 %v1970, 2147483648
        %v2035 = vxor.u32 %v1971, 2147483648
        %v2036 = vxor.u32 %v1972, 2147483648
        %v2037 = vxor.u32 %v1973, 2147483648
        %v2038 = vxor.u32 %v1974, 2147483648
        %v2039 = vxor.u32 %v1975, 2147483648
        %v2040 = vxor.u32 %v1976, 2147483648
        %v2041 = vxor.u32 %v1977, 2147483648
        %v2042 = vxor.u32 %v1978, 2147483648
        %v2043 = vxor.u32 %v1979, 2147483648
        %v2044 = vxor.u32 %v1980, 2147483648
        %v2045 = vxor.u32 %v1981, 2147483648
        %v2046 = vxor.u32 %v1982, 2147483648
        %v2047 = vxor.u32 %v1983, 2147483648
        %v2048 = vxor.u32 %v1984, 2147483648
        %v2049 = vxor.u32 %v1985, 2147483648
        %v2050 = vxor.u32 %v1986, 2147483648
        %v2051 = vxor.u32 %v1987, 2147483648
        %v2052 = vxor.u32 %v1988, 2147483648
        %v2053 = vxor.u32 %v1989, 2147483648
        %v2054 = vxor.u32 %v1990, 2147483648
        %v2055 = vxor.u32 %v1991, 2147483648
        %v2056 = vxor.u32 %v1992, 2147483648
        %v2057 = vxor.u32 %v1993, 2147483648
        %v2058 = vxor.u32 %v1994, 2147483648
        %v2059 = vxor.u32 %v1995, 2147483648
        %v2060 = vxor.u32 %v1996, 2147483648
        %v2061 = vxor.u32 %v1997, 2147483648
        %v2062 = vxor.u32 %v1998, 2147483648
        %v2063 = vxor.u32 %v1999, 2147483648
        %v2064 = vxor.u32 %v2000, 2147483648
        %v2065 = vxor.u32 %v2001, 2147483648
        %v2066 = vxor.u32 %v2002, 2147483648
        %v2067 = vxor.u32 %v2003, 2147483648
        %v2068 = vxor.u32 %v2004, 2147483648
        %v2069 = vxor.u32 %v2005, 2147483648
        %v2070 = vxor.u32 %v2006, 2147483648
        %v2071 = vxor.u32 %v2007, 2147483648
        %v2072 = vxor.u32 %v2008, 2147483648
        %v2073 = vxor.u32 %v2009, 2147483648
        %v2074 = vxor.u32 %v2010, 2147483648
        %v2075 = vxor.u32 %v2011, 2147483648
        %v2076 = vxor.u32 %v2012, 2147483648
        %v2077 = vxor.u32 %v2013, 2147483648
        %v2078 = vxor.u32 %v2014, 2147483648
        %v2079 = vxor.u32 %v2015, 2147483648
        %v2080 = vxor.u32 %v2016, 2147483648
        %v2081 = vxor.u32 %v2017, 2147483648
        %v2082 = vxor.u32 %v2018, 2147483648
        %v2083 = vxor.u32 %v2019, 2147483648
        %v2084 = vxor.u32 %v2020, 2147483648
        %v2085 = vxor.u32 %v2021, 2147483648
        %v2086 = vxor.u32 %v2022, 2147483648
        %v2087 = vmul.f32 %v2023, 1.442695
        %v2088 = vpow.pop %v2087
        %v2089 = vmul.f32 %v2024, 1.442695
        %v2090 = vpow.pop %v2089
        %v2091 = vmul.f32 %v2025, 1.442695
        %v2092 = vpow.pop %v2091
        %v2093 = vmul.f32 %v2026, 1.442695
        %v2094 = vpow.pop %v2093
        %v2095 = vmul.f32 %v2027, 1.442695
        %v2096 = vpow.pop %v2095
        %v2097 = vmul.f32 %v2028, 1.442695
        %v2098 = vpow.pop %v2097
        %v2099 = vmul.f32 %v2029, 1.442695
        %v2100 = vpow.pop %v2099
        %v2101 = vmul.f32 %v2030, 1.442695
        %v2102 = vpow.pop %v2101
        %v2103 = vmul.f32 %v2031, 1.442695
        %v2104 = vpow.pop %v2103
        %v2105 = vmul.f32 %v2032, 1.442695
        %v2106 = vpow.pop %v2105
        %v2107 = vmul.f32 %v2033, 1.442695
        %v2108 = vpow.pop %v2107
        %v2109 = vmul.f32 %v2034, 1.442695
        %v2110 = vpow.pop %v2109
        %v2111 = vmul.f32 %v2035, 1.442695
        %v2112 = vpow.pop %v2111
        %v2113 = vmul.f32 %v2036, 1.442695
        %v2114 = vpow.pop %v2113
        %v2115 = vmul.f32 %v2037, 1.442695
        %v2116 = vpow.pop %v2115
        %v2117 = vmul.f32 %v2038, 1.442695
        %v2118 = vpow.pop %v2117
        %v2119 = vmul.f32 %v2039, 1.442695
        %v2120 = vpow.pop %v2119
        %v2121 = vmul.f32 %v2040, 1.442695
        %v2122 = vpow.pop %v2121
        %v2123 = vmul.f32 %v2041, 1.442695
        %v2124 = vpow.pop %v2123
        %v2125 = vmul.f32 %v2042, 1.442695
        %v2126 = vpow.pop %v2125
        %v2127 = vmul.f32 %v2043, 1.442695
        %v2128 = vpow.pop %v2127
        %v2129 = vmul.f32 %v2044, 1.442695
        %v2130 = vpow.pop %v2129
        %v2131 = vmul.f32 %v2045, 1.442695
        %v2132 = vpow.pop %v2131
        %v2133 = vmul.f32 %v2046, 1.442695
        %v2134 = vpow.pop %v2133
        %v2135 = vmul.f32 %v2047, 1.442695
        %v2136 = vpow.pop %v2135
        %v2137 = vmul.f32 %v2048, 1.442695
        %v2138 = vpow.pop %v2137
        %v2139 = vmul.f32 %v2049, 1.442695
        %v2140 = vpow.pop %v2139
        %v2141 = vmul.f32 %v2050, 1.442695
        %v2142 = vpow.pop %v2141
        %v2143 = vmul.f32 %v2051, 1.442695
        %v2144 = vpow.pop %v2143
        %v2145 = vmul.f32 %v2052, 1.442695
        %v2146 = vpow.pop %v2145
        %v2147 = vmul.f32 %v2053, 1.442695
        %v2148 = vpow.pop %v2147
        %v2149 = vmul.f32 %v2054, 1.442695
        %v2150 = vpow.pop %v2149
        %v2151 = vmul.f32 %v2055, 1.442695
        %v2152 = vpow.pop %v2151
        %v2153 = vmul.f32 %v2056, 1.442695
        %v2154 = vpow.pop %v2153
        %v2155 = vmul.f32 %v2057, 1.442695
        %v2156 = vpow.pop %v2155
        %v2157 = vmul.f32 %v2058, 1.442695
        %v2158 = vpow.pop %v2157
        %v2159 = vmul.f32 %v2059, 1.442695
        %v2160 = vpow.pop %v2159
        %v2161 = vmul.f32 %v2060, 1.442695
        %v2162 = vpow.pop %v2161
        %v2163 = vmul.f32 %v2061, 1.442695
        %v2164 = vpow.pop %v2163
        %v2165 = vmul.f32 %v2062, 1.442695
        %v2166 = vpow.pop %v2165
        %v2167 = vmul.f32 %v2063, 1.442695
        %v2168 = vpow.pop %v2167
        %v2169 = vmul.f32 %v2064, 1.442695
        %v2170 = vpow.pop %v2169
        %v2171 = vmul.f32 %v2065, 1.442695
        %v2172 = vpow.pop %v2171
        %v2173 = vmul.f32 %v2066, 1.442695
        %v2174 = vpow.pop %v2173
        %v2175 = vmul.f32 %v2067, 1.442695
        %v2176 = vpow.pop %v2175
        %v2177 = vmul.f32 %v2068, 1.442695
        %v2178 = vpow.pop %v2177
        %v2179 = vmul.f32 %v2069, 1.442695
        %v2180 = vpow.pop %v2179
        %v2181 = vmul.f32 %v2070, 1.442695
        %v2182 = vpow.pop %v2181
        %v2183 = vmul.f32 %v2071, 1.442695
        %v2184 = vpow.pop %v2183
        %v2185 = vmul.f32 %v2072, 1.442695
        %v2186 = vpow.pop %v2185
        %v2187 = vmul.f32 %v2073, 1.442695
        %v2188 = vpow.pop %v2187
        %v2189 = vmul.f32 %v2074, 1.442695
        %v2190 = vpow.pop %v2189
        %v2191 = vmul.f32 %v2075, 1.442695
        %v2192 = vpow.pop %v2191
        %v2193 = vmul.f32 %v2076, 1.442695
        %v2194 = vpow.pop %v2193
        %v2195 = vmul.f32 %v2077, 1.442695
        %v2196 = vpow.pop %v2195
        %v2197 = vmul.f32 %v2078, 1.442695
        %v2198 = vpow.pop %v2197
        %v2199 = vmul.f32 %v2079, 1.442695
        %v2200 = vpow.pop %v2199
        %v2201 = vmul.f32 %v2080, 1.442695
        %v2202 = vpow.pop %v2201
        %v2203 = vmul.f32 %v2081, 1.442695
        %v2204 = vpow.pop %v2203
        %v2205 = vmul.f32 %v2082, 1.442695
        %v2206 = vpow.pop %v2205
        %v2207 = vmul.f32 %v2083, 1.442695
        %v2208 = vpow.pop %v2207
        %v2209 = vmul.f32 %v2084, 1.442695
        %v2210 = vpow.pop %v2209
        %v2211 = vmul.f32 %v2085, 1.442695
        %v2212 = vpow.pop %v2211
        %v2213 = vmul.f32 %v2086, 1.442695
        %v2214 = vpow.pop %v2213
        %v2215 = vadd.f32 %v2088, 1.0
        %v2216 = vadd.f32 %v2090, 1.0
        %v2217 = vadd.f32 %v2092, 1.0
        %v2218 = vadd.f32 %v2094, 1.0
        %v2219 = vadd.f32 %v2096, 1.0
        %v2220 = vadd.f32 %v2098, 1.0
        %v2221 = vadd.f32 %v2100, 1.0
        %v2222 = vadd.f32 %v2102, 1.0
        %v2223 = vadd.f32 %v2104, 1.0
        %v2224 = vadd.f32 %v2106, 1.0
        %v2225 = vadd.f32 %v2108, 1.0
        %v2226 = vadd.f32 %v2110, 1.0
        %v2227 = vadd.f32 %v2112, 1.0
        %v2228 = vadd.f32 %v2114, 1.0
        %v2229 = vadd.f32 %v2116, 1.0
        %v2230 = vadd.f32 %v2118, 1.0
        %v2231 = vadd.f32 %v2120, 1.0
        %v2232 = vadd.f32 %v2122, 1.0
        %v2233 = vadd.f32 %v2124, 1.0
        %v2234 = vadd.f32 %v2126, 1.0
        %v2235 = vadd.f32 %v2128, 1.0
        %v2236 = vadd.f32 %v2130, 1.0
        %v2237 = vadd.f32 %v2132, 1.0
        %v2238 = vadd.f32 %v2134, 1.0
        %v2239 = vadd.f32 %v2136, 1.0
        %v2240 = vadd.f32 %v2138, 1.0
        %v2241 = vadd.f32 %v2140, 1.0
        %v2242 = vadd.f32 %v2142, 1.0
        %v2243 = vadd.f32 %v2144, 1.0
        %v2244 = vadd.f32 %v2146, 1.0
        %v2245 = vadd.f32 %v2148, 1.0
        %v2246 = vadd.f32 %v2150, 1.0
        %v2247 = vadd.f32 %v2152, 1.0
        %v2248 = vadd.f32 %v2154, 1.0
        %v2249 = vadd.f32 %v2156, 1.0
        %v2250 = vadd.f32 %v2158, 1.0
        %v2251 = vadd.f32 %v2160, 1.0
        %v2252 = vadd.f32 %v2162, 1.0
        %v2253 = vadd.f32 %v2164, 1.0
        %v2254 = vadd.f32 %v2166, 1.0
        %v2255 = vadd.f32 %v2168, 1.0
        %v2256 = vadd.f32 %v2170, 1.0
        %v2257 = vadd.f32 %v2172, 1.0
        %v2258 = vadd.f32 %v2174, 1.0
        %v2259 = vadd.f32 %v2176, 1.0
        %v2260 = vadd.f32 %v2178, 1.0
        %v2261 = vadd.f32 %v2180, 1.0
        %v2262 = vadd.f32 %v2182, 1.0
        %v2263 = vadd.f32 %v2184, 1.0
        %v2264 = vadd.f32 %v2186, 1.0
        %v2265 = vadd.f32 %v2188, 1.0
        %v2266 = vadd.f32 %v2190, 1.0
        %v2267 = vadd.f32 %v2192, 1.0
        %v2268 = vadd.f32 %v2194, 1.0
        %v2269 = vadd.f32 %v2196, 1.0
        %v2270 = vadd.f32 %v2198, 1.0
        %v2271 = vadd.f32 %v2200, 1.0
        %v2272 = vadd.f32 %v2202, 1.0
        %v2273 = vadd.f32 %v2204, 1.0
        %v2274 = vadd.f32 %v2206, 1.0
        %v2275 = vadd.f32 %v2208, 1.0
        %v2276 = vadd.f32 %v2210, 1.0
        %v2277 = vadd.f32 %v2212, 1.0
        %v2278 = vadd.f32 %v2214, 1.0
        %v2279 = vrcp.pop %v2215
        %v2280 = vmul.f32 1.0, %v2279
        %v2281 = vrcp.pop %v2216
        %v2282 = vmul.f32 1.0, %v2281
        %v2283 = vrcp.pop %v2217
        %v2284 = vmul.f32 1.0, %v2283
        %v2285 = vrcp.pop %v2218
        %v2286 = vmul.f32 1.0, %v2285
        %v2287 = vrcp.pop %v2219
        %v2288 = vmul.f32 1.0, %v2287
        %v2289 = vrcp.pop %v2220
        %v2290 = vmul.f32 1.0, %v2289
        %v2291 = vrcp.pop %v2221
        %v2292 = vmul.f32 1.0, %v2291
        %v2293 = vrcp.pop %v2222
        %v2294 = vmul.f32 1.0, %v2293
        %v2295 = vrcp.pop %v2223
        %v2296 = vmul.f32 1.0, %v2295
        %v2297 = vrcp.pop %v2224
        %v2298 = vmul.f32 1.0, %v2297
        %v2299 = vrcp.pop %v2225
        %v2300 = vmul.f32 1.0, %v2299
        %v2301 = vrcp.pop %v2226
        %v2302 = vmul.f32 1.0, %v2301
        %v2303 = vrcp.pop %v2227
        %v2304 = vmul.f32 1.0, %v2303
        %v2305 = vrcp.pop %v2228
        %v2306 = vmul.f32 1.0, %v2305
        %v2307 = vrcp.pop %v2229
        %v2308 = vmul.f32 1.0, %v2307
        %v2309 = vrcp.pop %v2230
        %v2310 = vmul.f32 1.0, %v2309
        %v2311 = vrcp.pop %v2231
        %v2312 = vmul.f32 1.0, %v2311
        %v2313 = vrcp.pop %v2232
        %v2314 = vmul.f32 1.0, %v2313
        %v2315 = vrcp.pop %v2233
        %v2316 = vmul.f32 1.0, %v2315
        %v2317 = vrcp.pop %v2234
        %v2318 = vmul.f32 1.0, %v2317
        %v2319 = vrcp.pop %v2235
        %v2320 = vmul.f32 1.0, %v2319
        %v2321 = vrcp.pop %v2236
        %v2322 = vmul.f32 1.0, %v2321
        %v2323 = vrcp.pop %v2237
        %v2324 = vmul.f32 1.0, %v2323
        %v2325 = vrcp.pop %v2238
        %v2326 = vmul.f32 1.0, %v2325
        %v2327 = vrcp.pop %v2239
        %v2328 = vmul.f32 1.0, %v2327
        %v2329 = vrcp.pop %v2240
        %v2330 = vmul.f32 1.0, %v2329
        %v2331 = vrcp.pop %v2241
        %v2332 = vmul.f32 1.0, %v2331
        %v2333 = vrcp.pop %v2242
        %v2334 = vmul.f32 1.0, %v2333
        %v2335 = vrcp.pop %v2243
        %v2336 = vmul.f32 1.0, %v2335
        %v2337 = vrcp.pop %v2244
        %v2338 = vmul.f32 1.0, %v2337
        %v2339 = vrcp.pop %v2245
        %v2340 = vmul.f32 1.0, %v2339
        %v2341 = vrcp.pop %v2246
        %v2342 = vmul.f32 1.0, %v2341
        %v2343 = vrcp.pop %v2247
        %v2344 = vmul.f32 1.0, %v2343
        %v2345 = vrcp.pop %v2248
        %v2346 = vmul.f32 1.0, %v2345
        %v2347 = vrcp.pop %v2249
        %v2348 = vmul.f32 1.0, %v2347
        %v2349 = vrcp.pop %v2250
        %v2350 = vmul.f32 1.0, %v2349
        %v2351 = vrcp.pop %v2251
        %v2352 = vmul.f32 1.0, %v2351
        %v2353 = vrcp.pop %v2252
        %v2354 = vmul.f32 1.0, %v2353
        %v2355 = vrcp.pop %v2253
        %v2356 = vmul.f32 1.0, %v2355
        %v2357 = vrcp.pop %v2254
        %v2358 = vmul.f32 1.0, %v2357
        %v2359 = vrcp.pop %v2255
        %v2360 = vmul.f32 1.0, %v2359
        %v2361 = vrcp.pop %v2256
        %v2362 = vmul.f32 1.0, %v2361
        %v2363 = vrcp.pop %v2257
        %v2364 = vmul.f32 1.0, %v2363
        %v2365 = vrcp.pop %v2258
        %v2366 = vmul.f32 1.0, %v2365
        %v2367 = vrcp.pop %v2259
        %v2368 = vmul.f32 1.0, %v2367
        %v2369 = vrcp.pop %v2260
        %v2370 = vmul.f32 1.0, %v2369
        %v2371 = vrcp.pop %v2261
        %v2372 = vmul.f32 1.0, %v2371
        %v2373 = vrcp.pop %v2262
        %v2374 = vmul.f32 1.0, %v2373
        %v2375 = vrcp.pop %v2263
        %v2376 = vmul.f32 1.0, %v2375
        %v2377 = vrcp.pop %v2264
        %v2378 = vmul.f32 1.0, %v2377
        %v2379 = vrcp.pop %v2265
        %v2380 = vmul.f32 1.0, %v2379
        %v2381 = vrcp.pop %v2266
        %v2382 = vmul.f32 1.0, %v2381
        %v2383 = vrcp.pop %v2267
        %v2384 = vmul.f32 1.0, %v2383
        %v2385 = vrcp.pop %v2268
        %v2386 = vmul.f32 1.0, %v2385
        %v2387 = vrcp.pop %v2269
        %v2388 = vmul.f32 1.0, %v2387
        %v2389 = vrcp.pop %v2270
        %v2390 = vmul.f32 1.0, %v2389
        %v2391 = vrcp.pop %v2271
        %v2392 = vmul.f32 1.0, %v2391
        %v2393 = vrcp.pop %v2272
        %v2394 = vmul.f32 1.0, %v2393
        %v2395 = vrcp.pop %v2273
        %v2396 = vmul.f32 1.0, %v2395
        %v2397 = vrcp.pop %v2274
        %v2398 = vmul.f32 1.0, %v2397
        %v2399 = vrcp.pop %v2275
        %v2400 = vmul.f32 1.0, %v2399
        %v2401 = vrcp.pop %v2276
        %v2402 = vmul.f32 1.0, %v2401
        %v2403 = vrcp.pop %v2277
        %v2404 = vmul.f32 1.0, %v2403
        %v2405 = vrcp.pop %v2278
        %v2406 = vmul.f32 1.0, %v2405
        %v2407 = vld [vmem:[%s194 + $0x400] sm:$0xff]
        %v2408 = vld [vmem:[%s194 + $0x408] sm:$0xff]
        %v2409 = vld [vmem:[%s194 + $0x410] sm:$0xff]
        %v2410 = vld [vmem:[%s194 + $0x418] sm:$0xff]
        %v2411 = vld [vmem:[%s194 + $0x420] sm:$0xff]
        %v2412 = vld [vmem:[%s194 + $0x428] sm:$0xff]
        %v2413 = vld [vmem:[%s194 + $0x430] sm:$0xff]
        %v2414 = vld [vmem:[%s194 + $0x438] sm:$0xff]
        %v2415 = vld [vmem:[%s194 + $0x440] sm:$0xff]
        %v2416 = vld [vmem:[%s194 + $0x448] sm:$0xff]
        %v2417 = vld [vmem:[%s194 + $0x450] sm:$0xff]
        %v2418 = vld [vmem:[%s194 + $0x458] sm:$0xff]
        %v2419 = vld [vmem:[%s194 + $0x460] sm:$0xff]
        %v2420 = vld [vmem:[%s194 + $0x468] sm:$0xff]
        %v2421 = vld [vmem:[%s194 + $0x470] sm:$0xff]
        %v2422 = vld [vmem:[%s194 + $0x478] sm:$0xff]
        %v2423 = vld [vmem:[%s194 + $0x480] sm:$0xff]
        %v2424 = vld [vmem:[%s194 + $0x488] sm:$0xff]
        %v2425 = vld [vmem:[%s194 + $0x490] sm:$0xff]
        %v2426 = vld [vmem:[%s194 + $0x498] sm:$0xff]
        %v2427 = vld [vmem:[%s194 + $0x4a0] sm:$0xff]
        %v2428 = vld [vmem:[%s194 + $0x4a8] sm:$0xff]
        %v2429 = vld [vmem:[%s194 + $0x4b0] sm:$0xff]
        %v2430 = vld [vmem:[%s194 + $0x4b8] sm:$0xff]
        %v2431 = vld [vmem:[%s194 + $0x4c0] sm:$0xff]
        %v2432 = vld [vmem:[%s194 + $0x4c8] sm:$0xff]
        %v2433 = vld [vmem:[%s194 + $0x4d0] sm:$0xff]
        %v2434 = vld [vmem:[%s194 + $0x4d8] sm:$0xff]
        %v2435 = vld [vmem:[%s194 + $0x4e0] sm:$0xff]
        %v2436 = vld [vmem:[%s194 + $0x4e8] sm:$0xff]
        %v2437 = vld [vmem:[%s194 + $0x4f0] sm:$0xff]
        %v2438 = vld [vmem:[%s194 + $0x4f8] sm:$0xff]
        %v2439 = vld [vmem:[%s194 + $0x500] sm:$0xff]
        %v2440 = vld [vmem:[%s194 + $0x508] sm:$0xff]
        %v2441 = vld [vmem:[%s194 + $0x510] sm:$0xff]
        %v2442 = vld [vmem:[%s194 + $0x518] sm:$0xff]
        %v2443 = vld [vmem:[%s194 + $0x520] sm:$0xff]
        %v2444 = vld [vmem:[%s194 + $0x528] sm:$0xff]
        %v2445 = vld [vmem:[%s194 + $0x530] sm:$0xff]
        %v2446 = vld [vmem:[%s194 + $0x538] sm:$0xff]
        %v2447 = vld [vmem:[%s194 + $0x540] sm:$0xff]
        %v2448 = vld [vmem:[%s194 + $0x548] sm:$0xff]
        %v2449 = vld [vmem:[%s194 + $0x550] sm:$0xff]
        %v2450 = vld [vmem:[%s194 + $0x558] sm:$0xff]
        %v2451 = vld [vmem:[%s194 + $0x560] sm:$0xff]
        %v2452 = vld [vmem:[%s194 + $0x568] sm:$0xff]
        %v2453 = vld [vmem:[%s194 + $0x570] sm:$0xff]
        %v2454 = vld [vmem:[%s194 + $0x578] sm:$0xff]
        %v2455 = vld [vmem:[%s194 + $0x580] sm:$0xff]
        %v2456 = vld [vmem:[%s194 + $0x588] sm:$0xff]
        %v2457 = vld [vmem:[%s194 + $0x590] sm:$0xff]
        %v2458 = vld [vmem:[%s194 + $0x598] sm:$0xff]
        %v2459 = vld [vmem:[%s194 + $0x5a0] sm:$0xff]
        %v2460 = vld [vmem:[%s194 + $0x5a8] sm:$0xff]
        %v2461 = vld [vmem:[%s194 + $0x5b0] sm:$0xff]
        %v2462 = vld [vmem:[%s194 + $0x5b8] sm:$0xff]
        %v2463 = vld [vmem:[%s194 + $0x5c0] sm:$0xff]
        %v2464 = vld [vmem:[%s194 + $0x5c8] sm:$0xff]
        %v2465 = vld [vmem:[%s194 + $0x5d0] sm:$0xff]
        %v2466 = vld [vmem:[%s194 + $0x5d8] sm:$0xff]
        %v2467 = vld [vmem:[%s194 + $0x5e0] sm:$0xff]
        %v2468 = vld [vmem:[%s194 + $0x5e8] sm:$0xff]
        %v2469 = vld [vmem:[%s194 + $0x5f0] sm:$0xff]
        %v2470 = vld [vmem:[%s194 + $0x5f8] sm:$0xff]
        %v2471 = vadd.f32 %v2407, %v2408
        %v2472 = vadd.f32 %v2471, %v2409
        %v2473 = vadd.f32 %v2472, %v2410
        %v2474 = vadd.f32 %v2473, %v2411
        %v2475 = vadd.f32 %v2474, %v2412
        %v2476 = vadd.f32 %v2475, %v2413
        %v2477 = vadd.f32 %v2476, %v2414
        %v2478 = vadd.f32 %v2477, %v2415
        %v2479 = vadd.f32 %v2478, %v2416
        %v2480 = vadd.f32 %v2479, %v2417
        %v2481 = vadd.f32 %v2480, %v2418
        %v2482 = vadd.f32 %v2481, %v2419
        %v2483 = vadd.f32 %v2482, %v2420
        %v2484 = vadd.f32 %v2483, %v2421
        %v2485 = vadd.f32 %v2484, %v2422
        %v2486 = vadd.f32 %v2485, %v2423
        %v2487 = vadd.f32 %v2486, %v2424
        %v2488 = vadd.f32 %v2487, %v2425
        %v2489 = vadd.f32 %v2488, %v2426
        %v2490 = vadd.f32 %v2489, %v2427
        %v2491 = vadd.f32 %v2490, %v2428
        %v2492 = vadd.f32 %v2491, %v2429
        %v2493 = vadd.f32 %v2492, %v2430
        %v2494 = vadd.f32 %v2493, %v2431
        %v2495 = vadd.f32 %v2494, %v2432
        %v2496 = vadd.f32 %v2495, %v2433
        %v2497 = vadd.f32 %v2496, %v2434
        %v2498 = vadd.f32 %v2497, %v2435
        %v2499 = vadd.f32 %v2498, %v2436
        %v2500 = vadd.f32 %v2499, %v2437
        %v2501 = vadd.f32 %v2500, %v2438
        %v2502 = vadd.f32 %v2501, %v2439
        %v2503 = vadd.f32 %v2502, %v2440
        %v2504 = vadd.f32 %v2503, %v2441
        %v2505 = vadd.f32 %v2504, %v2442
        %v2506 = vadd.f32 %v2505, %v2443
        %v2507 = vadd.f32 %v2506, %v2444
        %v2508 = vadd.f32 %v2507, %v2445
        %v2509 = vadd.f32 %v2508, %v2446
        %v2510 = vadd.f32 %v2509, %v2447
        %v2511 = vadd.f32 %v2510, %v2448
        %v2512 = vadd.f32 %v2511, %v2449
        %v2513 = vadd.f32 %v2512, %v2450
        %v2514 = vadd.f32 %v2513, %v2451
        %v2515 = vadd.f32 %v2514, %v2452
        %v2516 = vadd.f32 %v2515, %v2453
        %v2517 = vadd.f32 %v2516, %v2454
        %v2518 = vadd.f32 %v2517, %v2455
        %v2519 = vadd.f32 %v2518, %v2456
        %v2520 = vadd.f32 %v2519, %v2457
        %v2521 = vadd.f32 %v2520, %v2458
        %v2522 = vadd.f32 %v2521, %v2459
        %v2523 = vadd.f32 %v2522, %v2460
        %v2524 = vadd.f32 %v2523, %v2461
        %v2525 = vadd.f32 %v2524, %v2462
        %v2526 = vadd.f32 %v2525, %v2463
        %v2527 = vadd.f32 %v2526, %v2464
        %v2528 = vadd.f32 %v2527, %v2465
        %v2529 = vadd.f32 %v2528, %v2466
        %v2530 = vadd.f32 %v2529, %v2467
        %v2531 = vadd.f32 %v2530, %v2468
        %v2532 = vadd.f32 %v2531, %v2469
        %v2533 = vadd.f32 %v2532, %v2470
        %v2534 = vadd.f32 %v1702, %v2533
        %v2535 = vmul.f32 %v2280, %v2407
        %v2536 = vmul.f32 %v2282, %v2408
        %v2537 = vmul.f32 %v2284, %v2409
        %v2538 = vmul.f32 %v2286, %v2410
        %v2539 = vmul.f32 %v2288, %v2411
        %v2540 = vmul.f32 %v2290, %v2412
        %v2541 = vmul.f32 %v2292, %v2413
        %v2542 = vmul.f32 %v2294, %v2414
        %v2543 = vmul.f32 %v2296, %v2415
        %v2544 = vmul.f32 %v2298, %v2416
        %v2545 = vmul.f32 %v2300, %v2417
        %v2546 = vmul.f32 %v2302, %v2418
        %v2547 = vmul.f32 %v2304, %v2419
        %v2548 = vmul.f32 %v2306, %v2420
        %v2549 = vmul.f32 %v2308, %v2421
        %v2550 = vmul.f32 %v2310, %v2422
        %v2551 = vmul.f32 %v2312, %v2423
        %v2552 = vmul.f32 %v2314, %v2424
        %v2553 = vmul.f32 %v2316, %v2425
        %v2554 = vmul.f32 %v2318, %v2426
        %v2555 = vmul.f32 %v2320, %v2427
        %v2556 = vmul.f32 %v2322, %v2428
        %v2557 = vmul.f32 %v2324, %v2429
        %v2558 = vmul.f32 %v2326, %v2430
        %v2559 = vmul.f32 %v2328, %v2431
        %v2560 = vmul.f32 %v2330, %v2432
        %v2561 = vmul.f32 %v2332, %v2433
        %v2562 = vmul.f32 %v2334, %v2434
        %v2563 = vmul.f32 %v2336, %v2435
        %v2564 = vmul.f32 %v2338, %v2436
        %v2565 = vmul.f32 %v2340, %v2437
        %v2566 = vmul.f32 %v2342, %v2438
        %v2567 = vmul.f32 %v2344, %v2439
        %v2568 = vmul.f32 %v2346, %v2440
        %v2569 = vmul.f32 %v2348, %v2441
        %v2570 = vmul.f32 %v2350, %v2442
        %v2571 = vmul.f32 %v2352, %v2443
        %v2572 = vmul.f32 %v2354, %v2444
        %v2573 = vmul.f32 %v2356, %v2445
        %v2574 = vmul.f32 %v2358, %v2446
        %v2575 = vmul.f32 %v2360, %v2447
        %v2576 = vmul.f32 %v2362, %v2448
        %v2577 = vmul.f32 %v2364, %v2449
        %v2578 = vmul.f32 %v2366, %v2450
        %v2579 = vmul.f32 %v2368, %v2451
        %v2580 = vmul.f32 %v2370, %v2452
        %v2581 = vmul.f32 %v2372, %v2453
        %v2582 = vmul.f32 %v2374, %v2454
        %v2583 = vmul.f32 %v2376, %v2455
        %v2584 = vmul.f32 %v2378, %v2456
        %v2585 = vmul.f32 %v2380, %v2457
        %v2586 = vmul.f32 %v2382, %v2458
        %v2587 = vmul.f32 %v2384, %v2459
        %v2588 = vmul.f32 %v2386, %v2460
        %v2589 = vmul.f32 %v2388, %v2461
        %v2590 = vmul.f32 %v2390, %v2462
        %v2591 = vmul.f32 %v2392, %v2463
        %v2592 = vmul.f32 %v2394, %v2464
        %v2593 = vmul.f32 %v2396, %v2465
        %v2594 = vmul.f32 %v2398, %v2466
        %v2595 = vmul.f32 %v2400, %v2467
        %v2596 = vmul.f32 %v2402, %v2468
        %v2597 = vmul.f32 %v2404, %v2469
        %v2598 = vmul.f32 %v2406, %v2470
        %v2599 = vadd.f32 %v2535, %v2536
        %v2600 = vadd.f32 %v2599, %v2537
        %v2601 = vadd.f32 %v2600, %v2538
        %v2602 = vadd.f32 %v2601, %v2539
        %v2603 = vadd.f32 %v2602, %v2540
        %v2604 = vadd.f32 %v2603, %v2541
        %v2605 = vadd.f32 %v2604, %v2542
        %v2606 = vadd.f32 %v2605, %v2543
        %v2607 = vadd.f32 %v2606, %v2544
        %v2608 = vadd.f32 %v2607, %v2545
        %v2609 = vadd.f32 %v2608, %v2546
        %v2610 = vadd.f32 %v2609, %v2547
        %v2611 = vadd.f32 %v2610, %v2548
        %v2612 = vadd.f32 %v2611, %v2549
        %v2613 = vadd.f32 %v2612, %v2550
        %v2614 = vadd.f32 %v2613, %v2551
        %v2615 = vadd.f32 %v2614, %v2552
        %v2616 = vadd.f32 %v2615, %v2553
        %v2617 = vadd.f32 %v2616, %v2554
        %v2618 = vadd.f32 %v2617, %v2555
        %v2619 = vadd.f32 %v2618, %v2556
        %v2620 = vadd.f32 %v2619, %v2557
        %v2621 = vadd.f32 %v2620, %v2558
        %v2622 = vadd.f32 %v2621, %v2559
        %v2623 = vadd.f32 %v2622, %v2560
        %v2624 = vadd.f32 %v2623, %v2561
        %v2625 = vadd.f32 %v2624, %v2562
        %v2626 = vadd.f32 %v2625, %v2563
        %v2627 = vadd.f32 %v2626, %v2564
        %v2628 = vadd.f32 %v2627, %v2565
        %v2629 = vadd.f32 %v2628, %v2566
        %v2630 = vadd.f32 %v2629, %v2567
        %v2631 = vadd.f32 %v2630, %v2568
        %v2632 = vadd.f32 %v2631, %v2569
        %v2633 = vadd.f32 %v2632, %v2570
        %v2634 = vadd.f32 %v2633, %v2571
        %v2635 = vadd.f32 %v2634, %v2572
        %v2636 = vadd.f32 %v2635, %v2573
        %v2637 = vadd.f32 %v2636, %v2574
        %v2638 = vadd.f32 %v2637, %v2575
        %v2639 = vadd.f32 %v2638, %v2576
        %v2640 = vadd.f32 %v2639, %v2577
        %v2641 = vadd.f32 %v2640, %v2578
        %v2642 = vadd.f32 %v2641, %v2579
        %v2643 = vadd.f32 %v2642, %v2580
        %v2644 = vadd.f32 %v2643, %v2581
        %v2645 = vadd.f32 %v2644, %v2582
        %v2646 = vadd.f32 %v2645, %v2583
        %v2647 = vadd.f32 %v2646, %v2584
        %v2648 = vadd.f32 %v2647, %v2585
        %v2649 = vadd.f32 %v2648, %v2586
        %v2650 = vadd.f32 %v2649, %v2587
        %v2651 = vadd.f32 %v2650, %v2588
        %v2652 = vadd.f32 %v2651, %v2589
        %v2653 = vadd.f32 %v2652, %v2590
        %v2654 = vadd.f32 %v2653, %v2591
        %v2655 = vadd.f32 %v2654, %v2592
        %v2656 = vadd.f32 %v2655, %v2593
        %v2657 = vadd.f32 %v2656, %v2594
        %v2658 = vadd.f32 %v2657, %v2595
        %v2659 = vadd.f32 %v2658, %v2596
        %v2660 = vadd.f32 %v2659, %v2597
        %v2661 = vadd.f32 %v2660, %v2598
        %v2662 = vadd.f32 %v1830, %v2661
        %v2663 = vadd.f32 %v2280, %v2282
        %v2664 = vadd.f32 %v2663, %v2284
        %v2665 = vadd.f32 %v2664, %v2286
        %v2666 = vadd.f32 %v2665, %v2288
        %v2667 = vadd.f32 %v2666, %v2290
        %v2668 = vadd.f32 %v2667, %v2292
        %v2669 = vadd.f32 %v2668, %v2294
        %v2670 = vadd.f32 %v2669, %v2296
        %v2671 = vadd.f32 %v2670, %v2298
        %v2672 = vadd.f32 %v2671, %v2300
        %v2673 = vadd.f32 %v2672, %v2302
        %v2674 = vadd.f32 %v2673, %v2304
        %v2675 = vadd.f32 %v2674, %v2306
        %v2676 = vadd.f32 %v2675, %v2308
        %v2677 = vadd.f32 %v2676, %v2310
        %v2678 = vadd.f32 %v2677, %v2312
        %v2679 = vadd.f32 %v2678, %v2314
        %v2680 = vadd.f32 %v2679, %v2316
        %v2681 = vadd.f32 %v2680, %v2318
        %v2682 = vadd.f32 %v2681, %v2320
        %v2683 = vadd.f32 %v2682, %v2322
        %v2684 = vadd.f32 %v2683, %v2324
        %v2685 = vadd.f32 %v2684, %v2326
        %v2686 = vadd.f32 %v2685, %v2328
        %v2687 = vadd.f32 %v2686, %v2330
        %v2688 = vadd.f32 %v2687, %v2332
        %v2689 = vadd.f32 %v2688, %v2334
        %v2690 = vadd.f32 %v2689, %v2336
        %v2691 = vadd.f32 %v2690, %v2338
        %v2692 = vadd.f32 %v2691, %v2340
        %v2693 = vadd.f32 %v2692, %v2342
        %v2694 = vadd.f32 %v2693, %v2344
        %v2695 = vadd.f32 %v2694, %v2346
        %v2696 = vadd.f32 %v2695, %v2348
        %v2697 = vadd.f32 %v2696, %v2350
        %v2698 = vadd.f32 %v2697, %v2352
        %v2699 = vadd.f32 %v2698, %v2354
        %v2700 = vadd.f32 %v2699, %v2356
        %v2701 = vadd.f32 %v2700, %v2358
        %v2702 = vadd.f32 %v2701, %v2360
        %v2703 = vadd.f32 %v2702, %v2362
        %v2704 = vadd.f32 %v2703, %v2364
        %v2705 = vadd.f32 %v2704, %v2366
        %v2706 = vadd.f32 %v2705, %v2368
        %v2707 = vadd.f32 %v2706, %v2370
        %v2708 = vadd.f32 %v2707, %v2372
        %v2709 = vadd.f32 %v2708, %v2374
        %v2710 = vadd.f32 %v2709, %v2376
        %v2711 = vadd.f32 %v2710, %v2378
        %v2712 = vadd.f32 %v2711, %v2380
        %v2713 = vadd.f32 %v2712, %v2382
        %v2714 = vadd.f32 %v2713, %v2384
        %v2715 = vadd.f32 %v2714, %v2386
        %v2716 = vadd.f32 %v2715, %v2388
        %v2717 = vadd.f32 %v2716, %v2390
        %v2718 = vadd.f32 %v2717, %v2392
        %v2719 = vadd.f32 %v2718, %v2394
        %v2720 = vadd.f32 %v2719, %v2396
        %v2721 = vadd.f32 %v2720, %v2398
        %v2722 = vadd.f32 %v2721, %v2400
        %v2723 = vadd.f32 %v2722, %v2402
        %v2724 = vadd.f32 %v2723, %v2404
        %v2725 = vadd.f32 %v2724, %v2406
        %v2726 = vadd.f32 %v1894, %v2725
        %v2727 = vld [vmem:[%s185 + $0x300] sm:$0xf]
        %v2728 = vld [vmem:[%s185 + $0x304] sm:$0xf]
        %v2729 = vld [vmem:[%s185 + $0x308] sm:$0xf]
        %v2730 = vld [vmem:[%s185 + $0x30c] sm:$0xf]
        %v2731 = vld [vmem:[%s185 + $0x310] sm:$0xf]
        %v2732 = vld [vmem:[%s185 + $0x314] sm:$0xf]
        %v2733 = vld [vmem:[%s185 + $0x318] sm:$0xf]
        %v2734 = vld [vmem:[%s185 + $0x31c] sm:$0xf]
        %v2735 = vld [vmem:[%s185 + $0x320] sm:$0xf]
        %v2736 = vld [vmem:[%s185 + $0x324] sm:$0xf]
        %v2737 = vld [vmem:[%s185 + $0x328] sm:$0xf]
        %v2738 = vld [vmem:[%s185 + $0x32c] sm:$0xf]
        %v2739 = vld [vmem:[%s185 + $0x330] sm:$0xf]
        %v2740 = vld [vmem:[%s185 + $0x334] sm:$0xf]
        %v2741 = vld [vmem:[%s185 + $0x338] sm:$0xf]
        %v2742 = vld [vmem:[%s185 + $0x33c] sm:$0xf]
        %v2743 = vld [vmem:[%s185 + $0x340] sm:$0xf]
        %v2744 = vld [vmem:[%s185 + $0x344] sm:$0xf]
        %v2745 = vld [vmem:[%s185 + $0x348] sm:$0xf]
        %v2746 = vld [vmem:[%s185 + $0x34c] sm:$0xf]
        %v2747 = vld [vmem:[%s185 + $0x350] sm:$0xf]
        %v2748 = vld [vmem:[%s185 + $0x354] sm:$0xf]
        %v2749 = vld [vmem:[%s185 + $0x358] sm:$0xf]
        %v2750 = vld [vmem:[%s185 + $0x35c] sm:$0xf]
        %v2751 = vld [vmem:[%s185 + $0x360] sm:$0xf]
        %v2752 = vld [vmem:[%s185 + $0x364] sm:$0xf]
        %v2753 = vld [vmem:[%s185 + $0x368] sm:$0xf]
        %v2754 = vld [vmem:[%s185 + $0x36c] sm:$0xf]
        %v2755 = vld [vmem:[%s185 + $0x370] sm:$0xf]
        %v2756 = vld [vmem:[%s185 + $0x374] sm:$0xf]
        %v2757 = vld [vmem:[%s185 + $0x378] sm:$0xf]
        %v2758 = vld [vmem:[%s185 + $0x37c] sm:$0xf]
        %v2759 = vld [vmem:[%s185 + $0x380] sm:$0xf]
        %v2760 = vld [vmem:[%s185 + $0x384] sm:$0xf]
        %v2761 = vld [vmem:[%s185 + $0x388] sm:$0xf]
        %v2762 = vld [vmem:[%s185 + $0x38c] sm:$0xf]
        %v2763 = vld [vmem:[%s185 + $0x390] sm:$0xf]
        %v2764 = vld [vmem:[%s185 + $0x394] sm:$0xf]
        %v2765 = vld [vmem:[%s185 + $0x398] sm:$0xf]
        %v2766 = vld [vmem:[%s185 + $0x39c] sm:$0xf]
        %v2767 = vld [vmem:[%s185 + $0x3a0] sm:$0xf]
        %v2768 = vld [vmem:[%s185 + $0x3a4] sm:$0xf]
        %v2769 = vld [vmem:[%s185 + $0x3a8] sm:$0xf]
        %v2770 = vld [vmem:[%s185 + $0x3ac] sm:$0xf]
        %v2771 = vld [vmem:[%s185 + $0x3b0] sm:$0xf]
        %v2772 = vld [vmem:[%s185 + $0x3b4] sm:$0xf]
        %v2773 = vld [vmem:[%s185 + $0x3b8] sm:$0xf]
        %v2774 = vld [vmem:[%s185 + $0x3bc] sm:$0xf]
        %v2775 = vld [vmem:[%s185 + $0x3c0] sm:$0xf]
        %v2776 = vld [vmem:[%s185 + $0x3c4] sm:$0xf]
        %v2777 = vld [vmem:[%s185 + $0x3c8] sm:$0xf]
        %v2778 = vld [vmem:[%s185 + $0x3cc] sm:$0xf]
        %v2779 = vld [vmem:[%s185 + $0x3d0] sm:$0xf]
        %v2780 = vld [vmem:[%s185 + $0x3d4] sm:$0xf]
        %v2781 = vld [vmem:[%s185 + $0x3d8] sm:$0xf]
        %v2782 = vld [vmem:[%s185 + $0x3dc] sm:$0xf]
        %v2783 = vld [vmem:[%s185 + $0x3e0] sm:$0xf]
        %v2784 = vld [vmem:[%s185 + $0x3e4] sm:$0xf]
        %v2785 = vld [vmem:[%s185 + $0x3e8] sm:$0xf]
        %v2786 = vld [vmem:[%s185 + $0x3ec] sm:$0xf]
        %v2787 = vld [vmem:[%s185 + $0x3f0] sm:$0xf]
        %v2788 = vld [vmem:[%s185 + $0x3f4] sm:$0xf]
        %v2789 = vld [vmem:[%s185 + $0x3f8] sm:$0xf]
        %v2790 = vld [vmem:[%s185 + $0x3fc] sm:$0xf]
        %v2791 = vunpack.c.l.bf16 %v2727
        %v2792 = vunpack.c.l.bf16 %v2728
        %v2793 = vunpack.c.l.bf16 %v2729
        %v2794 = vunpack.c.l.bf16 %v2730
        %v2795 = vunpack.c.l.bf16 %v2731
        %v2796 = vunpack.c.l.bf16 %v2732
        %v2797 = vunpack.c.l.bf16 %v2733
        %v2798 = vunpack.c.l.bf16 %v2734
        %v2799 = vunpack.c.l.bf16 %v2735
        %v2800 = vunpack.c.l.bf16 %v2736
        %v2801 = vunpack.c.l.bf16 %v2737
        %v2802 = vunpack.c.l.bf16 %v2738
        %v2803 = vunpack.c.l.bf16 %v2739
        %v2804 = vunpack.c.l.bf16 %v2740
        %v2805 = vunpack.c.l.bf16 %v2741
        %v2806 = vunpack.c.l.bf16 %v2742
        %v2807 = vunpack.c.l.bf16 %v2743
        %v2808 = vunpack.c.l.bf16 %v2744
        %v2809 = vunpack.c.l.bf16 %v2745
        %v2810 = vunpack.c.l.bf16 %v2746
        %v2811 = vunpack.c.l.bf16 %v2747
        %v2812 = vunpack.c.l.bf16 %v2748
        %v2813 = vunpack.c.l.bf16 %v2749
        %v2814 = vunpack.c.l.bf16 %v2750
        %v2815 = vunpack.c.l.bf16 %v2751
        %v2816 = vunpack.c.l.bf16 %v2752
        %v2817 = vunpack.c.l.bf16 %v2753
        %v2818 = vunpack.c.l.bf16 %v2754
        %v2819 = vunpack.c.l.bf16 %v2755
        %v2820 = vunpack.c.l.bf16 %v2756
        %v2821 = vunpack.c.l.bf16 %v2757
        %v2822 = vunpack.c.l.bf16 %v2758
        %v2823 = vunpack.c.l.bf16 %v2759
        %v2824 = vunpack.c.l.bf16 %v2760
        %v2825 = vunpack.c.l.bf16 %v2761
        %v2826 = vunpack.c.l.bf16 %v2762
        %v2827 = vunpack.c.l.bf16 %v2763
        %v2828 = vunpack.c.l.bf16 %v2764
        %v2829 = vunpack.c.l.bf16 %v2765
        %v2830 = vunpack.c.l.bf16 %v2766
        %v2831 = vunpack.c.l.bf16 %v2767
        %v2832 = vunpack.c.l.bf16 %v2768
        %v2833 = vunpack.c.l.bf16 %v2769
        %v2834 = vunpack.c.l.bf16 %v2770
        %v2835 = vunpack.c.l.bf16 %v2771
        %v2836 = vunpack.c.l.bf16 %v2772
        %v2837 = vunpack.c.l.bf16 %v2773
        %v2838 = vunpack.c.l.bf16 %v2774
        %v2839 = vunpack.c.l.bf16 %v2775
        %v2840 = vunpack.c.l.bf16 %v2776
        %v2841 = vunpack.c.l.bf16 %v2777
        %v2842 = vunpack.c.l.bf16 %v2778
        %v2843 = vunpack.c.l.bf16 %v2779
        %v2844 = vunpack.c.l.bf16 %v2780
        %v2845 = vunpack.c.l.bf16 %v2781
        %v2846 = vunpack.c.l.bf16 %v2782
        %v2847 = vunpack.c.l.bf16 %v2783
        %v2848 = vunpack.c.l.bf16 %v2784
        %v2849 = vunpack.c.l.bf16 %v2785
        %v2850 = vunpack.c.l.bf16 %v2786
        %v2851 = vunpack.c.l.bf16 %v2787
        %v2852 = vunpack.c.l.bf16 %v2788
        %v2853 = vunpack.c.l.bf16 %v2789
        %v2854 = vunpack.c.l.bf16 %v2790
        %v2855 = vxor.u32 %v2791, 2147483648
        %v2856 = vxor.u32 %v2792, 2147483648
        %v2857 = vxor.u32 %v2793, 2147483648
        %v2858 = vxor.u32 %v2794, 2147483648
        %v2859 = vxor.u32 %v2795, 2147483648
        %v2860 = vxor.u32 %v2796, 2147483648
        %v2861 = vxor.u32 %v2797, 2147483648
        %v2862 = vxor.u32 %v2798, 2147483648
        %v2863 = vxor.u32 %v2799, 2147483648
        %v2864 = vxor.u32 %v2800, 2147483648
        %v2865 = vxor.u32 %v2801, 2147483648
        %v2866 = vxor.u32 %v2802, 2147483648
        %v2867 = vxor.u32 %v2803, 2147483648
        %v2868 = vxor.u32 %v2804, 2147483648
        %v2869 = vxor.u32 %v2805, 2147483648
        %v2870 = vxor.u32 %v2806, 2147483648
        %v2871 = vxor.u32 %v2807, 2147483648
        %v2872 = vxor.u32 %v2808, 2147483648
        %v2873 = vxor.u32 %v2809, 2147483648
        %v2874 = vxor.u32 %v2810, 2147483648
        %v2875 = vxor.u32 %v2811, 2147483648
        %v2876 = vxor.u32 %v2812, 2147483648
        %v2877 = vxor.u32 %v2813, 2147483648
        %v2878 = vxor.u32 %v2814, 2147483648
        %v2879 = vxor.u32 %v2815, 2147483648
        %v2880 = vxor.u32 %v2816, 2147483648
        %v2881 = vxor.u32 %v2817, 2147483648
        %v2882 = vxor.u32 %v2818, 2147483648
        %v2883 = vxor.u32 %v2819, 2147483648
        %v2884 = vxor.u32 %v2820, 2147483648
        %v2885 = vxor.u32 %v2821, 2147483648
        %v2886 = vxor.u32 %v2822, 2147483648
        %v2887 = vxor.u32 %v2823, 2147483648
        %v2888 = vxor.u32 %v2824, 2147483648
        %v2889 = vxor.u32 %v2825, 2147483648
        %v2890 = vxor.u32 %v2826, 2147483648
        %v2891 = vxor.u32 %v2827, 2147483648
        %v2892 = vxor.u32 %v2828, 2147483648
        %v2893 = vxor.u32 %v2829, 2147483648
        %v2894 = vxor.u32 %v2830, 2147483648
        %v2895 = vxor.u32 %v2831, 2147483648
        %v2896 = vxor.u32 %v2832, 2147483648
        %v2897 = vxor.u32 %v2833, 2147483648
        %v2898 = vxor.u32 %v2834, 2147483648
        %v2899 = vxor.u32 %v2835, 2147483648
        %v2900 = vxor.u32 %v2836, 2147483648
        %v2901 = vxor.u32 %v2837, 2147483648
        %v2902 = vxor.u32 %v2838, 2147483648
        %v2903 = vxor.u32 %v2839, 2147483648
        %v2904 = vxor.u32 %v2840, 2147483648
        %v2905 = vxor.u32 %v2841, 2147483648
        %v2906 = vxor.u32 %v2842, 2147483648
        %v2907 = vxor.u32 %v2843, 2147483648
        %v2908 = vxor.u32 %v2844, 2147483648
        %v2909 = vxor.u32 %v2845, 2147483648
        %v2910 = vxor.u32 %v2846, 2147483648
        %v2911 = vxor.u32 %v2847, 2147483648
        %v2912 = vxor.u32 %v2848, 2147483648
        %v2913 = vxor.u32 %v2849, 2147483648
        %v2914 = vxor.u32 %v2850, 2147483648
        %v2915 = vxor.u32 %v2851, 2147483648
        %v2916 = vxor.u32 %v2852, 2147483648
        %v2917 = vxor.u32 %v2853, 2147483648
        %v2918 = vxor.u32 %v2854, 2147483648
        %v2919 = vmul.f32 %v2855, 1.442695
        %v2920 = vpow.pop %v2919
        %v2921 = vmul.f32 %v2856, 1.442695
        %v2922 = vpow.pop %v2921
        %v2923 = vmul.f32 %v2857, 1.442695
        %v2924 = vpow.pop %v2923
        %v2925 = vmul.f32 %v2858, 1.442695
        %v2926 = vpow.pop %v2925
        %v2927 = vmul.f32 %v2859, 1.442695
        %v2928 = vpow.pop %v2927
        %v2929 = vmul.f32 %v2860, 1.442695
        %v2930 = vpow.pop %v2929
        %v2931 = vmul.f32 %v2861, 1.442695
        %v2932 = vpow.pop %v2931
        %v2933 = vmul.f32 %v2862, 1.442695
        %v2934 = vpow.pop %v2933
        %v2935 = vmul.f32 %v2863, 1.442695
        %v2936 = vpow.pop %v2935
        %v2937 = vmul.f32 %v2864, 1.442695
        %v2938 = vpow.pop %v2937
        %v2939 = vmul.f32 %v2865, 1.442695
        %v2940 = vpow.pop %v2939
        %v2941 = vmul.f32 %v2866, 1.442695
        %v2942 = vpow.pop %v2941
        %v2943 = vmul.f32 %v2867, 1.442695
        %v2944 = vpow.pop %v2943
        %v2945 = vmul.f32 %v2868, 1.442695
        %v2946 = vpow.pop %v2945
        %v2947 = vmul.f32 %v2869, 1.442695
        %v2948 = vpow.pop %v2947
        %v2949 = vmul.f32 %v2870, 1.442695
        %v2950 = vpow.pop %v2949
        %v2951 = vmul.f32 %v2871, 1.442695
        %v2952 = vpow.pop %v2951
        %v2953 = vmul.f32 %v2872, 1.442695
        %v2954 = vpow.pop %v2953
        %v2955 = vmul.f32 %v2873, 1.442695
        %v2956 = vpow.pop %v2955
        %v2957 = vmul.f32 %v2874, 1.442695
        %v2958 = vpow.pop %v2957
        %v2959 = vmul.f32 %v2875, 1.442695
        %v2960 = vpow.pop %v2959
        %v2961 = vmul.f32 %v2876, 1.442695
        %v2962 = vpow.pop %v2961
        %v2963 = vmul.f32 %v2877, 1.442695
        %v2964 = vpow.pop %v2963
        %v2965 = vmul.f32 %v2878, 1.442695
        %v2966 = vpow.pop %v2965
        %v2967 = vmul.f32 %v2879, 1.442695
        %v2968 = vpow.pop %v2967
        %v2969 = vmul.f32 %v2880, 1.442695
        %v2970 = vpow.pop %v2969
        %v2971 = vmul.f32 %v2881, 1.442695
        %v2972 = vpow.pop %v2971
        %v2973 = vmul.f32 %v2882, 1.442695
        %v2974 = vpow.pop %v2973
        %v2975 = vmul.f32 %v2883, 1.442695
        %v2976 = vpow.pop %v2975
        %v2977 = vmul.f32 %v2884, 1.442695
        %v2978 = vpow.pop %v2977
        %v2979 = vmul.f32 %v2885, 1.442695
        %v2980 = vpow.pop %v2979
        %v2981 = vmul.f32 %v2886, 1.442695
        %v2982 = vpow.pop %v2981
        %v2983 = vmul.f32 %v2887, 1.442695
        %v2984 = vpow.pop %v2983
        %v2985 = vmul.f32 %v2888, 1.442695
        %v2986 = vpow.pop %v2985
        %v2987 = vmul.f32 %v2889, 1.442695
        %v2988 = vpow.pop %v2987
        %v2989 = vmul.f32 %v2890, 1.442695
        %v2990 = vpow.pop %v2989
        %v2991 = vmul.f32 %v2891, 1.442695
        %v2992 = vpow.pop %v2991
        %v2993 = vmul.f32 %v2892, 1.442695
        %v2994 = vpow.pop %v2993
        %v2995 = vmul.f32 %v2893, 1.442695
        %v2996 = vpow.pop %v2995
        %v2997 = vmul.f32 %v2894, 1.442695
        %v2998 = vpow.pop %v2997
        %v2999 = vmul.f32 %v2895, 1.442695
        %v3000 = vpow.pop %v2999
        %v3001 = vmul.f32 %v2896, 1.442695
        %v3002 = vpow.pop %v3001
        %v3003 = vmul.f32 %v2897, 1.442695
        %v3004 = vpow.pop %v3003
        %v3005 = vmul.f32 %v2898, 1.442695
        %v3006 = vpow.pop %v3005
        %v3007 = vmul.f32 %v2899, 1.442695
        %v3008 = vpow.pop %v3007
        %v3009 = vmul.f32 %v2900, 1.442695
        %v3010 = vpow.pop %v3009
        %v3011 = vmul.f32 %v2901, 1.442695
        %v3012 = vpow.pop %v3011
        %v3013 = vmul.f32 %v2902, 1.442695
        %v3014 = vpow.pop %v3013
        %v3015 = vmul.f32 %v2903, 1.442695
        %v3016 = vpow.pop %v3015
        %v3017 = vmul.f32 %v2904, 1.442695
        %v3018 = vpow.pop %v3017
        %v3019 = vmul.f32 %v2905, 1.442695
        %v3020 = vpow.pop %v3019
        %v3021 = vmul.f32 %v2906, 1.442695
        %v3022 = vpow.pop %v3021
        %v3023 = vmul.f32 %v2907, 1.442695
        %v3024 = vpow.pop %v3023
        %v3025 = vmul.f32 %v2908, 1.442695
        %v3026 = vpow.pop %v3025
        %v3027 = vmul.f32 %v2909, 1.442695
        %v3028 = vpow.pop %v3027
        %v3029 = vmul.f32 %v2910, 1.442695
        %v3030 = vpow.pop %v3029
        %v3031 = vmul.f32 %v2911, 1.442695
        %v3032 = vpow.pop %v3031
        %v3033 = vmul.f32 %v2912, 1.442695
        %v3034 = vpow.pop %v3033
        %v3035 = vmul.f32 %v2913, 1.442695
        %v3036 = vpow.pop %v3035
        %v3037 = vmul.f32 %v2914, 1.442695
        %v3038 = vpow.pop %v3037
        %v3039 = vmul.f32 %v2915, 1.442695
        %v3040 = vpow.pop %v3039
        %v3041 = vmul.f32 %v2916, 1.442695
        %v3042 = vpow.pop %v3041
        %v3043 = vmul.f32 %v2917, 1.442695
        %v3044 = vpow.pop %v3043
        %v3045 = vmul.f32 %v2918, 1.442695
        %v3046 = vpow.pop %v3045
        %v3047 = vadd.f32 %v2920, 1.0
        %v3048 = vadd.f32 %v2922, 1.0
        %v3049 = vadd.f32 %v2924, 1.0
        %v3050 = vadd.f32 %v2926, 1.0
        %v3051 = vadd.f32 %v2928, 1.0
        %v3052 = vadd.f32 %v2930, 1.0
        %v3053 = vadd.f32 %v2932, 1.0
        %v3054 = vadd.f32 %v2934, 1.0
        %v3055 = vadd.f32 %v2936, 1.0
        %v3056 = vadd.f32 %v2938, 1.0
        %v3057 = vadd.f32 %v2940, 1.0
        %v3058 = vadd.f32 %v2942, 1.0
        %v3059 = vadd.f32 %v2944, 1.0
        %v3060 = vadd.f32 %v2946, 1.0
        %v3061 = vadd.f32 %v2948, 1.0
        %v3062 = vadd.f32 %v2950, 1.0
        %v3063 = vadd.f32 %v2952, 1.0
        %v3064 = vadd.f32 %v2954, 1.0
        %v3065 = vadd.f32 %v2956, 1.0
        %v3066 = vadd.f32 %v2958, 1.0
        %v3067 = vadd.f32 %v2960, 1.0
        %v3068 = vadd.f32 %v2962, 1.0
        %v3069 = vadd.f32 %v2964, 1.0
        %v3070 = vadd.f32 %v2966, 1.0
        %v3071 = vadd.f32 %v2968, 1.0
        %v3072 = vadd.f32 %v2970, 1.0
        %v3073 = vadd.f32 %v2972, 1.0
        %v3074 = vadd.f32 %v2974, 1.0
        %v3075 = vadd.f32 %v2976, 1.0
        %v3076 = vadd.f32 %v2978, 1.0
        %v3077 = vadd.f32 %v2980, 1.0
        %v3078 = vadd.f32 %v2982, 1.0
        %v3079 = vadd.f32 %v2984, 1.0
        %v3080 = vadd.f32 %v2986, 1.0
        %v3081 = vadd.f32 %v2988, 1.0
        %v3082 = vadd.f32 %v2990, 1.0
        %v3083 = vadd.f32 %v2992, 1.0
        %v3084 = vadd.f32 %v2994, 1.0
        %v3085 = vadd.f32 %v2996, 1.0
        %v3086 = vadd.f32 %v2998, 1.0
        %v3087 = vadd.f32 %v3000, 1.0
        %v3088 = vadd.f32 %v3002, 1.0
        %v3089 = vadd.f32 %v3004, 1.0
        %v3090 = vadd.f32 %v3006, 1.0
        %v3091 = vadd.f32 %v3008, 1.0
        %v3092 = vadd.f32 %v3010, 1.0
        %v3093 = vadd.f32 %v3012, 1.0
        %v3094 = vadd.f32 %v3014, 1.0
        %v3095 = vadd.f32 %v3016, 1.0
        %v3096 = vadd.f32 %v3018, 1.0
        %v3097 = vadd.f32 %v3020, 1.0
        %v3098 = vadd.f32 %v3022, 1.0
        %v3099 = vadd.f32 %v3024, 1.0
        %v3100 = vadd.f32 %v3026, 1.0
        %v3101 = vadd.f32 %v3028, 1.0
        %v3102 = vadd.f32 %v3030, 1.0
        %v3103 = vadd.f32 %v3032, 1.0
        %v3104 = vadd.f32 %v3034, 1.0
        %v3105 = vadd.f32 %v3036, 1.0
        %v3106 = vadd.f32 %v3038, 1.0
        %v3107 = vadd.f32 %v3040, 1.0
        %v3108 = vadd.f32 %v3042, 1.0
        %v3109 = vadd.f32 %v3044, 1.0
        %v3110 = vadd.f32 %v3046, 1.0
        %v3111 = vrcp.pop %v3047
        %v3112 = vmul.f32 1.0, %v3111
        %v3113 = vrcp.pop %v3048
        %v3114 = vmul.f32 1.0, %v3113
        %v3115 = vrcp.pop %v3049
        %v3116 = vmul.f32 1.0, %v3115
        %v3117 = vrcp.pop %v3050
        %v3118 = vmul.f32 1.0, %v3117
        %v3119 = vrcp.pop %v3051
        %v3120 = vmul.f32 1.0, %v3119
        %v3121 = vrcp.pop %v3052
        %v3122 = vmul.f32 1.0, %v3121
        %v3123 = vrcp.pop %v3053
        %v3124 = vmul.f32 1.0, %v3123
        %v3125 = vrcp.pop %v3054
        %v3126 = vmul.f32 1.0, %v3125
        %v3127 = vrcp.pop %v3055
        %v3128 = vmul.f32 1.0, %v3127
        %v3129 = vrcp.pop %v3056
        %v3130 = vmul.f32 1.0, %v3129
        %v3131 = vrcp.pop %v3057
        %v3132 = vmul.f32 1.0, %v3131
        %v3133 = vrcp.pop %v3058
        %v3134 = vmul.f32 1.0, %v3133
        %v3135 = vrcp.pop %v3059
        %v3136 = vmul.f32 1.0, %v3135
        %v3137 = vrcp.pop %v3060
        %v3138 = vmul.f32 1.0, %v3137
        %v3139 = vrcp.pop %v3061
        %v3140 = vmul.f32 1.0, %v3139
        %v3141 = vrcp.pop %v3062
        %v3142 = vmul.f32 1.0, %v3141
        %v3143 = vrcp.pop %v3063
        %v3144 = vmul.f32 1.0, %v3143
        %v3145 = vrcp.pop %v3064
        %v3146 = vmul.f32 1.0, %v3145
        %v3147 = vrcp.pop %v3065
        %v3148 = vmul.f32 1.0, %v3147
        %v3149 = vrcp.pop %v3066
        %v3150 = vmul.f32 1.0, %v3149
        %v3151 = vrcp.pop %v3067
        %v3152 = vmul.f32 1.0, %v3151
        %v3153 = vrcp.pop %v3068
        %v3154 = vmul.f32 1.0, %v3153
        %v3155 = vrcp.pop %v3069
        %v3156 = vmul.f32 1.0, %v3155
        %v3157 = vrcp.pop %v3070
        %v3158 = vmul.f32 1.0, %v3157
        %v3159 = vrcp.pop %v3071
        %v3160 = vmul.f32 1.0, %v3159
        %v3161 = vrcp.pop %v3072
        %v3162 = vmul.f32 1.0, %v3161
        %v3163 = vrcp.pop %v3073
        %v3164 = vmul.f32 1.0, %v3163
        %v3165 = vrcp.pop %v3074
        %v3166 = vmul.f32 1.0, %v3165
        %v3167 = vrcp.pop %v3075
        %v3168 = vmul.f32 1.0, %v3167
        %v3169 = vrcp.pop %v3076
        %v3170 = vmul.f32 1.0, %v3169
        %v3171 = vrcp.pop %v3077
        %v3172 = vmul.f32 1.0, %v3171
        %v3173 = vrcp.pop %v3078
        %v3174 = vmul.f32 1.0, %v3173
        %v3175 = vrcp.pop %v3079
        %v3176 = vmul.f32 1.0, %v3175
        %v3177 = vrcp.pop %v3080
        %v3178 = vmul.f32 1.0, %v3177
        %v3179 = vrcp.pop %v3081
        %v3180 = vmul.f32 1.0, %v3179
        %v3181 = vrcp.pop %v3082
        %v3182 = vmul.f32 1.0, %v3181
        %v3183 = vrcp.pop %v3083
        %v3184 = vmul.f32 1.0, %v3183
        %v3185 = vrcp.pop %v3084
        %v3186 = vmul.f32 1.0, %v3185
        %v3187 = vrcp.pop %v3085
        %v3188 = vmul.f32 1.0, %v3187
        %v3189 = vrcp.pop %v3086
        %v3190 = vmul.f32 1.0, %v3189
        %v3191 = vrcp.pop %v3087
        %v3192 = vmul.f32 1.0, %v3191
        %v3193 = vrcp.pop %v3088
        %v3194 = vmul.f32 1.0, %v3193
        %v3195 = vrcp.pop %v3089
        %v3196 = vmul.f32 1.0, %v3195
        %v3197 = vrcp.pop %v3090
        %v3198 = vmul.f32 1.0, %v3197
        %v3199 = vrcp.pop %v3091
        %v3200 = vmul.f32 1.0, %v3199
        %v3201 = vrcp.pop %v3092
        %v3202 = vmul.f32 1.0, %v3201
        %v3203 = vrcp.pop %v3093
        %v3204 = vmul.f32 1.0, %v3203
        %v3205 = vrcp.pop %v3094
        %v3206 = vmul.f32 1.0, %v3205
        %v3207 = vrcp.pop %v3095
        %v3208 = vmul.f32 1.0, %v3207
        %v3209 = vrcp.pop %v3096
        %v3210 = vmul.f32 1.0, %v3209
        %v3211 = vrcp.pop %v3097
        %v3212 = vmul.f32 1.0, %v3211
        %v3213 = vrcp.pop %v3098
        %v3214 = vmul.f32 1.0, %v3213
        %v3215 = vrcp.pop %v3099
        %v3216 = vmul.f32 1.0, %v3215
        %v3217 = vrcp.pop %v3100
        %v3218 = vmul.f32 1.0, %v3217
        %v3219 = vrcp.pop %v3101
        %v3220 = vmul.f32 1.0, %v3219
        %v3221 = vrcp.pop %v3102
        %v3222 = vmul.f32 1.0, %v3221
        %v3223 = vrcp.pop %v3103
        %v3224 = vmul.f32 1.0, %v3223
        %v3225 = vrcp.pop %v3104
        %v3226 = vmul.f32 1.0, %v3225
        %v3227 = vrcp.pop %v3105
        %v3228 = vmul.f32 1.0, %v3227
        %v3229 = vrcp.pop %v3106
        %v3230 = vmul.f32 1.0, %v3229
        %v3231 = vrcp.pop %v3107
        %v3232 = vmul.f32 1.0, %v3231
        %v3233 = vrcp.pop %v3108
        %v3234 = vmul.f32 1.0, %v3233
        %v3235 = vrcp.pop %v3109
        %v3236 = vmul.f32 1.0, %v3235
        %v3237 = vrcp.pop %v3110
        %v3238 = vmul.f32 1.0, %v3237
        %v3239 = vld [vmem:[%s194 + $0x600] sm:$0xff]
        %v3240 = vld [vmem:[%s194 + $0x608] sm:$0xff]
        %v3241 = vld [vmem:[%s194 + $0x610] sm:$0xff]
        %v3242 = vld [vmem:[%s194 + $0x618] sm:$0xff]
        %v3243 = vld [vmem:[%s194 + $0x620] sm:$0xff]
        %v3244 = vld [vmem:[%s194 + $0x628] sm:$0xff]
        %v3245 = vld [vmem:[%s194 + $0x630] sm:$0xff]
        %v3246 = vld [vmem:[%s194 + $0x638] sm:$0xff]
        %v3247 = vld [vmem:[%s194 + $0x640] sm:$0xff]
        %v3248 = vld [vmem:[%s194 + $0x648] sm:$0xff]
        %v3249 = vld [vmem:[%s194 + $0x650] sm:$0xff]
        %v3250 = vld [vmem:[%s194 + $0x658] sm:$0xff]
        %v3251 = vld [vmem:[%s194 + $0x660] sm:$0xff]
        %v3252 = vld [vmem:[%s194 + $0x668] sm:$0xff]
        %v3253 = vld [vmem:[%s194 + $0x670] sm:$0xff]
        %v3254 = vld [vmem:[%s194 + $0x678] sm:$0xff]
        %v3255 = vld [vmem:[%s194 + $0x680] sm:$0xff]
        %v3256 = vld [vmem:[%s194 + $0x688] sm:$0xff]
        %v3257 = vld [vmem:[%s194 + $0x690] sm:$0xff]
        %v3258 = vld [vmem:[%s194 + $0x698] sm:$0xff]
        %v3259 = vld [vmem:[%s194 + $0x6a0] sm:$0xff]
        %v3260 = vld [vmem:[%s194 + $0x6a8] sm:$0xff]
        %v3261 = vld [vmem:[%s194 + $0x6b0] sm:$0xff]
        %v3262 = vld [vmem:[%s194 + $0x6b8] sm:$0xff]
        %v3263 = vld [vmem:[%s194 + $0x6c0] sm:$0xff]
        %v3264 = vld [vmem:[%s194 + $0x6c8] sm:$0xff]
        %v3265 = vld [vmem:[%s194 + $0x6d0] sm:$0xff]
        %v3266 = vld [vmem:[%s194 + $0x6d8] sm:$0xff]
        %v3267 = vld [vmem:[%s194 + $0x6e0] sm:$0xff]
        %v3268 = vld [vmem:[%s194 + $0x6e8] sm:$0xff]
        %v3269 = vld [vmem:[%s194 + $0x6f0] sm:$0xff]
        %v3270 = vld [vmem:[%s194 + $0x6f8] sm:$0xff]
        %v3271 = vld [vmem:[%s194 + $0x700] sm:$0xff]
        %v3272 = vld [vmem:[%s194 + $0x708] sm:$0xff]
        %v3273 = vld [vmem:[%s194 + $0x710] sm:$0xff]
        %v3274 = vld [vmem:[%s194 + $0x718] sm:$0xff]
        %v3275 = vld [vmem:[%s194 + $0x720] sm:$0xff]
        %v3276 = vld [vmem:[%s194 + $0x728] sm:$0xff]
        %v3277 = vld [vmem:[%s194 + $0x730] sm:$0xff]
        %v3278 = vld [vmem:[%s194 + $0x738] sm:$0xff]
        %v3279 = vld [vmem:[%s194 + $0x740] sm:$0xff]
        %v3280 = vld [vmem:[%s194 + $0x748] sm:$0xff]
        %v3281 = vld [vmem:[%s194 + $0x750] sm:$0xff]
        %v3282 = vld [vmem:[%s194 + $0x758] sm:$0xff]
        %v3283 = vld [vmem:[%s194 + $0x760] sm:$0xff]
        %v3284 = vld [vmem:[%s194 + $0x768] sm:$0xff]
        %v3285 = vld [vmem:[%s194 + $0x770] sm:$0xff]
        %v3286 = vld [vmem:[%s194 + $0x778] sm:$0xff]
        %v3287 = vld [vmem:[%s194 + $0x780] sm:$0xff]
        %v3288 = vld [vmem:[%s194 + $0x788] sm:$0xff]
        %v3289 = vld [vmem:[%s194 + $0x790] sm:$0xff]
        %v3290 = vld [vmem:[%s194 + $0x798] sm:$0xff]
        %v3291 = vld [vmem:[%s194 + $0x7a0] sm:$0xff]
        %v3292 = vld [vmem:[%s194 + $0x7a8] sm:$0xff]
        %v3293 = vld [vmem:[%s194 + $0x7b0] sm:$0xff]
        %v3294 = vld [vmem:[%s194 + $0x7b8] sm:$0xff]
        %v3295 = vld [vmem:[%s194 + $0x7c0] sm:$0xff]
        %v3296 = vld [vmem:[%s194 + $0x7c8] sm:$0xff]
        %v3297 = vld [vmem:[%s194 + $0x7d0] sm:$0xff]
        %v3298 = vld [vmem:[%s194 + $0x7d8] sm:$0xff]
        %v3299 = vld [vmem:[%s194 + $0x7e0] sm:$0xff]
        %v3300 = vld [vmem:[%s194 + $0x7e8] sm:$0xff]
        %v3301 = vld [vmem:[%s194 + $0x7f0] sm:$0xff]
        %v3302 = vld [vmem:[%s194 + $0x7f8] sm:$0xff]
        %v3303 = vadd.f32 %v3239, %v3240
        %v3304 = vadd.f32 %v3303, %v3241
        %v3305 = vadd.f32 %v3304, %v3242
        %v3306 = vadd.f32 %v3305, %v3243
        %v3307 = vadd.f32 %v3306, %v3244
        %v3308 = vadd.f32 %v3307, %v3245
        %v3309 = vadd.f32 %v3308, %v3246
        %v3310 = vadd.f32 %v3309, %v3247
        %v3311 = vadd.f32 %v3310, %v3248
        %v3312 = vadd.f32 %v3311, %v3249
        %v3313 = vadd.f32 %v3312, %v3250
        %v3314 = vadd.f32 %v3313, %v3251
        %v3315 = vadd.f32 %v3314, %v3252
        %v3316 = vadd.f32 %v3315, %v3253
        %v3317 = vadd.f32 %v3316, %v3254
        %v3318 = vadd.f32 %v3317, %v3255
        %v3319 = vadd.f32 %v3318, %v3256
        %v3320 = vadd.f32 %v3319, %v3257
        %v3321 = vadd.f32 %v3320, %v3258
        %v3322 = vadd.f32 %v3321, %v3259
        %v3323 = vadd.f32 %v3322, %v3260
        %v3324 = vadd.f32 %v3323, %v3261
        %v3325 = vadd.f32 %v3324, %v3262
        %v3326 = vadd.f32 %v3325, %v3263
        %v3327 = vadd.f32 %v3326, %v3264
        %v3328 = vadd.f32 %v3327, %v3265
        %v3329 = vadd.f32 %v3328, %v3266
        %v3330 = vadd.f32 %v3329, %v3267
        %v3331 = vadd.f32 %v3330, %v3268
        %v3332 = vadd.f32 %v3331, %v3269
        %v3333 = vadd.f32 %v3332, %v3270
        %v3334 = vadd.f32 %v3333, %v3271
        %v3335 = vadd.f32 %v3334, %v3272
        %v3336 = vadd.f32 %v3335, %v3273
        %v3337 = vadd.f32 %v3336, %v3274
        %v3338 = vadd.f32 %v3337, %v3275
        %v3339 = vadd.f32 %v3338, %v3276
        %v3340 = vadd.f32 %v3339, %v3277
        %v3341 = vadd.f32 %v3340, %v3278
        %v3342 = vadd.f32 %v3341, %v3279
        %v3343 = vadd.f32 %v3342, %v3280
        %v3344 = vadd.f32 %v3343, %v3281
        %v3345 = vadd.f32 %v3344, %v3282
        %v3346 = vadd.f32 %v3345, %v3283
        %v3347 = vadd.f32 %v3346, %v3284
        %v3348 = vadd.f32 %v3347, %v3285
        %v3349 = vadd.f32 %v3348, %v3286
        %v3350 = vadd.f32 %v3349, %v3287
        %v3351 = vadd.f32 %v3350, %v3288
        %v3352 = vadd.f32 %v3351, %v3289
        %v3353 = vadd.f32 %v3352, %v3290
        %v3354 = vadd.f32 %v3353, %v3291
        %v3355 = vadd.f32 %v3354, %v3292
        %v3356 = vadd.f32 %v3355, %v3293
        %v3357 = vadd.f32 %v3356, %v3294
        %v3358 = vadd.f32 %v3357, %v3295
        %v3359 = vadd.f32 %v3358, %v3296
        %v3360 = vadd.f32 %v3359, %v3297
        %v3361 = vadd.f32 %v3360, %v3298
        %v3362 = vadd.f32 %v3361, %v3299
        %v3363 = vadd.f32 %v3362, %v3300
        %v3364 = vadd.f32 %v3363, %v3301
        %v3365 = vadd.f32 %v3364, %v3302
        %v3366 = vadd.f32 %v2534, %v3365
        %v3367 = vmul.f32 %v3112, %v3239
        %v3368 = vmul.f32 %v3114, %v3240
        %v3369 = vmul.f32 %v3116, %v3241
        %v3370 = vmul.f32 %v3118, %v3242
        %v3371 = vmul.f32 %v3120, %v3243
        %v3372 = vmul.f32 %v3122, %v3244
        %v3373 = vmul.f32 %v3124, %v3245
        %v3374 = vmul.f32 %v3126, %v3246
        %v3375 = vmul.f32 %v3128, %v3247
        %v3376 = vmul.f32 %v3130, %v3248
        %v3377 = vmul.f32 %v3132, %v3249
        %v3378 = vmul.f32 %v3134, %v3250
        %v3379 = vmul.f32 %v3136, %v3251
        %v3380 = vmul.f32 %v3138, %v3252
        %v3381 = vmul.f32 %v3140, %v3253
        %v3382 = vmul.f32 %v3142, %v3254
        %v3383 = vmul.f32 %v3144, %v3255
        %v3384 = vmul.f32 %v3146, %v3256
        %v3385 = vmul.f32 %v3148, %v3257
        %v3386 = vmul.f32 %v3150, %v3258
        %v3387 = vmul.f32 %v3152, %v3259
        %v3388 = vmul.f32 %v3154, %v3260
        %v3389 = vmul.f32 %v3156, %v3261
        %v3390 = vmul.f32 %v3158, %v3262
        %v3391 = vmul.f32 %v3160, %v3263
        %v3392 = vmul.f32 %v3162, %v3264
        %v3393 = vmul.f32 %v3164, %v3265
        %v3394 = vmul.f32 %v3166, %v3266
        %v3395 = vmul.f32 %v3168, %v3267
        %v3396 = vmul.f32 %v3170, %v3268
        %v3397 = vmul.f32 %v3172, %v3269
        %v3398 = vmul.f32 %v3174, %v3270
        %v3399 = vmul.f32 %v3176, %v3271
        %v3400 = vmul.f32 %v3178, %v3272
        %v3401 = vmul.f32 %v3180, %v3273
        %v3402 = vmul.f32 %v3182, %v3274
        %v3403 = vmul.f32 %v3184, %v3275
        %v3404 = vmul.f32 %v3186, %v3276
        %v3405 = vmul.f32 %v3188, %v3277
        %v3406 = vmul.f32 %v3190, %v3278
        %v3407 = vmul.f32 %v3192, %v3279
        %v3408 = vmul.f32 %v3194, %v3280
        %v3409 = vmul.f32 %v3196, %v3281
        %v3410 = vmul.f32 %v3198, %v3282
        %v3411 = vmul.f32 %v3200, %v3283
        %v3412 = vmul.f32 %v3202, %v3284
        %v3413 = vmul.f32 %v3204, %v3285
        %v3414 = vmul.f32 %v3206, %v3286
        %v3415 = vmul.f32 %v3208, %v3287
        %v3416 = vmul.f32 %v3210, %v3288
        %v3417 = vmul.f32 %v3212, %v3289
        %v3418 = vmul.f32 %v3214, %v3290
        %v3419 = vmul.f32 %v3216, %v3291
        %v3420 = vmul.f32 %v3218, %v3292
        %v3421 = vmul.f32 %v3220, %v3293
        %v3422 = vmul.f32 %v3222, %v3294
        %v3423 = vmul.f32 %v3224, %v3295
        %v3424 = vmul.f32 %v3226, %v3296
        %v3425 = vmul.f32 %v3228, %v3297
        %v3426 = vmul.f32 %v3230, %v3298
        %v3427 = vmul.f32 %v3232, %v3299
        %v3428 = vmul.f32 %v3234, %v3300
        %v3429 = vmul.f32 %v3236, %v3301
        %v3430 = vmul.f32 %v3238, %v3302
        %v3431 = vadd.f32 %v3367, %v3368
        %v3432 = vadd.f32 %v3431, %v3369
        %v3433 = vadd.f32 %v3432, %v3370
        %v3434 = vadd.f32 %v3433, %v3371
        %v3435 = vadd.f32 %v3434, %v3372
        %v3436 = vadd.f32 %v3435, %v3373
        %v3437 = vadd.f32 %v3436, %v3374
        %v3438 = vadd.f32 %v3437, %v3375
        %v3439 = vadd.f32 %v3438, %v3376
        %v3440 = vadd.f32 %v3439, %v3377
        %v3441 = vadd.f32 %v3440, %v3378
        %v3442 = vadd.f32 %v3441, %v3379
        %v3443 = vadd.f32 %v3442, %v3380
        %v3444 = vadd.f32 %v3443, %v3381
        %v3445 = vadd.f32 %v3444, %v3382
        %v3446 = vadd.f32 %v3445, %v3383
        %v3447 = vadd.f32 %v3446, %v3384
        %v3448 = vadd.f32 %v3447, %v3385
        %v3449 = vadd.f32 %v3448, %v3386
        %v3450 = vadd.f32 %v3449, %v3387
        %v3451 = vadd.f32 %v3450, %v3388
        %v3452 = vadd.f32 %v3451, %v3389
        %v3453 = vadd.f32 %v3452, %v3390
        %v3454 = vadd.f32 %v3453, %v3391
        %v3455 = vadd.f32 %v3454, %v3392
        %v3456 = vadd.f32 %v3455, %v3393
        %v3457 = vadd.f32 %v3456, %v3394
        %v3458 = vadd.f32 %v3457, %v3395
        %v3459 = vadd.f32 %v3458, %v3396
        %v3460 = vadd.f32 %v3459, %v3397
        %v3461 = vadd.f32 %v3460, %v3398
        %v3462 = vadd.f32 %v3461, %v3399
        %v3463 = vadd.f32 %v3462, %v3400
        %v3464 = vadd.f32 %v3463, %v3401
        %v3465 = vadd.f32 %v3464, %v3402
        %v3466 = vadd.f32 %v3465, %v3403
        %v3467 = vadd.f32 %v3466, %v3404
        %v3468 = vadd.f32 %v3467, %v3405
        %v3469 = vadd.f32 %v3468, %v3406
        %v3470 = vadd.f32 %v3469, %v3407
        %v3471 = vadd.f32 %v3470, %v3408
        %v3472 = vadd.f32 %v3471, %v3409
        %v3473 = vadd.f32 %v3472, %v3410
        %v3474 = vadd.f32 %v3473, %v3411
        %v3475 = vadd.f32 %v3474, %v3412
        %v3476 = vadd.f32 %v3475, %v3413
        %v3477 = vadd.f32 %v3476, %v3414
        %v3478 = vadd.f32 %v3477, %v3415
        %v3479 = vadd.f32 %v3478, %v3416
        %v3480 = vadd.f32 %v3479, %v3417
        %v3481 = vadd.f32 %v3480, %v3418
        %v3482 = vadd.f32 %v3481, %v3419
        %v3483 = vadd.f32 %v3482, %v3420
        %v3484 = vadd.f32 %v3483, %v3421
        %v3485 = vadd.f32 %v3484, %v3422
        %v3486 = vadd.f32 %v3485, %v3423
        %v3487 = vadd.f32 %v3486, %v3424
        %v3488 = vadd.f32 %v3487, %v3425
        %v3489 = vadd.f32 %v3488, %v3426
        %v3490 = vadd.f32 %v3489, %v3427
        %v3491 = vadd.f32 %v3490, %v3428
        %v3492 = vadd.f32 %v3491, %v3429
        %v3493 = vadd.f32 %v3492, %v3430
        %v3494 = vadd.f32 %v2662, %v3493
        %v3495 = vadd.f32 %v3112, %v3114
        %v3496 = vadd.f32 %v3495, %v3116
        %v3497 = vadd.f32 %v3496, %v3118
        %v3498 = vadd.f32 %v3497, %v3120
        %v3499 = vadd.f32 %v3498, %v3122
        %v3500 = vadd.f32 %v3499, %v3124
        %v3501 = vadd.f32 %v3500, %v3126
        %v3502 = vadd.f32 %v3501, %v3128
        %v3503 = vadd.f32 %v3502, %v3130
        %v3504 = vadd.f32 %v3503, %v3132
        %v3505 = vadd.f32 %v3504, %v3134
        %v3506 = vadd.f32 %v3505, %v3136
        %v3507 = vadd.f32 %v3506, %v3138
        %v3508 = vadd.f32 %v3507, %v3140
        %v3509 = vadd.f32 %v3508, %v3142
        %v3510 = vadd.f32 %v3509, %v3144
        %v3511 = vadd.f32 %v3510, %v3146
        %v3512 = vadd.f32 %v3511, %v3148
        %v3513 = vadd.f32 %v3512, %v3150
        %v3514 = vadd.f32 %v3513, %v3152
        %v3515 = vadd.f32 %v3514, %v3154
        %v3516 = vadd.f32 %v3515, %v3156
        %v3517 = vadd.f32 %v3516, %v3158
        %v3518 = vadd.f32 %v3517, %v3160
        %v3519 = vadd.f32 %v3518, %v3162
        %v3520 = vadd.f32 %v3519, %v3164
        %v3521 = vadd.f32 %v3520, %v3166
        %v3522 = vadd.f32 %v3521, %v3168
        %v3523 = vadd.f32 %v3522, %v3170
        %v3524 = vadd.f32 %v3523, %v3172
        %v3525 = vadd.f32 %v3524, %v3174
        %v3526 = vadd.f32 %v3525, %v3176
        %v3527 = vadd.f32 %v3526, %v3178
        %v3528 = vadd.f32 %v3527, %v3180
        %v3529 = vadd.f32 %v3528, %v3182
        %v3530 = vadd.f32 %v3529, %v3184
        %v3531 = vadd.f32 %v3530, %v3186
        %v3532 = vadd.f32 %v3531, %v3188
        %v3533 = vadd.f32 %v3532, %v3190
        %v3534 = vadd.f32 %v3533, %v3192
        %v3535 = vadd.f32 %v3534, %v3194
        %v3536 = vadd.f32 %v3535, %v3196
        %v3537 = vadd.f32 %v3536, %v3198
        %v3538 = vadd.f32 %v3537, %v3200
        %v3539 = vadd.f32 %v3538, %v3202
        %v3540 = vadd.f32 %v3539, %v3204
        %v3541 = vadd.f32 %v3540, %v3206
        %v3542 = vadd.f32 %v3541, %v3208
        %v3543 = vadd.f32 %v3542, %v3210
        %v3544 = vadd.f32 %v3543, %v3212
        %v3545 = vadd.f32 %v3544, %v3214
        %v3546 = vadd.f32 %v3545, %v3216
        %v3547 = vadd.f32 %v3546, %v3218
        %v3548 = vadd.f32 %v3547, %v3220
        %v3549 = vadd.f32 %v3548, %v3222
        %v3550 = vadd.f32 %v3549, %v3224
        %v3551 = vadd.f32 %v3550, %v3226
        %v3552 = vadd.f32 %v3551, %v3228
        %v3553 = vadd.f32 %v3552, %v3230
        %v3554 = vadd.f32 %v3553, %v3232
        %v3555 = vadd.f32 %v3554, %v3234
        %v3556 = vadd.f32 %v3555, %v3236
        %v3557 = vadd.f32 %v3556, %v3238
        %v3558 = vadd.f32 %v2726, %v3557
        %v3559 = vld [vmem:[%s185 + $0x400] sm:$0xf]
        %v3560 = vld [vmem:[%s185 + $0x404] sm:$0xf]
        %v3561 = vld [vmem:[%s185 + $0x408] sm:$0xf]
        %v3562 = vld [vmem:[%s185 + $0x40c] sm:$0xf]
        %v3563 = vld [vmem:[%s185 + $0x410] sm:$0xf]
        %v3564 = vld [vmem:[%s185 + $0x414] sm:$0xf]
        %v3565 = vld [vmem:[%s185 + $0x418] sm:$0xf]
        %v3566 = vld [vmem:[%s185 + $0x41c] sm:$0xf]
        %v3567 = vld [vmem:[%s185 + $0x420] sm:$0xf]
        %v3568 = vld [vmem:[%s185 + $0x424] sm:$0xf]
        %v3569 = vld [vmem:[%s185 + $0x428] sm:$0xf]
        %v3570 = vld [vmem:[%s185 + $0x42c] sm:$0xf]
        %v3571 = vld [vmem:[%s185 + $0x430] sm:$0xf]
        %v3572 = vld [vmem:[%s185 + $0x434] sm:$0xf]
        %v3573 = vld [vmem:[%s185 + $0x438] sm:$0xf]
        %v3574 = vld [vmem:[%s185 + $0x43c] sm:$0xf]
        %v3575 = vld [vmem:[%s185 + $0x440] sm:$0xf]
        %v3576 = vld [vmem:[%s185 + $0x444] sm:$0xf]
        %v3577 = vld [vmem:[%s185 + $0x448] sm:$0xf]
        %v3578 = vld [vmem:[%s185 + $0x44c] sm:$0xf]
        %v3579 = vld [vmem:[%s185 + $0x450] sm:$0xf]
        %v3580 = vld [vmem:[%s185 + $0x454] sm:$0xf]
        %v3581 = vld [vmem:[%s185 + $0x458] sm:$0xf]
        %v3582 = vld [vmem:[%s185 + $0x45c] sm:$0xf]
        %v3583 = vld [vmem:[%s185 + $0x460] sm:$0xf]
        %v3584 = vld [vmem:[%s185 + $0x464] sm:$0xf]
        %v3585 = vld [vmem:[%s185 + $0x468] sm:$0xf]
        %v3586 = vld [vmem:[%s185 + $0x46c] sm:$0xf]
        %v3587 = vld [vmem:[%s185 + $0x470] sm:$0xf]
        %v3588 = vld [vmem:[%s185 + $0x474] sm:$0xf]
        %v3589 = vld [vmem:[%s185 + $0x478] sm:$0xf]
        %v3590 = vld [vmem:[%s185 + $0x47c] sm:$0xf]
        %v3591 = vld [vmem:[%s185 + $0x480] sm:$0xf]
        %v3592 = vld [vmem:[%s185 + $0x484] sm:$0xf]
        %v3593 = vld [vmem:[%s185 + $0x488] sm:$0xf]
        %v3594 = vld [vmem:[%s185 + $0x48c] sm:$0xf]
        %v3595 = vld [vmem:[%s185 + $0x490] sm:$0xf]
        %v3596 = vld [vmem:[%s185 + $0x494] sm:$0xf]
        %v3597 = vld [vmem:[%s185 + $0x498] sm:$0xf]
        %v3598 = vld [vmem:[%s185 + $0x49c] sm:$0xf]
        %v3599 = vld [vmem:[%s185 + $0x4a0] sm:$0xf]
        %v3600 = vld [vmem:[%s185 + $0x4a4] sm:$0xf]
        %v3601 = vld [vmem:[%s185 + $0x4a8] sm:$0xf]
        %v3602 = vld [vmem:[%s185 + $0x4ac] sm:$0xf]
        %v3603 = vld [vmem:[%s185 + $0x4b0] sm:$0xf]
        %v3604 = vld [vmem:[%s185 + $0x4b4] sm:$0xf]
        %v3605 = vld [vmem:[%s185 + $0x4b8] sm:$0xf]
        %v3606 = vld [vmem:[%s185 + $0x4bc] sm:$0xf]
        %v3607 = vld [vmem:[%s185 + $0x4c0] sm:$0xf]
        %v3608 = vld [vmem:[%s185 + $0x4c4] sm:$0xf]
        %v3609 = vld [vmem:[%s185 + $0x4c8] sm:$0xf]
        %v3610 = vld [vmem:[%s185 + $0x4cc] sm:$0xf]
        %v3611 = vld [vmem:[%s185 + $0x4d0] sm:$0xf]
        %v3612 = vld [vmem:[%s185 + $0x4d4] sm:$0xf]
        %v3613 = vld [vmem:[%s185 + $0x4d8] sm:$0xf]
        %v3614 = vld [vmem:[%s185 + $0x4dc] sm:$0xf]
        %v3615 = vld [vmem:[%s185 + $0x4e0] sm:$0xf]
        %v3616 = vld [vmem:[%s185 + $0x4e4] sm:$0xf]
        %v3617 = vld [vmem:[%s185 + $0x4e8] sm:$0xf]
        %v3618 = vld [vmem:[%s185 + $0x4ec] sm:$0xf]
        %v3619 = vld [vmem:[%s185 + $0x4f0] sm:$0xf]
        %v3620 = vld [vmem:[%s185 + $0x4f4] sm:$0xf]
        %v3621 = vld [vmem:[%s185 + $0x4f8] sm:$0xf]
        %v3622 = vld [vmem:[%s185 + $0x4fc] sm:$0xf]
        %v3623 = vunpack.c.l.bf16 %v3559
        %v3624 = vunpack.c.l.bf16 %v3560
        %v3625 = vunpack.c.l.bf16 %v3561
        %v3626 = vunpack.c.l.bf16 %v3562
        %v3627 = vunpack.c.l.bf16 %v3563
        %v3628 = vunpack.c.l.bf16 %v3564
        %v3629 = vunpack.c.l.bf16 %v3565
        %v3630 = vunpack.c.l.bf16 %v3566
        %v3631 = vunpack.c.l.bf16 %v3567
        %v3632 = vunpack.c.l.bf16 %v3568
        %v3633 = vunpack.c.l.bf16 %v3569
        %v3634 = vunpack.c.l.bf16 %v3570
        %v3635 = vunpack.c.l.bf16 %v3571
        %v3636 = vunpack.c.l.bf16 %v3572
        %v3637 = vunpack.c.l.bf16 %v3573
        %v3638 = vunpack.c.l.bf16 %v3574
        %v3639 = vunpack.c.l.bf16 %v3575
        %v3640 = vunpack.c.l.bf16 %v3576
        %v3641 = vunpack.c.l.bf16 %v3577
        %v3642 = vunpack.c.l.bf16 %v3578
        %v3643 = vunpack.c.l.bf16 %v3579
        %v3644 = vunpack.c.l.bf16 %v3580
        %v3645 = vunpack.c.l.bf16 %v3581
        %v3646 = vunpack.c.l.bf16 %v3582
        %v3647 = vunpack.c.l.bf16 %v3583
        %v3648 = vunpack.c.l.bf16 %v3584
        %v3649 = vunpack.c.l.bf16 %v3585
        %v3650 = vunpack.c.l.bf16 %v3586
        %v3651 = vunpack.c.l.bf16 %v3587
        %v3652 = vunpack.c.l.bf16 %v3588
        %v3653 = vunpack.c.l.bf16 %v3589
        %v3654 = vunpack.c.l.bf16 %v3590
        %v3655 = vunpack.c.l.bf16 %v3591
        %v3656 = vunpack.c.l.bf16 %v3592
        %v3657 = vunpack.c.l.bf16 %v3593
        %v3658 = vunpack.c.l.bf16 %v3594
        %v3659 = vunpack.c.l.bf16 %v3595
        %v3660 = vunpack.c.l.bf16 %v3596
        %v3661 = vunpack.c.l.bf16 %v3597
        %v3662 = vunpack.c.l.bf16 %v3598
        %v3663 = vunpack.c.l.bf16 %v3599
        %v3664 = vunpack.c.l.bf16 %v3600
        %v3665 = vunpack.c.l.bf16 %v3601
        %v3666 = vunpack.c.l.bf16 %v3602
        %v3667 = vunpack.c.l.bf16 %v3603
        %v3668 = vunpack.c.l.bf16 %v3604
        %v3669 = vunpack.c.l.bf16 %v3605
        %v3670 = vunpack.c.l.bf16 %v3606
        %v3671 = vunpack.c.l.bf16 %v3607
        %v3672 = vunpack.c.l.bf16 %v3608
        %v3673 = vunpack.c.l.bf16 %v3609
        %v3674 = vunpack.c.l.bf16 %v3610
        %v3675 = vunpack.c.l.bf16 %v3611
        %v3676 = vunpack.c.l.bf16 %v3612
        %v3677 = vunpack.c.l.bf16 %v3613
        %v3678 = vunpack.c.l.bf16 %v3614
        %v3679 = vunpack.c.l.bf16 %v3615
        %v3680 = vunpack.c.l.bf16 %v3616
        %v3681 = vunpack.c.l.bf16 %v3617
        %v3682 = vunpack.c.l.bf16 %v3618
        %v3683 = vunpack.c.l.bf16 %v3619
        %v3684 = vunpack.c.l.bf16 %v3620
        %v3685 = vunpack.c.l.bf16 %v3621
        %v3686 = vunpack.c.l.bf16 %v3622
        %v3687 = vxor.u32 %v3623, 2147483648
        %v3688 = vxor.u32 %v3624, 2147483648
        %v3689 = vxor.u32 %v3625, 2147483648
        %v3690 = vxor.u32 %v3626, 2147483648
        %v3691 = vxor.u32 %v3627, 2147483648
        %v3692 = vxor.u32 %v3628, 2147483648
        %v3693 = vxor.u32 %v3629, 2147483648
        %v3694 = vxor.u32 %v3630, 2147483648
        %v3695 = vxor.u32 %v3631, 2147483648
        %v3696 = vxor.u32 %v3632, 2147483648
        %v3697 = vxor.u32 %v3633, 2147483648
        %v3698 = vxor.u32 %v3634, 2147483648
        %v3699 = vxor.u32 %v3635, 2147483648
        %v3700 = vxor.u32 %v3636, 2147483648
        %v3701 = vxor.u32 %v3637, 2147483648
        %v3702 = vxor.u32 %v3638, 2147483648
        %v3703 = vxor.u32 %v3639, 2147483648
        %v3704 = vxor.u32 %v3640, 2147483648
        %v3705 = vxor.u32 %v3641, 2147483648
        %v3706 = vxor.u32 %v3642, 2147483648
        %v3707 = vxor.u32 %v3643, 2147483648
        %v3708 = vxor.u32 %v3644, 2147483648
        %v3709 = vxor.u32 %v3645, 2147483648
        %v3710 = vxor.u32 %v3646, 2147483648
        %v3711 = vxor.u32 %v3647, 2147483648
        %v3712 = vxor.u32 %v3648, 2147483648
        %v3713 = vxor.u32 %v3649, 2147483648
        %v3714 = vxor.u32 %v3650, 2147483648
        %v3715 = vxor.u32 %v3651, 2147483648
        %v3716 = vxor.u32 %v3652, 2147483648
        %v3717 = vxor.u32 %v3653, 2147483648
        %v3718 = vxor.u32 %v3654, 2147483648
        %v3719 = vxor.u32 %v3655, 2147483648
        %v3720 = vxor.u32 %v3656, 2147483648
        %v3721 = vxor.u32 %v3657, 2147483648
        %v3722 = vxor.u32 %v3658, 2147483648
        %v3723 = vxor.u32 %v3659, 2147483648
        %v3724 = vxor.u32 %v3660, 2147483648
        %v3725 = vxor.u32 %v3661, 2147483648
        %v3726 = vxor.u32 %v3662, 2147483648
        %v3727 = vxor.u32 %v3663, 2147483648
        %v3728 = vxor.u32 %v3664, 2147483648
        %v3729 = vxor.u32 %v3665, 2147483648
        %v3730 = vxor.u32 %v3666, 2147483648
        %v3731 = vxor.u32 %v3667, 2147483648
        %v3732 = vxor.u32 %v3668, 2147483648
        %v3733 = vxor.u32 %v3669, 2147483648
        %v3734 = vxor.u32 %v3670, 2147483648
        %v3735 = vxor.u32 %v3671, 2147483648
        %v3736 = vxor.u32 %v3672, 2147483648
        %v3737 = vxor.u32 %v3673, 2147483648
        %v3738 = vxor.u32 %v3674, 2147483648
        %v3739 = vxor.u32 %v3675, 2147483648
        %v3740 = vxor.u32 %v3676, 2147483648
        %v3741 = vxor.u32 %v3677, 2147483648
        %v3742 = vxor.u32 %v3678, 2147483648
        %v3743 = vxor.u32 %v3679, 2147483648
        %v3744 = vxor.u32 %v3680, 2147483648
        %v3745 = vxor.u32 %v3681, 2147483648
        %v3746 = vxor.u32 %v3682, 2147483648
        %v3747 = vxor.u32 %v3683, 2147483648
        %v3748 = vxor.u32 %v3684, 2147483648
        %v3749 = vxor.u32 %v3685, 2147483648
        %v3750 = vxor.u32 %v3686, 2147483648
        %v3751 = vmul.f32 %v3687, 1.442695
        %v3752 = vpow.pop %v3751
        %v3753 = vmul.f32 %v3688, 1.442695
        %v3754 = vpow.pop %v3753
        %v3755 = vmul.f32 %v3689, 1.442695
        %v3756 = vpow.pop %v3755
        %v3757 = vmul.f32 %v3690, 1.442695
        %v3758 = vpow.pop %v3757
        %v3759 = vmul.f32 %v3691, 1.442695
        %v3760 = vpow.pop %v3759
        %v3761 = vmul.f32 %v3692, 1.442695
        %v3762 = vpow.pop %v3761
        %v3763 = vmul.f32 %v3693, 1.442695
        %v3764 = vpow.pop %v3763
        %v3765 = vmul.f32 %v3694, 1.442695
        %v3766 = vpow.pop %v3765
        %v3767 = vmul.f32 %v3695, 1.442695
        %v3768 = vpow.pop %v3767
        %v3769 = vmul.f32 %v3696, 1.442695
        %v3770 = vpow.pop %v3769
        %v3771 = vmul.f32 %v3697, 1.442695
        %v3772 = vpow.pop %v3771
        %v3773 = vmul.f32 %v3698, 1.442695
        %v3774 = vpow.pop %v3773
        %v3775 = vmul.f32 %v3699, 1.442695
        %v3776 = vpow.pop %v3775
        %v3777 = vmul.f32 %v3700, 1.442695
        %v3778 = vpow.pop %v3777
        %v3779 = vmul.f32 %v3701, 1.442695
        %v3780 = vpow.pop %v3779
        %v3781 = vmul.f32 %v3702, 1.442695
        %v3782 = vpow.pop %v3781
        %v3783 = vmul.f32 %v3703, 1.442695
        %v3784 = vpow.pop %v3783
        %v3785 = vmul.f32 %v3704, 1.442695
        %v3786 = vpow.pop %v3785
        %v3787 = vmul.f32 %v3705, 1.442695
        %v3788 = vpow.pop %v3787
        %v3789 = vmul.f32 %v3706, 1.442695
        %v3790 = vpow.pop %v3789
        %v3791 = vmul.f32 %v3707, 1.442695
        %v3792 = vpow.pop %v3791
        %v3793 = vmul.f32 %v3708, 1.442695
        %v3794 = vpow.pop %v3793
        %v3795 = vmul.f32 %v3709, 1.442695
        %v3796 = vpow.pop %v3795
        %v3797 = vmul.f32 %v3710, 1.442695
        %v3798 = vpow.pop %v3797
        %v3799 = vmul.f32 %v3711, 1.442695
        %v3800 = vpow.pop %v3799
        %v3801 = vmul.f32 %v3712, 1.442695
        %v3802 = vpow.pop %v3801
        %v3803 = vmul.f32 %v3713, 1.442695
        %v3804 = vpow.pop %v3803
        %v3805 = vmul.f32 %v3714, 1.442695
        %v3806 = vpow.pop %v3805
        %v3807 = vmul.f32 %v3715, 1.442695
        %v3808 = vpow.pop %v3807
        %v3809 = vmul.f32 %v3716, 1.442695
        %v3810 = vpow.pop %v3809
        %v3811 = vmul.f32 %v3717, 1.442695
        %v3812 = vpow.pop %v3811
        %v3813 = vmul.f32 %v3718, 1.442695
        %v3814 = vpow.pop %v3813
        %v3815 = vmul.f32 %v3719, 1.442695
        %v3816 = vpow.pop %v3815
        %v3817 = vmul.f32 %v3720, 1.442695
        %v3818 = vpow.pop %v3817
        %v3819 = vmul.f32 %v3721, 1.442695
        %v3820 = vpow.pop %v3819
        %v3821 = vmul.f32 %v3722, 1.442695
        %v3822 = vpow.pop %v3821
        %v3823 = vmul.f32 %v3723, 1.442695
        %v3824 = vpow.pop %v3823
        %v3825 = vmul.f32 %v3724, 1.442695
        %v3826 = vpow.pop %v3825
        %v3827 = vmul.f32 %v3725, 1.442695
        %v3828 = vpow.pop %v3827
        %v3829 = vmul.f32 %v3726, 1.442695
        %v3830 = vpow.pop %v3829
        %v3831 = vmul.f32 %v3727, 1.442695
        %v3832 = vpow.pop %v3831
        %v3833 = vmul.f32 %v3728, 1.442695
        %v3834 = vpow.pop %v3833
        %v3835 = vmul.f32 %v3729, 1.442695
        %v3836 = vpow.pop %v3835
        %v3837 = vmul.f32 %v3730, 1.442695
        %v3838 = vpow.pop %v3837
        %v3839 = vmul.f32 %v3731, 1.442695
        %v3840 = vpow.pop %v3839
        %v3841 = vmul.f32 %v3732, 1.442695
        %v3842 = vpow.pop %v3841
        %v3843 = vmul.f32 %v3733, 1.442695
        %v3844 = vpow.pop %v3843
        %v3845 = vmul.f32 %v3734, 1.442695
        %v3846 = vpow.pop %v3845
        %v3847 = vmul.f32 %v3735, 1.442695
        %v3848 = vpow.pop %v3847
        %v3849 = vmul.f32 %v3736, 1.442695
        %v3850 = vpow.pop %v3849
        %v3851 = vmul.f32 %v3737, 1.442695
        %v3852 = vpow.pop %v3851
        %v3853 = vmul.f32 %v3738, 1.442695
        %v3854 = vpow.pop %v3853
        %v3855 = vmul.f32 %v3739, 1.442695
        %v3856 = vpow.pop %v3855
        %v3857 = vmul.f32 %v3740, 1.442695
        %v3858 = vpow.pop %v3857
        %v3859 = vmul.f32 %v3741, 1.442695
        %v3860 = vpow.pop %v3859
        %v3861 = vmul.f32 %v3742, 1.442695
        %v3862 = vpow.pop %v3861
        %v3863 = vmul.f32 %v3743, 1.442695
        %v3864 = vpow.pop %v3863
        %v3865 = vmul.f32 %v3744, 1.442695
        %v3866 = vpow.pop %v3865
        %v3867 = vmul.f32 %v3745, 1.442695
        %v3868 = vpow.pop %v3867
        %v3869 = vmul.f32 %v3746, 1.442695
        %v3870 = vpow.pop %v3869
        %v3871 = vmul.f32 %v3747, 1.442695
        %v3872 = vpow.pop %v3871
        %v3873 = vmul.f32 %v3748, 1.442695
        %v3874 = vpow.pop %v3873
        %v3875 = vmul.f32 %v3749, 1.442695
        %v3876 = vpow.pop %v3875
        %v3877 = vmul.f32 %v3750, 1.442695
        %v3878 = vpow.pop %v3877
        %v3879 = vadd.f32 %v3752, 1.0
        %v3880 = vadd.f32 %v3754, 1.0
        %v3881 = vadd.f32 %v3756, 1.0
        %v3882 = vadd.f32 %v3758, 1.0
        %v3883 = vadd.f32 %v3760, 1.0
        %v3884 = vadd.f32 %v3762, 1.0
        %v3885 = vadd.f32 %v3764, 1.0
        %v3886 = vadd.f32 %v3766, 1.0
        %v3887 = vadd.f32 %v3768, 1.0
        %v3888 = vadd.f32 %v3770, 1.0
        %v3889 = vadd.f32 %v3772, 1.0
        %v3890 = vadd.f32 %v3774, 1.0
        %v3891 = vadd.f32 %v3776, 1.0
        %v3892 = vadd.f32 %v3778, 1.0
        %v3893 = vadd.f32 %v3780, 1.0
        %v3894 = vadd.f32 %v3782, 1.0
        %v3895 = vadd.f32 %v3784, 1.0
        %v3896 = vadd.f32 %v3786, 1.0
        %v3897 = vadd.f32 %v3788, 1.0
        %v3898 = vadd.f32 %v3790, 1.0
        %v3899 = vadd.f32 %v3792, 1.0
        %v3900 = vadd.f32 %v3794, 1.0
        %v3901 = vadd.f32 %v3796, 1.0
        %v3902 = vadd.f32 %v3798, 1.0
        %v3903 = vadd.f32 %v3800, 1.0
        %v3904 = vadd.f32 %v3802, 1.0
        %v3905 = vadd.f32 %v3804, 1.0
        %v3906 = vadd.f32 %v3806, 1.0
        %v3907 = vadd.f32 %v3808, 1.0
        %v3908 = vadd.f32 %v3810, 1.0
        %v3909 = vadd.f32 %v3812, 1.0
        %v3910 = vadd.f32 %v3814, 1.0
        %v3911 = vadd.f32 %v3816, 1.0
        %v3912 = vadd.f32 %v3818, 1.0
        %v3913 = vadd.f32 %v3820, 1.0
        %v3914 = vadd.f32 %v3822, 1.0
        %v3915 = vadd.f32 %v3824, 1.0
        %v3916 = vadd.f32 %v3826, 1.0
        %v3917 = vadd.f32 %v3828, 1.0
        %v3918 = vadd.f32 %v3830, 1.0
        %v3919 = vadd.f32 %v3832, 1.0
        %v3920 = vadd.f32 %v3834, 1.0
        %v3921 = vadd.f32 %v3836, 1.0
        %v3922 = vadd.f32 %v3838, 1.0
        %v3923 = vadd.f32 %v3840, 1.0
        %v3924 = vadd.f32 %v3842, 1.0
        %v3925 = vadd.f32 %v3844, 1.0
        %v3926 = vadd.f32 %v3846, 1.0
        %v3927 = vadd.f32 %v3848, 1.0
        %v3928 = vadd.f32 %v3850, 1.0
        %v3929 = vadd.f32 %v3852, 1.0
        %v3930 = vadd.f32 %v3854, 1.0
        %v3931 = vadd.f32 %v3856, 1.0
        %v3932 = vadd.f32 %v3858, 1.0
        %v3933 = vadd.f32 %v3860, 1.0
        %v3934 = vadd.f32 %v3862, 1.0
        %v3935 = vadd.f32 %v3864, 1.0
        %v3936 = vadd.f32 %v3866, 1.0
        %v3937 = vadd.f32 %v3868, 1.0
        %v3938 = vadd.f32 %v3870, 1.0
        %v3939 = vadd.f32 %v3872, 1.0
        %v3940 = vadd.f32 %v3874, 1.0
        %v3941 = vadd.f32 %v3876, 1.0
        %v3942 = vadd.f32 %v3878, 1.0
        %v3943 = vrcp.pop %v3879
        %v3944 = vmul.f32 1.0, %v3943
        %v3945 = vrcp.pop %v3880
        %v3946 = vmul.f32 1.0, %v3945
        %v3947 = vrcp.pop %v3881
        %v3948 = vmul.f32 1.0, %v3947
        %v3949 = vrcp.pop %v3882
        %v3950 = vmul.f32 1.0, %v3949
        %v3951 = vrcp.pop %v3883
        %v3952 = vmul.f32 1.0, %v3951
        %v3953 = vrcp.pop %v3884
        %v3954 = vmul.f32 1.0, %v3953
        %v3955 = vrcp.pop %v3885
        %v3956 = vmul.f32 1.0, %v3955
        %v3957 = vrcp.pop %v3886
        %v3958 = vmul.f32 1.0, %v3957
        %v3959 = vrcp.pop %v3887
        %v3960 = vmul.f32 1.0, %v3959
        %v3961 = vrcp.pop %v3888
        %v3962 = vmul.f32 1.0, %v3961
        %v3963 = vrcp.pop %v3889
        %v3964 = vmul.f32 1.0, %v3963
        %v3965 = vrcp.pop %v3890
        %v3966 = vmul.f32 1.0, %v3965
        %v3967 = vrcp.pop %v3891
        %v3968 = vmul.f32 1.0, %v3967
        %v3969 = vrcp.pop %v3892
        %v3970 = vmul.f32 1.0, %v3969
        %v3971 = vrcp.pop %v3893
        %v3972 = vmul.f32 1.0, %v3971
        %v3973 = vrcp.pop %v3894
        %v3974 = vmul.f32 1.0, %v3973
        %v3975 = vrcp.pop %v3895
        %v3976 = vmul.f32 1.0, %v3975
        %v3977 = vrcp.pop %v3896
        %v3978 = vmul.f32 1.0, %v3977
        %v3979 = vrcp.pop %v3897
        %v3980 = vmul.f32 1.0, %v3979
        %v3981 = vrcp.pop %v3898
        %v3982 = vmul.f32 1.0, %v3981
        %v3983 = vrcp.pop %v3899
        %v3984 = vmul.f32 1.0, %v3983
        %v3985 = vrcp.pop %v3900
        %v3986 = vmul.f32 1.0, %v3985
        %v3987 = vrcp.pop %v3901
        %v3988 = vmul.f32 1.0, %v3987
        %v3989 = vrcp.pop %v3902
        %v3990 = vmul.f32 1.0, %v3989
        %v3991 = vrcp.pop %v3903
        %v3992 = vmul.f32 1.0, %v3991
        %v3993 = vrcp.pop %v3904
        %v3994 = vmul.f32 1.0, %v3993
        %v3995 = vrcp.pop %v3905
        %v3996 = vmul.f32 1.0, %v3995
        %v3997 = vrcp.pop %v3906
        %v3998 = vmul.f32 1.0, %v3997
        %v3999 = vrcp.pop %v3907
        %v4000 = vmul.f32 1.0, %v3999
        %v4001 = vrcp.pop %v3908
        %v4002 = vmul.f32 1.0, %v4001
        %v4003 = vrcp.pop %v3909
        %v4004 = vmul.f32 1.0, %v4003
        %v4005 = vrcp.pop %v3910
        %v4006 = vmul.f32 1.0, %v4005
        %v4007 = vrcp.pop %v3911
        %v4008 = vmul.f32 1.0, %v4007
        %v4009 = vrcp.pop %v3912
        %v4010 = vmul.f32 1.0, %v4009
        %v4011 = vrcp.pop %v3913
        %v4012 = vmul.f32 1.0, %v4011
        %v4013 = vrcp.pop %v3914
        %v4014 = vmul.f32 1.0, %v4013
        %v4015 = vrcp.pop %v3915
        %v4016 = vmul.f32 1.0, %v4015
        %v4017 = vrcp.pop %v3916
        %v4018 = vmul.f32 1.0, %v4017
        %v4019 = vrcp.pop %v3917
        %v4020 = vmul.f32 1.0, %v4019
        %v4021 = vrcp.pop %v3918
        %v4022 = vmul.f32 1.0, %v4021
        %v4023 = vrcp.pop %v3919
        %v4024 = vmul.f32 1.0, %v4023
        %v4025 = vrcp.pop %v3920
        %v4026 = vmul.f32 1.0, %v4025
        %v4027 = vrcp.pop %v3921
        %v4028 = vmul.f32 1.0, %v4027
        %v4029 = vrcp.pop %v3922
        %v4030 = vmul.f32 1.0, %v4029
        %v4031 = vrcp.pop %v3923
        %v4032 = vmul.f32 1.0, %v4031
        %v4033 = vrcp.pop %v3924
        %v4034 = vmul.f32 1.0, %v4033
        %v4035 = vrcp.pop %v3925
        %v4036 = vmul.f32 1.0, %v4035
        %v4037 = vrcp.pop %v3926
        %v4038 = vmul.f32 1.0, %v4037
        %v4039 = vrcp.pop %v3927
        %v4040 = vmul.f32 1.0, %v4039
        %v4041 = vrcp.pop %v3928
        %v4042 = vmul.f32 1.0, %v4041
        %v4043 = vrcp.pop %v3929
        %v4044 = vmul.f32 1.0, %v4043
        %v4045 = vrcp.pop %v3930
        %v4046 = vmul.f32 1.0, %v4045
        %v4047 = vrcp.pop %v3931
        %v4048 = vmul.f32 1.0, %v4047
        %v4049 = vrcp.pop %v3932
        %v4050 = vmul.f32 1.0, %v4049
        %v4051 = vrcp.pop %v3933
        %v4052 = vmul.f32 1.0, %v4051
        %v4053 = vrcp.pop %v3934
        %v4054 = vmul.f32 1.0, %v4053
        %v4055 = vrcp.pop %v3935
        %v4056 = vmul.f32 1.0, %v4055
        %v4057 = vrcp.pop %v3936
        %v4058 = vmul.f32 1.0, %v4057
        %v4059 = vrcp.pop %v3937
        %v4060 = vmul.f32 1.0, %v4059
        %v4061 = vrcp.pop %v3938
        %v4062 = vmul.f32 1.0, %v4061
        %v4063 = vrcp.pop %v3939
        %v4064 = vmul.f32 1.0, %v4063
        %v4065 = vrcp.pop %v3940
        %v4066 = vmul.f32 1.0, %v4065
        %v4067 = vrcp.pop %v3941
        %v4068 = vmul.f32 1.0, %v4067
        %v4069 = vrcp.pop %v3942
        %v4070 = vmul.f32 1.0, %v4069
        %v4071 = vld [vmem:[%s194 + $0x800] sm:$0xff]
        %v4072 = vld [vmem:[%s194 + $0x808] sm:$0xff]
        %v4073 = vld [vmem:[%s194 + $0x810] sm:$0xff]
        %v4074 = vld [vmem:[%s194 + $0x818] sm:$0xff]
        %v4075 = vld [vmem:[%s194 + $0x820] sm:$0xff]
        %v4076 = vld [vmem:[%s194 + $0x828] sm:$0xff]
        %v4077 = vld [vmem:[%s194 + $0x830] sm:$0xff]
        %v4078 = vld [vmem:[%s194 + $0x838] sm:$0xff]
        %v4079 = vld [vmem:[%s194 + $0x840] sm:$0xff]
        %v4080 = vld [vmem:[%s194 + $0x848] sm:$0xff]
        %v4081 = vld [vmem:[%s194 + $0x850] sm:$0xff]
        %v4082 = vld [vmem:[%s194 + $0x858] sm:$0xff]
        %v4083 = vld [vmem:[%s194 + $0x860] sm:$0xff]
        %v4084 = vld [vmem:[%s194 + $0x868] sm:$0xff]
        %v4085 = vld [vmem:[%s194 + $0x870] sm:$0xff]
        %v4086 = vld [vmem:[%s194 + $0x878] sm:$0xff]
        %v4087 = vld [vmem:[%s194 + $0x880] sm:$0xff]
        %v4088 = vld [vmem:[%s194 + $0x888] sm:$0xff]
        %v4089 = vld [vmem:[%s194 + $0x890] sm:$0xff]
        %v4090 = vld [vmem:[%s194 + $0x898] sm:$0xff]
        %v4091 = vld [vmem:[%s194 + $0x8a0] sm:$0xff]
        %v4092 = vld [vmem:[%s194 + $0x8a8] sm:$0xff]
        %v4093 = vld [vmem:[%s194 + $0x8b0] sm:$0xff]
        %v4094 = vld [vmem:[%s194 + $0x8b8] sm:$0xff]
        %v4095 = vld [vmem:[%s194 + $0x8c0] sm:$0xff]
        %v4096 = vld [vmem:[%s194 + $0x8c8] sm:$0xff]
        %v4097 = vld [vmem:[%s194 + $0x8d0] sm:$0xff]
        %v4098 = vld [vmem:[%s194 + $0x8d8] sm:$0xff]
        %v4099 = vld [vmem:[%s194 + $0x8e0] sm:$0xff]
        %v4100 = vld [vmem:[%s194 + $0x8e8] sm:$0xff]
        %v4101 = vld [vmem:[%s194 + $0x8f0] sm:$0xff]
        %v4102 = vld [vmem:[%s194 + $0x8f8] sm:$0xff]
        %v4103 = vld [vmem:[%s194 + $0x900] sm:$0xff]
        %v4104 = vld [vmem:[%s194 + $0x908] sm:$0xff]
        %v4105 = vld [vmem:[%s194 + $0x910] sm:$0xff]
        %v4106 = vld [vmem:[%s194 + $0x918] sm:$0xff]
        %v4107 = vld [vmem:[%s194 + $0x920] sm:$0xff]
        %v4108 = vld [vmem:[%s194 + $0x928] sm:$0xff]
        %v4109 = vld [vmem:[%s194 + $0x930] sm:$0xff]
        %v4110 = vld [vmem:[%s194 + $0x938] sm:$0xff]
        %v4111 = vld [vmem:[%s194 + $0x940] sm:$0xff]
        %v4112 = vld [vmem:[%s194 + $0x948] sm:$0xff]
        %v4113 = vld [vmem:[%s194 + $0x950] sm:$0xff]
        %v4114 = vld [vmem:[%s194 + $0x958] sm:$0xff]
        %v4115 = vld [vmem:[%s194 + $0x960] sm:$0xff]
        %v4116 = vld [vmem:[%s194 + $0x968] sm:$0xff]
        %v4117 = vld [vmem:[%s194 + $0x970] sm:$0xff]
        %v4118 = vld [vmem:[%s194 + $0x978] sm:$0xff]
        %v4119 = vld [vmem:[%s194 + $0x980] sm:$0xff]
        %v4120 = vld [vmem:[%s194 + $0x988] sm:$0xff]
        %v4121 = vld [vmem:[%s194 + $0x990] sm:$0xff]
        %v4122 = vld [vmem:[%s194 + $0x998] sm:$0xff]
        %v4123 = vld [vmem:[%s194 + $0x9a0] sm:$0xff]
        %v4124 = vld [vmem:[%s194 + $0x9a8] sm:$0xff]
        %v4125 = vld [vmem:[%s194 + $0x9b0] sm:$0xff]
        %v4126 = vld [vmem:[%s194 + $0x9b8] sm:$0xff]
        %v4127 = vld [vmem:[%s194 + $0x9c0] sm:$0xff]
        %v4128 = vld [vmem:[%s194 + $0x9c8] sm:$0xff]
        %v4129 = vld [vmem:[%s194 + $0x9d0] sm:$0xff]
        %v4130 = vld [vmem:[%s194 + $0x9d8] sm:$0xff]
        %v4131 = vld [vmem:[%s194 + $0x9e0] sm:$0xff]
        %v4132 = vld [vmem:[%s194 + $0x9e8] sm:$0xff]
        %v4133 = vld [vmem:[%s194 + $0x9f0] sm:$0xff]
        %v4134 = vld [vmem:[%s194 + $0x9f8] sm:$0xff]
        %v4135 = vadd.f32 %v4071, %v4072
        %v4136 = vadd.f32 %v4135, %v4073
        %v4137 = vadd.f32 %v4136, %v4074
        %v4138 = vadd.f32 %v4137, %v4075
        %v4139 = vadd.f32 %v4138, %v4076
        %v4140 = vadd.f32 %v4139, %v4077
        %v4141 = vadd.f32 %v4140, %v4078
        %v4142 = vadd.f32 %v4141, %v4079
        %v4143 = vadd.f32 %v4142, %v4080
        %v4144 = vadd.f32 %v4143, %v4081
        %v4145 = vadd.f32 %v4144, %v4082
        %v4146 = vadd.f32 %v4145, %v4083
        %v4147 = vadd.f32 %v4146, %v4084
        %v4148 = vadd.f32 %v4147, %v4085
        %v4149 = vadd.f32 %v4148, %v4086
        %v4150 = vadd.f32 %v4149, %v4087
        %v4151 = vadd.f32 %v4150, %v4088
        %v4152 = vadd.f32 %v4151, %v4089
        %v4153 = vadd.f32 %v4152, %v4090
        %v4154 = vadd.f32 %v4153, %v4091
        %v4155 = vadd.f32 %v4154, %v4092
        %v4156 = vadd.f32 %v4155, %v4093
        %v4157 = vadd.f32 %v4156, %v4094
        %v4158 = vadd.f32 %v4157, %v4095
        %v4159 = vadd.f32 %v4158, %v4096
        %v4160 = vadd.f32 %v4159, %v4097
        %v4161 = vadd.f32 %v4160, %v4098
        %v4162 = vadd.f32 %v4161, %v4099
        %v4163 = vadd.f32 %v4162, %v4100
        %v4164 = vadd.f32 %v4163, %v4101
        %v4165 = vadd.f32 %v4164, %v4102
        %v4166 = vadd.f32 %v4165, %v4103
        %v4167 = vadd.f32 %v4166, %v4104
        %v4168 = vadd.f32 %v4167, %v4105
        %v4169 = vadd.f32 %v4168, %v4106
        %v4170 = vadd.f32 %v4169, %v4107
        %v4171 = vadd.f32 %v4170, %v4108
        %v4172 = vadd.f32 %v4171, %v4109
        %v4173 = vadd.f32 %v4172, %v4110
        %v4174 = vadd.f32 %v4173, %v4111
        %v4175 = vadd.f32 %v4174, %v4112
        %v4176 = vadd.f32 %v4175, %v4113
        %v4177 = vadd.f32 %v4176, %v4114
        %v4178 = vadd.f32 %v4177, %v4115
        %v4179 = vadd.f32 %v4178, %v4116
        %v4180 = vadd.f32 %v4179, %v4117
        %v4181 = vadd.f32 %v4180, %v4118
        %v4182 = vadd.f32 %v4181, %v4119
        %v4183 = vadd.f32 %v4182, %v4120
        %v4184 = vadd.f32 %v4183, %v4121
        %v4185 = vadd.f32 %v4184, %v4122
        %v4186 = vadd.f32 %v4185, %v4123
        %v4187 = vadd.f32 %v4186, %v4124
        %v4188 = vadd.f32 %v4187, %v4125
        %v4189 = vadd.f32 %v4188, %v4126
        %v4190 = vadd.f32 %v4189, %v4127
        %v4191 = vadd.f32 %v4190, %v4128
        %v4192 = vadd.f32 %v4191, %v4129
        %v4193 = vadd.f32 %v4192, %v4130
        %v4194 = vadd.f32 %v4193, %v4131
        %v4195 = vadd.f32 %v4194, %v4132
        %v4196 = vadd.f32 %v4195, %v4133
        %v4197 = vadd.f32 %v4196, %v4134
        %v4198 = vadd.f32 %v3366, %v4197
        %v4199 = vmul.f32 %v3944, %v4071
        %v4200 = vmul.f32 %v3946, %v4072
        %v4201 = vmul.f32 %v3948, %v4073
        %v4202 = vmul.f32 %v3950, %v4074
        %v4203 = vmul.f32 %v3952, %v4075
        %v4204 = vmul.f32 %v3954, %v4076
        %v4205 = vmul.f32 %v3956, %v4077
        %v4206 = vmul.f32 %v3958, %v4078
        %v4207 = vmul.f32 %v3960, %v4079
        %v4208 = vmul.f32 %v3962, %v4080
        %v4209 = vmul.f32 %v3964, %v4081
        %v4210 = vmul.f32 %v3966, %v4082
        %v4211 = vmul.f32 %v3968, %v4083
        %v4212 = vmul.f32 %v3970, %v4084
        %v4213 = vmul.f32 %v3972, %v4085
        %v4214 = vmul.f32 %v3974, %v4086
        %v4215 = vmul.f32 %v3976, %v4087
        %v4216 = vmul.f32 %v3978, %v4088
        %v4217 = vmul.f32 %v3980, %v4089
        %v4218 = vmul.f32 %v3982, %v4090
        %v4219 = vmul.f32 %v3984, %v4091
        %v4220 = vmul.f32 %v3986, %v4092
        %v4221 = vmul.f32 %v3988, %v4093
        %v4222 = vmul.f32 %v3990, %v4094
        %v4223 = vmul.f32 %v3992, %v4095
        %v4224 = vmul.f32 %v3994, %v4096
        %v4225 = vmul.f32 %v3996, %v4097
        %v4226 = vmul.f32 %v3998, %v4098
        %v4227 = vmul.f32 %v4000, %v4099
        %v4228 = vmul.f32 %v4002, %v4100
        %v4229 = vmul.f32 %v4004, %v4101
        %v4230 = vmul.f32 %v4006, %v4102
        %v4231 = vmul.f32 %v4008, %v4103
        %v4232 = vmul.f32 %v4010, %v4104
        %v4233 = vmul.f32 %v4012, %v4105
        %v4234 = vmul.f32 %v4014, %v4106
        %v4235 = vmul.f32 %v4016, %v4107
        %v4236 = vmul.f32 %v4018, %v4108
        %v4237 = vmul.f32 %v4020, %v4109
        %v4238 = vmul.f32 %v4022, %v4110
        %v4239 = vmul.f32 %v4024, %v4111
        %v4240 = vmul.f32 %v4026, %v4112
        %v4241 = vmul.f32 %v4028, %v4113
        %v4242 = vmul.f32 %v4030, %v4114
        %v4243 = vmul.f32 %v4032, %v4115
        %v4244 = vmul.f32 %v4034, %v4116
        %v4245 = vmul.f32 %v4036, %v4117
        %v4246 = vmul.f32 %v4038, %v4118
        %v4247 = vmul.f32 %v4040, %v4119
        %v4248 = vmul.f32 %v4042, %v4120
        %v4249 = vmul.f32 %v4044, %v4121
        %v4250 = vmul.f32 %v4046, %v4122
        %v4251 = vmul.f32 %v4048, %v4123
        %v4252 = vmul.f32 %v4050, %v4124
        %v4253 = vmul.f32 %v4052, %v4125
        %v4254 = vmul.f32 %v4054, %v4126
        %v4255 = vmul.f32 %v4056, %v4127
        %v4256 = vmul.f32 %v4058, %v4128
        %v4257 = vmul.f32 %v4060, %v4129
        %v4258 = vmul.f32 %v4062, %v4130
        %v4259 = vmul.f32 %v4064, %v4131
        %v4260 = vmul.f32 %v4066, %v4132
        %v4261 = vmul.f32 %v4068, %v4133
        %v4262 = vmul.f32 %v4070, %v4134
        %v4263 = vadd.f32 %v4199, %v4200
        %v4264 = vadd.f32 %v4263, %v4201
        %v4265 = vadd.f32 %v4264, %v4202
        %v4266 = vadd.f32 %v4265, %v4203
        %v4267 = vadd.f32 %v4266, %v4204
        %v4268 = vadd.f32 %v4267, %v4205
        %v4269 = vadd.f32 %v4268, %v4206
        %v4270 = vadd.f32 %v4269, %v4207
        %v4271 = vadd.f32 %v4270, %v4208
        %v4272 = vadd.f32 %v4271, %v4209
        %v4273 = vadd.f32 %v4272, %v4210
        %v4274 = vadd.f32 %v4273, %v4211
        %v4275 = vadd.f32 %v4274, %v4212
        %v4276 = vadd.f32 %v4275, %v4213
        %v4277 = vadd.f32 %v4276, %v4214
        %v4278 = vadd.f32 %v4277, %v4215
        %v4279 = vadd.f32 %v4278, %v4216
        %v4280 = vadd.f32 %v4279, %v4217
        %v4281 = vadd.f32 %v4280, %v4218
        %v4282 = vadd.f32 %v4281, %v4219
        %v4283 = vadd.f32 %v4282, %v4220
        %v4284 = vadd.f32 %v4283, %v4221
        %v4285 = vadd.f32 %v4284, %v4222
        %v4286 = vadd.f32 %v4285, %v4223
        %v4287 = vadd.f32 %v4286, %v4224
        %v4288 = vadd.f32 %v4287, %v4225
        %v4289 = vadd.f32 %v4288, %v4226
        %v4290 = vadd.f32 %v4289, %v4227
        %v4291 = vadd.f32 %v4290, %v4228
        %v4292 = vadd.f32 %v4291, %v4229
        %v4293 = vadd.f32 %v4292, %v4230
        %v4294 = vadd.f32 %v4293, %v4231
        %v4295 = vadd.f32 %v4294, %v4232
        %v4296 = vadd.f32 %v4295, %v4233
        %v4297 = vadd.f32 %v4296, %v4234
        %v4298 = vadd.f32 %v4297, %v4235
        %v4299 = vadd.f32 %v4298, %v4236
        %v4300 = vadd.f32 %v4299, %v4237
        %v4301 = vadd.f32 %v4300, %v4238
        %v4302 = vadd.f32 %v4301, %v4239
        %v4303 = vadd.f32 %v4302, %v4240
        %v4304 = vadd.f32 %v4303, %v4241
        %v4305 = vadd.f32 %v4304, %v4242
        %v4306 = vadd.f32 %v4305, %v4243
        %v4307 = vadd.f32 %v4306, %v4244
        %v4308 = vadd.f32 %v4307, %v4245
        %v4309 = vadd.f32 %v4308, %v4246
        %v4310 = vadd.f32 %v4309, %v4247
        %v4311 = vadd.f32 %v4310, %v4248
        %v4312 = vadd.f32 %v4311, %v4249
        %v4313 = vadd.f32 %v4312, %v4250
        %v4314 = vadd.f32 %v4313, %v4251
        %v4315 = vadd.f32 %v4314, %v4252
        %v4316 = vadd.f32 %v4315, %v4253
        %v4317 = vadd.f32 %v4316, %v4254
        %v4318 = vadd.f32 %v4317, %v4255
        %v4319 = vadd.f32 %v4318, %v4256
        %v4320 = vadd.f32 %v4319, %v4257
        %v4321 = vadd.f32 %v4320, %v4258
        %v4322 = vadd.f32 %v4321, %v4259
        %v4323 = vadd.f32 %v4322, %v4260
        %v4324 = vadd.f32 %v4323, %v4261
        %v4325 = vadd.f32 %v4324, %v4262
        %v4326 = vadd.f32 %v3494, %v4325
        %v4327 = vadd.f32 %v3944, %v3946
        %v4328 = vadd.f32 %v4327, %v3948
        %v4329 = vadd.f32 %v4328, %v3950
        %v4330 = vadd.f32 %v4329, %v3952
        %v4331 = vadd.f32 %v4330, %v3954
        %v4332 = vadd.f32 %v4331, %v3956
        %v4333 = vadd.f32 %v4332, %v3958
        %v4334 = vadd.f32 %v4333, %v3960
        %v4335 = vadd.f32 %v4334, %v3962
        %v4336 = vadd.f32 %v4335, %v3964
        %v4337 = vadd.f32 %v4336, %v3966
        %v4338 = vadd.f32 %v4337, %v3968
        %v4339 = vadd.f32 %v4338, %v3970
        %v4340 = vadd.f32 %v4339, %v3972
        %v4341 = vadd.f32 %v4340, %v3974
        %v4342 = vadd.f32 %v4341, %v3976
        %v4343 = vadd.f32 %v4342, %v3978
        %v4344 = vadd.f32 %v4343, %v3980
        %v4345 = vadd.f32 %v4344, %v3982
        %v4346 = vadd.f32 %v4345, %v3984
        %v4347 = vadd.f32 %v4346, %v3986
        %v4348 = vadd.f32 %v4347, %v3988
        %v4349 = vadd.f32 %v4348, %v3990
        %v4350 = vadd.f32 %v4349, %v3992
        %v4351 = vadd.f32 %v4350, %v3994
        %v4352 = vadd.f32 %v4351, %v3996
        %v4353 = vadd.f32 %v4352, %v3998
        %v4354 = vadd.f32 %v4353, %v4000
        %v4355 = vadd.f32 %v4354, %v4002
        %v4356 = vadd.f32 %v4355, %v4004
        %v4357 = vadd.f32 %v4356, %v4006
        %v4358 = vadd.f32 %v4357, %v4008
        %v4359 = vadd.f32 %v4358, %v4010
        %v4360 = vadd.f32 %v4359, %v4012
        %v4361 = vadd.f32 %v4360, %v4014
        %v4362 = vadd.f32 %v4361, %v4016
        %v4363 = vadd.f32 %v4362, %v4018
        %v4364 = vadd.f32 %v4363, %v4020
        %v4365 = vadd.f32 %v4364, %v4022
        %v4366 = vadd.f32 %v4365, %v4024
        %v4367 = vadd.f32 %v4366, %v4026
        %v4368 = vadd.f32 %v4367, %v4028
        %v4369 = vadd.f32 %v4368, %v4030
        %v4370 = vadd.f32 %v4369, %v4032
        %v4371 = vadd.f32 %v4370, %v4034
        %v4372 = vadd.f32 %v4371, %v4036
        %v4373 = vadd.f32 %v4372, %v4038
        %v4374 = vadd.f32 %v4373, %v4040
        %v4375 = vadd.f32 %v4374, %v4042
        %v4376 = vadd.f32 %v4375, %v4044
        %v4377 = vadd.f32 %v4376, %v4046
        %v4378 = vadd.f32 %v4377, %v4048
        %v4379 = vadd.f32 %v4378, %v4050
        %v4380 = vadd.f32 %v4379, %v4052
        %v4381 = vadd.f32 %v4380, %v4054
        %v4382 = vadd.f32 %v4381, %v4056
        %v4383 = vadd.f32 %v4382, %v4058
        %v4384 = vadd.f32 %v4383, %v4060
        %v4385 = vadd.f32 %v4384, %v4062
        %v4386 = vadd.f32 %v4385, %v4064
        %v4387 = vadd.f32 %v4386, %v4066
        %v4388 = vadd.f32 %v4387, %v4068
        %v4389 = vadd.f32 %v4388, %v4070
        %v4390 = vadd.f32 %v3558, %v4389
        %v4391 = vld [vmem:[%s185 + $0x500] sm:$0xf]
        %v4392 = vld [vmem:[%s185 + $0x504] sm:$0xf]
        %v4393 = vld [vmem:[%s185 + $0x508] sm:$0xf]
        %v4394 = vld [vmem:[%s185 + $0x50c] sm:$0xf]
        %v4395 = vld [vmem:[%s185 + $0x510] sm:$0xf]
        %v4396 = vld [vmem:[%s185 + $0x514] sm:$0xf]
        %v4397 = vld [vmem:[%s185 + $0x518] sm:$0xf]
        %v4398 = vld [vmem:[%s185 + $0x51c] sm:$0xf]
        %v4399 = vld [vmem:[%s185 + $0x520] sm:$0xf]
        %v4400 = vld [vmem:[%s185 + $0x524] sm:$0xf]
        %v4401 = vld [vmem:[%s185 + $0x528] sm:$0xf]
        %v4402 = vld [vmem:[%s185 + $0x52c] sm:$0xf]
        %v4403 = vld [vmem:[%s185 + $0x530] sm:$0xf]
        %v4404 = vld [vmem:[%s185 + $0x534] sm:$0xf]
        %v4405 = vld [vmem:[%s185 + $0x538] sm:$0xf]
        %v4406 = vld [vmem:[%s185 + $0x53c] sm:$0xf]
        %v4407 = vld [vmem:[%s185 + $0x540] sm:$0xf]
        %v4408 = vld [vmem:[%s185 + $0x544] sm:$0xf]
        %v4409 = vld [vmem:[%s185 + $0x548] sm:$0xf]
        %v4410 = vld [vmem:[%s185 + $0x54c] sm:$0xf]
        %v4411 = vld [vmem:[%s185 + $0x550] sm:$0xf]
        %v4412 = vld [vmem:[%s185 + $0x554] sm:$0xf]
        %v4413 = vld [vmem:[%s185 + $0x558] sm:$0xf]
        %v4414 = vld [vmem:[%s185 + $0x55c] sm:$0xf]
        %v4415 = vld [vmem:[%s185 + $0x560] sm:$0xf]
        %v4416 = vld [vmem:[%s185 + $0x564] sm:$0xf]
        %v4417 = vld [vmem:[%s185 + $0x568] sm:$0xf]
        %v4418 = vld [vmem:[%s185 + $0x56c] sm:$0xf]
        %v4419 = vld [vmem:[%s185 + $0x570] sm:$0xf]
        %v4420 = vld [vmem:[%s185 + $0x574] sm:$0xf]
        %v4421 = vld [vmem:[%s185 + $0x578] sm:$0xf]
        %v4422 = vld [vmem:[%s185 + $0x57c] sm:$0xf]
        %v4423 = vld [vmem:[%s185 + $0x580] sm:$0xf]
        %v4424 = vld [vmem:[%s185 + $0x584] sm:$0xf]
        %v4425 = vld [vmem:[%s185 + $0x588] sm:$0xf]
        %v4426 = vld [vmem:[%s185 + $0x58c] sm:$0xf]
        %v4427 = vld [vmem:[%s185 + $0x590] sm:$0xf]
        %v4428 = vld [vmem:[%s185 + $0x594] sm:$0xf]
        %v4429 = vld [vmem:[%s185 + $0x598] sm:$0xf]
        %v4430 = vld [vmem:[%s185 + $0x59c] sm:$0xf]
        %v4431 = vld [vmem:[%s185 + $0x5a0] sm:$0xf]
        %v4432 = vld [vmem:[%s185 + $0x5a4] sm:$0xf]
        %v4433 = vld [vmem:[%s185 + $0x5a8] sm:$0xf]
        %v4434 = vld [vmem:[%s185 + $0x5ac] sm:$0xf]
        %v4435 = vld [vmem:[%s185 + $0x5b0] sm:$0xf]
        %v4436 = vld [vmem:[%s185 + $0x5b4] sm:$0xf]
        %v4437 = vld [vmem:[%s185 + $0x5b8] sm:$0xf]
        %v4438 = vld [vmem:[%s185 + $0x5bc] sm:$0xf]
        %v4439 = vld [vmem:[%s185 + $0x5c0] sm:$0xf]
        %v4440 = vld [vmem:[%s185 + $0x5c4] sm:$0xf]
        %v4441 = vld [vmem:[%s185 + $0x5c8] sm:$0xf]
        %v4442 = vld [vmem:[%s185 + $0x5cc] sm:$0xf]
        %v4443 = vld [vmem:[%s185 + $0x5d0] sm:$0xf]
        %v4444 = vld [vmem:[%s185 + $0x5d4] sm:$0xf]
        %v4445 = vld [vmem:[%s185 + $0x5d8] sm:$0xf]
        %v4446 = vld [vmem:[%s185 + $0x5dc] sm:$0xf]
        %v4447 = vld [vmem:[%s185 + $0x5e0] sm:$0xf]
        %v4448 = vld [vmem:[%s185 + $0x5e4] sm:$0xf]
        %v4449 = vld [vmem:[%s185 + $0x5e8] sm:$0xf]
        %v4450 = vld [vmem:[%s185 + $0x5ec] sm:$0xf]
        %v4451 = vld [vmem:[%s185 + $0x5f0] sm:$0xf]
        %v4452 = vld [vmem:[%s185 + $0x5f4] sm:$0xf]
        %v4453 = vld [vmem:[%s185 + $0x5f8] sm:$0xf]
        %v4454 = vld [vmem:[%s185 + $0x5fc] sm:$0xf]
        %v4455 = vunpack.c.l.bf16 %v4391
        %v4456 = vunpack.c.l.bf16 %v4392
        %v4457 = vunpack.c.l.bf16 %v4393
        %v4458 = vunpack.c.l.bf16 %v4394
        %v4459 = vunpack.c.l.bf16 %v4395
        %v4460 = vunpack.c.l.bf16 %v4396
        %v4461 = vunpack.c.l.bf16 %v4397
        %v4462 = vunpack.c.l.bf16 %v4398
        %v4463 = vunpack.c.l.bf16 %v4399
        %v4464 = vunpack.c.l.bf16 %v4400
        %v4465 = vunpack.c.l.bf16 %v4401
        %v4466 = vunpack.c.l.bf16 %v4402
        %v4467 = vunpack.c.l.bf16 %v4403
        %v4468 = vunpack.c.l.bf16 %v4404
        %v4469 = vunpack.c.l.bf16 %v4405
        %v4470 = vunpack.c.l.bf16 %v4406
        %v4471 = vunpack.c.l.bf16 %v4407
        %v4472 = vunpack.c.l.bf16 %v4408
        %v4473 = vunpack.c.l.bf16 %v4409
        %v4474 = vunpack.c.l.bf16 %v4410
        %v4475 = vunpack.c.l.bf16 %v4411
        %v4476 = vunpack.c.l.bf16 %v4412
        %v4477 = vunpack.c.l.bf16 %v4413
        %v4478 = vunpack.c.l.bf16 %v4414
        %v4479 = vunpack.c.l.bf16 %v4415
        %v4480 = vunpack.c.l.bf16 %v4416
        %v4481 = vunpack.c.l.bf16 %v4417
        %v4482 = vunpack.c.l.bf16 %v4418
        %v4483 = vunpack.c.l.bf16 %v4419
        %v4484 = vunpack.c.l.bf16 %v4420
        %v4485 = vunpack.c.l.bf16 %v4421
        %v4486 = vunpack.c.l.bf16 %v4422
        %v4487 = vunpack.c.l.bf16 %v4423
        %v4488 = vunpack.c.l.bf16 %v4424
        %v4489 = vunpack.c.l.bf16 %v4425
        %v4490 = vunpack.c.l.bf16 %v4426
        %v4491 = vunpack.c.l.bf16 %v4427
        %v4492 = vunpack.c.l.bf16 %v4428
        %v4493 = vunpack.c.l.bf16 %v4429
        %v4494 = vunpack.c.l.bf16 %v4430
        %v4495 = vunpack.c.l.bf16 %v4431
        %v4496 = vunpack.c.l.bf16 %v4432
        %v4497 = vunpack.c.l.bf16 %v4433
        %v4498 = vunpack.c.l.bf16 %v4434
        %v4499 = vunpack.c.l.bf16 %v4435
        %v4500 = vunpack.c.l.bf16 %v4436
        %v4501 = vunpack.c.l.bf16 %v4437
        %v4502 = vunpack.c.l.bf16 %v4438
        %v4503 = vunpack.c.l.bf16 %v4439
        %v4504 = vunpack.c.l.bf16 %v4440
        %v4505 = vunpack.c.l.bf16 %v4441
        %v4506 = vunpack.c.l.bf16 %v4442
        %v4507 = vunpack.c.l.bf16 %v4443
        %v4508 = vunpack.c.l.bf16 %v4444
        %v4509 = vunpack.c.l.bf16 %v4445
        %v4510 = vunpack.c.l.bf16 %v4446
        %v4511 = vunpack.c.l.bf16 %v4447
        %v4512 = vunpack.c.l.bf16 %v4448
        %v4513 = vunpack.c.l.bf16 %v4449
        %v4514 = vunpack.c.l.bf16 %v4450
        %v4515 = vunpack.c.l.bf16 %v4451
        %v4516 = vunpack.c.l.bf16 %v4452
        %v4517 = vunpack.c.l.bf16 %v4453
        %v4518 = vunpack.c.l.bf16 %v4454
        %v4519 = vxor.u32 %v4455, 2147483648
        %v4520 = vxor.u32 %v4456, 2147483648
        %v4521 = vxor.u32 %v4457, 2147483648
        %v4522 = vxor.u32 %v4458, 2147483648
        %v4523 = vxor.u32 %v4459, 2147483648
        %v4524 = vxor.u32 %v4460, 2147483648
        %v4525 = vxor.u32 %v4461, 2147483648
        %v4526 = vxor.u32 %v4462, 2147483648
        %v4527 = vxor.u32 %v4463, 2147483648
        %v4528 = vxor.u32 %v4464, 2147483648
        %v4529 = vxor.u32 %v4465, 2147483648
        %v4530 = vxor.u32 %v4466, 2147483648
        %v4531 = vxor.u32 %v4467, 2147483648
        %v4532 = vxor.u32 %v4468, 2147483648
        %v4533 = vxor.u32 %v4469, 2147483648
        %v4534 = vxor.u32 %v4470, 2147483648
        %v4535 = vxor.u32 %v4471, 2147483648
        %v4536 = vxor.u32 %v4472, 2147483648
        %v4537 = vxor.u32 %v4473, 2147483648
        %v4538 = vxor.u32 %v4474, 2147483648
        %v4539 = vxor.u32 %v4475, 2147483648
        %v4540 = vxor.u32 %v4476, 2147483648
        %v4541 = vxor.u32 %v4477, 2147483648
        %v4542 = vxor.u32 %v4478, 2147483648
        %v4543 = vxor.u32 %v4479, 2147483648
        %v4544 = vxor.u32 %v4480, 2147483648
        %v4545 = vxor.u32 %v4481, 2147483648
        %v4546 = vxor.u32 %v4482, 2147483648
        %v4547 = vxor.u32 %v4483, 2147483648
        %v4548 = vxor.u32 %v4484, 2147483648
        %v4549 = vxor.u32 %v4485, 2147483648
        %v4550 = vxor.u32 %v4486, 2147483648
        %v4551 = vxor.u32 %v4487, 2147483648
        %v4552 = vxor.u32 %v4488, 2147483648
        %v4553 = vxor.u32 %v4489, 2147483648
        %v4554 = vxor.u32 %v4490, 2147483648
        %v4555 = vxor.u32 %v4491, 2147483648
        %v4556 = vxor.u32 %v4492, 2147483648
        %v4557 = vxor.u32 %v4493, 2147483648
        %v4558 = vxor.u32 %v4494, 2147483648
        %v4559 = vxor.u32 %v4495, 2147483648
        %v4560 = vxor.u32 %v4496, 2147483648
        %v4561 = vxor.u32 %v4497, 2147483648
        %v4562 = vxor.u32 %v4498, 2147483648
        %v4563 = vxor.u32 %v4499, 2147483648
        %v4564 = vxor.u32 %v4500, 2147483648
        %v4565 = vxor.u32 %v4501, 2147483648
        %v4566 = vxor.u32 %v4502, 2147483648
        %v4567 = vxor.u32 %v4503, 2147483648
        %v4568 = vxor.u32 %v4504, 2147483648
        %v4569 = vxor.u32 %v4505, 2147483648
        %v4570 = vxor.u32 %v4506, 2147483648
        %v4571 = vxor.u32 %v4507, 2147483648
        %v4572 = vxor.u32 %v4508, 2147483648
        %v4573 = vxor.u32 %v4509, 2147483648
        %v4574 = vxor.u32 %v4510, 2147483648
        %v4575 = vxor.u32 %v4511, 2147483648
        %v4576 = vxor.u32 %v4512, 2147483648
        %v4577 = vxor.u32 %v4513, 2147483648
        %v4578 = vxor.u32 %v4514, 2147483648
        %v4579 = vxor.u32 %v4515, 2147483648
        %v4580 = vxor.u32 %v4516, 2147483648
        %v4581 = vxor.u32 %v4517, 2147483648
        %v4582 = vxor.u32 %v4518, 2147483648
        %v4583 = vmul.f32 %v4519, 1.442695
        %v4584 = vpow.pop %v4583
        %v4585 = vmul.f32 %v4520, 1.442695
        %v4586 = vpow.pop %v4585
        %v4587 = vmul.f32 %v4521, 1.442695
        %v4588 = vpow.pop %v4587
        %v4589 = vmul.f32 %v4522, 1.442695
        %v4590 = vpow.pop %v4589
        %v4591 = vmul.f32 %v4523, 1.442695
        %v4592 = vpow.pop %v4591
        %v4593 = vmul.f32 %v4524, 1.442695
        %v4594 = vpow.pop %v4593
        %v4595 = vmul.f32 %v4525, 1.442695
        %v4596 = vpow.pop %v4595
        %v4597 = vmul.f32 %v4526, 1.442695
        %v4598 = vpow.pop %v4597
        %v4599 = vmul.f32 %v4527, 1.442695
        %v4600 = vpow.pop %v4599
        %v4601 = vmul.f32 %v4528, 1.442695
        %v4602 = vpow.pop %v4601
        %v4603 = vmul.f32 %v4529, 1.442695
        %v4604 = vpow.pop %v4603
        %v4605 = vmul.f32 %v4530, 1.442695
        %v4606 = vpow.pop %v4605
        %v4607 = vmul.f32 %v4531, 1.442695
        %v4608 = vpow.pop %v4607
        %v4609 = vmul.f32 %v4532, 1.442695
        %v4610 = vpow.pop %v4609
        %v4611 = vmul.f32 %v4533, 1.442695
        %v4612 = vpow.pop %v4611
        %v4613 = vmul.f32 %v4534, 1.442695
        %v4614 = vpow.pop %v4613
        %v4615 = vmul.f32 %v4535, 1.442695
        %v4616 = vpow.pop %v4615
        %v4617 = vmul.f32 %v4536, 1.442695
        %v4618 = vpow.pop %v4617
        %v4619 = vmul.f32 %v4537, 1.442695
        %v4620 = vpow.pop %v4619
        %v4621 = vmul.f32 %v4538, 1.442695
        %v4622 = vpow.pop %v4621
        %v4623 = vmul.f32 %v4539, 1.442695
        %v4624 = vpow.pop %v4623
        %v4625 = vmul.f32 %v4540, 1.442695
        %v4626 = vpow.pop %v4625
        %v4627 = vmul.f32 %v4541, 1.442695
        %v4628 = vpow.pop %v4627
        %v4629 = vmul.f32 %v4542, 1.442695
        %v4630 = vpow.pop %v4629
        %v4631 = vmul.f32 %v4543, 1.442695
        %v4632 = vpow.pop %v4631
        %v4633 = vmul.f32 %v4544, 1.442695
        %v4634 = vpow.pop %v4633
        %v4635 = vmul.f32 %v4545, 1.442695
        %v4636 = vpow.pop %v4635
        %v4637 = vmul.f32 %v4546, 1.442695
        %v4638 = vpow.pop %v4637
        %v4639 = vmul.f32 %v4547, 1.442695
        %v4640 = vpow.pop %v4639
        %v4641 = vmul.f32 %v4548, 1.442695
        %v4642 = vpow.pop %v4641
        %v4643 = vmul.f32 %v4549, 1.442695
        %v4644 = vpow.pop %v4643
        %v4645 = vmul.f32 %v4550, 1.442695
        %v4646 = vpow.pop %v4645
        %v4647 = vmul.f32 %v4551, 1.442695
        %v4648 = vpow.pop %v4647
        %v4649 = vmul.f32 %v4552, 1.442695
        %v4650 = vpow.pop %v4649
        %v4651 = vmul.f32 %v4553, 1.442695
        %v4652 = vpow.pop %v4651
        %v4653 = vmul.f32 %v4554, 1.442695
        %v4654 = vpow.pop %v4653
        %v4655 = vmul.f32 %v4555, 1.442695
        %v4656 = vpow.pop %v4655
        %v4657 = vmul.f32 %v4556, 1.442695
        %v4658 = vpow.pop %v4657
        %v4659 = vmul.f32 %v4557, 1.442695
        %v4660 = vpow.pop %v4659
        %v4661 = vmul.f32 %v4558, 1.442695
        %v4662 = vpow.pop %v4661
        %v4663 = vmul.f32 %v4559, 1.442695
        %v4664 = vpow.pop %v4663
        %v4665 = vmul.f32 %v4560, 1.442695
        %v4666 = vpow.pop %v4665
        %v4667 = vmul.f32 %v4561, 1.442695
        %v4668 = vpow.pop %v4667
        %v4669 = vmul.f32 %v4562, 1.442695
        %v4670 = vpow.pop %v4669
        %v4671 = vmul.f32 %v4563, 1.442695
        %v4672 = vpow.pop %v4671
        %v4673 = vmul.f32 %v4564, 1.442695
        %v4674 = vpow.pop %v4673
        %v4675 = vmul.f32 %v4565, 1.442695
        %v4676 = vpow.pop %v4675
        %v4677 = vmul.f32 %v4566, 1.442695
        %v4678 = vpow.pop %v4677
        %v4679 = vmul.f32 %v4567, 1.442695
        %v4680 = vpow.pop %v4679
        %v4681 = vmul.f32 %v4568, 1.442695
        %v4682 = vpow.pop %v4681
        %v4683 = vmul.f32 %v4569, 1.442695
        %v4684 = vpow.pop %v4683
        %v4685 = vmul.f32 %v4570, 1.442695
        %v4686 = vpow.pop %v4685
        %v4687 = vmul.f32 %v4571, 1.442695
        %v4688 = vpow.pop %v4687
        %v4689 = vmul.f32 %v4572, 1.442695
        %v4690 = vpow.pop %v4689
        %v4691 = vmul.f32 %v4573, 1.442695
        %v4692 = vpow.pop %v4691
        %v4693 = vmul.f32 %v4574, 1.442695
        %v4694 = vpow.pop %v4693
        %v4695 = vmul.f32 %v4575, 1.442695
        %v4696 = vpow.pop %v4695
        %v4697 = vmul.f32 %v4576, 1.442695
        %v4698 = vpow.pop %v4697
        %v4699 = vmul.f32 %v4577, 1.442695
        %v4700 = vpow.pop %v4699
        %v4701 = vmul.f32 %v4578, 1.442695
        %v4702 = vpow.pop %v4701
        %v4703 = vmul.f32 %v4579, 1.442695
        %v4704 = vpow.pop %v4703
        %v4705 = vmul.f32 %v4580, 1.442695
        %v4706 = vpow.pop %v4705
        %v4707 = vmul.f32 %v4581, 1.442695
        %v4708 = vpow.pop %v4707
        %v4709 = vmul.f32 %v4582, 1.442695
        %v4710 = vpow.pop %v4709
        %v4711 = vadd.f32 %v4584, 1.0
        %v4712 = vadd.f32 %v4586, 1.0
        %v4713 = vadd.f32 %v4588, 1.0
        %v4714 = vadd.f32 %v4590, 1.0
        %v4715 = vadd.f32 %v4592, 1.0
        %v4716 = vadd.f32 %v4594, 1.0
        %v4717 = vadd.f32 %v4596, 1.0
        %v4718 = vadd.f32 %v4598, 1.0
        %v4719 = vadd.f32 %v4600, 1.0
        %v4720 = vadd.f32 %v4602, 1.0
        %v4721 = vadd.f32 %v4604, 1.0
        %v4722 = vadd.f32 %v4606, 1.0
        %v4723 = vadd.f32 %v4608, 1.0
        %v4724 = vadd.f32 %v4610, 1.0
        %v4725 = vadd.f32 %v4612, 1.0
        %v4726 = vadd.f32 %v4614, 1.0
        %v4727 = vadd.f32 %v4616, 1.0
        %v4728 = vadd.f32 %v4618, 1.0
        %v4729 = vadd.f32 %v4620, 1.0
        %v4730 = vadd.f32 %v4622, 1.0
        %v4731 = vadd.f32 %v4624, 1.0
        %v4732 = vadd.f32 %v4626, 1.0
        %v4733 = vadd.f32 %v4628, 1.0
        %v4734 = vadd.f32 %v4630, 1.0
        %v4735 = vadd.f32 %v4632, 1.0
        %v4736 = vadd.f32 %v4634, 1.0
        %v4737 = vadd.f32 %v4636, 1.0
        %v4738 = vadd.f32 %v4638, 1.0
        %v4739 = vadd.f32 %v4640, 1.0
        %v4740 = vadd.f32 %v4642, 1.0
        %v4741 = vadd.f32 %v4644, 1.0
        %v4742 = vadd.f32 %v4646, 1.0
        %v4743 = vadd.f32 %v4648, 1.0
        %v4744 = vadd.f32 %v4650, 1.0
        %v4745 = vadd.f32 %v4652, 1.0
        %v4746 = vadd.f32 %v4654, 1.0
        %v4747 = vadd.f32 %v4656, 1.0
        %v4748 = vadd.f32 %v4658, 1.0
        %v4749 = vadd.f32 %v4660, 1.0
        %v4750 = vadd.f32 %v4662, 1.0
        %v4751 = vadd.f32 %v4664, 1.0
        %v4752 = vadd.f32 %v4666, 1.0
        %v4753 = vadd.f32 %v4668, 1.0
        %v4754 = vadd.f32 %v4670, 1.0
        %v4755 = vadd.f32 %v4672, 1.0
        %v4756 = vadd.f32 %v4674, 1.0
        %v4757 = vadd.f32 %v4676, 1.0
        %v4758 = vadd.f32 %v4678, 1.0
        %v4759 = vadd.f32 %v4680, 1.0
        %v4760 = vadd.f32 %v4682, 1.0
        %v4761 = vadd.f32 %v4684, 1.0
        %v4762 = vadd.f32 %v4686, 1.0
        %v4763 = vadd.f32 %v4688, 1.0
        %v4764 = vadd.f32 %v4690, 1.0
        %v4765 = vadd.f32 %v4692, 1.0
        %v4766 = vadd.f32 %v4694, 1.0
        %v4767 = vadd.f32 %v4696, 1.0
        %v4768 = vadd.f32 %v4698, 1.0
        %v4769 = vadd.f32 %v4700, 1.0
        %v4770 = vadd.f32 %v4702, 1.0
        %v4771 = vadd.f32 %v4704, 1.0
        %v4772 = vadd.f32 %v4706, 1.0
        %v4773 = vadd.f32 %v4708, 1.0
        %v4774 = vadd.f32 %v4710, 1.0
        %v4775 = vrcp.pop %v4711
        %v4776 = vmul.f32 1.0, %v4775
        %v4777 = vrcp.pop %v4712
        %v4778 = vmul.f32 1.0, %v4777
        %v4779 = vrcp.pop %v4713
        %v4780 = vmul.f32 1.0, %v4779
        %v4781 = vrcp.pop %v4714
        %v4782 = vmul.f32 1.0, %v4781
        %v4783 = vrcp.pop %v4715
        %v4784 = vmul.f32 1.0, %v4783
        %v4785 = vrcp.pop %v4716
        %v4786 = vmul.f32 1.0, %v4785
        %v4787 = vrcp.pop %v4717
        %v4788 = vmul.f32 1.0, %v4787
        %v4789 = vrcp.pop %v4718
        %v4790 = vmul.f32 1.0, %v4789
        %v4791 = vrcp.pop %v4719
        %v4792 = vmul.f32 1.0, %v4791
        %v4793 = vrcp.pop %v4720
        %v4794 = vmul.f32 1.0, %v4793
        %v4795 = vrcp.pop %v4721
        %v4796 = vmul.f32 1.0, %v4795
        %v4797 = vrcp.pop %v4722
        %v4798 = vmul.f32 1.0, %v4797
        %v4799 = vrcp.pop %v4723
        %v4800 = vmul.f32 1.0, %v4799
        %v4801 = vrcp.pop %v4724
        %v4802 = vmul.f32 1.0, %v4801
        %v4803 = vrcp.pop %v4725
        %v4804 = vmul.f32 1.0, %v4803
        %v4805 = vrcp.pop %v4726
        %v4806 = vmul.f32 1.0, %v4805
        %v4807 = vrcp.pop %v4727
        %v4808 = vmul.f32 1.0, %v4807
        %v4809 = vrcp.pop %v4728
        %v4810 = vmul.f32 1.0, %v4809
        %v4811 = vrcp.pop %v4729
        %v4812 = vmul.f32 1.0, %v4811
        %v4813 = vrcp.pop %v4730
        %v4814 = vmul.f32 1.0, %v4813
        %v4815 = vrcp.pop %v4731
        %v4816 = vmul.f32 1.0, %v4815
        %v4817 = vrcp.pop %v4732
        %v4818 = vmul.f32 1.0, %v4817
        %v4819 = vrcp.pop %v4733
        %v4820 = vmul.f32 1.0, %v4819
        %v4821 = vrcp.pop %v4734
        %v4822 = vmul.f32 1.0, %v4821
        %v4823 = vrcp.pop %v4735
        %v4824 = vmul.f32 1.0, %v4823
        %v4825 = vrcp.pop %v4736
        %v4826 = vmul.f32 1.0, %v4825
        %v4827 = vrcp.pop %v4737
        %v4828 = vmul.f32 1.0, %v4827
        %v4829 = vrcp.pop %v4738
        %v4830 = vmul.f32 1.0, %v4829
        %v4831 = vrcp.pop %v4739
        %v4832 = vmul.f32 1.0, %v4831
        %v4833 = vrcp.pop %v4740
        %v4834 = vmul.f32 1.0, %v4833
        %v4835 = vrcp.pop %v4741
        %v4836 = vmul.f32 1.0, %v4835
        %v4837 = vrcp.pop %v4742
        %v4838 = vmul.f32 1.0, %v4837
        %v4839 = vrcp.pop %v4743
        %v4840 = vmul.f32 1.0, %v4839
        %v4841 = vrcp.pop %v4744
        %v4842 = vmul.f32 1.0, %v4841
        %v4843 = vrcp.pop %v4745
        %v4844 = vmul.f32 1.0, %v4843
        %v4845 = vrcp.pop %v4746
        %v4846 = vmul.f32 1.0, %v4845
        %v4847 = vrcp.pop %v4747
        %v4848 = vmul.f32 1.0, %v4847
        %v4849 = vrcp.pop %v4748
        %v4850 = vmul.f32 1.0, %v4849
        %v4851 = vrcp.pop %v4749
        %v4852 = vmul.f32 1.0, %v4851
        %v4853 = vrcp.pop %v4750
        %v4854 = vmul.f32 1.0, %v4853
        %v4855 = vrcp.pop %v4751
        %v4856 = vmul.f32 1.0, %v4855
        %v4857 = vrcp.pop %v4752
        %v4858 = vmul.f32 1.0, %v4857
        %v4859 = vrcp.pop %v4753
        %v4860 = vmul.f32 1.0, %v4859
        %v4861 = vrcp.pop %v4754
        %v4862 = vmul.f32 1.0, %v4861
        %v4863 = vrcp.pop %v4755
        %v4864 = vmul.f32 1.0, %v4863
        %v4865 = vrcp.pop %v4756
        %v4866 = vmul.f32 1.0, %v4865
        %v4867 = vrcp.pop %v4757
        %v4868 = vmul.f32 1.0, %v4867
        %v4869 = vrcp.pop %v4758
        %v4870 = vmul.f32 1.0, %v4869
        %v4871 = vrcp.pop %v4759
        %v4872 = vmul.f32 1.0, %v4871
        %v4873 = vrcp.pop %v4760
        %v4874 = vmul.f32 1.0, %v4873
        %v4875 = vrcp.pop %v4761
        %v4876 = vmul.f32 1.0, %v4875
        %v4877 = vrcp.pop %v4762
        %v4878 = vmul.f32 1.0, %v4877
        %v4879 = vrcp.pop %v4763
        %v4880 = vmul.f32 1.0, %v4879
        %v4881 = vrcp.pop %v4764
        %v4882 = vmul.f32 1.0, %v4881
        %v4883 = vrcp.pop %v4765
        %v4884 = vmul.f32 1.0, %v4883
        %v4885 = vrcp.pop %v4766
        %v4886 = vmul.f32 1.0, %v4885
        %v4887 = vrcp.pop %v4767
        %v4888 = vmul.f32 1.0, %v4887
        %v4889 = vrcp.pop %v4768
        %v4890 = vmul.f32 1.0, %v4889
        %v4891 = vrcp.pop %v4769
        %v4892 = vmul.f32 1.0, %v4891
        %v4893 = vrcp.pop %v4770
        %v4894 = vmul.f32 1.0, %v4893
        %v4895 = vrcp.pop %v4771
        %v4896 = vmul.f32 1.0, %v4895
        %v4897 = vrcp.pop %v4772
        %v4898 = vmul.f32 1.0, %v4897
        %v4899 = vrcp.pop %v4773
        %v4900 = vmul.f32 1.0, %v4899
        %v4901 = vrcp.pop %v4774
        %v4902 = vmul.f32 1.0, %v4901
        %v4903 = vld [vmem:[%s194 + $0xa00] sm:$0xff]
        %v4904 = vld [vmem:[%s194 + $0xa08] sm:$0xff]
        %v4905 = vld [vmem:[%s194 + $0xa10] sm:$0xff]
        %v4906 = vld [vmem:[%s194 + $0xa18] sm:$0xff]
        %v4907 = vld [vmem:[%s194 + $0xa20] sm:$0xff]
        %v4908 = vld [vmem:[%s194 + $0xa28] sm:$0xff]
        %v4909 = vld [vmem:[%s194 + $0xa30] sm:$0xff]
        %v4910 = vld [vmem:[%s194 + $0xa38] sm:$0xff]
        %v4911 = vld [vmem:[%s194 + $0xa40] sm:$0xff]
        %v4912 = vld [vmem:[%s194 + $0xa48] sm:$0xff]
        %v4913 = vld [vmem:[%s194 + $0xa50] sm:$0xff]
        %v4914 = vld [vmem:[%s194 + $0xa58] sm:$0xff]
        %v4915 = vld [vmem:[%s194 + $0xa60] sm:$0xff]
        %v4916 = vld [vmem:[%s194 + $0xa68] sm:$0xff]
        %v4917 = vld [vmem:[%s194 + $0xa70] sm:$0xff]
        %v4918 = vld [vmem:[%s194 + $0xa78] sm:$0xff]
        %v4919 = vld [vmem:[%s194 + $0xa80] sm:$0xff]
        %v4920 = vld [vmem:[%s194 + $0xa88] sm:$0xff]
        %v4921 = vld [vmem:[%s194 + $0xa90] sm:$0xff]
        %v4922 = vld [vmem:[%s194 + $0xa98] sm:$0xff]
        %v4923 = vld [vmem:[%s194 + $0xaa0] sm:$0xff]
        %v4924 = vld [vmem:[%s194 + $0xaa8] sm:$0xff]
        %v4925 = vld [vmem:[%s194 + $0xab0] sm:$0xff]
        %v4926 = vld [vmem:[%s194 + $0xab8] sm:$0xff]
        %v4927 = vld [vmem:[%s194 + $0xac0] sm:$0xff]
        %v4928 = vld [vmem:[%s194 + $0xac8] sm:$0xff]
        %v4929 = vld [vmem:[%s194 + $0xad0] sm:$0xff]
        %v4930 = vld [vmem:[%s194 + $0xad8] sm:$0xff]
        %v4931 = vld [vmem:[%s194 + $0xae0] sm:$0xff]
        %v4932 = vld [vmem:[%s194 + $0xae8] sm:$0xff]
        %v4933 = vld [vmem:[%s194 + $0xaf0] sm:$0xff]
        %v4934 = vld [vmem:[%s194 + $0xaf8] sm:$0xff]
        %v4935 = vld [vmem:[%s194 + $0xb00] sm:$0xff]
        %v4936 = vld [vmem:[%s194 + $0xb08] sm:$0xff]
        %v4937 = vld [vmem:[%s194 + $0xb10] sm:$0xff]
        %v4938 = vld [vmem:[%s194 + $0xb18] sm:$0xff]
        %v4939 = vld [vmem:[%s194 + $0xb20] sm:$0xff]
        %v4940 = vld [vmem:[%s194 + $0xb28] sm:$0xff]
        %v4941 = vld [vmem:[%s194 + $0xb30] sm:$0xff]
        %v4942 = vld [vmem:[%s194 + $0xb38] sm:$0xff]
        %v4943 = vld [vmem:[%s194 + $0xb40] sm:$0xff]
        %v4944 = vld [vmem:[%s194 + $0xb48] sm:$0xff]
        %v4945 = vld [vmem:[%s194 + $0xb50] sm:$0xff]
        %v4946 = vld [vmem:[%s194 + $0xb58] sm:$0xff]
        %v4947 = vld [vmem:[%s194 + $0xb60] sm:$0xff]
        %v4948 = vld [vmem:[%s194 + $0xb68] sm:$0xff]
        %v4949 = vld [vmem:[%s194 + $0xb70] sm:$0xff]
        %v4950 = vld [vmem:[%s194 + $0xb78] sm:$0xff]
        %v4951 = vld [vmem:[%s194 + $0xb80] sm:$0xff]
        %v4952 = vld [vmem:[%s194 + $0xb88] sm:$0xff]
        %v4953 = vld [vmem:[%s194 + $0xb90] sm:$0xff]
        %v4954 = vld [vmem:[%s194 + $0xb98] sm:$0xff]
        %v4955 = vld [vmem:[%s194 + $0xba0] sm:$0xff]
        %v4956 = vld [vmem:[%s194 + $0xba8] sm:$0xff]
        %v4957 = vld [vmem:[%s194 + $0xbb0] sm:$0xff]
        %v4958 = vld [vmem:[%s194 + $0xbb8] sm:$0xff]
        %v4959 = vld [vmem:[%s194 + $0xbc0] sm:$0xff]
        %v4960 = vld [vmem:[%s194 + $0xbc8] sm:$0xff]
        %v4961 = vld [vmem:[%s194 + $0xbd0] sm:$0xff]
        %v4962 = vld [vmem:[%s194 + $0xbd8] sm:$0xff]
        %v4963 = vld [vmem:[%s194 + $0xbe0] sm:$0xff]
        %v4964 = vld [vmem:[%s194 + $0xbe8] sm:$0xff]
        %v4965 = vld [vmem:[%s194 + $0xbf0] sm:$0xff]
        %v4966 = vld [vmem:[%s194 + $0xbf8] sm:$0xff]
        %v4967 = vadd.f32 %v4903, %v4904
        %v4968 = vadd.f32 %v4967, %v4905
        %v4969 = vadd.f32 %v4968, %v4906
        %v4970 = vadd.f32 %v4969, %v4907
        %v4971 = vadd.f32 %v4970, %v4908
        %v4972 = vadd.f32 %v4971, %v4909
        %v4973 = vadd.f32 %v4972, %v4910
        %v4974 = vadd.f32 %v4973, %v4911
        %v4975 = vadd.f32 %v4974, %v4912
        %v4976 = vadd.f32 %v4975, %v4913
        %v4977 = vadd.f32 %v4976, %v4914
        %v4978 = vadd.f32 %v4977, %v4915
        %v4979 = vadd.f32 %v4978, %v4916
        %v4980 = vadd.f32 %v4979, %v4917
        %v4981 = vadd.f32 %v4980, %v4918
        %v4982 = vadd.f32 %v4981, %v4919
        %v4983 = vadd.f32 %v4982, %v4920
        %v4984 = vadd.f32 %v4983, %v4921
        %v4985 = vadd.f32 %v4984, %v4922
        %v4986 = vadd.f32 %v4985, %v4923
        %v4987 = vadd.f32 %v4986, %v4924
        %v4988 = vadd.f32 %v4987, %v4925
        %v4989 = vadd.f32 %v4988, %v4926
        %v4990 = vadd.f32 %v4989, %v4927
        %v4991 = vadd.f32 %v4990, %v4928
        %v4992 = vadd.f32 %v4991, %v4929
        %v4993 = vadd.f32 %v4992, %v4930
        %v4994 = vadd.f32 %v4993, %v4931
        %v4995 = vadd.f32 %v4994, %v4932
        %v4996 = vadd.f32 %v4995, %v4933
        %v4997 = vadd.f32 %v4996, %v4934
        %v4998 = vadd.f32 %v4997, %v4935
        %v4999 = vadd.f32 %v4998, %v4936
        %v5000 = vadd.f32 %v4999, %v4937
        %v5001 = vadd.f32 %v5000, %v4938
        %v5002 = vadd.f32 %v5001, %v4939
        %v5003 = vadd.f32 %v5002, %v4940
        %v5004 = vadd.f32 %v5003, %v4941
        %v5005 = vadd.f32 %v5004, %v4942
        %v5006 = vadd.f32 %v5005, %v4943
        %v5007 = vadd.f32 %v5006, %v4944
        %v5008 = vadd.f32 %v5007, %v4945
        %v5009 = vadd.f32 %v5008, %v4946
        %v5010 = vadd.f32 %v5009, %v4947
        %v5011 = vadd.f32 %v5010, %v4948
        %v5012 = vadd.f32 %v5011, %v4949
        %v5013 = vadd.f32 %v5012, %v4950
        %v5014 = vadd.f32 %v5013, %v4951
        %v5015 = vadd.f32 %v5014, %v4952
        %v5016 = vadd.f32 %v5015, %v4953
        %v5017 = vadd.f32 %v5016, %v4954
        %v5018 = vadd.f32 %v5017, %v4955
        %v5019 = vadd.f32 %v5018, %v4956
        %v5020 = vadd.f32 %v5019, %v4957
        %v5021 = vadd.f32 %v5020, %v4958
        %v5022 = vadd.f32 %v5021, %v4959
        %v5023 = vadd.f32 %v5022, %v4960
        %v5024 = vadd.f32 %v5023, %v4961
        %v5025 = vadd.f32 %v5024, %v4962
        %v5026 = vadd.f32 %v5025, %v4963
        %v5027 = vadd.f32 %v5026, %v4964
        %v5028 = vadd.f32 %v5027, %v4965
        %v5029 = vadd.f32 %v5028, %v4966
        %v5030 = vadd.f32 %v4198, %v5029
        %v5031 = vmul.f32 %v4776, %v4903
        %v5032 = vmul.f32 %v4778, %v4904
        %v5033 = vmul.f32 %v4780, %v4905
        %v5034 = vmul.f32 %v4782, %v4906
        %v5035 = vmul.f32 %v4784, %v4907
        %v5036 = vmul.f32 %v4786, %v4908
        %v5037 = vmul.f32 %v4788, %v4909
        %v5038 = vmul.f32 %v4790, %v4910
        %v5039 = vmul.f32 %v4792, %v4911
        %v5040 = vmul.f32 %v4794, %v4912
        %v5041 = vmul.f32 %v4796, %v4913
        %v5042 = vmul.f32 %v4798, %v4914
        %v5043 = vmul.f32 %v4800, %v4915
        %v5044 = vmul.f32 %v4802, %v4916
        %v5045 = vmul.f32 %v4804, %v4917
        %v5046 = vmul.f32 %v4806, %v4918
        %v5047 = vmul.f32 %v4808, %v4919
        %v5048 = vmul.f32 %v4810, %v4920
        %v5049 = vmul.f32 %v4812, %v4921
        %v5050 = vmul.f32 %v4814, %v4922
        %v5051 = vmul.f32 %v4816, %v4923
        %v5052 = vmul.f32 %v4818, %v4924
        %v5053 = vmul.f32 %v4820, %v4925
        %v5054 = vmul.f32 %v4822, %v4926
        %v5055 = vmul.f32 %v4824, %v4927
        %v5056 = vmul.f32 %v4826, %v4928
        %v5057 = vmul.f32 %v4828, %v4929
        %v5058 = vmul.f32 %v4830, %v4930
        %v5059 = vmul.f32 %v4832, %v4931
        %v5060 = vmul.f32 %v4834, %v4932
        %v5061 = vmul.f32 %v4836, %v4933
        %v5062 = vmul.f32 %v4838, %v4934
        %v5063 = vmul.f32 %v4840, %v4935
        %v5064 = vmul.f32 %v4842, %v4936
        %v5065 = vmul.f32 %v4844, %v4937
        %v5066 = vmul.f32 %v4846, %v4938
        %v5067 = vmul.f32 %v4848, %v4939
        %v5068 = vmul.f32 %v4850, %v4940
        %v5069 = vmul.f32 %v4852, %v4941
        %v5070 = vmul.f32 %v4854, %v4942
        %v5071 = vmul.f32 %v4856, %v4943
        %v5072 = vmul.f32 %v4858, %v4944
        %v5073 = vmul.f32 %v4860, %v4945
        %v5074 = vmul.f32 %v4862, %v4946
        %v5075 = vmul.f32 %v4864, %v4947
        %v5076 = vmul.f32 %v4866, %v4948
        %v5077 = vmul.f32 %v4868, %v4949
        %v5078 = vmul.f32 %v4870, %v4950
        %v5079 = vmul.f32 %v4872, %v4951
        %v5080 = vmul.f32 %v4874, %v4952
        %v5081 = vmul.f32 %v4876, %v4953
        %v5082 = vmul.f32 %v4878, %v4954
        %v5083 = vmul.f32 %v4880, %v4955
        %v5084 = vmul.f32 %v4882, %v4956
        %v5085 = vmul.f32 %v4884, %v4957
        %v5086 = vmul.f32 %v4886, %v4958
        %v5087 = vmul.f32 %v4888, %v4959
        %v5088 = vmul.f32 %v4890, %v4960
        %v5089 = vmul.f32 %v4892, %v4961
        %v5090 = vmul.f32 %v4894, %v4962
        %v5091 = vmul.f32 %v4896, %v4963
        %v5092 = vmul.f32 %v4898, %v4964
        %v5093 = vmul.f32 %v4900, %v4965
        %v5094 = vmul.f32 %v4902, %v4966
        %v5095 = vadd.f32 %v5031, %v5032
        %v5096 = vadd.f32 %v5095, %v5033
        %v5097 = vadd.f32 %v5096, %v5034
        %v5098 = vadd.f32 %v5097, %v5035
        %v5099 = vadd.f32 %v5098, %v5036
        %v5100 = vadd.f32 %v5099, %v5037
        %v5101 = vadd.f32 %v5100, %v5038
        %v5102 = vadd.f32 %v5101, %v5039
        %v5103 = vadd.f32 %v5102, %v5040
        %v5104 = vadd.f32 %v5103, %v5041
        %v5105 = vadd.f32 %v5104, %v5042
        %v5106 = vadd.f32 %v5105, %v5043
        %v5107 = vadd.f32 %v5106, %v5044
        %v5108 = vadd.f32 %v5107, %v5045
        %v5109 = vadd.f32 %v5108, %v5046
        %v5110 = vadd.f32 %v5109, %v5047
        %v5111 = vadd.f32 %v5110, %v5048
        %v5112 = vadd.f32 %v5111, %v5049
        %v5113 = vadd.f32 %v5112, %v5050
        %v5114 = vadd.f32 %v5113, %v5051
        %v5115 = vadd.f32 %v5114, %v5052
        %v5116 = vadd.f32 %v5115, %v5053
        %v5117 = vadd.f32 %v5116, %v5054
        %v5118 = vadd.f32 %v5117, %v5055
        %v5119 = vadd.f32 %v5118, %v5056
        %v5120 = vadd.f32 %v5119, %v5057
        %v5121 = vadd.f32 %v5120, %v5058
        %v5122 = vadd.f32 %v5121, %v5059
        %v5123 = vadd.f32 %v5122, %v5060
        %v5124 = vadd.f32 %v5123, %v5061
        %v5125 = vadd.f32 %v5124, %v5062
        %v5126 = vadd.f32 %v5125, %v5063
        %v5127 = vadd.f32 %v5126, %v5064
        %v5128 = vadd.f32 %v5127, %v5065
        %v5129 = vadd.f32 %v5128, %v5066
        %v5130 = vadd.f32 %v5129, %v5067
        %v5131 = vadd.f32 %v5130, %v5068
        %v5132 = vadd.f32 %v5131, %v5069
        %v5133 = vadd.f32 %v5132, %v5070
        %v5134 = vadd.f32 %v5133, %v5071
        %v5135 = vadd.f32 %v5134, %v5072
        %v5136 = vadd.f32 %v5135, %v5073
        %v5137 = vadd.f32 %v5136, %v5074
        %v5138 = vadd.f32 %v5137, %v5075
        %v5139 = vadd.f32 %v5138, %v5076
        %v5140 = vadd.f32 %v5139, %v5077
        %v5141 = vadd.f32 %v5140, %v5078
        %v5142 = vadd.f32 %v5141, %v5079
        %v5143 = vadd.f32 %v5142, %v5080
        %v5144 = vadd.f32 %v5143, %v5081
        %v5145 = vadd.f32 %v5144, %v5082
        %v5146 = vadd.f32 %v5145, %v5083
        %v5147 = vadd.f32 %v5146, %v5084
        %v5148 = vadd.f32 %v5147, %v5085
        %v5149 = vadd.f32 %v5148, %v5086
        %v5150 = vadd.f32 %v5149, %v5087
        %v5151 = vadd.f32 %v5150, %v5088
        %v5152 = vadd.f32 %v5151, %v5089
        %v5153 = vadd.f32 %v5152, %v5090
        %v5154 = vadd.f32 %v5153, %v5091
        %v5155 = vadd.f32 %v5154, %v5092
        %v5156 = vadd.f32 %v5155, %v5093
        %v5157 = vadd.f32 %v5156, %v5094
        %v5158 = vadd.f32 %v4326, %v5157
        %v5159 = vadd.f32 %v4776, %v4778
        %v5160 = vadd.f32 %v5159, %v4780
        %v5161 = vadd.f32 %v5160, %v4782
        %v5162 = vadd.f32 %v5161, %v4784
        %v5163 = vadd.f32 %v5162, %v4786
        %v5164 = vadd.f32 %v5163, %v4788
        %v5165 = vadd.f32 %v5164, %v4790
        %v5166 = vadd.f32 %v5165, %v4792
        %v5167 = vadd.f32 %v5166, %v4794
        %v5168 = vadd.f32 %v5167, %v4796
        %v5169 = vadd.f32 %v5168, %v4798
        %v5170 = vadd.f32 %v5169, %v4800
        %v5171 = vadd.f32 %v5170, %v4802
        %v5172 = vadd.f32 %v5171, %v4804
        %v5173 = vadd.f32 %v5172, %v4806
        %v5174 = vadd.f32 %v5173, %v4808
        %v5175 = vadd.f32 %v5174, %v4810
        %v5176 = vadd.f32 %v5175, %v4812
        %v5177 = vadd.f32 %v5176, %v4814
        %v5178 = vadd.f32 %v5177, %v4816
        %v5179 = vadd.f32 %v5178, %v4818
        %v5180 = vadd.f32 %v5179, %v4820
        %v5181 = vadd.f32 %v5180, %v4822
        %v5182 = vadd.f32 %v5181, %v4824
        %v5183 = vadd.f32 %v5182, %v4826
        %v5184 = vadd.f32 %v5183, %v4828
        %v5185 = vadd.f32 %v5184, %v4830
        %v5186 = vadd.f32 %v5185, %v4832
        %v5187 = vadd.f32 %v5186, %v4834
        %v5188 = vadd.f32 %v5187, %v4836
        %v5189 = vadd.f32 %v5188, %v4838
        %v5190 = vadd.f32 %v5189, %v4840
        %v5191 = vadd.f32 %v5190, %v4842
        %v5192 = vadd.f32 %v5191, %v4844
        %v5193 = vadd.f32 %v5192, %v4846
        %v5194 = vadd.f32 %v5193, %v4848
        %v5195 = vadd.f32 %v5194, %v4850
        %v5196 = vadd.f32 %v5195, %v4852
        %v5197 = vadd.f32 %v5196, %v4854
        %v5198 = vadd.f32 %v5197, %v4856
        %v5199 = vadd.f32 %v5198, %v4858
        %v5200 = vadd.f32 %v5199, %v4860
        %v5201 = vadd.f32 %v5200, %v4862
        %v5202 = vadd.f32 %v5201, %v4864
        %v5203 = vadd.f32 %v5202, %v4866
        %v5204 = vadd.f32 %v5203, %v4868
        %v5205 = vadd.f32 %v5204, %v4870
        %v5206 = vadd.f32 %v5205, %v4872
        %v5207 = vadd.f32 %v5206, %v4874
        %v5208 = vadd.f32 %v5207, %v4876
        %v5209 = vadd.f32 %v5208, %v4878
        %v5210 = vadd.f32 %v5209, %v4880
        %v5211 = vadd.f32 %v5210, %v4882
        %v5212 = vadd.f32 %v5211, %v4884
        %v5213 = vadd.f32 %v5212, %v4886
        %v5214 = vadd.f32 %v5213, %v4888
        %v5215 = vadd.f32 %v5214, %v4890
        %v5216 = vadd.f32 %v5215, %v4892
        %v5217 = vadd.f32 %v5216, %v4894
        %v5218 = vadd.f32 %v5217, %v4896
        %v5219 = vadd.f32 %v5218, %v4898
        %v5220 = vadd.f32 %v5219, %v4900
        %v5221 = vadd.f32 %v5220, %v4902
        %v5222 = vadd.f32 %v4390, %v5221
        %v5223 = vld [vmem:[%s185 + $0x600] sm:$0xf]
        %v5224 = vld [vmem:[%s185 + $0x604] sm:$0xf]
        %v5225 = vld [vmem:[%s185 + $0x608] sm:$0xf]
        %v5226 = vld [vmem:[%s185 + $0x60c] sm:$0xf]
        %v5227 = vld [vmem:[%s185 + $0x610] sm:$0xf]
        %v5228 = vld [vmem:[%s185 + $0x614] sm:$0xf]
        %v5229 = vld [vmem:[%s185 + $0x618] sm:$0xf]
        %v5230 = vld [vmem:[%s185 + $0x61c] sm:$0xf]
        %v5231 = vld [vmem:[%s185 + $0x620] sm:$0xf]
        %v5232 = vld [vmem:[%s185 + $0x624] sm:$0xf]
        %v5233 = vld [vmem:[%s185 + $0x628] sm:$0xf]
        %v5234 = vld [vmem:[%s185 + $0x62c] sm:$0xf]
        %v5235 = vld [vmem:[%s185 + $0x630] sm:$0xf]
        %v5236 = vld [vmem:[%s185 + $0x634] sm:$0xf]
        %v5237 = vld [vmem:[%s185 + $0x638] sm:$0xf]
        %v5238 = vld [vmem:[%s185 + $0x63c] sm:$0xf]
        %v5239 = vld [vmem:[%s185 + $0x640] sm:$0xf]
        %v5240 = vld [vmem:[%s185 + $0x644] sm:$0xf]
        %v5241 = vld [vmem:[%s185 + $0x648] sm:$0xf]
        %v5242 = vld [vmem:[%s185 + $0x64c] sm:$0xf]
        %v5243 = vld [vmem:[%s185 + $0x650] sm:$0xf]
        %v5244 = vld [vmem:[%s185 + $0x654] sm:$0xf]
        %v5245 = vld [vmem:[%s185 + $0x658] sm:$0xf]
        %v5246 = vld [vmem:[%s185 + $0x65c] sm:$0xf]
        %v5247 = vld [vmem:[%s185 + $0x660] sm:$0xf]
        %v5248 = vld [vmem:[%s185 + $0x664] sm:$0xf]
        %v5249 = vld [vmem:[%s185 + $0x668] sm:$0xf]
        %v5250 = vld [vmem:[%s185 + $0x66c] sm:$0xf]
        %v5251 = vld [vmem:[%s185 + $0x670] sm:$0xf]
        %v5252 = vld [vmem:[%s185 + $0x674] sm:$0xf]
        %v5253 = vld [vmem:[%s185 + $0x678] sm:$0xf]
        %v5254 = vld [vmem:[%s185 + $0x67c] sm:$0xf]
        %v5255 = vld [vmem:[%s185 + $0x680] sm:$0xf]
        %v5256 = vld [vmem:[%s185 + $0x684] sm:$0xf]
        %v5257 = vld [vmem:[%s185 + $0x688] sm:$0xf]
        %v5258 = vld [vmem:[%s185 + $0x68c] sm:$0xf]
        %v5259 = vld [vmem:[%s185 + $0x690] sm:$0xf]
        %v5260 = vld [vmem:[%s185 + $0x694] sm:$0xf]
        %v5261 = vld [vmem:[%s185 + $0x698] sm:$0xf]
        %v5262 = vld [vmem:[%s185 + $0x69c] sm:$0xf]
        %v5263 = vld [vmem:[%s185 + $0x6a0] sm:$0xf]
        %v5264 = vld [vmem:[%s185 + $0x6a4] sm:$0xf]
        %v5265 = vld [vmem:[%s185 + $0x6a8] sm:$0xf]
        %v5266 = vld [vmem:[%s185 + $0x6ac] sm:$0xf]
        %v5267 = vld [vmem:[%s185 + $0x6b0] sm:$0xf]
        %v5268 = vld [vmem:[%s185 + $0x6b4] sm:$0xf]
        %v5269 = vld [vmem:[%s185 + $0x6b8] sm:$0xf]
        %v5270 = vld [vmem:[%s185 + $0x6bc] sm:$0xf]
        %v5271 = vld [vmem:[%s185 + $0x6c0] sm:$0xf]
        %v5272 = vld [vmem:[%s185 + $0x6c4] sm:$0xf]
        %v5273 = vld [vmem:[%s185 + $0x6c8] sm:$0xf]
        %v5274 = vld [vmem:[%s185 + $0x6cc] sm:$0xf]
        %v5275 = vld [vmem:[%s185 + $0x6d0] sm:$0xf]
        %v5276 = vld [vmem:[%s185 + $0x6d4] sm:$0xf]
        %v5277 = vld [vmem:[%s185 + $0x6d8] sm:$0xf]
        %v5278 = vld [vmem:[%s185 + $0x6dc] sm:$0xf]
        %v5279 = vld [vmem:[%s185 + $0x6e0] sm:$0xf]
        %v5280 = vld [vmem:[%s185 + $0x6e4] sm:$0xf]
        %v5281 = vld [vmem:[%s185 + $0x6e8] sm:$0xf]
        %v5282 = vld [vmem:[%s185 + $0x6ec] sm:$0xf]
        %v5283 = vld [vmem:[%s185 + $0x6f0] sm:$0xf]
        %v5284 = vld [vmem:[%s185 + $0x6f4] sm:$0xf]
        %v5285 = vld [vmem:[%s185 + $0x6f8] sm:$0xf]
        %v5286 = vld [vmem:[%s185 + $0x6fc] sm:$0xf]
        %v5287 = vunpack.c.l.bf16 %v5223
        %v5288 = vunpack.c.l.bf16 %v5224
        %v5289 = vunpack.c.l.bf16 %v5225
        %v5290 = vunpack.c.l.bf16 %v5226
        %v5291 = vunpack.c.l.bf16 %v5227
        %v5292 = vunpack.c.l.bf16 %v5228
        %v5293 = vunpack.c.l.bf16 %v5229
        %v5294 = vunpack.c.l.bf16 %v5230
        %v5295 = vunpack.c.l.bf16 %v5231
        %v5296 = vunpack.c.l.bf16 %v5232
        %v5297 = vunpack.c.l.bf16 %v5233
        %v5298 = vunpack.c.l.bf16 %v5234
        %v5299 = vunpack.c.l.bf16 %v5235
        %v5300 = vunpack.c.l.bf16 %v5236
        %v5301 = vunpack.c.l.bf16 %v5237
        %v5302 = vunpack.c.l.bf16 %v5238
        %v5303 = vunpack.c.l.bf16 %v5239
        %v5304 = vunpack.c.l.bf16 %v5240
        %v5305 = vunpack.c.l.bf16 %v5241
        %v5306 = vunpack.c.l.bf16 %v5242
        %v5307 = vunpack.c.l.bf16 %v5243
        %v5308 = vunpack.c.l.bf16 %v5244
        %v5309 = vunpack.c.l.bf16 %v5245
        %v5310 = vunpack.c.l.bf16 %v5246
        %v5311 = vunpack.c.l.bf16 %v5247
        %v5312 = vunpack.c.l.bf16 %v5248
        %v5313 = vunpack.c.l.bf16 %v5249
        %v5314 = vunpack.c.l.bf16 %v5250
        %v5315 = vunpack.c.l.bf16 %v5251
        %v5316 = vunpack.c.l.bf16 %v5252
        %v5317 = vunpack.c.l.bf16 %v5253
        %v5318 = vunpack.c.l.bf16 %v5254
        %v5319 = vunpack.c.l.bf16 %v5255
        %v5320 = vunpack.c.l.bf16 %v5256
        %v5321 = vunpack.c.l.bf16 %v5257
        %v5322 = vunpack.c.l.bf16 %v5258
        %v5323 = vunpack.c.l.bf16 %v5259
        %v5324 = vunpack.c.l.bf16 %v5260
        %v5325 = vunpack.c.l.bf16 %v5261
        %v5326 = vunpack.c.l.bf16 %v5262
        %v5327 = vunpack.c.l.bf16 %v5263
        %v5328 = vunpack.c.l.bf16 %v5264
        %v5329 = vunpack.c.l.bf16 %v5265
        %v5330 = vunpack.c.l.bf16 %v5266
        %v5331 = vunpack.c.l.bf16 %v5267
        %v5332 = vunpack.c.l.bf16 %v5268
        %v5333 = vunpack.c.l.bf16 %v5269
        %v5334 = vunpack.c.l.bf16 %v5270
        %v5335 = vunpack.c.l.bf16 %v5271
        %v5336 = vunpack.c.l.bf16 %v5272
        %v5337 = vunpack.c.l.bf16 %v5273
        %v5338 = vunpack.c.l.bf16 %v5274
        %v5339 = vunpack.c.l.bf16 %v5275
        %v5340 = vunpack.c.l.bf16 %v5276
        %v5341 = vunpack.c.l.bf16 %v5277
        %v5342 = vunpack.c.l.bf16 %v5278
        %v5343 = vunpack.c.l.bf16 %v5279
        %v5344 = vunpack.c.l.bf16 %v5280
        %v5345 = vunpack.c.l.bf16 %v5281
        %v5346 = vunpack.c.l.bf16 %v5282
        %v5347 = vunpack.c.l.bf16 %v5283
        %v5348 = vunpack.c.l.bf16 %v5284
        %v5349 = vunpack.c.l.bf16 %v5285
        %v5350 = vunpack.c.l.bf16 %v5286
        %v5351 = vxor.u32 %v5287, 2147483648
        %v5352 = vxor.u32 %v5288, 2147483648
        %v5353 = vxor.u32 %v5289, 2147483648
        %v5354 = vxor.u32 %v5290, 2147483648
        %v5355 = vxor.u32 %v5291, 2147483648
        %v5356 = vxor.u32 %v5292, 2147483648
        %v5357 = vxor.u32 %v5293, 2147483648
        %v5358 = vxor.u32 %v5294, 2147483648
        %v5359 = vxor.u32 %v5295, 2147483648
        %v5360 = vxor.u32 %v5296, 2147483648
        %v5361 = vxor.u32 %v5297, 2147483648
        %v5362 = vxor.u32 %v5298, 2147483648
        %v5363 = vxor.u32 %v5299, 2147483648
        %v5364 = vxor.u32 %v5300, 2147483648
        %v5365 = vxor.u32 %v5301, 2147483648
        %v5366 = vxor.u32 %v5302, 2147483648
        %v5367 = vxor.u32 %v5303, 2147483648
        %v5368 = vxor.u32 %v5304, 2147483648
        %v5369 = vxor.u32 %v5305, 2147483648
        %v5370 = vxor.u32 %v5306, 2147483648
        %v5371 = vxor.u32 %v5307, 2147483648
        %v5372 = vxor.u32 %v5308, 2147483648
        %v5373 = vxor.u32 %v5309, 2147483648
        %v5374 = vxor.u32 %v5310, 2147483648
        %v5375 = vxor.u32 %v5311, 2147483648
        %v5376 = vxor.u32 %v5312, 2147483648
        %v5377 = vxor.u32 %v5313, 2147483648
        %v5378 = vxor.u32 %v5314, 2147483648
        %v5379 = vxor.u32 %v5315, 2147483648
        %v5380 = vxor.u32 %v5316, 2147483648
        %v5381 = vxor.u32 %v5317, 2147483648
        %v5382 = vxor.u32 %v5318, 2147483648
        %v5383 = vxor.u32 %v5319, 2147483648
        %v5384 = vxor.u32 %v5320, 2147483648
        %v5385 = vxor.u32 %v5321, 2147483648
        %v5386 = vxor.u32 %v5322, 2147483648
        %v5387 = vxor.u32 %v5323, 2147483648
        %v5388 = vxor.u32 %v5324, 2147483648
        %v5389 = vxor.u32 %v5325, 2147483648
        %v5390 = vxor.u32 %v5326, 2147483648
        %v5391 = vxor.u32 %v5327, 2147483648
        %v5392 = vxor.u32 %v5328, 2147483648
        %v5393 = vxor.u32 %v5329, 2147483648
        %v5394 = vxor.u32 %v5330, 2147483648
        %v5395 = vxor.u32 %v5331, 2147483648
        %v5396 = vxor.u32 %v5332, 2147483648
        %v5397 = vxor.u32 %v5333, 2147483648
        %v5398 = vxor.u32 %v5334, 2147483648
        %v5399 = vxor.u32 %v5335, 2147483648
        %v5400 = vxor.u32 %v5336, 2147483648
        %v5401 = vxor.u32 %v5337, 2147483648
        %v5402 = vxor.u32 %v5338, 2147483648
        %v5403 = vxor.u32 %v5339, 2147483648
        %v5404 = vxor.u32 %v5340, 2147483648
        %v5405 = vxor.u32 %v5341, 2147483648
        %v5406 = vxor.u32 %v5342, 2147483648
        %v5407 = vxor.u32 %v5343, 2147483648
        %v5408 = vxor.u32 %v5344, 2147483648
        %v5409 = vxor.u32 %v5345, 2147483648
        %v5410 = vxor.u32 %v5346, 2147483648
        %v5411 = vxor.u32 %v5347, 2147483648
        %v5412 = vxor.u32 %v5348, 2147483648
        %v5413 = vxor.u32 %v5349, 2147483648
        %v5414 = vxor.u32 %v5350, 2147483648
        %v5415 = vmul.f32 %v5351, 1.442695
        %v5416 = vpow.pop %v5415
        %v5417 = vmul.f32 %v5352, 1.442695
        %v5418 = vpow.pop %v5417
        %v5419 = vmul.f32 %v5353, 1.442695
        %v5420 = vpow.pop %v5419
        %v5421 = vmul.f32 %v5354, 1.442695
        %v5422 = vpow.pop %v5421
        %v5423 = vmul.f32 %v5355, 1.442695
        %v5424 = vpow.pop %v5423
        %v5425 = vmul.f32 %v5356, 1.442695
        %v5426 = vpow.pop %v5425
        %v5427 = vmul.f32 %v5357, 1.442695
        %v5428 = vpow.pop %v5427
        %v5429 = vmul.f32 %v5358, 1.442695
        %v5430 = vpow.pop %v5429
        %v5431 = vmul.f32 %v5359, 1.442695
        %v5432 = vpow.pop %v5431
        %v5433 = vmul.f32 %v5360, 1.442695
        %v5434 = vpow.pop %v5433
        %v5435 = vmul.f32 %v5361, 1.442695
        %v5436 = vpow.pop %v5435
        %v5437 = vmul.f32 %v5362, 1.442695
        %v5438 = vpow.pop %v5437
        %v5439 = vmul.f32 %v5363, 1.442695
        %v5440 = vpow.pop %v5439
        %v5441 = vmul.f32 %v5364, 1.442695
        %v5442 = vpow.pop %v5441
        %v5443 = vmul.f32 %v5365, 1.442695
        %v5444 = vpow.pop %v5443
        %v5445 = vmul.f32 %v5366, 1.442695
        %v5446 = vpow.pop %v5445
        %v5447 = vmul.f32 %v5367, 1.442695
        %v5448 = vpow.pop %v5447
        %v5449 = vmul.f32 %v5368, 1.442695
        %v5450 = vpow.pop %v5449
        %v5451 = vmul.f32 %v5369, 1.442695
        %v5452 = vpow.pop %v5451
        %v5453 = vmul.f32 %v5370, 1.442695
        %v5454 = vpow.pop %v5453
        %v5455 = vmul.f32 %v5371, 1.442695
        %v5456 = vpow.pop %v5455
        %v5457 = vmul.f32 %v5372, 1.442695
        %v5458 = vpow.pop %v5457
        %v5459 = vmul.f32 %v5373, 1.442695
        %v5460 = vpow.pop %v5459
        %v5461 = vmul.f32 %v5374, 1.442695
        %v5462 = vpow.pop %v5461
        %v5463 = vmul.f32 %v5375, 1.442695
        %v5464 = vpow.pop %v5463
        %v5465 = vmul.f32 %v5376, 1.442695
        %v5466 = vpow.pop %v5465
        %v5467 = vmul.f32 %v5377, 1.442695
        %v5468 = vpow.pop %v5467
        %v5469 = vmul.f32 %v5378, 1.442695
        %v5470 = vpow.pop %v5469
        %v5471 = vmul.f32 %v5379, 1.442695
        %v5472 = vpow.pop %v5471
        %v5473 = vmul.f32 %v5380, 1.442695
        %v5474 = vpow.pop %v5473
        %v5475 = vmul.f32 %v5381, 1.442695
        %v5476 = vpow.pop %v5475
        %v5477 = vmul.f32 %v5382, 1.442695
        %v5478 = vpow.pop %v5477
        %v5479 = vmul.f32 %v5383, 1.442695
        %v5480 = vpow.pop %v5479
        %v5481 = vmul.f32 %v5384, 1.442695
        %v5482 = vpow.pop %v5481
        %v5483 = vmul.f32 %v5385, 1.442695
        %v5484 = vpow.pop %v5483
        %v5485 = vmul.f32 %v5386, 1.442695
        %v5486 = vpow.pop %v5485
        %v5487 = vmul.f32 %v5387, 1.442695
        %v5488 = vpow.pop %v5487
        %v5489 = vmul.f32 %v5388, 1.442695
        %v5490 = vpow.pop %v5489
        %v5491 = vmul.f32 %v5389, 1.442695
        %v5492 = vpow.pop %v5491
        %v5493 = vmul.f32 %v5390, 1.442695
        %v5494 = vpow.pop %v5493
        %v5495 = vmul.f32 %v5391, 1.442695
        %v5496 = vpow.pop %v5495
        %v5497 = vmul.f32 %v5392, 1.442695
        %v5498 = vpow.pop %v5497
        %v5499 = vmul.f32 %v5393, 1.442695
        %v5500 = vpow.pop %v5499
        %v5501 = vmul.f32 %v5394, 1.442695
        %v5502 = vpow.pop %v5501
        %v5503 = vmul.f32 %v5395, 1.442695
        %v5504 = vpow.pop %v5503
        %v5505 = vmul.f32 %v5396, 1.442695
        %v5506 = vpow.pop %v5505
        %v5507 = vmul.f32 %v5397, 1.442695
        %v5508 = vpow.pop %v5507
        %v5509 = vmul.f32 %v5398, 1.442695
        %v5510 = vpow.pop %v5509
        %v5511 = vmul.f32 %v5399, 1.442695
        %v5512 = vpow.pop %v5511
        %v5513 = vmul.f32 %v5400, 1.442695
        %v5514 = vpow.pop %v5513
        %v5515 = vmul.f32 %v5401, 1.442695
        %v5516 = vpow.pop %v5515
        %v5517 = vmul.f32 %v5402, 1.442695
        %v5518 = vpow.pop %v5517
        %v5519 = vmul.f32 %v5403, 1.442695
        %v5520 = vpow.pop %v5519
        %v5521 = vmul.f32 %v5404, 1.442695
        %v5522 = vpow.pop %v5521
        %v5523 = vmul.f32 %v5405, 1.442695
        %v5524 = vpow.pop %v5523
        %v5525 = vmul.f32 %v5406, 1.442695
        %v5526 = vpow.pop %v5525
        %v5527 = vmul.f32 %v5407, 1.442695
        %v5528 = vpow.pop %v5527
        %v5529 = vmul.f32 %v5408, 1.442695
        %v5530 = vpow.pop %v5529
        %v5531 = vmul.f32 %v5409, 1.442695
        %v5532 = vpow.pop %v5531
        %v5533 = vmul.f32 %v5410, 1.442695
        %v5534 = vpow.pop %v5533
        %v5535 = vmul.f32 %v5411, 1.442695
        %v5536 = vpow.pop %v5535
        %v5537 = vmul.f32 %v5412, 1.442695
        %v5538 = vpow.pop %v5537
        %v5539 = vmul.f32 %v5413, 1.442695
        %v5540 = vpow.pop %v5539
        %v5541 = vmul.f32 %v5414, 1.442695
        %v5542 = vpow.pop %v5541
        %v5543 = vadd.f32 %v5416, 1.0
        %v5544 = vadd.f32 %v5418, 1.0
        %v5545 = vadd.f32 %v5420, 1.0
        %v5546 = vadd.f32 %v5422, 1.0
        %v5547 = vadd.f32 %v5424, 1.0
        %v5548 = vadd.f32 %v5426, 1.0
        %v5549 = vadd.f32 %v5428, 1.0
        %v5550 = vadd.f32 %v5430, 1.0
        %v5551 = vadd.f32 %v5432, 1.0
        %v5552 = vadd.f32 %v5434, 1.0
        %v5553 = vadd.f32 %v5436, 1.0
        %v5554 = vadd.f32 %v5438, 1.0
        %v5555 = vadd.f32 %v5440, 1.0
        %v5556 = vadd.f32 %v5442, 1.0
        %v5557 = vadd.f32 %v5444, 1.0
        %v5558 = vadd.f32 %v5446, 1.0
        %v5559 = vadd.f32 %v5448, 1.0
        %v5560 = vadd.f32 %v5450, 1.0
        %v5561 = vadd.f32 %v5452, 1.0
        %v5562 = vadd.f32 %v5454, 1.0
        %v5563 = vadd.f32 %v5456, 1.0
        %v5564 = vadd.f32 %v5458, 1.0
        %v5565 = vadd.f32 %v5460, 1.0
        %v5566 = vadd.f32 %v5462, 1.0
        %v5567 = vadd.f32 %v5464, 1.0
        %v5568 = vadd.f32 %v5466, 1.0
        %v5569 = vadd.f32 %v5468, 1.0
        %v5570 = vadd.f32 %v5470, 1.0
        %v5571 = vadd.f32 %v5472, 1.0
        %v5572 = vadd.f32 %v5474, 1.0
        %v5573 = vadd.f32 %v5476, 1.0
        %v5574 = vadd.f32 %v5478, 1.0
        %v5575 = vadd.f32 %v5480, 1.0
        %v5576 = vadd.f32 %v5482, 1.0
        %v5577 = vadd.f32 %v5484, 1.0
        %v5578 = vadd.f32 %v5486, 1.0
        %v5579 = vadd.f32 %v5488, 1.0
        %v5580 = vadd.f32 %v5490, 1.0
        %v5581 = vadd.f32 %v5492, 1.0
        %v5582 = vadd.f32 %v5494, 1.0
        %v5583 = vadd.f32 %v5496, 1.0
        %v5584 = vadd.f32 %v5498, 1.0
        %v5585 = vadd.f32 %v5500, 1.0
        %v5586 = vadd.f32 %v5502, 1.0
        %v5587 = vadd.f32 %v5504, 1.0
        %v5588 = vadd.f32 %v5506, 1.0
        %v5589 = vadd.f32 %v5508, 1.0
        %v5590 = vadd.f32 %v5510, 1.0
        %v5591 = vadd.f32 %v5512, 1.0
        %v5592 = vadd.f32 %v5514, 1.0
        %v5593 = vadd.f32 %v5516, 1.0
        %v5594 = vadd.f32 %v5518, 1.0
        %v5595 = vadd.f32 %v5520, 1.0
        %v5596 = vadd.f32 %v5522, 1.0
        %v5597 = vadd.f32 %v5524, 1.0
        %v5598 = vadd.f32 %v5526, 1.0
        %v5599 = vadd.f32 %v5528, 1.0
        %v5600 = vadd.f32 %v5530, 1.0
        %v5601 = vadd.f32 %v5532, 1.0
        %v5602 = vadd.f32 %v5534, 1.0
        %v5603 = vadd.f32 %v5536, 1.0
        %v5604 = vadd.f32 %v5538, 1.0
        %v5605 = vadd.f32 %v5540, 1.0
        %v5606 = vadd.f32 %v5542, 1.0
        %v5607 = vrcp.pop %v5543
        %v5608 = vmul.f32 1.0, %v5607
        %v5609 = vrcp.pop %v5544
        %v5610 = vmul.f32 1.0, %v5609
        %v5611 = vrcp.pop %v5545
        %v5612 = vmul.f32 1.0, %v5611
        %v5613 = vrcp.pop %v5546
        %v5614 = vmul.f32 1.0, %v5613
        %v5615 = vrcp.pop %v5547
        %v5616 = vmul.f32 1.0, %v5615
        %v5617 = vrcp.pop %v5548
        %v5618 = vmul.f32 1.0, %v5617
        %v5619 = vrcp.pop %v5549
        %v5620 = vmul.f32 1.0, %v5619
        %v5621 = vrcp.pop %v5550
        %v5622 = vmul.f32 1.0, %v5621
        %v5623 = vrcp.pop %v5551
        %v5624 = vmul.f32 1.0, %v5623
        %v5625 = vrcp.pop %v5552
        %v5626 = vmul.f32 1.0, %v5625
        %v5627 = vrcp.pop %v5553
        %v5628 = vmul.f32 1.0, %v5627
        %v5629 = vrcp.pop %v5554
        %v5630 = vmul.f32 1.0, %v5629
        %v5631 = vrcp.pop %v5555
        %v5632 = vmul.f32 1.0, %v5631
        %v5633 = vrcp.pop %v5556
        %v5634 = vmul.f32 1.0, %v5633
        %v5635 = vrcp.pop %v5557
        %v5636 = vmul.f32 1.0, %v5635
        %v5637 = vrcp.pop %v5558
        %v5638 = vmul.f32 1.0, %v5637
        %v5639 = vrcp.pop %v5559
        %v5640 = vmul.f32 1.0, %v5639
        %v5641 = vrcp.pop %v5560
        %v5642 = vmul.f32 1.0, %v5641
        %v5643 = vrcp.pop %v5561
        %v5644 = vmul.f32 1.0, %v5643
        %v5645 = vrcp.pop %v5562
        %v5646 = vmul.f32 1.0, %v5645
        %v5647 = vrcp.pop %v5563
        %v5648 = vmul.f32 1.0, %v5647
        %v5649 = vrcp.pop %v5564
        %v5650 = vmul.f32 1.0, %v5649
        %v5651 = vrcp.pop %v5565
        %v5652 = vmul.f32 1.0, %v5651
        %v5653 = vrcp.pop %v5566
        %v5654 = vmul.f32 1.0, %v5653
        %v5655 = vrcp.pop %v5567
        %v5656 = vmul.f32 1.0, %v5655
        %v5657 = vrcp.pop %v5568
        %v5658 = vmul.f32 1.0, %v5657
        %v5659 = vrcp.pop %v5569
        %v5660 = vmul.f32 1.0, %v5659
        %v5661 = vrcp.pop %v5570
        %v5662 = vmul.f32 1.0, %v5661
        %v5663 = vrcp.pop %v5571
        %v5664 = vmul.f32 1.0, %v5663
        %v5665 = vrcp.pop %v5572
        %v5666 = vmul.f32 1.0, %v5665
        %v5667 = vrcp.pop %v5573
        %v5668 = vmul.f32 1.0, %v5667
        %v5669 = vrcp.pop %v5574
        %v5670 = vmul.f32 1.0, %v5669
        %v5671 = vrcp.pop %v5575
        %v5672 = vmul.f32 1.0, %v5671
        %v5673 = vrcp.pop %v5576
        %v5674 = vmul.f32 1.0, %v5673
        %v5675 = vrcp.pop %v5577
        %v5676 = vmul.f32 1.0, %v5675
        %v5677 = vrcp.pop %v5578
        %v5678 = vmul.f32 1.0, %v5677
        %v5679 = vrcp.pop %v5579
        %v5680 = vmul.f32 1.0, %v5679
        %v5681 = vrcp.pop %v5580
        %v5682 = vmul.f32 1.0, %v5681
        %v5683 = vrcp.pop %v5581
        %v5684 = vmul.f32 1.0, %v5683
        %v5685 = vrcp.pop %v5582
        %v5686 = vmul.f32 1.0, %v5685
        %v5687 = vrcp.pop %v5583
        %v5688 = vmul.f32 1.0, %v5687
        %v5689 = vrcp.pop %v5584
        %v5690 = vmul.f32 1.0, %v5689
        %v5691 = vrcp.pop %v5585
        %v5692 = vmul.f32 1.0, %v5691
        %v5693 = vrcp.pop %v5586
        %v5694 = vmul.f32 1.0, %v5693
        %v5695 = vrcp.pop %v5587
        %v5696 = vmul.f32 1.0, %v5695
        %v5697 = vrcp.pop %v5588
        %v5698 = vmul.f32 1.0, %v5697
        %v5699 = vrcp.pop %v5589
        %v5700 = vmul.f32 1.0, %v5699
        %v5701 = vrcp.pop %v5590
        %v5702 = vmul.f32 1.0, %v5701
        %v5703 = vrcp.pop %v5591
        %v5704 = vmul.f32 1.0, %v5703
        %v5705 = vrcp.pop %v5592
        %v5706 = vmul.f32 1.0, %v5705
        %v5707 = vrcp.pop %v5593
        %v5708 = vmul.f32 1.0, %v5707
        %v5709 = vrcp.pop %v5594
        %v5710 = vmul.f32 1.0, %v5709
        %v5711 = vrcp.pop %v5595
        %v5712 = vmul.f32 1.0, %v5711
        %v5713 = vrcp.pop %v5596
        %v5714 = vmul.f32 1.0, %v5713
        %v5715 = vrcp.pop %v5597
        %v5716 = vmul.f32 1.0, %v5715
        %v5717 = vrcp.pop %v5598
        %v5718 = vmul.f32 1.0, %v5717
        %v5719 = vrcp.pop %v5599
        %v5720 = vmul.f32 1.0, %v5719
        %v5721 = vrcp.pop %v5600
        %v5722 = vmul.f32 1.0, %v5721
        %v5723 = vrcp.pop %v5601
        %v5724 = vmul.f32 1.0, %v5723
        %v5725 = vrcp.pop %v5602
        %v5726 = vmul.f32 1.0, %v5725
        %v5727 = vrcp.pop %v5603
        %v5728 = vmul.f32 1.0, %v5727
        %v5729 = vrcp.pop %v5604
        %v5730 = vmul.f32 1.0, %v5729
        %v5731 = vrcp.pop %v5605
        %v5732 = vmul.f32 1.0, %v5731
        %v5733 = vrcp.pop %v5606
        %v5734 = vmul.f32 1.0, %v5733
        %v5735 = vld [vmem:[%s194 + $0xc00] sm:$0xff]
        %v5736 = vld [vmem:[%s194 + $0xc08] sm:$0xff]
        %v5737 = vld [vmem:[%s194 + $0xc10] sm:$0xff]
        %v5738 = vld [vmem:[%s194 + $0xc18] sm:$0xff]
        %v5739 = vld [vmem:[%s194 + $0xc20] sm:$0xff]
        %v5740 = vld [vmem:[%s194 + $0xc28] sm:$0xff]
        %v5741 = vld [vmem:[%s194 + $0xc30] sm:$0xff]
        %v5742 = vld [vmem:[%s194 + $0xc38] sm:$0xff]
        %v5743 = vld [vmem:[%s194 + $0xc40] sm:$0xff]
        %v5744 = vld [vmem:[%s194 + $0xc48] sm:$0xff]
        %v5745 = vld [vmem:[%s194 + $0xc50] sm:$0xff]
        %v5746 = vld [vmem:[%s194 + $0xc58] sm:$0xff]
        %v5747 = vld [vmem:[%s194 + $0xc60] sm:$0xff]
        %v5748 = vld [vmem:[%s194 + $0xc68] sm:$0xff]
        %v5749 = vld [vmem:[%s194 + $0xc70] sm:$0xff]
        %v5750 = vld [vmem:[%s194 + $0xc78] sm:$0xff]
        %v5751 = vld [vmem:[%s194 + $0xc80] sm:$0xff]
        %v5752 = vld [vmem:[%s194 + $0xc88] sm:$0xff]
        %v5753 = vld [vmem:[%s194 + $0xc90] sm:$0xff]
        %v5754 = vld [vmem:[%s194 + $0xc98] sm:$0xff]
        %v5755 = vld [vmem:[%s194 + $0xca0] sm:$0xff]
        %v5756 = vld [vmem:[%s194 + $0xca8] sm:$0xff]
        %v5757 = vld [vmem:[%s194 + $0xcb0] sm:$0xff]
        %v5758 = vld [vmem:[%s194 + $0xcb8] sm:$0xff]
        %v5759 = vld [vmem:[%s194 + $0xcc0] sm:$0xff]
        %v5760 = vld [vmem:[%s194 + $0xcc8] sm:$0xff]
        %v5761 = vld [vmem:[%s194 + $0xcd0] sm:$0xff]
        %v5762 = vld [vmem:[%s194 + $0xcd8] sm:$0xff]
        %v5763 = vld [vmem:[%s194 + $0xce0] sm:$0xff]
        %v5764 = vld [vmem:[%s194 + $0xce8] sm:$0xff]
        %v5765 = vld [vmem:[%s194 + $0xcf0] sm:$0xff]
        %v5766 = vld [vmem:[%s194 + $0xcf8] sm:$0xff]
        %v5767 = vld [vmem:[%s194 + $0xd00] sm:$0xff]
        %v5768 = vld [vmem:[%s194 + $0xd08] sm:$0xff]
        %v5769 = vld [vmem:[%s194 + $0xd10] sm:$0xff]
        %v5770 = vld [vmem:[%s194 + $0xd18] sm:$0xff]
        %v5771 = vld [vmem:[%s194 + $0xd20] sm:$0xff]
        %v5772 = vld [vmem:[%s194 + $0xd28] sm:$0xff]
        %v5773 = vld [vmem:[%s194 + $0xd30] sm:$0xff]
        %v5774 = vld [vmem:[%s194 + $0xd38] sm:$0xff]
        %v5775 = vld [vmem:[%s194 + $0xd40] sm:$0xff]
        %v5776 = vld [vmem:[%s194 + $0xd48] sm:$0xff]
        %v5777 = vld [vmem:[%s194 + $0xd50] sm:$0xff]
        %v5778 = vld [vmem:[%s194 + $0xd58] sm:$0xff]
        %v5779 = vld [vmem:[%s194 + $0xd60] sm:$0xff]
        %v5780 = vld [vmem:[%s194 + $0xd68] sm:$0xff]
        %v5781 = vld [vmem:[%s194 + $0xd70] sm:$0xff]
        %v5782 = vld [vmem:[%s194 + $0xd78] sm:$0xff]
        %v5783 = vld [vmem:[%s194 + $0xd80] sm:$0xff]
        %v5784 = vld [vmem:[%s194 + $0xd88] sm:$0xff]
        %v5785 = vld [vmem:[%s194 + $0xd90] sm:$0xff]
        %v5786 = vld [vmem:[%s194 + $0xd98] sm:$0xff]
        %v5787 = vld [vmem:[%s194 + $0xda0] sm:$0xff]
        %v5788 = vld [vmem:[%s194 + $0xda8] sm:$0xff]
        %v5789 = vld [vmem:[%s194 + $0xdb0] sm:$0xff]
        %v5790 = vld [vmem:[%s194 + $0xdb8] sm:$0xff]
        %v5791 = vld [vmem:[%s194 + $0xdc0] sm:$0xff]
        %v5792 = vld [vmem:[%s194 + $0xdc8] sm:$0xff]
        %v5793 = vld [vmem:[%s194 + $0xdd0] sm:$0xff]
        %v5794 = vld [vmem:[%s194 + $0xdd8] sm:$0xff]
        %v5795 = vld [vmem:[%s194 + $0xde0] sm:$0xff]
        %v5796 = vld [vmem:[%s194 + $0xde8] sm:$0xff]
        %v5797 = vld [vmem:[%s194 + $0xdf0] sm:$0xff]
        %v5798 = vld [vmem:[%s194 + $0xdf8] sm:$0xff]
        %v5799 = vadd.f32 %v5735, %v5736
        %v5800 = vadd.f32 %v5799, %v5737
        %v5801 = vadd.f32 %v5800, %v5738
        %v5802 = vadd.f32 %v5801, %v5739
        %v5803 = vadd.f32 %v5802, %v5740
        %v5804 = vadd.f32 %v5803, %v5741
        %v5805 = vadd.f32 %v5804, %v5742
        %v5806 = vadd.f32 %v5805, %v5743
        %v5807 = vadd.f32 %v5806, %v5744
        %v5808 = vadd.f32 %v5807, %v5745
        %v5809 = vadd.f32 %v5808, %v5746
        %v5810 = vadd.f32 %v5809, %v5747
        %v5811 = vadd.f32 %v5810, %v5748
        %v5812 = vadd.f32 %v5811, %v5749
        %v5813 = vadd.f32 %v5812, %v5750
        %v5814 = vadd.f32 %v5813, %v5751
        %v5815 = vadd.f32 %v5814, %v5752
        %v5816 = vadd.f32 %v5815, %v5753
        %v5817 = vadd.f32 %v5816, %v5754
        %v5818 = vadd.f32 %v5817, %v5755
        %v5819 = vadd.f32 %v5818, %v5756
        %v5820 = vadd.f32 %v5819, %v5757
        %v5821 = vadd.f32 %v5820, %v5758
        %v5822 = vadd.f32 %v5821, %v5759
        %v5823 = vadd.f32 %v5822, %v5760
        %v5824 = vadd.f32 %v5823, %v5761
        %v5825 = vadd.f32 %v5824, %v5762
        %v5826 = vadd.f32 %v5825, %v5763
        %v5827 = vadd.f32 %v5826, %v5764
        %v5828 = vadd.f32 %v5827, %v5765
        %v5829 = vadd.f32 %v5828, %v5766
        %v5830 = vadd.f32 %v5829, %v5767
        %v5831 = vadd.f32 %v5830, %v5768
        %v5832 = vadd.f32 %v5831, %v5769
        %v5833 = vadd.f32 %v5832, %v5770
        %v5834 = vadd.f32 %v5833, %v5771
        %v5835 = vadd.f32 %v5834, %v5772
        %v5836 = vadd.f32 %v5835, %v5773
        %v5837 = vadd.f32 %v5836, %v5774
        %v5838 = vadd.f32 %v5837, %v5775
        %v5839 = vadd.f32 %v5838, %v5776
        %v5840 = vadd.f32 %v5839, %v5777
        %v5841 = vadd.f32 %v5840, %v5778
        %v5842 = vadd.f32 %v5841, %v5779
        %v5843 = vadd.f32 %v5842, %v5780
        %v5844 = vadd.f32 %v5843, %v5781
        %v5845 = vadd.f32 %v5844, %v5782
        %v5846 = vadd.f32 %v5845, %v5783
        %v5847 = vadd.f32 %v5846, %v5784
        %v5848 = vadd.f32 %v5847, %v5785
        %v5849 = vadd.f32 %v5848, %v5786
        %v5850 = vadd.f32 %v5849, %v5787
        %v5851 = vadd.f32 %v5850, %v5788
        %v5852 = vadd.f32 %v5851, %v5789
        %v5853 = vadd.f32 %v5852, %v5790
        %v5854 = vadd.f32 %v5853, %v5791
        %v5855 = vadd.f32 %v5854, %v5792
        %v5856 = vadd.f32 %v5855, %v5793
        %v5857 = vadd.f32 %v5856, %v5794
        %v5858 = vadd.f32 %v5857, %v5795
        %v5859 = vadd.f32 %v5858, %v5796
        %v5860 = vadd.f32 %v5859, %v5797
        %v5861 = vadd.f32 %v5860, %v5798
        %v5862 = vadd.f32 %v5030, %v5861
        %v5863 = vmul.f32 %v5608, %v5735
        %v5864 = vmul.f32 %v5610, %v5736
        %v5865 = vmul.f32 %v5612, %v5737
        %v5866 = vmul.f32 %v5614, %v5738
        %v5867 = vmul.f32 %v5616, %v5739
        %v5868 = vmul.f32 %v5618, %v5740
        %v5869 = vmul.f32 %v5620, %v5741
        %v5870 = vmul.f32 %v5622, %v5742
        %v5871 = vmul.f32 %v5624, %v5743
        %v5872 = vmul.f32 %v5626, %v5744
        %v5873 = vmul.f32 %v5628, %v5745
        %v5874 = vmul.f32 %v5630, %v5746
        %v5875 = vmul.f32 %v5632, %v5747
        %v5876 = vmul.f32 %v5634, %v5748
        %v5877 = vmul.f32 %v5636, %v5749
        %v5878 = vmul.f32 %v5638, %v5750
        %v5879 = vmul.f32 %v5640, %v5751
        %v5880 = vmul.f32 %v5642, %v5752
        %v5881 = vmul.f32 %v5644, %v5753
        %v5882 = vmul.f32 %v5646, %v5754
        %v5883 = vmul.f32 %v5648, %v5755
        %v5884 = vmul.f32 %v5650, %v5756
        %v5885 = vmul.f32 %v5652, %v5757
        %v5886 = vmul.f32 %v5654, %v5758
        %v5887 = vmul.f32 %v5656, %v5759
        %v5888 = vmul.f32 %v5658, %v5760
        %v5889 = vmul.f32 %v5660, %v5761
        %v5890 = vmul.f32 %v5662, %v5762
        %v5891 = vmul.f32 %v5664, %v5763
        %v5892 = vmul.f32 %v5666, %v5764
        %v5893 = vmul.f32 %v5668, %v5765
        %v5894 = vmul.f32 %v5670, %v5766
        %v5895 = vmul.f32 %v5672, %v5767
        %v5896 = vmul.f32 %v5674, %v5768
        %v5897 = vmul.f32 %v5676, %v5769
        %v5898 = vmul.f32 %v5678, %v5770
        %v5899 = vmul.f32 %v5680, %v5771
        %v5900 = vmul.f32 %v5682, %v5772
        %v5901 = vmul.f32 %v5684, %v5773
        %v5902 = vmul.f32 %v5686, %v5774
        %v5903 = vmul.f32 %v5688, %v5775
        %v5904 = vmul.f32 %v5690, %v5776
        %v5905 = vmul.f32 %v5692, %v5777
        %v5906 = vmul.f32 %v5694, %v5778
        %v5907 = vmul.f32 %v5696, %v5779
        %v5908 = vmul.f32 %v5698, %v5780
        %v5909 = vmul.f32 %v5700, %v5781
        %v5910 = vmul.f32 %v5702, %v5782
        %v5911 = vmul.f32 %v5704, %v5783
        %v5912 = vmul.f32 %v5706, %v5784
        %v5913 = vmul.f32 %v5708, %v5785
        %v5914 = vmul.f32 %v5710, %v5786
        %v5915 = vmul.f32 %v5712, %v5787
        %v5916 = vmul.f32 %v5714, %v5788
        %v5917 = vmul.f32 %v5716, %v5789
        %v5918 = vmul.f32 %v5718, %v5790
        %v5919 = vmul.f32 %v5720, %v5791
        %v5920 = vmul.f32 %v5722, %v5792
        %v5921 = vmul.f32 %v5724, %v5793
        %v5922 = vmul.f32 %v5726, %v5794
        %v5923 = vmul.f32 %v5728, %v5795
        %v5924 = vmul.f32 %v5730, %v5796
        %v5925 = vmul.f32 %v5732, %v5797
        %v5926 = vmul.f32 %v5734, %v5798
        %v5927 = vadd.f32 %v5863, %v5864
        %v5928 = vadd.f32 %v5927, %v5865
        %v5929 = vadd.f32 %v5928, %v5866
        %v5930 = vadd.f32 %v5929, %v5867
        %v5931 = vadd.f32 %v5930, %v5868
        %v5932 = vadd.f32 %v5931, %v5869
        %v5933 = vadd.f32 %v5932, %v5870
        %v5934 = vadd.f32 %v5933, %v5871
        %v5935 = vadd.f32 %v5934, %v5872
        %v5936 = vadd.f32 %v5935, %v5873
        %v5937 = vadd.f32 %v5936, %v5874
        %v5938 = vadd.f32 %v5937, %v5875
        %v5939 = vadd.f32 %v5938, %v5876
        %v5940 = vadd.f32 %v5939, %v5877
        %v5941 = vadd.f32 %v5940, %v5878
        %v5942 = vadd.f32 %v5941, %v5879
        %v5943 = vadd.f32 %v5942, %v5880
        %v5944 = vadd.f32 %v5943, %v5881
        %v5945 = vadd.f32 %v5944, %v5882
        %v5946 = vadd.f32 %v5945, %v5883
        %v5947 = vadd.f32 %v5946, %v5884
        %v5948 = vadd.f32 %v5947, %v5885
        %v5949 = vadd.f32 %v5948, %v5886
        %v5950 = vadd.f32 %v5949, %v5887
        %v5951 = vadd.f32 %v5950, %v5888
        %v5952 = vadd.f32 %v5951, %v5889
        %v5953 = vadd.f32 %v5952, %v5890
        %v5954 = vadd.f32 %v5953, %v5891
        %v5955 = vadd.f32 %v5954, %v5892
        %v5956 = vadd.f32 %v5955, %v5893
        %v5957 = vadd.f32 %v5956, %v5894
        %v5958 = vadd.f32 %v5957, %v5895
        %v5959 = vadd.f32 %v5958, %v5896
        %v5960 = vadd.f32 %v5959, %v5897
        %v5961 = vadd.f32 %v5960, %v5898
        %v5962 = vadd.f32 %v5961, %v5899
        %v5963 = vadd.f32 %v5962, %v5900
        %v5964 = vadd.f32 %v5963, %v5901
        %v5965 = vadd.f32 %v5964, %v5902
        %v5966 = vadd.f32 %v5965, %v5903
        %v5967 = vadd.f32 %v5966, %v5904
        %v5968 = vadd.f32 %v5967, %v5905
        %v5969 = vadd.f32 %v5968, %v5906
        %v5970 = vadd.f32 %v5969, %v5907
        %v5971 = vadd.f32 %v5970, %v5908
        %v5972 = vadd.f32 %v5971, %v5909
        %v5973 = vadd.f32 %v5972, %v5910
        %v5974 = vadd.f32 %v5973, %v5911
        %v5975 = vadd.f32 %v5974, %v5912
        %v5976 = vadd.f32 %v5975, %v5913
        %v5977 = vadd.f32 %v5976, %v5914
        %v5978 = vadd.f32 %v5977, %v5915
        %v5979 = vadd.f32 %v5978, %v5916
        %v5980 = vadd.f32 %v5979, %v5917
        %v5981 = vadd.f32 %v5980, %v5918
        %v5982 = vadd.f32 %v5981, %v5919
        %v5983 = vadd.f32 %v5982, %v5920
        %v5984 = vadd.f32 %v5983, %v5921
        %v5985 = vadd.f32 %v5984, %v5922
        %v5986 = vadd.f32 %v5985, %v5923
        %v5987 = vadd.f32 %v5986, %v5924
        %v5988 = vadd.f32 %v5987, %v5925
        %v5989 = vadd.f32 %v5988, %v5926
        %v5990 = vadd.f32 %v5158, %v5989
        %v5991 = vadd.f32 %v5608, %v5610
        %v5992 = vadd.f32 %v5991, %v5612
        %v5993 = vadd.f32 %v5992, %v5614
        %v5994 = vadd.f32 %v5993, %v5616
        %v5995 = vadd.f32 %v5994, %v5618
        %v5996 = vadd.f32 %v5995, %v5620
        %v5997 = vadd.f32 %v5996, %v5622
        %v5998 = vadd.f32 %v5997, %v5624
        %v5999 = vadd.f32 %v5998, %v5626
        %v6000 = vadd.f32 %v5999, %v5628
        %v6001 = vadd.f32 %v6000, %v5630
        %v6002 = vadd.f32 %v6001, %v5632
        %v6003 = vadd.f32 %v6002, %v5634
        %v6004 = vadd.f32 %v6003, %v5636
        %v6005 = vadd.f32 %v6004, %v5638
        %v6006 = vadd.f32 %v6005, %v5640
        %v6007 = vadd.f32 %v6006, %v5642
        %v6008 = vadd.f32 %v6007, %v5644
        %v6009 = vadd.f32 %v6008, %v5646
        %v6010 = vadd.f32 %v6009, %v5648
        %v6011 = vadd.f32 %v6010, %v5650
        %v6012 = vadd.f32 %v6011, %v5652
        %v6013 = vadd.f32 %v6012, %v5654
        %v6014 = vadd.f32 %v6013, %v5656
        %v6015 = vadd.f32 %v6014, %v5658
        %v6016 = vadd.f32 %v6015, %v5660
        %v6017 = vadd.f32 %v6016, %v5662
        %v6018 = vadd.f32 %v6017, %v5664
        %v6019 = vadd.f32 %v6018, %v5666
        %v6020 = vadd.f32 %v6019, %v5668
        %v6021 = vadd.f32 %v6020, %v5670
        %v6022 = vadd.f32 %v6021, %v5672
        %v6023 = vadd.f32 %v6022, %v5674
        %v6024 = vadd.f32 %v6023, %v5676
        %v6025 = vadd.f32 %v6024, %v5678
        %v6026 = vadd.f32 %v6025, %v5680
        %v6027 = vadd.f32 %v6026, %v5682
        %v6028 = vadd.f32 %v6027, %v5684
        %v6029 = vadd.f32 %v6028, %v5686
        %v6030 = vadd.f32 %v6029, %v5688
        %v6031 = vadd.f32 %v6030, %v5690
        %v6032 = vadd.f32 %v6031, %v5692
        %v6033 = vadd.f32 %v6032, %v5694
        %v6034 = vadd.f32 %v6033, %v5696
        %v6035 = vadd.f32 %v6034, %v5698
        %v6036 = vadd.f32 %v6035, %v5700
        %v6037 = vadd.f32 %v6036, %v5702
        %v6038 = vadd.f32 %v6037, %v5704
        %v6039 = vadd.f32 %v6038, %v5706
        %v6040 = vadd.f32 %v6039, %v5708
        %v6041 = vadd.f32 %v6040, %v5710
        %v6042 = vadd.f32 %v6041, %v5712
        %v6043 = vadd.f32 %v6042, %v5714
        %v6044 = vadd.f32 %v6043, %v5716
        %v6045 = vadd.f32 %v6044, %v5718
        %v6046 = vadd.f32 %v6045, %v5720
        %v6047 = vadd.f32 %v6046, %v5722
        %v6048 = vadd.f32 %v6047, %v5724
        %v6049 = vadd.f32 %v6048, %v5726
        %v6050 = vadd.f32 %v6049, %v5728
        %v6051 = vadd.f32 %v6050, %v5730
        %v6052 = vadd.f32 %v6051, %v5732
        %v6053 = vadd.f32 %v6052, %v5734
        %v6054 = vadd.f32 %v5222, %v6053
        %v6055 = vld [vmem:[%s185 + $0x700] sm:$0xf]
        %v6056 = vld [vmem:[%s185 + $0x704] sm:$0xf]
        %v6057 = vld [vmem:[%s185 + $0x708] sm:$0xf]
        %v6058 = vld [vmem:[%s185 + $0x70c] sm:$0xf]
        %v6059 = vld [vmem:[%s185 + $0x710] sm:$0xf]
        %v6060 = vld [vmem:[%s185 + $0x714] sm:$0xf]
        %v6061 = vld [vmem:[%s185 + $0x718] sm:$0xf]
        %v6062 = vld [vmem:[%s185 + $0x71c] sm:$0xf]
        %v6063 = vld [vmem:[%s185 + $0x720] sm:$0xf]
        %v6064 = vld [vmem:[%s185 + $0x724] sm:$0xf]
        %v6065 = vld [vmem:[%s185 + $0x728] sm:$0xf]
        %v6066 = vld [vmem:[%s185 + $0x72c] sm:$0xf]
        %v6067 = vld [vmem:[%s185 + $0x730] sm:$0xf]
        %v6068 = vld [vmem:[%s185 + $0x734] sm:$0xf]
        %v6069 = vld [vmem:[%s185 + $0x738] sm:$0xf]
        %v6070 = vld [vmem:[%s185 + $0x73c] sm:$0xf]
        %v6071 = vld [vmem:[%s185 + $0x740] sm:$0xf]
        %v6072 = vld [vmem:[%s185 + $0x744] sm:$0xf]
        %v6073 = vld [vmem:[%s185 + $0x748] sm:$0xf]
        %v6074 = vld [vmem:[%s185 + $0x74c] sm:$0xf]
        %v6075 = vld [vmem:[%s185 + $0x750] sm:$0xf]
        %v6076 = vld [vmem:[%s185 + $0x754] sm:$0xf]
        %v6077 = vld [vmem:[%s185 + $0x758] sm:$0xf]
        %v6078 = vld [vmem:[%s185 + $0x75c] sm:$0xf]
        %v6079 = vld [vmem:[%s185 + $0x760] sm:$0xf]
        %v6080 = vld [vmem:[%s185 + $0x764] sm:$0xf]
        %v6081 = vld [vmem:[%s185 + $0x768] sm:$0xf]
        %v6082 = vld [vmem:[%s185 + $0x76c] sm:$0xf]
        %v6083 = vld [vmem:[%s185 + $0x770] sm:$0xf]
        %v6084 = vld [vmem:[%s185 + $0x774] sm:$0xf]
        %v6085 = vld [vmem:[%s185 + $0x778] sm:$0xf]
        %v6086 = vld [vmem:[%s185 + $0x77c] sm:$0xf]
        %v6087 = vld [vmem:[%s185 + $0x780] sm:$0xf]
        %v6088 = vld [vmem:[%s185 + $0x784] sm:$0xf]
        %v6089 = vld [vmem:[%s185 + $0x788] sm:$0xf]
        %v6090 = vld [vmem:[%s185 + $0x78c] sm:$0xf]
        %v6091 = vld [vmem:[%s185 + $0x790] sm:$0xf]
        %v6092 = vld [vmem:[%s185 + $0x794] sm:$0xf]
        %v6093 = vld [vmem:[%s185 + $0x798] sm:$0xf]
        %v6094 = vld [vmem:[%s185 + $0x79c] sm:$0xf]
        %v6095 = vld [vmem:[%s185 + $0x7a0] sm:$0xf]
        %v6096 = vld [vmem:[%s185 + $0x7a4] sm:$0xf]
        %v6097 = vld [vmem:[%s185 + $0x7a8] sm:$0xf]
        %v6098 = vld [vmem:[%s185 + $0x7ac] sm:$0xf]
        %v6099 = vld [vmem:[%s185 + $0x7b0] sm:$0xf]
        %v6100 = vld [vmem:[%s185 + $0x7b4] sm:$0xf]
        %v6101 = vld [vmem:[%s185 + $0x7b8] sm:$0xf]
        %v6102 = vld [vmem:[%s185 + $0x7bc] sm:$0xf]
        %v6103 = vld [vmem:[%s185 + $0x7c0] sm:$0xf]
        %v6104 = vld [vmem:[%s185 + $0x7c4] sm:$0xf]
        %v6105 = vld [vmem:[%s185 + $0x7c8] sm:$0xf]
        %v6106 = vld [vmem:[%s185 + $0x7cc] sm:$0xf]
        %v6107 = vld [vmem:[%s185 + $0x7d0] sm:$0xf]
        %v6108 = vld [vmem:[%s185 + $0x7d4] sm:$0xf]
        %v6109 = vld [vmem:[%s185 + $0x7d8] sm:$0xf]
        %v6110 = vld [vmem:[%s185 + $0x7dc] sm:$0xf]
        %v6111 = vld [vmem:[%s185 + $0x7e0] sm:$0xf]
        %v6112 = vld [vmem:[%s185 + $0x7e4] sm:$0xf]
        %v6113 = vld [vmem:[%s185 + $0x7e8] sm:$0xf]
        %v6114 = vld [vmem:[%s185 + $0x7ec] sm:$0xf]
        %v6115 = vld [vmem:[%s185 + $0x7f0] sm:$0xf]
        %v6116 = vld [vmem:[%s185 + $0x7f4] sm:$0xf]
        %v6117 = vld [vmem:[%s185 + $0x7f8] sm:$0xf]
        %v6118 = vld [vmem:[%s185 + $0x7fc] sm:$0xf]
        %v6119 = vunpack.c.l.bf16 %v6055
        %v6120 = vunpack.c.l.bf16 %v6056
        %v6121 = vunpack.c.l.bf16 %v6057
        %v6122 = vunpack.c.l.bf16 %v6058
        %v6123 = vunpack.c.l.bf16 %v6059
        %v6124 = vunpack.c.l.bf16 %v6060
        %v6125 = vunpack.c.l.bf16 %v6061
        %v6126 = vunpack.c.l.bf16 %v6062
        %v6127 = vunpack.c.l.bf16 %v6063
        %v6128 = vunpack.c.l.bf16 %v6064
        %v6129 = vunpack.c.l.bf16 %v6065
        %v6130 = vunpack.c.l.bf16 %v6066
        %v6131 = vunpack.c.l.bf16 %v6067
        %v6132 = vunpack.c.l.bf16 %v6068
        %v6133 = vunpack.c.l.bf16 %v6069
        %v6134 = vunpack.c.l.bf16 %v6070
        %v6135 = vunpack.c.l.bf16 %v6071
        %v6136 = vunpack.c.l.bf16 %v6072
        %v6137 = vunpack.c.l.bf16 %v6073
        %v6138 = vunpack.c.l.bf16 %v6074
        %v6139 = vunpack.c.l.bf16 %v6075
        %v6140 = vunpack.c.l.bf16 %v6076
        %v6141 = vunpack.c.l.bf16 %v6077
        %v6142 = vunpack.c.l.bf16 %v6078
        %v6143 = vunpack.c.l.bf16 %v6079
        %v6144 = vunpack.c.l.bf16 %v6080
        %v6145 = vunpack.c.l.bf16 %v6081
        %v6146 = vunpack.c.l.bf16 %v6082
        %v6147 = vunpack.c.l.bf16 %v6083
        %v6148 = vunpack.c.l.bf16 %v6084
        %v6149 = vunpack.c.l.bf16 %v6085
        %v6150 = vunpack.c.l.bf16 %v6086
        %v6151 = vunpack.c.l.bf16 %v6087
        %v6152 = vunpack.c.l.bf16 %v6088
        %v6153 = vunpack.c.l.bf16 %v6089
        %v6154 = vunpack.c.l.bf16 %v6090
        %v6155 = vunpack.c.l.bf16 %v6091
        %v6156 = vunpack.c.l.bf16 %v6092
        %v6157 = vunpack.c.l.bf16 %v6093
        %v6158 = vunpack.c.l.bf16 %v6094
        %v6159 = vunpack.c.l.bf16 %v6095
        %v6160 = vunpack.c.l.bf16 %v6096
        %v6161 = vunpack.c.l.bf16 %v6097
        %v6162 = vunpack.c.l.bf16 %v6098
        %v6163 = vunpack.c.l.bf16 %v6099
        %v6164 = vunpack.c.l.bf16 %v6100
        %v6165 = vunpack.c.l.bf16 %v6101
        %v6166 = vunpack.c.l.bf16 %v6102
        %v6167 = vunpack.c.l.bf16 %v6103
        %v6168 = vunpack.c.l.bf16 %v6104
        %v6169 = vunpack.c.l.bf16 %v6105
        %v6170 = vunpack.c.l.bf16 %v6106
        %v6171 = vunpack.c.l.bf16 %v6107
        %v6172 = vunpack.c.l.bf16 %v6108
        %v6173 = vunpack.c.l.bf16 %v6109
        %v6174 = vunpack.c.l.bf16 %v6110
        %v6175 = vunpack.c.l.bf16 %v6111
        %v6176 = vunpack.c.l.bf16 %v6112
        %v6177 = vunpack.c.l.bf16 %v6113
        %v6178 = vunpack.c.l.bf16 %v6114
        %v6179 = vunpack.c.l.bf16 %v6115
        %v6180 = vunpack.c.l.bf16 %v6116
        %v6181 = vunpack.c.l.bf16 %v6117
        %v6182 = vunpack.c.l.bf16 %v6118
        %v6183 = vxor.u32 %v6119, 2147483648
        %v6184 = vxor.u32 %v6120, 2147483648
        %v6185 = vxor.u32 %v6121, 2147483648
        %v6186 = vxor.u32 %v6122, 2147483648
        %v6187 = vxor.u32 %v6123, 2147483648
        %v6188 = vxor.u32 %v6124, 2147483648
        %v6189 = vxor.u32 %v6125, 2147483648
        %v6190 = vxor.u32 %v6126, 2147483648
        %v6191 = vxor.u32 %v6127, 2147483648
        %v6192 = vxor.u32 %v6128, 2147483648
        %v6193 = vxor.u32 %v6129, 2147483648
        %v6194 = vxor.u32 %v6130, 2147483648
        %v6195 = vxor.u32 %v6131, 2147483648
        %v6196 = vxor.u32 %v6132, 2147483648
        %v6197 = vxor.u32 %v6133, 2147483648
        %v6198 = vxor.u32 %v6134, 2147483648
        %v6199 = vxor.u32 %v6135, 2147483648
        %v6200 = vxor.u32 %v6136, 2147483648
        %v6201 = vxor.u32 %v6137, 2147483648
        %v6202 = vxor.u32 %v6138, 2147483648
        %v6203 = vxor.u32 %v6139, 2147483648
        %v6204 = vxor.u32 %v6140, 2147483648
        %v6205 = vxor.u32 %v6141, 2147483648
        %v6206 = vxor.u32 %v6142, 2147483648
        %v6207 = vxor.u32 %v6143, 2147483648
        %v6208 = vxor.u32 %v6144, 2147483648
        %v6209 = vxor.u32 %v6145, 2147483648
        %v6210 = vxor.u32 %v6146, 2147483648
        %v6211 = vxor.u32 %v6147, 2147483648
        %v6212 = vxor.u32 %v6148, 2147483648
        %v6213 = vxor.u32 %v6149, 2147483648
        %v6214 = vxor.u32 %v6150, 2147483648
        %v6215 = vxor.u32 %v6151, 2147483648
        %v6216 = vxor.u32 %v6152, 2147483648
        %v6217 = vxor.u32 %v6153, 2147483648
        %v6218 = vxor.u32 %v6154, 2147483648
        %v6219 = vxor.u32 %v6155, 2147483648
        %v6220 = vxor.u32 %v6156, 2147483648
        %v6221 = vxor.u32 %v6157, 2147483648
        %v6222 = vxor.u32 %v6158, 2147483648
        %v6223 = vxor.u32 %v6159, 2147483648
        %v6224 = vxor.u32 %v6160, 2147483648
        %v6225 = vxor.u32 %v6161, 2147483648
        %v6226 = vxor.u32 %v6162, 2147483648
        %v6227 = vxor.u32 %v6163, 2147483648
        %v6228 = vxor.u32 %v6164, 2147483648
        %v6229 = vxor.u32 %v6165, 2147483648
        %v6230 = vxor.u32 %v6166, 2147483648
        %v6231 = vxor.u32 %v6167, 2147483648
        %v6232 = vxor.u32 %v6168, 2147483648
        %v6233 = vxor.u32 %v6169, 2147483648
        %v6234 = vxor.u32 %v6170, 2147483648
        %v6235 = vxor.u32 %v6171, 2147483648
        %v6236 = vxor.u32 %v6172, 2147483648
        %v6237 = vxor.u32 %v6173, 2147483648
        %v6238 = vxor.u32 %v6174, 2147483648
        %v6239 = vxor.u32 %v6175, 2147483648
        %v6240 = vxor.u32 %v6176, 2147483648
        %v6241 = vxor.u32 %v6177, 2147483648
        %v6242 = vxor.u32 %v6178, 2147483648
        %v6243 = vxor.u32 %v6179, 2147483648
        %v6244 = vxor.u32 %v6180, 2147483648
        %v6245 = vxor.u32 %v6181, 2147483648
        %v6246 = vxor.u32 %v6182, 2147483648
        %v6247 = vmul.f32 %v6183, 1.442695
        %v6248 = vpow.pop %v6247
        %v6249 = vmul.f32 %v6184, 1.442695
        %v6250 = vpow.pop %v6249
        %v6251 = vmul.f32 %v6185, 1.442695
        %v6252 = vpow.pop %v6251
        %v6253 = vmul.f32 %v6186, 1.442695
        %v6254 = vpow.pop %v6253
        %v6255 = vmul.f32 %v6187, 1.442695
        %v6256 = vpow.pop %v6255
        %v6257 = vmul.f32 %v6188, 1.442695
        %v6258 = vpow.pop %v6257
        %v6259 = vmul.f32 %v6189, 1.442695
        %v6260 = vpow.pop %v6259
        %v6261 = vmul.f32 %v6190, 1.442695
        %v6262 = vpow.pop %v6261
        %v6263 = vmul.f32 %v6191, 1.442695
        %v6264 = vpow.pop %v6263
        %v6265 = vmul.f32 %v6192, 1.442695
        %v6266 = vpow.pop %v6265
        %v6267 = vmul.f32 %v6193, 1.442695
        %v6268 = vpow.pop %v6267
        %v6269 = vmul.f32 %v6194, 1.442695
        %v6270 = vpow.pop %v6269
        %v6271 = vmul.f32 %v6195, 1.442695
        %v6272 = vpow.pop %v6271
        %v6273 = vmul.f32 %v6196, 1.442695
        %v6274 = vpow.pop %v6273
        %v6275 = vmul.f32 %v6197, 1.442695
        %v6276 = vpow.pop %v6275
        %v6277 = vmul.f32 %v6198, 1.442695
        %v6278 = vpow.pop %v6277
        %v6279 = vmul.f32 %v6199, 1.442695
        %v6280 = vpow.pop %v6279
        %v6281 = vmul.f32 %v6200, 1.442695
        %v6282 = vpow.pop %v6281
        %v6283 = vmul.f32 %v6201, 1.442695
        %v6284 = vpow.pop %v6283
        %v6285 = vmul.f32 %v6202, 1.442695
        %v6286 = vpow.pop %v6285
        %v6287 = vmul.f32 %v6203, 1.442695
        %v6288 = vpow.pop %v6287
        %v6289 = vmul.f32 %v6204, 1.442695
        %v6290 = vpow.pop %v6289
        %v6291 = vmul.f32 %v6205, 1.442695
        %v6292 = vpow.pop %v6291
        %v6293 = vmul.f32 %v6206, 1.442695
        %v6294 = vpow.pop %v6293
        %v6295 = vmul.f32 %v6207, 1.442695
        %v6296 = vpow.pop %v6295
        %v6297 = vmul.f32 %v6208, 1.442695
        %v6298 = vpow.pop %v6297
        %v6299 = vmul.f32 %v6209, 1.442695
        %v6300 = vpow.pop %v6299
        %v6301 = vmul.f32 %v6210, 1.442695
        %v6302 = vpow.pop %v6301
        %v6303 = vmul.f32 %v6211, 1.442695
        %v6304 = vpow.pop %v6303
        %v6305 = vmul.f32 %v6212, 1.442695
        %v6306 = vpow.pop %v6305
        %v6307 = vmul.f32 %v6213, 1.442695
        %v6308 = vpow.pop %v6307
        %v6309 = vmul.f32 %v6214, 1.442695
        %v6310 = vpow.pop %v6309
        %v6311 = vmul.f32 %v6215, 1.442695
        %v6312 = vpow.pop %v6311
        %v6313 = vmul.f32 %v6216, 1.442695
        %v6314 = vpow.pop %v6313
        %v6315 = vmul.f32 %v6217, 1.442695
        %v6316 = vpow.pop %v6315
        %v6317 = vmul.f32 %v6218, 1.442695
        %v6318 = vpow.pop %v6317
        %v6319 = vmul.f32 %v6219, 1.442695
        %v6320 = vpow.pop %v6319
        %v6321 = vmul.f32 %v6220, 1.442695
        %v6322 = vpow.pop %v6321
        %v6323 = vmul.f32 %v6221, 1.442695
        %v6324 = vpow.pop %v6323
        %v6325 = vmul.f32 %v6222, 1.442695
        %v6326 = vpow.pop %v6325
        %v6327 = vmul.f32 %v6223, 1.442695
        %v6328 = vpow.pop %v6327
        %v6329 = vmul.f32 %v6224, 1.442695
        %v6330 = vpow.pop %v6329
        %v6331 = vmul.f32 %v6225, 1.442695
        %v6332 = vpow.pop %v6331
        %v6333 = vmul.f32 %v6226, 1.442695
        %v6334 = vpow.pop %v6333
        %v6335 = vmul.f32 %v6227, 1.442695
        %v6336 = vpow.pop %v6335
        %v6337 = vmul.f32 %v6228, 1.442695
        %v6338 = vpow.pop %v6337
        %v6339 = vmul.f32 %v6229, 1.442695
        %v6340 = vpow.pop %v6339
        %v6341 = vmul.f32 %v6230, 1.442695
        %v6342 = vpow.pop %v6341
        %v6343 = vmul.f32 %v6231, 1.442695
        %v6344 = vpow.pop %v6343
        %v6345 = vmul.f32 %v6232, 1.442695
        %v6346 = vpow.pop %v6345
        %v6347 = vmul.f32 %v6233, 1.442695
        %v6348 = vpow.pop %v6347
        %v6349 = vmul.f32 %v6234, 1.442695
        %v6350 = vpow.pop %v6349
        %v6351 = vmul.f32 %v6235, 1.442695
        %v6352 = vpow.pop %v6351
        %v6353 = vmul.f32 %v6236, 1.442695
        %v6354 = vpow.pop %v6353
        %v6355 = vmul.f32 %v6237, 1.442695
        %v6356 = vpow.pop %v6355
        %v6357 = vmul.f32 %v6238, 1.442695
        %v6358 = vpow.pop %v6357
        %v6359 = vmul.f32 %v6239, 1.442695
        %v6360 = vpow.pop %v6359
        %v6361 = vmul.f32 %v6240, 1.442695
        %v6362 = vpow.pop %v6361
        %v6363 = vmul.f32 %v6241, 1.442695
        %v6364 = vpow.pop %v6363
        %v6365 = vmul.f32 %v6242, 1.442695
        %v6366 = vpow.pop %v6365
        %v6367 = vmul.f32 %v6243, 1.442695
        %v6368 = vpow.pop %v6367
        %v6369 = vmul.f32 %v6244, 1.442695
        %v6370 = vpow.pop %v6369
        %v6371 = vmul.f32 %v6245, 1.442695
        %v6372 = vpow.pop %v6371
        %v6373 = vmul.f32 %v6246, 1.442695
        %v6374 = vpow.pop %v6373
        %v6375 = vadd.f32 %v6248, 1.0
        %v6376 = vadd.f32 %v6250, 1.0
        %v6377 = vadd.f32 %v6252, 1.0
        %v6378 = vadd.f32 %v6254, 1.0
        %v6379 = vadd.f32 %v6256, 1.0
        %v6380 = vadd.f32 %v6258, 1.0
        %v6381 = vadd.f32 %v6260, 1.0
        %v6382 = vadd.f32 %v6262, 1.0
        %v6383 = vadd.f32 %v6264, 1.0
        %v6384 = vadd.f32 %v6266, 1.0
        %v6385 = vadd.f32 %v6268, 1.0
        %v6386 = vadd.f32 %v6270, 1.0
        %v6387 = vadd.f32 %v6272, 1.0
        %v6388 = vadd.f32 %v6274, 1.0
        %v6389 = vadd.f32 %v6276, 1.0
        %v6390 = vadd.f32 %v6278, 1.0
        %v6391 = vadd.f32 %v6280, 1.0
        %v6392 = vadd.f32 %v6282, 1.0
        %v6393 = vadd.f32 %v6284, 1.0
        %v6394 = vadd.f32 %v6286, 1.0
        %v6395 = vadd.f32 %v6288, 1.0
        %v6396 = vadd.f32 %v6290, 1.0
        %v6397 = vadd.f32 %v6292, 1.0
        %v6398 = vadd.f32 %v6294, 1.0
        %v6399 = vadd.f32 %v6296, 1.0
        %v6400 = vadd.f32 %v6298, 1.0
        %v6401 = vadd.f32 %v6300, 1.0
        %v6402 = vadd.f32 %v6302, 1.0
        %v6403 = vadd.f32 %v6304, 1.0
        %v6404 = vadd.f32 %v6306, 1.0
        %v6405 = vadd.f32 %v6308, 1.0
        %v6406 = vadd.f32 %v6310, 1.0
        %v6407 = vadd.f32 %v6312, 1.0
        %v6408 = vadd.f32 %v6314, 1.0
        %v6409 = vadd.f32 %v6316, 1.0
        %v6410 = vadd.f32 %v6318, 1.0
        %v6411 = vadd.f32 %v6320, 1.0
        %v6412 = vadd.f32 %v6322, 1.0
        %v6413 = vadd.f32 %v6324, 1.0
        %v6414 = vadd.f32 %v6326, 1.0
        %v6415 = vadd.f32 %v6328, 1.0
        %v6416 = vadd.f32 %v6330, 1.0
        %v6417 = vadd.f32 %v6332, 1.0
        %v6418 = vadd.f32 %v6334, 1.0
        %v6419 = vadd.f32 %v6336, 1.0
        %v6420 = vadd.f32 %v6338, 1.0
        %v6421 = vadd.f32 %v6340, 1.0
        %v6422 = vadd.f32 %v6342, 1.0
        %v6423 = vadd.f32 %v6344, 1.0
        %v6424 = vadd.f32 %v6346, 1.0
        %v6425 = vadd.f32 %v6348, 1.0
        %v6426 = vadd.f32 %v6350, 1.0
        %v6427 = vadd.f32 %v6352, 1.0
        %v6428 = vadd.f32 %v6354, 1.0
        %v6429 = vadd.f32 %v6356, 1.0
        %v6430 = vadd.f32 %v6358, 1.0
        %v6431 = vadd.f32 %v6360, 1.0
        %v6432 = vadd.f32 %v6362, 1.0
        %v6433 = vadd.f32 %v6364, 1.0
        %v6434 = vadd.f32 %v6366, 1.0
        %v6435 = vadd.f32 %v6368, 1.0
        %v6436 = vadd.f32 %v6370, 1.0
        %v6437 = vadd.f32 %v6372, 1.0
        %v6438 = vadd.f32 %v6374, 1.0
        %v6439 = vrcp.pop %v6375
        %v6440 = vmul.f32 1.0, %v6439
        %v6441 = vrcp.pop %v6376
        %v6442 = vmul.f32 1.0, %v6441
        %v6443 = vrcp.pop %v6377
        %v6444 = vmul.f32 1.0, %v6443
        %v6445 = vrcp.pop %v6378
        %v6446 = vmul.f32 1.0, %v6445
        %v6447 = vrcp.pop %v6379
        %v6448 = vmul.f32 1.0, %v6447
        %v6449 = vrcp.pop %v6380
        %v6450 = vmul.f32 1.0, %v6449
        %v6451 = vrcp.pop %v6381
        %v6452 = vmul.f32 1.0, %v6451
        %v6453 = vrcp.pop %v6382
        %v6454 = vmul.f32 1.0, %v6453
        %v6455 = vrcp.pop %v6383
        %v6456 = vmul.f32 1.0, %v6455
        %v6457 = vrcp.pop %v6384
        %v6458 = vmul.f32 1.0, %v6457
        %v6459 = vrcp.pop %v6385
        %v6460 = vmul.f32 1.0, %v6459
        %v6461 = vrcp.pop %v6386
        %v6462 = vmul.f32 1.0, %v6461
        %v6463 = vrcp.pop %v6387
        %v6464 = vmul.f32 1.0, %v6463
        %v6465 = vrcp.pop %v6388
        %v6466 = vmul.f32 1.0, %v6465
        %v6467 = vrcp.pop %v6389
        %v6468 = vmul.f32 1.0, %v6467
        %v6469 = vrcp.pop %v6390
        %v6470 = vmul.f32 1.0, %v6469
        %v6471 = vrcp.pop %v6391
        %v6472 = vmul.f32 1.0, %v6471
        %v6473 = vrcp.pop %v6392
        %v6474 = vmul.f32 1.0, %v6473
        %v6475 = vrcp.pop %v6393
        %v6476 = vmul.f32 1.0, %v6475
        %v6477 = vrcp.pop %v6394
        %v6478 = vmul.f32 1.0, %v6477
        %v6479 = vrcp.pop %v6395
        %v6480 = vmul.f32 1.0, %v6479
        %v6481 = vrcp.pop %v6396
        %v6482 = vmul.f32 1.0, %v6481
        %v6483 = vrcp.pop %v6397
        %v6484 = vmul.f32 1.0, %v6483
        %v6485 = vrcp.pop %v6398
        %v6486 = vmul.f32 1.0, %v6485
        %v6487 = vrcp.pop %v6399
        %v6488 = vmul.f32 1.0, %v6487
        %v6489 = vrcp.pop %v6400
        %v6490 = vmul.f32 1.0, %v6489
        %v6491 = vrcp.pop %v6401
        %v6492 = vmul.f32 1.0, %v6491
        %v6493 = vrcp.pop %v6402
        %v6494 = vmul.f32 1.0, %v6493
        %v6495 = vrcp.pop %v6403
        %v6496 = vmul.f32 1.0, %v6495
        %v6497 = vrcp.pop %v6404
        %v6498 = vmul.f32 1.0, %v6497
        %v6499 = vrcp.pop %v6405
        %v6500 = vmul.f32 1.0, %v6499
        %v6501 = vrcp.pop %v6406
        %v6502 = vmul.f32 1.0, %v6501
        %v6503 = vrcp.pop %v6407
        %v6504 = vmul.f32 1.0, %v6503
        %v6505 = vrcp.pop %v6408
        %v6506 = vmul.f32 1.0, %v6505
        %v6507 = vrcp.pop %v6409
        %v6508 = vmul.f32 1.0, %v6507
        %v6509 = vrcp.pop %v6410
        %v6510 = vmul.f32 1.0, %v6509
        %v6511 = vrcp.pop %v6411
        %v6512 = vmul.f32 1.0, %v6511
        %v6513 = vrcp.pop %v6412
        %v6514 = vmul.f32 1.0, %v6513
        %v6515 = vrcp.pop %v6413
        %v6516 = vmul.f32 1.0, %v6515
        %v6517 = vrcp.pop %v6414
        %v6518 = vmul.f32 1.0, %v6517
        %v6519 = vrcp.pop %v6415
        %v6520 = vmul.f32 1.0, %v6519
        %v6521 = vrcp.pop %v6416
        %v6522 = vmul.f32 1.0, %v6521
        %v6523 = vrcp.pop %v6417
        %v6524 = vmul.f32 1.0, %v6523
        %v6525 = vrcp.pop %v6418
        %v6526 = vmul.f32 1.0, %v6525
        %v6527 = vrcp.pop %v6419
        %v6528 = vmul.f32 1.0, %v6527
        %v6529 = vrcp.pop %v6420
        %v6530 = vmul.f32 1.0, %v6529
        %v6531 = vrcp.pop %v6421
        %v6532 = vmul.f32 1.0, %v6531
        %v6533 = vrcp.pop %v6422
        %v6534 = vmul.f32 1.0, %v6533
        %v6535 = vrcp.pop %v6423
        %v6536 = vmul.f32 1.0, %v6535
        %v6537 = vrcp.pop %v6424
        %v6538 = vmul.f32 1.0, %v6537
        %v6539 = vrcp.pop %v6425
        %v6540 = vmul.f32 1.0, %v6539
        %v6541 = vrcp.pop %v6426
        %v6542 = vmul.f32 1.0, %v6541
        %v6543 = vrcp.pop %v6427
        %v6544 = vmul.f32 1.0, %v6543
        %v6545 = vrcp.pop %v6428
        %v6546 = vmul.f32 1.0, %v6545
        %v6547 = vrcp.pop %v6429
        %v6548 = vmul.f32 1.0, %v6547
        %v6549 = vrcp.pop %v6430
        %v6550 = vmul.f32 1.0, %v6549
        %v6551 = vrcp.pop %v6431
        %v6552 = vmul.f32 1.0, %v6551
        %v6553 = vrcp.pop %v6432
        %v6554 = vmul.f32 1.0, %v6553
        %v6555 = vrcp.pop %v6433
        %v6556 = vmul.f32 1.0, %v6555
        %v6557 = vrcp.pop %v6434
        %v6558 = vmul.f32 1.0, %v6557
        %v6559 = vrcp.pop %v6435
        %v6560 = vmul.f32 1.0, %v6559
        %v6561 = vrcp.pop %v6436
        %v6562 = vmul.f32 1.0, %v6561
        %v6563 = vrcp.pop %v6437
        %v6564 = vmul.f32 1.0, %v6563
        %v6565 = vrcp.pop %v6438
        %v6566 = vmul.f32 1.0, %v6565
        %v6567 = vld [vmem:[%s194 + $0xe00] sm:$0xff]
        %v6568 = vld [vmem:[%s194 + $0xe08] sm:$0xff]
        %v6569 = vld [vmem:[%s194 + $0xe10] sm:$0xff]
        %v6570 = vld [vmem:[%s194 + $0xe18] sm:$0xff]
        %v6571 = vld [vmem:[%s194 + $0xe20] sm:$0xff]
        %v6572 = vld [vmem:[%s194 + $0xe28] sm:$0xff]
        %v6573 = vld [vmem:[%s194 + $0xe30] sm:$0xff]
        %v6574 = vld [vmem:[%s194 + $0xe38] sm:$0xff]
        %v6575 = vld [vmem:[%s194 + $0xe40] sm:$0xff]
        %v6576 = vld [vmem:[%s194 + $0xe48] sm:$0xff]
        %v6577 = vld [vmem:[%s194 + $0xe50] sm:$0xff]
        %v6578 = vld [vmem:[%s194 + $0xe58] sm:$0xff]
        %v6579 = vld [vmem:[%s194 + $0xe60] sm:$0xff]
        %v6580 = vld [vmem:[%s194 + $0xe68] sm:$0xff]
        %v6581 = vld [vmem:[%s194 + $0xe70] sm:$0xff]
        %v6582 = vld [vmem:[%s194 + $0xe78] sm:$0xff]
        %v6583 = vld [vmem:[%s194 + $0xe80] sm:$0xff]
        %v6584 = vld [vmem:[%s194 + $0xe88] sm:$0xff]
        %v6585 = vld [vmem:[%s194 + $0xe90] sm:$0xff]
        %v6586 = vld [vmem:[%s194 + $0xe98] sm:$0xff]
        %v6587 = vld [vmem:[%s194 + $0xea0] sm:$0xff]
        %v6588 = vld [vmem:[%s194 + $0xea8] sm:$0xff]
        %v6589 = vld [vmem:[%s194 + $0xeb0] sm:$0xff]
        %v6590 = vld [vmem:[%s194 + $0xeb8] sm:$0xff]
        %v6591 = vld [vmem:[%s194 + $0xec0] sm:$0xff]
        %v6592 = vld [vmem:[%s194 + $0xec8] sm:$0xff]
        %v6593 = vld [vmem:[%s194 + $0xed0] sm:$0xff]
        %v6594 = vld [vmem:[%s194 + $0xed8] sm:$0xff]
        %v6595 = vld [vmem:[%s194 + $0xee0] sm:$0xff]
        %v6596 = vld [vmem:[%s194 + $0xee8] sm:$0xff]
        %v6597 = vld [vmem:[%s194 + $0xef0] sm:$0xff]
        %v6598 = vld [vmem:[%s194 + $0xef8] sm:$0xff]
        %v6599 = vld [vmem:[%s194 + $0xf00] sm:$0xff]
        %v6600 = vld [vmem:[%s194 + $0xf08] sm:$0xff]
        %v6601 = vld [vmem:[%s194 + $0xf10] sm:$0xff]
        %v6602 = vld [vmem:[%s194 + $0xf18] sm:$0xff]
        %v6603 = vld [vmem:[%s194 + $0xf20] sm:$0xff]
        %v6604 = vld [vmem:[%s194 + $0xf28] sm:$0xff]
        %v6605 = vld [vmem:[%s194 + $0xf30] sm:$0xff]
        %v6606 = vld [vmem:[%s194 + $0xf38] sm:$0xff]
        %v6607 = vld [vmem:[%s194 + $0xf40] sm:$0xff]
        %v6608 = vld [vmem:[%s194 + $0xf48] sm:$0xff]
        %v6609 = vld [vmem:[%s194 + $0xf50] sm:$0xff]
        %v6610 = vld [vmem:[%s194 + $0xf58] sm:$0xff]
        %v6611 = vld [vmem:[%s194 + $0xf60] sm:$0xff]
        %v6612 = vld [vmem:[%s194 + $0xf68] sm:$0xff]
        %v6613 = vld [vmem:[%s194 + $0xf70] sm:$0xff]
        %v6614 = vld [vmem:[%s194 + $0xf78] sm:$0xff]
        %v6615 = vld [vmem:[%s194 + $0xf80] sm:$0xff]
        %v6616 = vld [vmem:[%s194 + $0xf88] sm:$0xff]
        %v6617 = vld [vmem:[%s194 + $0xf90] sm:$0xff]
        %v6618 = vld [vmem:[%s194 + $0xf98] sm:$0xff]
        %v6619 = vld [vmem:[%s194 + $0xfa0] sm:$0xff]
        %v6620 = vld [vmem:[%s194 + $0xfa8] sm:$0xff]
        %v6621 = vld [vmem:[%s194 + $0xfb0] sm:$0xff]
        %v6622 = vld [vmem:[%s194 + $0xfb8] sm:$0xff]
        %v6623 = vld [vmem:[%s194 + $0xfc0] sm:$0xff]
        %v6624 = vld [vmem:[%s194 + $0xfc8] sm:$0xff]
        %v6625 = vld [vmem:[%s194 + $0xfd0] sm:$0xff]
        %v6626 = vld [vmem:[%s194 + $0xfd8] sm:$0xff]
        %v6627 = vld [vmem:[%s194 + $0xfe0] sm:$0xff]
        %v6628 = vld [vmem:[%s194 + $0xfe8] sm:$0xff]
        %v6629 = vld [vmem:[%s194 + $0xff0] sm:$0xff]
        %v6630 = vld [vmem:[%s194 + $0xff8] sm:$0xff]
        %v6631 = vadd.f32 %v6567, %v6568
        %v6632 = vadd.f32 %v6631, %v6569
        %v6633 = vadd.f32 %v6632, %v6570
        %v6634 = vadd.f32 %v6633, %v6571
        %v6635 = vadd.f32 %v6634, %v6572
        %v6636 = vadd.f32 %v6635, %v6573
        %v6637 = vadd.f32 %v6636, %v6574
        %v6638 = vadd.f32 %v6637, %v6575
        %v6639 = vadd.f32 %v6638, %v6576
        %v6640 = vadd.f32 %v6639, %v6577
        %v6641 = vadd.f32 %v6640, %v6578
        %v6642 = vadd.f32 %v6641, %v6579
        %v6643 = vadd.f32 %v6642, %v6580
        %v6644 = vadd.f32 %v6643, %v6581
        %v6645 = vadd.f32 %v6644, %v6582
        %v6646 = vadd.f32 %v6645, %v6583
        %v6647 = vadd.f32 %v6646, %v6584
        %v6648 = vadd.f32 %v6647, %v6585
        %v6649 = vadd.f32 %v6648, %v6586
        %v6650 = vadd.f32 %v6649, %v6587
        %v6651 = vadd.f32 %v6650, %v6588
        %v6652 = vadd.f32 %v6651, %v6589
        %v6653 = vadd.f32 %v6652, %v6590
        %v6654 = vadd.f32 %v6653, %v6591
        %v6655 = vadd.f32 %v6654, %v6592
        %v6656 = vadd.f32 %v6655, %v6593
        %v6657 = vadd.f32 %v6656, %v6594
        %v6658 = vadd.f32 %v6657, %v6595
        %v6659 = vadd.f32 %v6658, %v6596
        %v6660 = vadd.f32 %v6659, %v6597
        %v6661 = vadd.f32 %v6660, %v6598
        %v6662 = vadd.f32 %v6661, %v6599
        %v6663 = vadd.f32 %v6662, %v6600
        %v6664 = vadd.f32 %v6663, %v6601
        %v6665 = vadd.f32 %v6664, %v6602
        %v6666 = vadd.f32 %v6665, %v6603
        %v6667 = vadd.f32 %v6666, %v6604
        %v6668 = vadd.f32 %v6667, %v6605
        %v6669 = vadd.f32 %v6668, %v6606
        %v6670 = vadd.f32 %v6669, %v6607
        %v6671 = vadd.f32 %v6670, %v6608
        %v6672 = vadd.f32 %v6671, %v6609
        %v6673 = vadd.f32 %v6672, %v6610
        %v6674 = vadd.f32 %v6673, %v6611
        %v6675 = vadd.f32 %v6674, %v6612
        %v6676 = vadd.f32 %v6675, %v6613
        %v6677 = vadd.f32 %v6676, %v6614
        %v6678 = vadd.f32 %v6677, %v6615
        %v6679 = vadd.f32 %v6678, %v6616
        %v6680 = vadd.f32 %v6679, %v6617
        %v6681 = vadd.f32 %v6680, %v6618
        %v6682 = vadd.f32 %v6681, %v6619
        %v6683 = vadd.f32 %v6682, %v6620
        %v6684 = vadd.f32 %v6683, %v6621
        %v6685 = vadd.f32 %v6684, %v6622
        %v6686 = vadd.f32 %v6685, %v6623
        %v6687 = vadd.f32 %v6686, %v6624
        %v6688 = vadd.f32 %v6687, %v6625
        %v6689 = vadd.f32 %v6688, %v6626
        %v6690 = vadd.f32 %v6689, %v6627
        %v6691 = vadd.f32 %v6690, %v6628
        %v6692 = vadd.f32 %v6691, %v6629
        %v6693 = vadd.f32 %v6692, %v6630
        %v6694 = vadd.f32 %v5862, %v6693
        %v6695 = vmul.f32 %v6440, %v6567
        %v6696 = vmul.f32 %v6442, %v6568
        %v6697 = vmul.f32 %v6444, %v6569
        %v6698 = vmul.f32 %v6446, %v6570
        %v6699 = vmul.f32 %v6448, %v6571
        %v6700 = vmul.f32 %v6450, %v6572
        %v6701 = vmul.f32 %v6452, %v6573
        %v6702 = vmul.f32 %v6454, %v6574
        %v6703 = vmul.f32 %v6456, %v6575
        %v6704 = vmul.f32 %v6458, %v6576
        %v6705 = vmul.f32 %v6460, %v6577
        %v6706 = vmul.f32 %v6462, %v6578
        %v6707 = vmul.f32 %v6464, %v6579
        %v6708 = vmul.f32 %v6466, %v6580
        %v6709 = vmul.f32 %v6468, %v6581
        %v6710 = vmul.f32 %v6470, %v6582
        %v6711 = vmul.f32 %v6472, %v6583
        %v6712 = vmul.f32 %v6474, %v6584
        %v6713 = vmul.f32 %v6476, %v6585
        %v6714 = vmul.f32 %v6478, %v6586
        %v6715 = vmul.f32 %v6480, %v6587
        %v6716 = vmul.f32 %v6482, %v6588
        %v6717 = vmul.f32 %v6484, %v6589
        %v6718 = vmul.f32 %v6486, %v6590
        %v6719 = vmul.f32 %v6488, %v6591
        %v6720 = vmul.f32 %v6490, %v6592
        %v6721 = vmul.f32 %v6492, %v6593
        %v6722 = vmul.f32 %v6494, %v6594
        %v6723 = vmul.f32 %v6496, %v6595
        %v6724 = vmul.f32 %v6498, %v6596
        %v6725 = vmul.f32 %v6500, %v6597
        %v6726 = vmul.f32 %v6502, %v6598
        %v6727 = vmul.f32 %v6504, %v6599
        %v6728 = vmul.f32 %v6506, %v6600
        %v6729 = vmul.f32 %v6508, %v6601
        %v6730 = vmul.f32 %v6510, %v6602
        %v6731 = vmul.f32 %v6512, %v6603
        %v6732 = vmul.f32 %v6514, %v6604
        %v6733 = vmul.f32 %v6516, %v6605
        %v6734 = vmul.f32 %v6518, %v6606
        %v6735 = vmul.f32 %v6520, %v6607
        %v6736 = vmul.f32 %v6522, %v6608
        %v6737 = vmul.f32 %v6524, %v6609
        %v6738 = vmul.f32 %v6526, %v6610
        %v6739 = vmul.f32 %v6528, %v6611
        %v6740 = vmul.f32 %v6530, %v6612
        %v6741 = vmul.f32 %v6532, %v6613
        %v6742 = vmul.f32 %v6534, %v6614
        %v6743 = vmul.f32 %v6536, %v6615
        %v6744 = vmul.f32 %v6538, %v6616
        %v6745 = vmul.f32 %v6540, %v6617
        %v6746 = vmul.f32 %v6542, %v6618
        %v6747 = vmul.f32 %v6544, %v6619
        %v6748 = vmul.f32 %v6546, %v6620
        %v6749 = vmul.f32 %v6548, %v6621
        %v6750 = vmul.f32 %v6550, %v6622
        %v6751 = vmul.f32 %v6552, %v6623
        %v6752 = vmul.f32 %v6554, %v6624
        %v6753 = vmul.f32 %v6556, %v6625
        %v6754 = vmul.f32 %v6558, %v6626
        %v6755 = vmul.f32 %v6560, %v6627
        %v6756 = vmul.f32 %v6562, %v6628
        %v6757 = vmul.f32 %v6564, %v6629
        %v6758 = vmul.f32 %v6566, %v6630
        %v6759 = vadd.f32 %v6695, %v6696
        %v6760 = vadd.f32 %v6759, %v6697
        %v6761 = vadd.f32 %v6760, %v6698
        %v6762 = vadd.f32 %v6761, %v6699
        %v6763 = vadd.f32 %v6762, %v6700
        %v6764 = vadd.f32 %v6763, %v6701
        %v6765 = vadd.f32 %v6764, %v6702
        %v6766 = vadd.f32 %v6765, %v6703
        %v6767 = vadd.f32 %v6766, %v6704
        %v6768 = vadd.f32 %v6767, %v6705
        %v6769 = vadd.f32 %v6768, %v6706
        %v6770 = vadd.f32 %v6769, %v6707
        %v6771 = vadd.f32 %v6770, %v6708
        %v6772 = vadd.f32 %v6771, %v6709
        %v6773 = vadd.f32 %v6772, %v6710
        %v6774 = vadd.f32 %v6773, %v6711
        %v6775 = vadd.f32 %v6774, %v6712
        %v6776 = vadd.f32 %v6775, %v6713
        %v6777 = vadd.f32 %v6776, %v6714
        %v6778 = vadd.f32 %v6777, %v6715
        %v6779 = vadd.f32 %v6778, %v6716
        %v6780 = vadd.f32 %v6779, %v6717
        %v6781 = vadd.f32 %v6780, %v6718
        %v6782 = vadd.f32 %v6781, %v6719
        %v6783 = vadd.f32 %v6782, %v6720
        %v6784 = vadd.f32 %v6783, %v6721
        %v6785 = vadd.f32 %v6784, %v6722
        %v6786 = vadd.f32 %v6785, %v6723
        %v6787 = vadd.f32 %v6786, %v6724
        %v6788 = vadd.f32 %v6787, %v6725
        %v6789 = vadd.f32 %v6788, %v6726
        %v6790 = vadd.f32 %v6789, %v6727
        %v6791 = vadd.f32 %v6790, %v6728
        %v6792 = vadd.f32 %v6791, %v6729
        %v6793 = vadd.f32 %v6792, %v6730
        %v6794 = vadd.f32 %v6793, %v6731
        %v6795 = vadd.f32 %v6794, %v6732
        %v6796 = vadd.f32 %v6795, %v6733
        %v6797 = vadd.f32 %v6796, %v6734
        %v6798 = vadd.f32 %v6797, %v6735
        %v6799 = vadd.f32 %v6798, %v6736
        %v6800 = vadd.f32 %v6799, %v6737
        %v6801 = vadd.f32 %v6800, %v6738
        %v6802 = vadd.f32 %v6801, %v6739
        %v6803 = vadd.f32 %v6802, %v6740
        %v6804 = vadd.f32 %v6803, %v6741
        %v6805 = vadd.f32 %v6804, %v6742
        %v6806 = vadd.f32 %v6805, %v6743
        %v6807 = vadd.f32 %v6806, %v6744
        %v6808 = vadd.f32 %v6807, %v6745
        %v6809 = vadd.f32 %v6808, %v6746
        %v6810 = vadd.f32 %v6809, %v6747
        %v6811 = vadd.f32 %v6810, %v6748
        %v6812 = vadd.f32 %v6811, %v6749
        %v6813 = vadd.f32 %v6812, %v6750
        %v6814 = vadd.f32 %v6813, %v6751
        %v6815 = vadd.f32 %v6814, %v6752
        %v6816 = vadd.f32 %v6815, %v6753
        %v6817 = vadd.f32 %v6816, %v6754
        %v6818 = vadd.f32 %v6817, %v6755
        %v6819 = vadd.f32 %v6818, %v6756
        %v6820 = vadd.f32 %v6819, %v6757
        %v6821 = vadd.f32 %v6820, %v6758
        %v6822 = vadd.f32 %v5990, %v6821
        %v6823 = vadd.f32 %v6440, %v6442
        %v6824 = vadd.f32 %v6823, %v6444
        %v6825 = vadd.f32 %v6824, %v6446
        %v6826 = vadd.f32 %v6825, %v6448
        %v6827 = vadd.f32 %v6826, %v6450
        %v6828 = vadd.f32 %v6827, %v6452
        %v6829 = vadd.f32 %v6828, %v6454
        %v6830 = vadd.f32 %v6829, %v6456
        %v6831 = vadd.f32 %v6830, %v6458
        %v6832 = vadd.f32 %v6831, %v6460
        %v6833 = vadd.f32 %v6832, %v6462
        %v6834 = vadd.f32 %v6833, %v6464
        %v6835 = vadd.f32 %v6834, %v6466
        %v6836 = vadd.f32 %v6835, %v6468
        %v6837 = vadd.f32 %v6836, %v6470
        %v6838 = vadd.f32 %v6837, %v6472
        %v6839 = vadd.f32 %v6838, %v6474
        %v6840 = vadd.f32 %v6839, %v6476
        %v6841 = vadd.f32 %v6840, %v6478
        %v6842 = vadd.f32 %v6841, %v6480
        %v6843 = vadd.f32 %v6842, %v6482
        %v6844 = vadd.f32 %v6843, %v6484
        %v6845 = vadd.f32 %v6844, %v6486
        %v6846 = vadd.f32 %v6845, %v6488
        %v6847 = vadd.f32 %v6846, %v6490
        %v6848 = vadd.f32 %v6847, %v6492
        %v6849 = vadd.f32 %v6848, %v6494
        %v6850 = vadd.f32 %v6849, %v6496
        %v6851 = vadd.f32 %v6850, %v6498
        %v6852 = vadd.f32 %v6851, %v6500
        %v6853 = vadd.f32 %v6852, %v6502
        %v6854 = vadd.f32 %v6853, %v6504
        %v6855 = vadd.f32 %v6854, %v6506
        %v6856 = vadd.f32 %v6855, %v6508
        %v6857 = vadd.f32 %v6856, %v6510
        %v6858 = vadd.f32 %v6857, %v6512
        %v6859 = vadd.f32 %v6858, %v6514
        %v6860 = vadd.f32 %v6859, %v6516
        %v6861 = vadd.f32 %v6860, %v6518
        %v6862 = vadd.f32 %v6861, %v6520
        %v6863 = vadd.f32 %v6862, %v6522
        %v6864 = vadd.f32 %v6863, %v6524
        %v6865 = vadd.f32 %v6864, %v6526
        %v6866 = vadd.f32 %v6865, %v6528
        %v6867 = vadd.f32 %v6866, %v6530
        %v6868 = vadd.f32 %v6867, %v6532
        %v6869 = vadd.f32 %v6868, %v6534
        %v6870 = vadd.f32 %v6869, %v6536
        %v6871 = vadd.f32 %v6870, %v6538
        %v6872 = vadd.f32 %v6871, %v6540
        %v6873 = vadd.f32 %v6872, %v6542
        %v6874 = vadd.f32 %v6873, %v6544
        %v6875 = vadd.f32 %v6874, %v6546
        %v6876 = vadd.f32 %v6875, %v6548
        %v6877 = vadd.f32 %v6876, %v6550
        %v6878 = vadd.f32 %v6877, %v6552
        %v6879 = vadd.f32 %v6878, %v6554
        %v6880 = vadd.f32 %v6879, %v6556
        %v6881 = vadd.f32 %v6880, %v6558
        %v6882 = vadd.f32 %v6881, %v6560
        %v6883 = vadd.f32 %v6882, %v6562
        %v6884 = vadd.f32 %v6883, %v6564
        %v6885 = vadd.f32 %v6884, %v6566
        %v6886 = vadd.f32 %v6054, %v6885
        %v6887 = vld [vmem:[%s185 + $0x800] sm:$0xf]
        %v6888 = vld [vmem:[%s185 + $0x804] sm:$0xf]
        %v6889 = vld [vmem:[%s185 + $0x808] sm:$0xf]
        %v6890 = vld [vmem:[%s185 + $0x80c] sm:$0xf]
        %v6891 = vld [vmem:[%s185 + $0x810] sm:$0xf]
        %v6892 = vld [vmem:[%s185 + $0x814] sm:$0xf]
        %v6893 = vld [vmem:[%s185 + $0x818] sm:$0xf]
        %v6894 = vld [vmem:[%s185 + $0x81c] sm:$0xf]
        %v6895 = vld [vmem:[%s185 + $0x820] sm:$0xf]
        %v6896 = vld [vmem:[%s185 + $0x824] sm:$0xf]
        %v6897 = vld [vmem:[%s185 + $0x828] sm:$0xf]
        %v6898 = vld [vmem:[%s185 + $0x82c] sm:$0xf]
        %v6899 = vld [vmem:[%s185 + $0x830] sm:$0xf]
        %v6900 = vld [vmem:[%s185 + $0x834] sm:$0xf]
        %v6901 = vld [vmem:[%s185 + $0x838] sm:$0xf]
        %v6902 = vld [vmem:[%s185 + $0x83c] sm:$0xf]
        %v6903 = vld [vmem:[%s185 + $0x840] sm:$0xf]
        %v6904 = vld [vmem:[%s185 + $0x844] sm:$0xf]
        %v6905 = vld [vmem:[%s185 + $0x848] sm:$0xf]
        %v6906 = vld [vmem:[%s185 + $0x84c] sm:$0xf]
        %v6907 = vld [vmem:[%s185 + $0x850] sm:$0xf]
        %v6908 = vld [vmem:[%s185 + $0x854] sm:$0xf]
        %v6909 = vld [vmem:[%s185 + $0x858] sm:$0xf]
        %v6910 = vld [vmem:[%s185 + $0x85c] sm:$0xf]
        %v6911 = vld [vmem:[%s185 + $0x860] sm:$0xf]
        %v6912 = vld [vmem:[%s185 + $0x864] sm:$0xf]
        %v6913 = vld [vmem:[%s185 + $0x868] sm:$0xf]
        %v6914 = vld [vmem:[%s185 + $0x86c] sm:$0xf]
        %v6915 = vld [vmem:[%s185 + $0x870] sm:$0xf]
        %v6916 = vld [vmem:[%s185 + $0x874] sm:$0xf]
        %v6917 = vld [vmem:[%s185 + $0x878] sm:$0xf]
        %v6918 = vld [vmem:[%s185 + $0x87c] sm:$0xf]
        %v6919 = vld [vmem:[%s185 + $0x880] sm:$0xf]
        %v6920 = vld [vmem:[%s185 + $0x884] sm:$0xf]
        %v6921 = vld [vmem:[%s185 + $0x888] sm:$0xf]
        %v6922 = vld [vmem:[%s185 + $0x88c] sm:$0xf]
        %v6923 = vld [vmem:[%s185 + $0x890] sm:$0xf]
        %v6924 = vld [vmem:[%s185 + $0x894] sm:$0xf]
        %v6925 = vld [vmem:[%s185 + $0x898] sm:$0xf]
        %v6926 = vld [vmem:[%s185 + $0x89c] sm:$0xf]
        %v6927 = vld [vmem:[%s185 + $0x8a0] sm:$0xf]
        %v6928 = vld [vmem:[%s185 + $0x8a4] sm:$0xf]
        %v6929 = vld [vmem:[%s185 + $0x8a8] sm:$0xf]
        %v6930 = vld [vmem:[%s185 + $0x8ac] sm:$0xf]
        %v6931 = vld [vmem:[%s185 + $0x8b0] sm:$0xf]
        %v6932 = vld [vmem:[%s185 + $0x8b4] sm:$0xf]
        %v6933 = vld [vmem:[%s185 + $0x8b8] sm:$0xf]
        %v6934 = vld [vmem:[%s185 + $0x8bc] sm:$0xf]
        %v6935 = vld [vmem:[%s185 + $0x8c0] sm:$0xf]
        %v6936 = vld [vmem:[%s185 + $0x8c4] sm:$0xf]
        %v6937 = vld [vmem:[%s185 + $0x8c8] sm:$0xf]
        %v6938 = vld [vmem:[%s185 + $0x8cc] sm:$0xf]
        %v6939 = vld [vmem:[%s185 + $0x8d0] sm:$0xf]
        %v6940 = vld [vmem:[%s185 + $0x8d4] sm:$0xf]
        %v6941 = vld [vmem:[%s185 + $0x8d8] sm:$0xf]
        %v6942 = vld [vmem:[%s185 + $0x8dc] sm:$0xf]
        %v6943 = vld [vmem:[%s185 + $0x8e0] sm:$0xf]
        %v6944 = vld [vmem:[%s185 + $0x8e4] sm:$0xf]
        %v6945 = vld [vmem:[%s185 + $0x8e8] sm:$0xf]
        %v6946 = vld [vmem:[%s185 + $0x8ec] sm:$0xf]
        %v6947 = vld [vmem:[%s185 + $0x8f0] sm:$0xf]
        %v6948 = vld [vmem:[%s185 + $0x8f4] sm:$0xf]
        %v6949 = vld [vmem:[%s185 + $0x8f8] sm:$0xf]
        %v6950 = vld [vmem:[%s185 + $0x8fc] sm:$0xf]
        %v6951 = vunpack.c.l.bf16 %v6887
        %v6952 = vunpack.c.l.bf16 %v6888
        %v6953 = vunpack.c.l.bf16 %v6889
        %v6954 = vunpack.c.l.bf16 %v6890
        %v6955 = vunpack.c.l.bf16 %v6891
        %v6956 = vunpack.c.l.bf16 %v6892
        %v6957 = vunpack.c.l.bf16 %v6893
        %v6958 = vunpack.c.l.bf16 %v6894
        %v6959 = vunpack.c.l.bf16 %v6895
        %v6960 = vunpack.c.l.bf16 %v6896
        %v6961 = vunpack.c.l.bf16 %v6897
        %v6962 = vunpack.c.l.bf16 %v6898
        %v6963 = vunpack.c.l.bf16 %v6899
        %v6964 = vunpack.c.l.bf16 %v6900
        %v6965 = vunpack.c.l.bf16 %v6901
        %v6966 = vunpack.c.l.bf16 %v6902
        %v6967 = vunpack.c.l.bf16 %v6903
        %v6968 = vunpack.c.l.bf16 %v6904
        %v6969 = vunpack.c.l.bf16 %v6905
        %v6970 = vunpack.c.l.bf16 %v6906
        %v6971 = vunpack.c.l.bf16 %v6907
        %v6972 = vunpack.c.l.bf16 %v6908
        %v6973 = vunpack.c.l.bf16 %v6909
        %v6974 = vunpack.c.l.bf16 %v6910
        %v6975 = vunpack.c.l.bf16 %v6911
        %v6976 = vunpack.c.l.bf16 %v6912
        %v6977 = vunpack.c.l.bf16 %v6913
        %v6978 = vunpack.c.l.bf16 %v6914
        %v6979 = vunpack.c.l.bf16 %v6915
        %v6980 = vunpack.c.l.bf16 %v6916
        %v6981 = vunpack.c.l.bf16 %v6917
        %v6982 = vunpack.c.l.bf16 %v6918
        %v6983 = vunpack.c.l.bf16 %v6919
        %v6984 = vunpack.c.l.bf16 %v6920
        %v6985 = vunpack.c.l.bf16 %v6921
        %v6986 = vunpack.c.l.bf16 %v6922
        %v6987 = vunpack.c.l.bf16 %v6923
        %v6988 = vunpack.c.l.bf16 %v6924
        %v6989 = vunpack.c.l.bf16 %v6925
        %v6990 = vunpack.c.l.bf16 %v6926
        %v6991 = vunpack.c.l.bf16 %v6927
        %v6992 = vunpack.c.l.bf16 %v6928
        %v6993 = vunpack.c.l.bf16 %v6929
        %v6994 = vunpack.c.l.bf16 %v6930
        %v6995 = vunpack.c.l.bf16 %v6931
        %v6996 = vunpack.c.l.bf16 %v6932
        %v6997 = vunpack.c.l.bf16 %v6933
        %v6998 = vunpack.c.l.bf16 %v6934
        %v6999 = vunpack.c.l.bf16 %v6935
        %v7000 = vunpack.c.l.bf16 %v6936
        %v7001 = vunpack.c.l.bf16 %v6937
        %v7002 = vunpack.c.l.bf16 %v6938
        %v7003 = vunpack.c.l.bf16 %v6939
        %v7004 = vunpack.c.l.bf16 %v6940
        %v7005 = vunpack.c.l.bf16 %v6941
        %v7006 = vunpack.c.l.bf16 %v6942
        %v7007 = vunpack.c.l.bf16 %v6943
        %v7008 = vunpack.c.l.bf16 %v6944
        %v7009 = vunpack.c.l.bf16 %v6945
        %v7010 = vunpack.c.l.bf16 %v6946
        %v7011 = vunpack.c.l.bf16 %v6947
        %v7012 = vunpack.c.l.bf16 %v6948
        %v7013 = vunpack.c.l.bf16 %v6949
        %v7014 = vunpack.c.l.bf16 %v6950
        %v7015 = vxor.u32 %v6951, 2147483648
        %v7016 = vxor.u32 %v6952, 2147483648
        %v7017 = vxor.u32 %v6953, 2147483648
        %v7018 = vxor.u32 %v6954, 2147483648
        %v7019 = vxor.u32 %v6955, 2147483648
        %v7020 = vxor.u32 %v6956, 2147483648
        %v7021 = vxor.u32 %v6957, 2147483648
        %v7022 = vxor.u32 %v6958, 2147483648
        %v7023 = vxor.u32 %v6959, 2147483648
        %v7024 = vxor.u32 %v6960, 2147483648
        %v7025 = vxor.u32 %v6961, 2147483648
        %v7026 = vxor.u32 %v6962, 2147483648
        %v7027 = vxor.u32 %v6963, 2147483648
        %v7028 = vxor.u32 %v6964, 2147483648
        %v7029 = vxor.u32 %v6965, 2147483648
        %v7030 = vxor.u32 %v6966, 2147483648
        %v7031 = vxor.u32 %v6967, 2147483648
        %v7032 = vxor.u32 %v6968, 2147483648
        %v7033 = vxor.u32 %v6969, 2147483648
        %v7034 = vxor.u32 %v6970, 2147483648
        %v7035 = vxor.u32 %v6971, 2147483648
        %v7036 = vxor.u32 %v6972, 2147483648
        %v7037 = vxor.u32 %v6973, 2147483648
        %v7038 = vxor.u32 %v6974, 2147483648
        %v7039 = vxor.u32 %v6975, 2147483648
        %v7040 = vxor.u32 %v6976, 2147483648
        %v7041 = vxor.u32 %v6977, 2147483648
        %v7042 = vxor.u32 %v6978, 2147483648
        %v7043 = vxor.u32 %v6979, 2147483648
        %v7044 = vxor.u32 %v6980, 2147483648
        %v7045 = vxor.u32 %v6981, 2147483648
        %v7046 = vxor.u32 %v6982, 2147483648
        %v7047 = vxor.u32 %v6983, 2147483648
        %v7048 = vxor.u32 %v6984, 2147483648
        %v7049 = vxor.u32 %v6985, 2147483648
        %v7050 = vxor.u32 %v6986, 2147483648
        %v7051 = vxor.u32 %v6987, 2147483648
        %v7052 = vxor.u32 %v6988, 2147483648
        %v7053 = vxor.u32 %v6989, 2147483648
        %v7054 = vxor.u32 %v6990, 2147483648
        %v7055 = vxor.u32 %v6991, 2147483648
        %v7056 = vxor.u32 %v6992, 2147483648
        %v7057 = vxor.u32 %v6993, 2147483648
        %v7058 = vxor.u32 %v6994, 2147483648
        %v7059 = vxor.u32 %v6995, 2147483648
        %v7060 = vxor.u32 %v6996, 2147483648
        %v7061 = vxor.u32 %v6997, 2147483648
        %v7062 = vxor.u32 %v6998, 2147483648
        %v7063 = vxor.u32 %v6999, 2147483648
        %v7064 = vxor.u32 %v7000, 2147483648
        %v7065 = vxor.u32 %v7001, 2147483648
        %v7066 = vxor.u32 %v7002, 2147483648
        %v7067 = vxor.u32 %v7003, 2147483648
        %v7068 = vxor.u32 %v7004, 2147483648
        %v7069 = vxor.u32 %v7005, 2147483648
        %v7070 = vxor.u32 %v7006, 2147483648
        %v7071 = vxor.u32 %v7007, 2147483648
        %v7072 = vxor.u32 %v7008, 2147483648
        %v7073 = vxor.u32 %v7009, 2147483648
        %v7074 = vxor.u32 %v7010, 2147483648
        %v7075 = vxor.u32 %v7011, 2147483648
        %v7076 = vxor.u32 %v7012, 2147483648
        %v7077 = vxor.u32 %v7013, 2147483648
        %v7078 = vxor.u32 %v7014, 2147483648
        %v7079 = vmul.f32 %v7015, 1.442695
        %v7080 = vpow.pop %v7079
        %v7081 = vmul.f32 %v7016, 1.442695
        %v7082 = vpow.pop %v7081
        %v7083 = vmul.f32 %v7017, 1.442695
        %v7084 = vpow.pop %v7083
        %v7085 = vmul.f32 %v7018, 1.442695
        %v7086 = vpow.pop %v7085
        %v7087 = vmul.f32 %v7019, 1.442695
        %v7088 = vpow.pop %v7087
        %v7089 = vmul.f32 %v7020, 1.442695
        %v7090 = vpow.pop %v7089
        %v7091 = vmul.f32 %v7021, 1.442695
        %v7092 = vpow.pop %v7091
        %v7093 = vmul.f32 %v7022, 1.442695
        %v7094 = vpow.pop %v7093
        %v7095 = vmul.f32 %v7023, 1.442695
        %v7096 = vpow.pop %v7095
        %v7097 = vmul.f32 %v7024, 1.442695
        %v7098 = vpow.pop %v7097
        %v7099 = vmul.f32 %v7025, 1.442695
        %v7100 = vpow.pop %v7099
        %v7101 = vmul.f32 %v7026, 1.442695
        %v7102 = vpow.pop %v7101
        %v7103 = vmul.f32 %v7027, 1.442695
        %v7104 = vpow.pop %v7103
        %v7105 = vmul.f32 %v7028, 1.442695
        %v7106 = vpow.pop %v7105
        %v7107 = vmul.f32 %v7029, 1.442695
        %v7108 = vpow.pop %v7107
        %v7109 = vmul.f32 %v7030, 1.442695
        %v7110 = vpow.pop %v7109
        %v7111 = vmul.f32 %v7031, 1.442695
        %v7112 = vpow.pop %v7111
        %v7113 = vmul.f32 %v7032, 1.442695
        %v7114 = vpow.pop %v7113
        %v7115 = vmul.f32 %v7033, 1.442695
        %v7116 = vpow.pop %v7115
        %v7117 = vmul.f32 %v7034, 1.442695
        %v7118 = vpow.pop %v7117
        %v7119 = vmul.f32 %v7035, 1.442695
        %v7120 = vpow.pop %v7119
        %v7121 = vmul.f32 %v7036, 1.442695
        %v7122 = vpow.pop %v7121
        %v7123 = vmul.f32 %v7037, 1.442695
        %v7124 = vpow.pop %v7123
        %v7125 = vmul.f32 %v7038, 1.442695
        %v7126 = vpow.pop %v7125
        %v7127 = vmul.f32 %v7039, 1.442695
        %v7128 = vpow.pop %v7127
        %v7129 = vmul.f32 %v7040, 1.442695
        %v7130 = vpow.pop %v7129
        %v7131 = vmul.f32 %v7041, 1.442695
        %v7132 = vpow.pop %v7131
        %v7133 = vmul.f32 %v7042, 1.442695
        %v7134 = vpow.pop %v7133
        %v7135 = vmul.f32 %v7043, 1.442695
        %v7136 = vpow.pop %v7135
        %v7137 = vmul.f32 %v7044, 1.442695
        %v7138 = vpow.pop %v7137
        %v7139 = vmul.f32 %v7045, 1.442695
        %v7140 = vpow.pop %v7139
        %v7141 = vmul.f32 %v7046, 1.442695
        %v7142 = vpow.pop %v7141
        %v7143 = vmul.f32 %v7047, 1.442695
        %v7144 = vpow.pop %v7143
        %v7145 = vmul.f32 %v7048, 1.442695
        %v7146 = vpow.pop %v7145
        %v7147 = vmul.f32 %v7049, 1.442695
        %v7148 = vpow.pop %v7147
        %v7149 = vmul.f32 %v7050, 1.442695
        %v7150 = vpow.pop %v7149
        %v7151 = vmul.f32 %v7051, 1.442695
        %v7152 = vpow.pop %v7151
        %v7153 = vmul.f32 %v7052, 1.442695
        %v7154 = vpow.pop %v7153
        %v7155 = vmul.f32 %v7053, 1.442695
        %v7156 = vpow.pop %v7155
        %v7157 = vmul.f32 %v7054, 1.442695
        %v7158 = vpow.pop %v7157
        %v7159 = vmul.f32 %v7055, 1.442695
        %v7160 = vpow.pop %v7159
        %v7161 = vmul.f32 %v7056, 1.442695
        %v7162 = vpow.pop %v7161
        %v7163 = vmul.f32 %v7057, 1.442695
        %v7164 = vpow.pop %v7163
        %v7165 = vmul.f32 %v7058, 1.442695
        %v7166 = vpow.pop %v7165
        %v7167 = vmul.f32 %v7059, 1.442695
        %v7168 = vpow.pop %v7167
        %v7169 = vmul.f32 %v7060, 1.442695
        %v7170 = vpow.pop %v7169
        %v7171 = vmul.f32 %v7061, 1.442695
        %v7172 = vpow.pop %v7171
        %v7173 = vmul.f32 %v7062, 1.442695
        %v7174 = vpow.pop %v7173
        %v7175 = vmul.f32 %v7063, 1.442695
        %v7176 = vpow.pop %v7175
        %v7177 = vmul.f32 %v7064, 1.442695
        %v7178 = vpow.pop %v7177
        %v7179 = vmul.f32 %v7065, 1.442695
        %v7180 = vpow.pop %v7179
        %v7181 = vmul.f32 %v7066, 1.442695
        %v7182 = vpow.pop %v7181
        %v7183 = vmul.f32 %v7067, 1.442695
        %v7184 = vpow.pop %v7183
        %v7185 = vmul.f32 %v7068, 1.442695
        %v7186 = vpow.pop %v7185
        %v7187 = vmul.f32 %v7069, 1.442695
        %v7188 = vpow.pop %v7187
        %v7189 = vmul.f32 %v7070, 1.442695
        %v7190 = vpow.pop %v7189
        %v7191 = vmul.f32 %v7071, 1.442695
        %v7192 = vpow.pop %v7191
        %v7193 = vmul.f32 %v7072, 1.442695
        %v7194 = vpow.pop %v7193
        %v7195 = vmul.f32 %v7073, 1.442695
        %v7196 = vpow.pop %v7195
        %v7197 = vmul.f32 %v7074, 1.442695
        %v7198 = vpow.pop %v7197
        %v7199 = vmul.f32 %v7075, 1.442695
        %v7200 = vpow.pop %v7199
        %v7201 = vmul.f32 %v7076, 1.442695
        %v7202 = vpow.pop %v7201
        %v7203 = vmul.f32 %v7077, 1.442695
        %v7204 = vpow.pop %v7203
        %v7205 = vmul.f32 %v7078, 1.442695
        %v7206 = vpow.pop %v7205
        %v7207 = vadd.f32 %v7080, 1.0
        %v7208 = vadd.f32 %v7082, 1.0
        %v7209 = vadd.f32 %v7084, 1.0
        %v7210 = vadd.f32 %v7086, 1.0
        %v7211 = vadd.f32 %v7088, 1.0
        %v7212 = vadd.f32 %v7090, 1.0
        %v7213 = vadd.f32 %v7092, 1.0
        %v7214 = vadd.f32 %v7094, 1.0
        %v7215 = vadd.f32 %v7096, 1.0
        %v7216 = vadd.f32 %v7098, 1.0
        %v7217 = vadd.f32 %v7100, 1.0
        %v7218 = vadd.f32 %v7102, 1.0
        %v7219 = vadd.f32 %v7104, 1.0
        %v7220 = vadd.f32 %v7106, 1.0
        %v7221 = vadd.f32 %v7108, 1.0
        %v7222 = vadd.f32 %v7110, 1.0
        %v7223 = vadd.f32 %v7112, 1.0
        %v7224 = vadd.f32 %v7114, 1.0
        %v7225 = vadd.f32 %v7116, 1.0
        %v7226 = vadd.f32 %v7118, 1.0
        %v7227 = vadd.f32 %v7120, 1.0
        %v7228 = vadd.f32 %v7122, 1.0
        %v7229 = vadd.f32 %v7124, 1.0
        %v7230 = vadd.f32 %v7126, 1.0
        %v7231 = vadd.f32 %v7128, 1.0
        %v7232 = vadd.f32 %v7130, 1.0
        %v7233 = vadd.f32 %v7132, 1.0
        %v7234 = vadd.f32 %v7134, 1.0
        %v7235 = vadd.f32 %v7136, 1.0
        %v7236 = vadd.f32 %v7138, 1.0
        %v7237 = vadd.f32 %v7140, 1.0
        %v7238 = vadd.f32 %v7142, 1.0
        %v7239 = vadd.f32 %v7144, 1.0
        %v7240 = vadd.f32 %v7146, 1.0
        %v7241 = vadd.f32 %v7148, 1.0
        %v7242 = vadd.f32 %v7150, 1.0
        %v7243 = vadd.f32 %v7152, 1.0
        %v7244 = vadd.f32 %v7154, 1.0
        %v7245 = vadd.f32 %v7156, 1.0
        %v7246 = vadd.f32 %v7158, 1.0
        %v7247 = vadd.f32 %v7160, 1.0
        %v7248 = vadd.f32 %v7162, 1.0
        %v7249 = vadd.f32 %v7164, 1.0
        %v7250 = vadd.f32 %v7166, 1.0
        %v7251 = vadd.f32 %v7168, 1.0
        %v7252 = vadd.f32 %v7170, 1.0
        %v7253 = vadd.f32 %v7172, 1.0
        %v7254 = vadd.f32 %v7174, 1.0
        %v7255 = vadd.f32 %v7176, 1.0
        %v7256 = vadd.f32 %v7178, 1.0
        %v7257 = vadd.f32 %v7180, 1.0
        %v7258 = vadd.f32 %v7182, 1.0
        %v7259 = vadd.f32 %v7184, 1.0
        %v7260 = vadd.f32 %v7186, 1.0
        %v7261 = vadd.f32 %v7188, 1.0
        %v7262 = vadd.f32 %v7190, 1.0
        %v7263 = vadd.f32 %v7192, 1.0
        %v7264 = vadd.f32 %v7194, 1.0
        %v7265 = vadd.f32 %v7196, 1.0
        %v7266 = vadd.f32 %v7198, 1.0
        %v7267 = vadd.f32 %v7200, 1.0
        %v7268 = vadd.f32 %v7202, 1.0
        %v7269 = vadd.f32 %v7204, 1.0
        %v7270 = vadd.f32 %v7206, 1.0
        %v7271 = vrcp.pop %v7207
        %v7272 = vmul.f32 1.0, %v7271
        %v7273 = vrcp.pop %v7208
        %v7274 = vmul.f32 1.0, %v7273
        %v7275 = vrcp.pop %v7209
        %v7276 = vmul.f32 1.0, %v7275
        %v7277 = vrcp.pop %v7210
        %v7278 = vmul.f32 1.0, %v7277
        %v7279 = vrcp.pop %v7211
        %v7280 = vmul.f32 1.0, %v7279
        %v7281 = vrcp.pop %v7212
        %v7282 = vmul.f32 1.0, %v7281
        %v7283 = vrcp.pop %v7213
        %v7284 = vmul.f32 1.0, %v7283
        %v7285 = vrcp.pop %v7214
        %v7286 = vmul.f32 1.0, %v7285
        %v7287 = vrcp.pop %v7215
        %v7288 = vmul.f32 1.0, %v7287
        %v7289 = vrcp.pop %v7216
        %v7290 = vmul.f32 1.0, %v7289
        %v7291 = vrcp.pop %v7217
        %v7292 = vmul.f32 1.0, %v7291
        %v7293 = vrcp.pop %v7218
        %v7294 = vmul.f32 1.0, %v7293
        %v7295 = vrcp.pop %v7219
        %v7296 = vmul.f32 1.0, %v7295
        %v7297 = vrcp.pop %v7220
        %v7298 = vmul.f32 1.0, %v7297
        %v7299 = vrcp.pop %v7221
        %v7300 = vmul.f32 1.0, %v7299
        %v7301 = vrcp.pop %v7222
        %v7302 = vmul.f32 1.0, %v7301
        %v7303 = vrcp.pop %v7223
        %v7304 = vmul.f32 1.0, %v7303
        %v7305 = vrcp.pop %v7224
        %v7306 = vmul.f32 1.0, %v7305
        %v7307 = vrcp.pop %v7225
        %v7308 = vmul.f32 1.0, %v7307
        %v7309 = vrcp.pop %v7226
        %v7310 = vmul.f32 1.0, %v7309
        %v7311 = vrcp.pop %v7227
        %v7312 = vmul.f32 1.0, %v7311
        %v7313 = vrcp.pop %v7228
        %v7314 = vmul.f32 1.0, %v7313
        %v7315 = vrcp.pop %v7229
        %v7316 = vmul.f32 1.0, %v7315
        %v7317 = vrcp.pop %v7230
        %v7318 = vmul.f32 1.0, %v7317
        %v7319 = vrcp.pop %v7231
        %v7320 = vmul.f32 1.0, %v7319
        %v7321 = vrcp.pop %v7232
        %v7322 = vmul.f32 1.0, %v7321
        %v7323 = vrcp.pop %v7233
        %v7324 = vmul.f32 1.0, %v7323
        %v7325 = vrcp.pop %v7234
        %v7326 = vmul.f32 1.0, %v7325
        %v7327 = vrcp.pop %v7235
        %v7328 = vmul.f32 1.0, %v7327
        %v7329 = vrcp.pop %v7236
        %v7330 = vmul.f32 1.0, %v7329
        %v7331 = vrcp.pop %v7237
        %v7332 = vmul.f32 1.0, %v7331
        %v7333 = vrcp.pop %v7238
        %v7334 = vmul.f32 1.0, %v7333
        %v7335 = vrcp.pop %v7239
        %v7336 = vmul.f32 1.0, %v7335
        %v7337 = vrcp.pop %v7240
        %v7338 = vmul.f32 1.0, %v7337
        %v7339 = vrcp.pop %v7241
        %v7340 = vmul.f32 1.0, %v7339
        %v7341 = vrcp.pop %v7242
        %v7342 = vmul.f32 1.0, %v7341
        %v7343 = vrcp.pop %v7243
        %v7344 = vmul.f32 1.0, %v7343
        %v7345 = vrcp.pop %v7244
        %v7346 = vmul.f32 1.0, %v7345
        %v7347 = vrcp.pop %v7245
        %v7348 = vmul.f32 1.0, %v7347
        %v7349 = vrcp.pop %v7246
        %v7350 = vmul.f32 1.0, %v7349
        %v7351 = vrcp.pop %v7247
        %v7352 = vmul.f32 1.0, %v7351
        %v7353 = vrcp.pop %v7248
        %v7354 = vmul.f32 1.0, %v7353
        %v7355 = vrcp.pop %v7249
        %v7356 = vmul.f32 1.0, %v7355
        %v7357 = vrcp.pop %v7250
        %v7358 = vmul.f32 1.0, %v7357
        %v7359 = vrcp.pop %v7251
        %v7360 = vmul.f32 1.0, %v7359
        %v7361 = vrcp.pop %v7252
        %v7362 = vmul.f32 1.0, %v7361
        %v7363 = vrcp.pop %v7253
        %v7364 = vmul.f32 1.0, %v7363
        %v7365 = vrcp.pop %v7254
        %v7366 = vmul.f32 1.0, %v7365
        %v7367 = vrcp.pop %v7255
        %v7368 = vmul.f32 1.0, %v7367
        %v7369 = vrcp.pop %v7256
        %v7370 = vmul.f32 1.0, %v7369
        %v7371 = vrcp.pop %v7257
        %v7372 = vmul.f32 1.0, %v7371
        %v7373 = vrcp.pop %v7258
        %v7374 = vmul.f32 1.0, %v7373
        %v7375 = vrcp.pop %v7259
        %v7376 = vmul.f32 1.0, %v7375
        %v7377 = vrcp.pop %v7260
        %v7378 = vmul.f32 1.0, %v7377
        %v7379 = vrcp.pop %v7261
        %v7380 = vmul.f32 1.0, %v7379
        %v7381 = vrcp.pop %v7262
        %v7382 = vmul.f32 1.0, %v7381
        %v7383 = vrcp.pop %v7263
        %v7384 = vmul.f32 1.0, %v7383
        %v7385 = vrcp.pop %v7264
        %v7386 = vmul.f32 1.0, %v7385
        %v7387 = vrcp.pop %v7265
        %v7388 = vmul.f32 1.0, %v7387
        %v7389 = vrcp.pop %v7266
        %v7390 = vmul.f32 1.0, %v7389
        %v7391 = vrcp.pop %v7267
        %v7392 = vmul.f32 1.0, %v7391
        %v7393 = vrcp.pop %v7268
        %v7394 = vmul.f32 1.0, %v7393
        %v7395 = vrcp.pop %v7269
        %v7396 = vmul.f32 1.0, %v7395
        %v7397 = vrcp.pop %v7270
        %v7398 = vmul.f32 1.0, %v7397
        %v7399 = vld [vmem:[%s194 + $0x1000] sm:$0xff]
        %v7400 = vld [vmem:[%s194 + $0x1008] sm:$0xff]
        %v7401 = vld [vmem:[%s194 + $0x1010] sm:$0xff]
        %v7402 = vld [vmem:[%s194 + $0x1018] sm:$0xff]
        %v7403 = vld [vmem:[%s194 + $0x1020] sm:$0xff]
        %v7404 = vld [vmem:[%s194 + $0x1028] sm:$0xff]
        %v7405 = vld [vmem:[%s194 + $0x1030] sm:$0xff]
        %v7406 = vld [vmem:[%s194 + $0x1038] sm:$0xff]
        %v7407 = vld [vmem:[%s194 + $0x1040] sm:$0xff]
        %v7408 = vld [vmem:[%s194 + $0x1048] sm:$0xff]
        %v7409 = vld [vmem:[%s194 + $0x1050] sm:$0xff]
        %v7410 = vld [vmem:[%s194 + $0x1058] sm:$0xff]
        %v7411 = vld [vmem:[%s194 + $0x1060] sm:$0xff]
        %v7412 = vld [vmem:[%s194 + $0x1068] sm:$0xff]
        %v7413 = vld [vmem:[%s194 + $0x1070] sm:$0xff]
        %v7414 = vld [vmem:[%s194 + $0x1078] sm:$0xff]
        %v7415 = vld [vmem:[%s194 + $0x1080] sm:$0xff]
        %v7416 = vld [vmem:[%s194 + $0x1088] sm:$0xff]
        %v7417 = vld [vmem:[%s194 + $0x1090] sm:$0xff]
        %v7418 = vld [vmem:[%s194 + $0x1098] sm:$0xff]
        %v7419 = vld [vmem:[%s194 + $0x10a0] sm:$0xff]
        %v7420 = vld [vmem:[%s194 + $0x10a8] sm:$0xff]
        %v7421 = vld [vmem:[%s194 + $0x10b0] sm:$0xff]
        %v7422 = vld [vmem:[%s194 + $0x10b8] sm:$0xff]
        %v7423 = vld [vmem:[%s194 + $0x10c0] sm:$0xff]
        %v7424 = vld [vmem:[%s194 + $0x10c8] sm:$0xff]
        %v7425 = vld [vmem:[%s194 + $0x10d0] sm:$0xff]
        %v7426 = vld [vmem:[%s194 + $0x10d8] sm:$0xff]
        %v7427 = vld [vmem:[%s194 + $0x10e0] sm:$0xff]
        %v7428 = vld [vmem:[%s194 + $0x10e8] sm:$0xff]
        %v7429 = vld [vmem:[%s194 + $0x10f0] sm:$0xff]
        %v7430 = vld [vmem:[%s194 + $0x10f8] sm:$0xff]
        %v7431 = vld [vmem:[%s194 + $0x1100] sm:$0xff]
        %v7432 = vld [vmem:[%s194 + $0x1108] sm:$0xff]
        %v7433 = vld [vmem:[%s194 + $0x1110] sm:$0xff]
        %v7434 = vld [vmem:[%s194 + $0x1118] sm:$0xff]
        %v7435 = vld [vmem:[%s194 + $0x1120] sm:$0xff]
        %v7436 = vld [vmem:[%s194 + $0x1128] sm:$0xff]
        %v7437 = vld [vmem:[%s194 + $0x1130] sm:$0xff]
        %v7438 = vld [vmem:[%s194 + $0x1138] sm:$0xff]
        %v7439 = vld [vmem:[%s194 + $0x1140] sm:$0xff]
        %v7440 = vld [vmem:[%s194 + $0x1148] sm:$0xff]
        %v7441 = vld [vmem:[%s194 + $0x1150] sm:$0xff]
        %v7442 = vld [vmem:[%s194 + $0x1158] sm:$0xff]
        %v7443 = vld [vmem:[%s194 + $0x1160] sm:$0xff]
        %v7444 = vld [vmem:[%s194 + $0x1168] sm:$0xff]
        %v7445 = vld [vmem:[%s194 + $0x1170] sm:$0xff]
        %v7446 = vld [vmem:[%s194 + $0x1178] sm:$0xff]
        %v7447 = vld [vmem:[%s194 + $0x1180] sm:$0xff]
        %v7448 = vld [vmem:[%s194 + $0x1188] sm:$0xff]
        %v7449 = vld [vmem:[%s194 + $0x1190] sm:$0xff]
        %v7450 = vld [vmem:[%s194 + $0x1198] sm:$0xff]
        %v7451 = vld [vmem:[%s194 + $0x11a0] sm:$0xff]
        %v7452 = vld [vmem:[%s194 + $0x11a8] sm:$0xff]
        %v7453 = vld [vmem:[%s194 + $0x11b0] sm:$0xff]
        %v7454 = vld [vmem:[%s194 + $0x11b8] sm:$0xff]
        %v7455 = vld [vmem:[%s194 + $0x11c0] sm:$0xff]
        %v7456 = vld [vmem:[%s194 + $0x11c8] sm:$0xff]
        %v7457 = vld [vmem:[%s194 + $0x11d0] sm:$0xff]
        %v7458 = vld [vmem:[%s194 + $0x11d8] sm:$0xff]
        %v7459 = vld [vmem:[%s194 + $0x11e0] sm:$0xff]
        %v7460 = vld [vmem:[%s194 + $0x11e8] sm:$0xff]
        %v7461 = vld [vmem:[%s194 + $0x11f0] sm:$0xff]
        %v7462 = vld [vmem:[%s194 + $0x11f8] sm:$0xff]
        %v7463 = vadd.f32 %v7399, %v7400
        %v7464 = vadd.f32 %v7463, %v7401
        %v7465 = vadd.f32 %v7464, %v7402
        %v7466 = vadd.f32 %v7465, %v7403
        %v7467 = vadd.f32 %v7466, %v7404
        %v7468 = vadd.f32 %v7467, %v7405
        %v7469 = vadd.f32 %v7468, %v7406
        %v7470 = vadd.f32 %v7469, %v7407
        %v7471 = vadd.f32 %v7470, %v7408
        %v7472 = vadd.f32 %v7471, %v7409
        %v7473 = vadd.f32 %v7472, %v7410
        %v7474 = vadd.f32 %v7473, %v7411
        %v7475 = vadd.f32 %v7474, %v7412
        %v7476 = vadd.f32 %v7475, %v7413
        %v7477 = vadd.f32 %v7476, %v7414
        %v7478 = vadd.f32 %v7477, %v7415
        %v7479 = vadd.f32 %v7478, %v7416
        %v7480 = vadd.f32 %v7479, %v7417
        %v7481 = vadd.f32 %v7480, %v7418
        %v7482 = vadd.f32 %v7481, %v7419
        %v7483 = vadd.f32 %v7482, %v7420
        %v7484 = vadd.f32 %v7483, %v7421
        %v7485 = vadd.f32 %v7484, %v7422
        %v7486 = vadd.f32 %v7485, %v7423
        %v7487 = vadd.f32 %v7486, %v7424
        %v7488 = vadd.f32 %v7487, %v7425
        %v7489 = vadd.f32 %v7488, %v7426
        %v7490 = vadd.f32 %v7489, %v7427
        %v7491 = vadd.f32 %v7490, %v7428
        %v7492 = vadd.f32 %v7491, %v7429
        %v7493 = vadd.f32 %v7492, %v7430
        %v7494 = vadd.f32 %v7493, %v7431
        %v7495 = vadd.f32 %v7494, %v7432
        %v7496 = vadd.f32 %v7495, %v7433
        %v7497 = vadd.f32 %v7496, %v7434
        %v7498 = vadd.f32 %v7497, %v7435
        %v7499 = vadd.f32 %v7498, %v7436
        %v7500 = vadd.f32 %v7499, %v7437
        %v7501 = vadd.f32 %v7500, %v7438
        %v7502 = vadd.f32 %v7501, %v7439
        %v7503 = vadd.f32 %v7502, %v7440
        %v7504 = vadd.f32 %v7503, %v7441
        %v7505 = vadd.f32 %v7504, %v7442
        %v7506 = vadd.f32 %v7505, %v7443
        %v7507 = vadd.f32 %v7506, %v7444
        %v7508 = vadd.f32 %v7507, %v7445
        %v7509 = vadd.f32 %v7508, %v7446
        %v7510 = vadd.f32 %v7509, %v7447
        %v7511 = vadd.f32 %v7510, %v7448
        %v7512 = vadd.f32 %v7511, %v7449
        %v7513 = vadd.f32 %v7512, %v7450
        %v7514 = vadd.f32 %v7513, %v7451
        %v7515 = vadd.f32 %v7514, %v7452
        %v7516 = vadd.f32 %v7515, %v7453
        %v7517 = vadd.f32 %v7516, %v7454
        %v7518 = vadd.f32 %v7517, %v7455
        %v7519 = vadd.f32 %v7518, %v7456
        %v7520 = vadd.f32 %v7519, %v7457
        %v7521 = vadd.f32 %v7520, %v7458
        %v7522 = vadd.f32 %v7521, %v7459
        %v7523 = vadd.f32 %v7522, %v7460
        %v7524 = vadd.f32 %v7523, %v7461
        %v7525 = vadd.f32 %v7524, %v7462
        %v7526 = vadd.f32 %v6694, %v7525
        %v7527 = vmul.f32 %v7272, %v7399
        %v7528 = vmul.f32 %v7274, %v7400
        %v7529 = vmul.f32 %v7276, %v7401
        %v7530 = vmul.f32 %v7278, %v7402
        %v7531 = vmul.f32 %v7280, %v7403
        %v7532 = vmul.f32 %v7282, %v7404
        %v7533 = vmul.f32 %v7284, %v7405
        %v7534 = vmul.f32 %v7286, %v7406
        %v7535 = vmul.f32 %v7288, %v7407
        %v7536 = vmul.f32 %v7290, %v7408
        %v7537 = vmul.f32 %v7292, %v7409
        %v7538 = vmul.f32 %v7294, %v7410
        %v7539 = vmul.f32 %v7296, %v7411
        %v7540 = vmul.f32 %v7298, %v7412
        %v7541 = vmul.f32 %v7300, %v7413
        %v7542 = vmul.f32 %v7302, %v7414
        %v7543 = vmul.f32 %v7304, %v7415
        %v7544 = vmul.f32 %v7306, %v7416
        %v7545 = vmul.f32 %v7308, %v7417
        %v7546 = vmul.f32 %v7310, %v7418
        %v7547 = vmul.f32 %v7312, %v7419
        %v7548 = vmul.f32 %v7314, %v7420
        %v7549 = vmul.f32 %v7316, %v7421
        %v7550 = vmul.f32 %v7318, %v7422
        %v7551 = vmul.f32 %v7320, %v7423
        %v7552 = vmul.f32 %v7322, %v7424
        %v7553 = vmul.f32 %v7324, %v7425
        %v7554 = vmul.f32 %v7326, %v7426
        %v7555 = vmul.f32 %v7328, %v7427
        %v7556 = vmul.f32 %v7330, %v7428
        %v7557 = vmul.f32 %v7332, %v7429
        %v7558 = vmul.f32 %v7334, %v7430
        %v7559 = vmul.f32 %v7336, %v7431
        %v7560 = vmul.f32 %v7338, %v7432
        %v7561 = vmul.f32 %v7340, %v7433
        %v7562 = vmul.f32 %v7342, %v7434
        %v7563 = vmul.f32 %v7344, %v7435
        %v7564 = vmul.f32 %v7346, %v7436
        %v7565 = vmul.f32 %v7348, %v7437
        %v7566 = vmul.f32 %v7350, %v7438
        %v7567 = vmul.f32 %v7352, %v7439
        %v7568 = vmul.f32 %v7354, %v7440
        %v7569 = vmul.f32 %v7356, %v7441
        %v7570 = vmul.f32 %v7358, %v7442
        %v7571 = vmul.f32 %v7360, %v7443
        %v7572 = vmul.f32 %v7362, %v7444
        %v7573 = vmul.f32 %v7364, %v7445
        %v7574 = vmul.f32 %v7366, %v7446
        %v7575 = vmul.f32 %v7368, %v7447
        %v7576 = vmul.f32 %v7370, %v7448
        %v7577 = vmul.f32 %v7372, %v7449
        %v7578 = vmul.f32 %v7374, %v7450
        %v7579 = vmul.f32 %v7376, %v7451
        %v7580 = vmul.f32 %v7378, %v7452
        %v7581 = vmul.f32 %v7380, %v7453
        %v7582 = vmul.f32 %v7382, %v7454
        %v7583 = vmul.f32 %v7384, %v7455
        %v7584 = vmul.f32 %v7386, %v7456
        %v7585 = vmul.f32 %v7388, %v7457
        %v7586 = vmul.f32 %v7390, %v7458
        %v7587 = vmul.f32 %v7392, %v7459
        %v7588 = vmul.f32 %v7394, %v7460
        %v7589 = vmul.f32 %v7396, %v7461
        %v7590 = vmul.f32 %v7398, %v7462
        %v7591 = vadd.f32 %v7527, %v7528
        %v7592 = vadd.f32 %v7591, %v7529
        %v7593 = vadd.f32 %v7592, %v7530
        %v7594 = vadd.f32 %v7593, %v7531
        %v7595 = vadd.f32 %v7594, %v7532
        %v7596 = vadd.f32 %v7595, %v7533
        %v7597 = vadd.f32 %v7596, %v7534
        %v7598 = vadd.f32 %v7597, %v7535
        %v7599 = vadd.f32 %v7598, %v7536
        %v7600 = vadd.f32 %v7599, %v7537
        %v7601 = vadd.f32 %v7600, %v7538
        %v7602 = vadd.f32 %v7601, %v7539
        %v7603 = vadd.f32 %v7602, %v7540
        %v7604 = vadd.f32 %v7603, %v7541
        %v7605 = vadd.f32 %v7604, %v7542
        %v7606 = vadd.f32 %v7605, %v7543
        %v7607 = vadd.f32 %v7606, %v7544
        %v7608 = vadd.f32 %v7607, %v7545
        %v7609 = vadd.f32 %v7608, %v7546
        %v7610 = vadd.f32 %v7609, %v7547
        %v7611 = vadd.f32 %v7610, %v7548
        %v7612 = vadd.f32 %v7611, %v7549
        %v7613 = vadd.f32 %v7612, %v7550
        %v7614 = vadd.f32 %v7613, %v7551
        %v7615 = vadd.f32 %v7614, %v7552
        %v7616 = vadd.f32 %v7615, %v7553
        %v7617 = vadd.f32 %v7616, %v7554
        %v7618 = vadd.f32 %v7617, %v7555
        %v7619 = vadd.f32 %v7618, %v7556
        %v7620 = vadd.f32 %v7619, %v7557
        %v7621 = vadd.f32 %v7620, %v7558
        %v7622 = vadd.f32 %v7621, %v7559
        %v7623 = vadd.f32 %v7622, %v7560
        %v7624 = vadd.f32 %v7623, %v7561
        %v7625 = vadd.f32 %v7624, %v7562
        %v7626 = vadd.f32 %v7625, %v7563
        %v7627 = vadd.f32 %v7626, %v7564
        %v7628 = vadd.f32 %v7627, %v7565
        %v7629 = vadd.f32 %v7628, %v7566
        %v7630 = vadd.f32 %v7629, %v7567
        %v7631 = vadd.f32 %v7630, %v7568
        %v7632 = vadd.f32 %v7631, %v7569
        %v7633 = vadd.f32 %v7632, %v7570
        %v7634 = vadd.f32 %v7633, %v7571
        %v7635 = vadd.f32 %v7634, %v7572
        %v7636 = vadd.f32 %v7635, %v7573
        %v7637 = vadd.f32 %v7636, %v7574
        %v7638 = vadd.f32 %v7637, %v7575
        %v7639 = vadd.f32 %v7638, %v7576
        %v7640 = vadd.f32 %v7639, %v7577
        %v7641 = vadd.f32 %v7640, %v7578
        %v7642 = vadd.f32 %v7641, %v7579
        %v7643 = vadd.f32 %v7642, %v7580
        %v7644 = vadd.f32 %v7643, %v7581
        %v7645 = vadd.f32 %v7644, %v7582
        %v7646 = vadd.f32 %v7645, %v7583
        %v7647 = vadd.f32 %v7646, %v7584
        %v7648 = vadd.f32 %v7647, %v7585
        %v7649 = vadd.f32 %v7648, %v7586
        %v7650 = vadd.f32 %v7649, %v7587
        %v7651 = vadd.f32 %v7650, %v7588
        %v7652 = vadd.f32 %v7651, %v7589
        %v7653 = vadd.f32 %v7652, %v7590
        %v7654 = vadd.f32 %v6822, %v7653
        %v7655 = vadd.f32 %v7272, %v7274
        %v7656 = vadd.f32 %v7655, %v7276
        %v7657 = vadd.f32 %v7656, %v7278
        %v7658 = vadd.f32 %v7657, %v7280
        %v7659 = vadd.f32 %v7658, %v7282
        %v7660 = vadd.f32 %v7659, %v7284
        %v7661 = vadd.f32 %v7660, %v7286
        %v7662 = vadd.f32 %v7661, %v7288
        %v7663 = vadd.f32 %v7662, %v7290
        %v7664 = vadd.f32 %v7663, %v7292
        %v7665 = vadd.f32 %v7664, %v7294
        %v7666 = vadd.f32 %v7665, %v7296
        %v7667 = vadd.f32 %v7666, %v7298
        %v7668 = vadd.f32 %v7667, %v7300
        %v7669 = vadd.f32 %v7668, %v7302
        %v7670 = vadd.f32 %v7669, %v7304
        %v7671 = vadd.f32 %v7670, %v7306
        %v7672 = vadd.f32 %v7671, %v7308
        %v7673 = vadd.f32 %v7672, %v7310
        %v7674 = vadd.f32 %v7673, %v7312
        %v7675 = vadd.f32 %v7674, %v7314
        %v7676 = vadd.f32 %v7675, %v7316
        %v7677 = vadd.f32 %v7676, %v7318
        %v7678 = vadd.f32 %v7677, %v7320
        %v7679 = vadd.f32 %v7678, %v7322
        %v7680 = vadd.f32 %v7679, %v7324
        %v7681 = vadd.f32 %v7680, %v7326
        %v7682 = vadd.f32 %v7681, %v7328
        %v7683 = vadd.f32 %v7682, %v7330
        %v7684 = vadd.f32 %v7683, %v7332
        %v7685 = vadd.f32 %v7684, %v7334
        %v7686 = vadd.f32 %v7685, %v7336
        %v7687 = vadd.f32 %v7686, %v7338
        %v7688 = vadd.f32 %v7687, %v7340
        %v7689 = vadd.f32 %v7688, %v7342
        %v7690 = vadd.f32 %v7689, %v7344
        %v7691 = vadd.f32 %v7690, %v7346
        %v7692 = vadd.f32 %v7691, %v7348
        %v7693 = vadd.f32 %v7692, %v7350
        %v7694 = vadd.f32 %v7693, %v7352
        %v7695 = vadd.f32 %v7694, %v7354
        %v7696 = vadd.f32 %v7695, %v7356
        %v7697 = vadd.f32 %v7696, %v7358
        %v7698 = vadd.f32 %v7697, %v7360
        %v7699 = vadd.f32 %v7698, %v7362
        %v7700 = vadd.f32 %v7699, %v7364
        %v7701 = vadd.f32 %v7700, %v7366
        %v7702 = vadd.f32 %v7701, %v7368
        %v7703 = vadd.f32 %v7702, %v7370
        %v7704 = vadd.f32 %v7703, %v7372
        %v7705 = vadd.f32 %v7704, %v7374
        %v7706 = vadd.f32 %v7705, %v7376
        %v7707 = vadd.f32 %v7706, %v7378
        %v7708 = vadd.f32 %v7707, %v7380
        %v7709 = vadd.f32 %v7708, %v7382
        %v7710 = vadd.f32 %v7709, %v7384
        %v7711 = vadd.f32 %v7710, %v7386
        %v7712 = vadd.f32 %v7711, %v7388
        %v7713 = vadd.f32 %v7712, %v7390
        %v7714 = vadd.f32 %v7713, %v7392
        %v7715 = vadd.f32 %v7714, %v7394
        %v7716 = vadd.f32 %v7715, %v7396
        %v7717 = vadd.f32 %v7716, %v7398
        %v7718 = vadd.f32 %v6886, %v7717
        %v7719 = vld [vmem:[%s185 + $0x900] sm:$0xf]
        %v7720 = vld [vmem:[%s185 + $0x904] sm:$0xf]
        %v7721 = vld [vmem:[%s185 + $0x908] sm:$0xf]
        %v7722 = vld [vmem:[%s185 + $0x90c] sm:$0xf]
        %v7723 = vld [vmem:[%s185 + $0x910] sm:$0xf]
        %v7724 = vld [vmem:[%s185 + $0x914] sm:$0xf]
        %v7725 = vld [vmem:[%s185 + $0x918] sm:$0xf]
        %v7726 = vld [vmem:[%s185 + $0x91c] sm:$0xf]
        %v7727 = vld [vmem:[%s185 + $0x920] sm:$0xf]
        %v7728 = vld [vmem:[%s185 + $0x924] sm:$0xf]
        %v7729 = vld [vmem:[%s185 + $0x928] sm:$0xf]
        %v7730 = vld [vmem:[%s185 + $0x92c] sm:$0xf]
        %v7731 = vld [vmem:[%s185 + $0x930] sm:$0xf]
        %v7732 = vld [vmem:[%s185 + $0x934] sm:$0xf]
        %v7733 = vld [vmem:[%s185 + $0x938] sm:$0xf]
        %v7734 = vld [vmem:[%s185 + $0x93c] sm:$0xf]
        %v7735 = vld [vmem:[%s185 + $0x940] sm:$0xf]
        %v7736 = vld [vmem:[%s185 + $0x944] sm:$0xf]
        %v7737 = vld [vmem:[%s185 + $0x948] sm:$0xf]
        %v7738 = vld [vmem:[%s185 + $0x94c] sm:$0xf]
        %v7739 = vld [vmem:[%s185 + $0x950] sm:$0xf]
        %v7740 = vld [vmem:[%s185 + $0x954] sm:$0xf]
        %v7741 = vld [vmem:[%s185 + $0x958] sm:$0xf]
        %v7742 = vld [vmem:[%s185 + $0x95c] sm:$0xf]
        %v7743 = vld [vmem:[%s185 + $0x960] sm:$0xf]
        %v7744 = vld [vmem:[%s185 + $0x964] sm:$0xf]
        %v7745 = vld [vmem:[%s185 + $0x968] sm:$0xf]
        %v7746 = vld [vmem:[%s185 + $0x96c] sm:$0xf]
        %v7747 = vld [vmem:[%s185 + $0x970] sm:$0xf]
        %v7748 = vld [vmem:[%s185 + $0x974] sm:$0xf]
        %v7749 = vld [vmem:[%s185 + $0x978] sm:$0xf]
        %v7750 = vld [vmem:[%s185 + $0x97c] sm:$0xf]
        %v7751 = vld [vmem:[%s185 + $0x980] sm:$0xf]
        %v7752 = vld [vmem:[%s185 + $0x984] sm:$0xf]
        %v7753 = vld [vmem:[%s185 + $0x988] sm:$0xf]
        %v7754 = vld [vmem:[%s185 + $0x98c] sm:$0xf]
        %v7755 = vld [vmem:[%s185 + $0x990] sm:$0xf]
        %v7756 = vld [vmem:[%s185 + $0x994] sm:$0xf]
        %v7757 = vld [vmem:[%s185 + $0x998] sm:$0xf]
        %v7758 = vld [vmem:[%s185 + $0x99c] sm:$0xf]
        %v7759 = vld [vmem:[%s185 + $0x9a0] sm:$0xf]
        %v7760 = vld [vmem:[%s185 + $0x9a4] sm:$0xf]
        %v7761 = vld [vmem:[%s185 + $0x9a8] sm:$0xf]
        %v7762 = vld [vmem:[%s185 + $0x9ac] sm:$0xf]
        %v7763 = vld [vmem:[%s185 + $0x9b0] sm:$0xf]
        %v7764 = vld [vmem:[%s185 + $0x9b4] sm:$0xf]
        %v7765 = vld [vmem:[%s185 + $0x9b8] sm:$0xf]
        %v7766 = vld [vmem:[%s185 + $0x9bc] sm:$0xf]
        %v7767 = vld [vmem:[%s185 + $0x9c0] sm:$0xf]
        %v7768 = vld [vmem:[%s185 + $0x9c4] sm:$0xf]
        %v7769 = vld [vmem:[%s185 + $0x9c8] sm:$0xf]
        %v7770 = vld [vmem:[%s185 + $0x9cc] sm:$0xf]
        %v7771 = vld [vmem:[%s185 + $0x9d0] sm:$0xf]
        %v7772 = vld [vmem:[%s185 + $0x9d4] sm:$0xf]
        %v7773 = vld [vmem:[%s185 + $0x9d8] sm:$0xf]
        %v7774 = vld [vmem:[%s185 + $0x9dc] sm:$0xf]
        %v7775 = vld [vmem:[%s185 + $0x9e0] sm:$0xf]
        %v7776 = vld [vmem:[%s185 + $0x9e4] sm:$0xf]
        %v7777 = vld [vmem:[%s185 + $0x9e8] sm:$0xf]
        %v7778 = vld [vmem:[%s185 + $0x9ec] sm:$0xf]
        %v7779 = vld [vmem:[%s185 + $0x9f0] sm:$0xf]
        %v7780 = vld [vmem:[%s185 + $0x9f4] sm:$0xf]
        %v7781 = vld [vmem:[%s185 + $0x9f8] sm:$0xf]
        %v7782 = vld [vmem:[%s185 + $0x9fc] sm:$0xf]
        %v7783 = vunpack.c.l.bf16 %v7719
        %v7784 = vunpack.c.l.bf16 %v7720
        %v7785 = vunpack.c.l.bf16 %v7721
        %v7786 = vunpack.c.l.bf16 %v7722
        %v7787 = vunpack.c.l.bf16 %v7723
        %v7788 = vunpack.c.l.bf16 %v7724
        %v7789 = vunpack.c.l.bf16 %v7725
        %v7790 = vunpack.c.l.bf16 %v7726
        %v7791 = vunpack.c.l.bf16 %v7727
        %v7792 = vunpack.c.l.bf16 %v7728
        %v7793 = vunpack.c.l.bf16 %v7729
        %v7794 = vunpack.c.l.bf16 %v7730
        %v7795 = vunpack.c.l.bf16 %v7731
        %v7796 = vunpack.c.l.bf16 %v7732
        %v7797 = vunpack.c.l.bf16 %v7733
        %v7798 = vunpack.c.l.bf16 %v7734
        %v7799 = vunpack.c.l.bf16 %v7735
        %v7800 = vunpack.c.l.bf16 %v7736
        %v7801 = vunpack.c.l.bf16 %v7737
        %v7802 = vunpack.c.l.bf16 %v7738
        %v7803 = vunpack.c.l.bf16 %v7739
        %v7804 = vunpack.c.l.bf16 %v7740
        %v7805 = vunpack.c.l.bf16 %v7741
        %v7806 = vunpack.c.l.bf16 %v7742
        %v7807 = vunpack.c.l.bf16 %v7743
        %v7808 = vunpack.c.l.bf16 %v7744
        %v7809 = vunpack.c.l.bf16 %v7745
        %v7810 = vunpack.c.l.bf16 %v7746
        %v7811 = vunpack.c.l.bf16 %v7747
        %v7812 = vunpack.c.l.bf16 %v7748
        %v7813 = vunpack.c.l.bf16 %v7749
        %v7814 = vunpack.c.l.bf16 %v7750
        %v7815 = vunpack.c.l.bf16 %v7751
        %v7816 = vunpack.c.l.bf16 %v7752
        %v7817 = vunpack.c.l.bf16 %v7753
        %v7818 = vunpack.c.l.bf16 %v7754
        %v7819 = vunpack.c.l.bf16 %v7755
        %v7820 = vunpack.c.l.bf16 %v7756
        %v7821 = vunpack.c.l.bf16 %v7757
        %v7822 = vunpack.c.l.bf16 %v7758
        %v7823 = vunpack.c.l.bf16 %v7759
        %v7824 = vunpack.c.l.bf16 %v7760
        %v7825 = vunpack.c.l.bf16 %v7761
        %v7826 = vunpack.c.l.bf16 %v7762
        %v7827 = vunpack.c.l.bf16 %v7763
        %v7828 = vunpack.c.l.bf16 %v7764
        %v7829 = vunpack.c.l.bf16 %v7765
        %v7830 = vunpack.c.l.bf16 %v7766
        %v7831 = vunpack.c.l.bf16 %v7767
        %v7832 = vunpack.c.l.bf16 %v7768
        %v7833 = vunpack.c.l.bf16 %v7769
        %v7834 = vunpack.c.l.bf16 %v7770
        %v7835 = vunpack.c.l.bf16 %v7771
        %v7836 = vunpack.c.l.bf16 %v7772
        %v7837 = vunpack.c.l.bf16 %v7773
        %v7838 = vunpack.c.l.bf16 %v7774
        %v7839 = vunpack.c.l.bf16 %v7775
        %v7840 = vunpack.c.l.bf16 %v7776
        %v7841 = vunpack.c.l.bf16 %v7777
        %v7842 = vunpack.c.l.bf16 %v7778
        %v7843 = vunpack.c.l.bf16 %v7779
        %v7844 = vunpack.c.l.bf16 %v7780
        %v7845 = vunpack.c.l.bf16 %v7781
        %v7846 = vunpack.c.l.bf16 %v7782
        %v7847 = vxor.u32 %v7783, 2147483648
        %v7848 = vxor.u32 %v7784, 2147483648
        %v7849 = vxor.u32 %v7785, 2147483648
        %v7850 = vxor.u32 %v7786, 2147483648
        %v7851 = vxor.u32 %v7787, 2147483648
        %v7852 = vxor.u32 %v7788, 2147483648
        %v7853 = vxor.u32 %v7789, 2147483648
        %v7854 = vxor.u32 %v7790, 2147483648
        %v7855 = vxor.u32 %v7791, 2147483648
        %v7856 = vxor.u32 %v7792, 2147483648
        %v7857 = vxor.u32 %v7793, 2147483648
        %v7858 = vxor.u32 %v7794, 2147483648
        %v7859 = vxor.u32 %v7795, 2147483648
        %v7860 = vxor.u32 %v7796, 2147483648
        %v7861 = vxor.u32 %v7797, 2147483648
        %v7862 = vxor.u32 %v7798, 2147483648
        %v7863 = vxor.u32 %v7799, 2147483648
        %v7864 = vxor.u32 %v7800, 2147483648
        %v7865 = vxor.u32 %v7801, 2147483648
        %v7866 = vxor.u32 %v7802, 2147483648
        %v7867 = vxor.u32 %v7803, 2147483648
        %v7868 = vxor.u32 %v7804, 2147483648
        %v7869 = vxor.u32 %v7805, 2147483648
        %v7870 = vxor.u32 %v7806, 2147483648
        %v7871 = vxor.u32 %v7807, 2147483648
        %v7872 = vxor.u32 %v7808, 2147483648
        %v7873 = vxor.u32 %v7809, 2147483648
        %v7874 = vxor.u32 %v7810, 2147483648
        %v7875 = vxor.u32 %v7811, 2147483648
        %v7876 = vxor.u32 %v7812, 2147483648
        %v7877 = vxor.u32 %v7813, 2147483648
        %v7878 = vxor.u32 %v7814, 2147483648
        %v7879 = vxor.u32 %v7815, 2147483648
        %v7880 = vxor.u32 %v7816, 2147483648
        %v7881 = vxor.u32 %v7817, 2147483648
        %v7882 = vxor.u32 %v7818, 2147483648
        %v7883 = vxor.u32 %v7819, 2147483648
        %v7884 = vxor.u32 %v7820, 2147483648
        %v7885 = vxor.u32 %v7821, 2147483648
        %v7886 = vxor.u32 %v7822, 2147483648
        %v7887 = vxor.u32 %v7823, 2147483648
        %v7888 = vxor.u32 %v7824, 2147483648
        %v7889 = vxor.u32 %v7825, 2147483648
        %v7890 = vxor.u32 %v7826, 2147483648
        %v7891 = vxor.u32 %v7827, 2147483648
        %v7892 = vxor.u32 %v7828, 2147483648
        %v7893 = vxor.u32 %v7829, 2147483648
        %v7894 = vxor.u32 %v7830, 2147483648
        %v7895 = vxor.u32 %v7831, 2147483648
        %v7896 = vxor.u32 %v7832, 2147483648
        %v7897 = vxor.u32 %v7833, 2147483648
        %v7898 = vxor.u32 %v7834, 2147483648
        %v7899 = vxor.u32 %v7835, 2147483648
        %v7900 = vxor.u32 %v7836, 2147483648
        %v7901 = vxor.u32 %v7837, 2147483648
        %v7902 = vxor.u32 %v7838, 2147483648
        %v7903 = vxor.u32 %v7839, 2147483648
        %v7904 = vxor.u32 %v7840, 2147483648
        %v7905 = vxor.u32 %v7841, 2147483648
        %v7906 = vxor.u32 %v7842, 2147483648
        %v7907 = vxor.u32 %v7843, 2147483648
        %v7908 = vxor.u32 %v7844, 2147483648
        %v7909 = vxor.u32 %v7845, 2147483648
        %v7910 = vxor.u32 %v7846, 2147483648
        %v7911 = vmul.f32 %v7847, 1.442695
        %v7912 = vpow.pop %v7911
        %v7913 = vmul.f32 %v7848, 1.442695
        %v7914 = vpow.pop %v7913
        %v7915 = vmul.f32 %v7849, 1.442695
        %v7916 = vpow.pop %v7915
        %v7917 = vmul.f32 %v7850, 1.442695
        %v7918 = vpow.pop %v7917
        %v7919 = vmul.f32 %v7851, 1.442695
        %v7920 = vpow.pop %v7919
        %v7921 = vmul.f32 %v7852, 1.442695
        %v7922 = vpow.pop %v7921
        %v7923 = vmul.f32 %v7853, 1.442695
        %v7924 = vpow.pop %v7923
        %v7925 = vmul.f32 %v7854, 1.442695
        %v7926 = vpow.pop %v7925
        %v7927 = vmul.f32 %v7855, 1.442695
        %v7928 = vpow.pop %v7927
        %v7929 = vmul.f32 %v7856, 1.442695
        %v7930 = vpow.pop %v7929
        %v7931 = vmul.f32 %v7857, 1.442695
        %v7932 = vpow.pop %v7931
        %v7933 = vmul.f32 %v7858, 1.442695
        %v7934 = vpow.pop %v7933
        %v7935 = vmul.f32 %v7859, 1.442695
        %v7936 = vpow.pop %v7935
        %v7937 = vmul.f32 %v7860, 1.442695
        %v7938 = vpow.pop %v7937
        %v7939 = vmul.f32 %v7861, 1.442695
        %v7940 = vpow.pop %v7939
        %v7941 = vmul.f32 %v7862, 1.442695
        %v7942 = vpow.pop %v7941
        %v7943 = vmul.f32 %v7863, 1.442695
        %v7944 = vpow.pop %v7943
        %v7945 = vmul.f32 %v7864, 1.442695
        %v7946 = vpow.pop %v7945
        %v7947 = vmul.f32 %v7865, 1.442695
        %v7948 = vpow.pop %v7947
        %v7949 = vmul.f32 %v7866, 1.442695
        %v7950 = vpow.pop %v7949
        %v7951 = vmul.f32 %v7867, 1.442695
        %v7952 = vpow.pop %v7951
        %v7953 = vmul.f32 %v7868, 1.442695
        %v7954 = vpow.pop %v7953
        %v7955 = vmul.f32 %v7869, 1.442695
        %v7956 = vpow.pop %v7955
        %v7957 = vmul.f32 %v7870, 1.442695
        %v7958 = vpow.pop %v7957
        %v7959 = vmul.f32 %v7871, 1.442695
        %v7960 = vpow.pop %v7959
        %v7961 = vmul.f32 %v7872, 1.442695
        %v7962 = vpow.pop %v7961
        %v7963 = vmul.f32 %v7873, 1.442695
        %v7964 = vpow.pop %v7963
        %v7965 = vmul.f32 %v7874, 1.442695
        %v7966 = vpow.pop %v7965
        %v7967 = vmul.f32 %v7875, 1.442695
        %v7968 = vpow.pop %v7967
        %v7969 = vmul.f32 %v7876, 1.442695
        %v7970 = vpow.pop %v7969
        %v7971 = vmul.f32 %v7877, 1.442695
        %v7972 = vpow.pop %v7971
        %v7973 = vmul.f32 %v7878, 1.442695
        %v7974 = vpow.pop %v7973
        %v7975 = vmul.f32 %v7879, 1.442695
        %v7976 = vpow.pop %v7975
        %v7977 = vmul.f32 %v7880, 1.442695
        %v7978 = vpow.pop %v7977
        %v7979 = vmul.f32 %v7881, 1.442695
        %v7980 = vpow.pop %v7979
        %v7981 = vmul.f32 %v7882, 1.442695
        %v7982 = vpow.pop %v7981
        %v7983 = vmul.f32 %v7883, 1.442695
        %v7984 = vpow.pop %v7983
        %v7985 = vmul.f32 %v7884, 1.442695
        %v7986 = vpow.pop %v7985
        %v7987 = vmul.f32 %v7885, 1.442695
        %v7988 = vpow.pop %v7987
        %v7989 = vmul.f32 %v7886, 1.442695
        %v7990 = vpow.pop %v7989
        %v7991 = vmul.f32 %v7887, 1.442695
        %v7992 = vpow.pop %v7991
        %v7993 = vmul.f32 %v7888, 1.442695
        %v7994 = vpow.pop %v7993
        %v7995 = vmul.f32 %v7889, 1.442695
        %v7996 = vpow.pop %v7995
        %v7997 = vmul.f32 %v7890, 1.442695
        %v7998 = vpow.pop %v7997
        %v7999 = vmul.f32 %v7891, 1.442695
        %v8000 = vpow.pop %v7999
        %v8001 = vmul.f32 %v7892, 1.442695
        %v8002 = vpow.pop %v8001
        %v8003 = vmul.f32 %v7893, 1.442695
        %v8004 = vpow.pop %v8003
        %v8005 = vmul.f32 %v7894, 1.442695
        %v8006 = vpow.pop %v8005
        %v8007 = vmul.f32 %v7895, 1.442695
        %v8008 = vpow.pop %v8007
        %v8009 = vmul.f32 %v7896, 1.442695
        %v8010 = vpow.pop %v8009
        %v8011 = vmul.f32 %v7897, 1.442695
        %v8012 = vpow.pop %v8011
        %v8013 = vmul.f32 %v7898, 1.442695
        %v8014 = vpow.pop %v8013
        %v8015 = vmul.f32 %v7899, 1.442695
        %v8016 = vpow.pop %v8015
        %v8017 = vmul.f32 %v7900, 1.442695
        %v8018 = vpow.pop %v8017
        %v8019 = vmul.f32 %v7901, 1.442695
        %v8020 = vpow.pop %v8019
        %v8021 = vmul.f32 %v7902, 1.442695
        %v8022 = vpow.pop %v8021
        %v8023 = vmul.f32 %v7903, 1.442695
        %v8024 = vpow.pop %v8023
        %v8025 = vmul.f32 %v7904, 1.442695
        %v8026 = vpow.pop %v8025
        %v8027 = vmul.f32 %v7905, 1.442695
        %v8028 = vpow.pop %v8027
        %v8029 = vmul.f32 %v7906, 1.442695
        %v8030 = vpow.pop %v8029
        %v8031 = vmul.f32 %v7907, 1.442695
        %v8032 = vpow.pop %v8031
        %v8033 = vmul.f32 %v7908, 1.442695
        %v8034 = vpow.pop %v8033
        %v8035 = vmul.f32 %v7909, 1.442695
        %v8036 = vpow.pop %v8035
        %v8037 = vmul.f32 %v7910, 1.442695
        %v8038 = vpow.pop %v8037
        %v8039 = vadd.f32 %v7912, 1.0
        %v8040 = vadd.f32 %v7914, 1.0
        %v8041 = vadd.f32 %v7916, 1.0
        %v8042 = vadd.f32 %v7918, 1.0
        %v8043 = vadd.f32 %v7920, 1.0
        %v8044 = vadd.f32 %v7922, 1.0
        %v8045 = vadd.f32 %v7924, 1.0
        %v8046 = vadd.f32 %v7926, 1.0
        %v8047 = vadd.f32 %v7928, 1.0
        %v8048 = vadd.f32 %v7930, 1.0
        %v8049 = vadd.f32 %v7932, 1.0
        %v8050 = vadd.f32 %v7934, 1.0
        %v8051 = vadd.f32 %v7936, 1.0
        %v8052 = vadd.f32 %v7938, 1.0
        %v8053 = vadd.f32 %v7940, 1.0
        %v8054 = vadd.f32 %v7942, 1.0
        %v8055 = vadd.f32 %v7944, 1.0
        %v8056 = vadd.f32 %v7946, 1.0
        %v8057 = vadd.f32 %v7948, 1.0
        %v8058 = vadd.f32 %v7950, 1.0
        %v8059 = vadd.f32 %v7952, 1.0
        %v8060 = vadd.f32 %v7954, 1.0
        %v8061 = vadd.f32 %v7956, 1.0
        %v8062 = vadd.f32 %v7958, 1.0
        %v8063 = vadd.f32 %v7960, 1.0
        %v8064 = vadd.f32 %v7962, 1.0
        %v8065 = vadd.f32 %v7964, 1.0
        %v8066 = vadd.f32 %v7966, 1.0
        %v8067 = vadd.f32 %v7968, 1.0
        %v8068 = vadd.f32 %v7970, 1.0
        %v8069 = vadd.f32 %v7972, 1.0
        %v8070 = vadd.f32 %v7974, 1.0
        %v8071 = vadd.f32 %v7976, 1.0
        %v8072 = vadd.f32 %v7978, 1.0
        %v8073 = vadd.f32 %v7980, 1.0
        %v8074 = vadd.f32 %v7982, 1.0
        %v8075 = vadd.f32 %v7984, 1.0
        %v8076 = vadd.f32 %v7986, 1.0
        %v8077 = vadd.f32 %v7988, 1.0
        %v8078 = vadd.f32 %v7990, 1.0
        %v8079 = vadd.f32 %v7992, 1.0
        %v8080 = vadd.f32 %v7994, 1.0
        %v8081 = vadd.f32 %v7996, 1.0
        %v8082 = vadd.f32 %v7998, 1.0
        %v8083 = vadd.f32 %v8000, 1.0
        %v8084 = vadd.f32 %v8002, 1.0
        %v8085 = vadd.f32 %v8004, 1.0
        %v8086 = vadd.f32 %v8006, 1.0
        %v8087 = vadd.f32 %v8008, 1.0
        %v8088 = vadd.f32 %v8010, 1.0
        %v8089 = vadd.f32 %v8012, 1.0
        %v8090 = vadd.f32 %v8014, 1.0
        %v8091 = vadd.f32 %v8016, 1.0
        %v8092 = vadd.f32 %v8018, 1.0
        %v8093 = vadd.f32 %v8020, 1.0
        %v8094 = vadd.f32 %v8022, 1.0
        %v8095 = vadd.f32 %v8024, 1.0
        %v8096 = vadd.f32 %v8026, 1.0
        %v8097 = vadd.f32 %v8028, 1.0
        %v8098 = vadd.f32 %v8030, 1.0
        %v8099 = vadd.f32 %v8032, 1.0
        %v8100 = vadd.f32 %v8034, 1.0
        %v8101 = vadd.f32 %v8036, 1.0
        %v8102 = vadd.f32 %v8038, 1.0
        %v8103 = vrcp.pop %v8039
        %v8104 = vmul.f32 1.0, %v8103
        %v8105 = vrcp.pop %v8040
        %v8106 = vmul.f32 1.0, %v8105
        %v8107 = vrcp.pop %v8041
        %v8108 = vmul.f32 1.0, %v8107
        %v8109 = vrcp.pop %v8042
        %v8110 = vmul.f32 1.0, %v8109
        %v8111 = vrcp.pop %v8043
        %v8112 = vmul.f32 1.0, %v8111
        %v8113 = vrcp.pop %v8044
        %v8114 = vmul.f32 1.0, %v8113
        %v8115 = vrcp.pop %v8045
        %v8116 = vmul.f32 1.0, %v8115
        %v8117 = vrcp.pop %v8046
        %v8118 = vmul.f32 1.0, %v8117
        %v8119 = vrcp.pop %v8047
        %v8120 = vmul.f32 1.0, %v8119
        %v8121 = vrcp.pop %v8048
        %v8122 = vmul.f32 1.0, %v8121
        %v8123 = vrcp.pop %v8049
        %v8124 = vmul.f32 1.0, %v8123
        %v8125 = vrcp.pop %v8050
        %v8126 = vmul.f32 1.0, %v8125
        %v8127 = vrcp.pop %v8051
        %v8128 = vmul.f32 1.0, %v8127
        %v8129 = vrcp.pop %v8052
        %v8130 = vmul.f32 1.0, %v8129
        %v8131 = vrcp.pop %v8053
        %v8132 = vmul.f32 1.0, %v8131
        %v8133 = vrcp.pop %v8054
        %v8134 = vmul.f32 1.0, %v8133
        %v8135 = vrcp.pop %v8055
        %v8136 = vmul.f32 1.0, %v8135
        %v8137 = vrcp.pop %v8056
        %v8138 = vmul.f32 1.0, %v8137
        %v8139 = vrcp.pop %v8057
        %v8140 = vmul.f32 1.0, %v8139
        %v8141 = vrcp.pop %v8058
        %v8142 = vmul.f32 1.0, %v8141
        %v8143 = vrcp.pop %v8059
        %v8144 = vmul.f32 1.0, %v8143
        %v8145 = vrcp.pop %v8060
        %v8146 = vmul.f32 1.0, %v8145
        %v8147 = vrcp.pop %v8061
        %v8148 = vmul.f32 1.0, %v8147
        %v8149 = vrcp.pop %v8062
        %v8150 = vmul.f32 1.0, %v8149
        %v8151 = vrcp.pop %v8063
        %v8152 = vmul.f32 1.0, %v8151
        %v8153 = vrcp.pop %v8064
        %v8154 = vmul.f32 1.0, %v8153
        %v8155 = vrcp.pop %v8065
        %v8156 = vmul.f32 1.0, %v8155
        %v8157 = vrcp.pop %v8066
        %v8158 = vmul.f32 1.0, %v8157
        %v8159 = vrcp.pop %v8067
        %v8160 = vmul.f32 1.0, %v8159
        %v8161 = vrcp.pop %v8068
        %v8162 = vmul.f32 1.0, %v8161
        %v8163 = vrcp.pop %v8069
        %v8164 = vmul.f32 1.0, %v8163
        %v8165 = vrcp.pop %v8070
        %v8166 = vmul.f32 1.0, %v8165
        %v8167 = vrcp.pop %v8071
        %v8168 = vmul.f32 1.0, %v8167
        %v8169 = vrcp.pop %v8072
        %v8170 = vmul.f32 1.0, %v8169
        %v8171 = vrcp.pop %v8073
        %v8172 = vmul.f32 1.0, %v8171
        %v8173 = vrcp.pop %v8074
        %v8174 = vmul.f32 1.0, %v8173
        %v8175 = vrcp.pop %v8075
        %v8176 = vmul.f32 1.0, %v8175
        %v8177 = vrcp.pop %v8076
        %v8178 = vmul.f32 1.0, %v8177
        %v8179 = vrcp.pop %v8077
        %v8180 = vmul.f32 1.0, %v8179
        %v8181 = vrcp.pop %v8078
        %v8182 = vmul.f32 1.0, %v8181
        %v8183 = vrcp.pop %v8079
        %v8184 = vmul.f32 1.0, %v8183
        %v8185 = vrcp.pop %v8080
        %v8186 = vmul.f32 1.0, %v8185
        %v8187 = vrcp.pop %v8081
        %v8188 = vmul.f32 1.0, %v8187
        %v8189 = vrcp.pop %v8082
        %v8190 = vmul.f32 1.0, %v8189
        %v8191 = vrcp.pop %v8083
        %v8192 = vmul.f32 1.0, %v8191
        %v8193 = vrcp.pop %v8084
        %v8194 = vmul.f32 1.0, %v8193
        %v8195 = vrcp.pop %v8085
        %v8196 = vmul.f32 1.0, %v8195
        %v8197 = vrcp.pop %v8086
        %v8198 = vmul.f32 1.0, %v8197
        %v8199 = vrcp.pop %v8087
        %v8200 = vmul.f32 1.0, %v8199
        %v8201 = vrcp.pop %v8088
        %v8202 = vmul.f32 1.0, %v8201
        %v8203 = vrcp.pop %v8089
        %v8204 = vmul.f32 1.0, %v8203
        %v8205 = vrcp.pop %v8090
        %v8206 = vmul.f32 1.0, %v8205
        %v8207 = vrcp.pop %v8091
        %v8208 = vmul.f32 1.0, %v8207
        %v8209 = vrcp.pop %v8092
        %v8210 = vmul.f32 1.0, %v8209
        %v8211 = vrcp.pop %v8093
        %v8212 = vmul.f32 1.0, %v8211
        %v8213 = vrcp.pop %v8094
        %v8214 = vmul.f32 1.0, %v8213
        %v8215 = vrcp.pop %v8095
        %v8216 = vmul.f32 1.0, %v8215
        %v8217 = vrcp.pop %v8096
        %v8218 = vmul.f32 1.0, %v8217
        %v8219 = vrcp.pop %v8097
        %v8220 = vmul.f32 1.0, %v8219
        %v8221 = vrcp.pop %v8098
        %v8222 = vmul.f32 1.0, %v8221
        %v8223 = vrcp.pop %v8099
        %v8224 = vmul.f32 1.0, %v8223
        %v8225 = vrcp.pop %v8100
        %v8226 = vmul.f32 1.0, %v8225
        %v8227 = vrcp.pop %v8101
        %v8228 = vmul.f32 1.0, %v8227
        %v8229 = vrcp.pop %v8102
        %v8230 = vmul.f32 1.0, %v8229
        %v8231 = vld [vmem:[%s194 + $0x1200] sm:$0xff]
        %v8232 = vld [vmem:[%s194 + $0x1208] sm:$0xff]
        %v8233 = vld [vmem:[%s194 + $0x1210] sm:$0xff]
        %v8234 = vld [vmem:[%s194 + $0x1218] sm:$0xff]
        %v8235 = vld [vmem:[%s194 + $0x1220] sm:$0xff]
        %v8236 = vld [vmem:[%s194 + $0x1228] sm:$0xff]
        %v8237 = vld [vmem:[%s194 + $0x1230] sm:$0xff]
        %v8238 = vld [vmem:[%s194 + $0x1238] sm:$0xff]
        %v8239 = vld [vmem:[%s194 + $0x1240] sm:$0xff]
        %v8240 = vld [vmem:[%s194 + $0x1248] sm:$0xff]
        %v8241 = vld [vmem:[%s194 + $0x1250] sm:$0xff]
        %v8242 = vld [vmem:[%s194 + $0x1258] sm:$0xff]
        %v8243 = vld [vmem:[%s194 + $0x1260] sm:$0xff]
        %v8244 = vld [vmem:[%s194 + $0x1268] sm:$0xff]
        %v8245 = vld [vmem:[%s194 + $0x1270] sm:$0xff]
        %v8246 = vld [vmem:[%s194 + $0x1278] sm:$0xff]
        %v8247 = vld [vmem:[%s194 + $0x1280] sm:$0xff]
        %v8248 = vld [vmem:[%s194 + $0x1288] sm:$0xff]
        %v8249 = vld [vmem:[%s194 + $0x1290] sm:$0xff]
        %v8250 = vld [vmem:[%s194 + $0x1298] sm:$0xff]
        %v8251 = vld [vmem:[%s194 + $0x12a0] sm:$0xff]
        %v8252 = vld [vmem:[%s194 + $0x12a8] sm:$0xff]
        %v8253 = vld [vmem:[%s194 + $0x12b0] sm:$0xff]
        %v8254 = vld [vmem:[%s194 + $0x12b8] sm:$0xff]
        %v8255 = vld [vmem:[%s194 + $0x12c0] sm:$0xff]
        %v8256 = vld [vmem:[%s194 + $0x12c8] sm:$0xff]
        %v8257 = vld [vmem:[%s194 + $0x12d0] sm:$0xff]
        %v8258 = vld [vmem:[%s194 + $0x12d8] sm:$0xff]
        %v8259 = vld [vmem:[%s194 + $0x12e0] sm:$0xff]
        %v8260 = vld [vmem:[%s194 + $0x12e8] sm:$0xff]
        %v8261 = vld [vmem:[%s194 + $0x12f0] sm:$0xff]
        %v8262 = vld [vmem:[%s194 + $0x12f8] sm:$0xff]
        %v8263 = vld [vmem:[%s194 + $0x1300] sm:$0xff]
        %v8264 = vld [vmem:[%s194 + $0x1308] sm:$0xff]
        %v8265 = vld [vmem:[%s194 + $0x1310] sm:$0xff]
        %v8266 = vld [vmem:[%s194 + $0x1318] sm:$0xff]
        %v8267 = vld [vmem:[%s194 + $0x1320] sm:$0xff]
        %v8268 = vld [vmem:[%s194 + $0x1328] sm:$0xff]
        %v8269 = vld [vmem:[%s194 + $0x1330] sm:$0xff]
        %v8270 = vld [vmem:[%s194 + $0x1338] sm:$0xff]
        %v8271 = vld [vmem:[%s194 + $0x1340] sm:$0xff]
        %v8272 = vld [vmem:[%s194 + $0x1348] sm:$0xff]
        %v8273 = vld [vmem:[%s194 + $0x1350] sm:$0xff]
        %v8274 = vld [vmem:[%s194 + $0x1358] sm:$0xff]
        %v8275 = vld [vmem:[%s194 + $0x1360] sm:$0xff]
        %v8276 = vld [vmem:[%s194 + $0x1368] sm:$0xff]
        %v8277 = vld [vmem:[%s194 + $0x1370] sm:$0xff]
        %v8278 = vld [vmem:[%s194 + $0x1378] sm:$0xff]
        %v8279 = vld [vmem:[%s194 + $0x1380] sm:$0xff]
        %v8280 = vld [vmem:[%s194 + $0x1388] sm:$0xff]
        %v8281 = vld [vmem:[%s194 + $0x1390] sm:$0xff]
        %v8282 = vld [vmem:[%s194 + $0x1398] sm:$0xff]
        %v8283 = vld [vmem:[%s194 + $0x13a0] sm:$0xff]
        %v8284 = vld [vmem:[%s194 + $0x13a8] sm:$0xff]
        %v8285 = vld [vmem:[%s194 + $0x13b0] sm:$0xff]
        %v8286 = vld [vmem:[%s194 + $0x13b8] sm:$0xff]
        %v8287 = vld [vmem:[%s194 + $0x13c0] sm:$0xff]
        %v8288 = vld [vmem:[%s194 + $0x13c8] sm:$0xff]
        %v8289 = vld [vmem:[%s194 + $0x13d0] sm:$0xff]
        %v8290 = vld [vmem:[%s194 + $0x13d8] sm:$0xff]
        %v8291 = vld [vmem:[%s194 + $0x13e0] sm:$0xff]
        %v8292 = vld [vmem:[%s194 + $0x13e8] sm:$0xff]
        %v8293 = vld [vmem:[%s194 + $0x13f0] sm:$0xff]
        %v8294 = vld [vmem:[%s194 + $0x13f8] sm:$0xff]
        %v8295 = vadd.f32 %v8231, %v8232
        %v8296 = vadd.f32 %v8295, %v8233
        %v8297 = vadd.f32 %v8296, %v8234
        %v8298 = vadd.f32 %v8297, %v8235
        %v8299 = vadd.f32 %v8298, %v8236
        %v8300 = vadd.f32 %v8299, %v8237
        %v8301 = vadd.f32 %v8300, %v8238
        %v8302 = vadd.f32 %v8301, %v8239
        %v8303 = vadd.f32 %v8302, %v8240
        %v8304 = vadd.f32 %v8303, %v8241
        %v8305 = vadd.f32 %v8304, %v8242
        %v8306 = vadd.f32 %v8305, %v8243
        %v8307 = vadd.f32 %v8306, %v8244
        %v8308 = vadd.f32 %v8307, %v8245
        %v8309 = vadd.f32 %v8308, %v8246
        %v8310 = vadd.f32 %v8309, %v8247
        %v8311 = vadd.f32 %v8310, %v8248
        %v8312 = vadd.f32 %v8311, %v8249
        %v8313 = vadd.f32 %v8312, %v8250
        %v8314 = vadd.f32 %v8313, %v8251
        %v8315 = vadd.f32 %v8314, %v8252
        %v8316 = vadd.f32 %v8315, %v8253
        %v8317 = vadd.f32 %v8316, %v8254
        %v8318 = vadd.f32 %v8317, %v8255
        %v8319 = vadd.f32 %v8318, %v8256
        %v8320 = vadd.f32 %v8319, %v8257
        %v8321 = vadd.f32 %v8320, %v8258
        %v8322 = vadd.f32 %v8321, %v8259
        %v8323 = vadd.f32 %v8322, %v8260
        %v8324 = vadd.f32 %v8323, %v8261
        %v8325 = vadd.f32 %v8324, %v8262
        %v8326 = vadd.f32 %v8325, %v8263
        %v8327 = vadd.f32 %v8326, %v8264
        %v8328 = vadd.f32 %v8327, %v8265
        %v8329 = vadd.f32 %v8328, %v8266
        %v8330 = vadd.f32 %v8329, %v8267
        %v8331 = vadd.f32 %v8330, %v8268
        %v8332 = vadd.f32 %v8331, %v8269
        %v8333 = vadd.f32 %v8332, %v8270
        %v8334 = vadd.f32 %v8333, %v8271
        %v8335 = vadd.f32 %v8334, %v8272
        %v8336 = vadd.f32 %v8335, %v8273
        %v8337 = vadd.f32 %v8336, %v8274
        %v8338 = vadd.f32 %v8337, %v8275
        %v8339 = vadd.f32 %v8338, %v8276
        %v8340 = vadd.f32 %v8339, %v8277
        %v8341 = vadd.f32 %v8340, %v8278
        %v8342 = vadd.f32 %v8341, %v8279
        %v8343 = vadd.f32 %v8342, %v8280
        %v8344 = vadd.f32 %v8343, %v8281
        %v8345 = vadd.f32 %v8344, %v8282
        %v8346 = vadd.f32 %v8345, %v8283
        %v8347 = vadd.f32 %v8346, %v8284
        %v8348 = vadd.f32 %v8347, %v8285
        %v8349 = vadd.f32 %v8348, %v8286
        %v8350 = vadd.f32 %v8349, %v8287
        %v8351 = vadd.f32 %v8350, %v8288
        %v8352 = vadd.f32 %v8351, %v8289
        %v8353 = vadd.f32 %v8352, %v8290
        %v8354 = vadd.f32 %v8353, %v8291
        %v8355 = vadd.f32 %v8354, %v8292
        %v8356 = vadd.f32 %v8355, %v8293
        %v8357 = vadd.f32 %v8356, %v8294
        %v8358 = vadd.f32 %v7526, %v8357
        %v8359 = vmul.f32 %v8104, %v8231
        %v8360 = vmul.f32 %v8106, %v8232
        %v8361 = vmul.f32 %v8108, %v8233
        %v8362 = vmul.f32 %v8110, %v8234
        %v8363 = vmul.f32 %v8112, %v8235
        %v8364 = vmul.f32 %v8114, %v8236
        %v8365 = vmul.f32 %v8116, %v8237
        %v8366 = vmul.f32 %v8118, %v8238
        %v8367 = vmul.f32 %v8120, %v8239
        %v8368 = vmul.f32 %v8122, %v8240
        %v8369 = vmul.f32 %v8124, %v8241
        %v8370 = vmul.f32 %v8126, %v8242
        %v8371 = vmul.f32 %v8128, %v8243
        %v8372 = vmul.f32 %v8130, %v8244
        %v8373 = vmul.f32 %v8132, %v8245
        %v8374 = vmul.f32 %v8134, %v8246
        %v8375 = vmul.f32 %v8136, %v8247
        %v8376 = vmul.f32 %v8138, %v8248
        %v8377 = vmul.f32 %v8140, %v8249
        %v8378 = vmul.f32 %v8142, %v8250
        %v8379 = vmul.f32 %v8144, %v8251
        %v8380 = vmul.f32 %v8146, %v8252
        %v8381 = vmul.f32 %v8148, %v8253
        %v8382 = vmul.f32 %v8150, %v8254
        %v8383 = vmul.f32 %v8152, %v8255
        %v8384 = vmul.f32 %v8154, %v8256
        %v8385 = vmul.f32 %v8156, %v8257
        %v8386 = vmul.f32 %v8158, %v8258
        %v8387 = vmul.f32 %v8160, %v8259
        %v8388 = vmul.f32 %v8162, %v8260
        %v8389 = vmul.f32 %v8164, %v8261
        %v8390 = vmul.f32 %v8166, %v8262
        %v8391 = vmul.f32 %v8168, %v8263
        %v8392 = vmul.f32 %v8170, %v8264
        %v8393 = vmul.f32 %v8172, %v8265
        %v8394 = vmul.f32 %v8174, %v8266
        %v8395 = vmul.f32 %v8176, %v8267
        %v8396 = vmul.f32 %v8178, %v8268
        %v8397 = vmul.f32 %v8180, %v8269
        %v8398 = vmul.f32 %v8182, %v8270
        %v8399 = vmul.f32 %v8184, %v8271
        %v8400 = vmul.f32 %v8186, %v8272
        %v8401 = vmul.f32 %v8188, %v8273
        %v8402 = vmul.f32 %v8190, %v8274
        %v8403 = vmul.f32 %v8192, %v8275
        %v8404 = vmul.f32 %v8194, %v8276
        %v8405 = vmul.f32 %v8196, %v8277
        %v8406 = vmul.f32 %v8198, %v8278
        %v8407 = vmul.f32 %v8200, %v8279
        %v8408 = vmul.f32 %v8202, %v8280
        %v8409 = vmul.f32 %v8204, %v8281
        %v8410 = vmul.f32 %v8206, %v8282
        %v8411 = vmul.f32 %v8208, %v8283
        %v8412 = vmul.f32 %v8210, %v8284
        %v8413 = vmul.f32 %v8212, %v8285
        %v8414 = vmul.f32 %v8214, %v8286
        %v8415 = vmul.f32 %v8216, %v8287
        %v8416 = vmul.f32 %v8218, %v8288
        %v8417 = vmul.f32 %v8220, %v8289
        %v8418 = vmul.f32 %v8222, %v8290
        %v8419 = vmul.f32 %v8224, %v8291
        %v8420 = vmul.f32 %v8226, %v8292
        %v8421 = vmul.f32 %v8228, %v8293
        %v8422 = vmul.f32 %v8230, %v8294
        %v8423 = vadd.f32 %v8359, %v8360
        %v8424 = vadd.f32 %v8423, %v8361
        %v8425 = vadd.f32 %v8424, %v8362
        %v8426 = vadd.f32 %v8425, %v8363
        %v8427 = vadd.f32 %v8426, %v8364
        %v8428 = vadd.f32 %v8427, %v8365
        %v8429 = vadd.f32 %v8428, %v8366
        %v8430 = vadd.f32 %v8429, %v8367
        %v8431 = vadd.f32 %v8430, %v8368
        %v8432 = vadd.f32 %v8431, %v8369
        %v8433 = vadd.f32 %v8432, %v8370
        %v8434 = vadd.f32 %v8433, %v8371
        %v8435 = vadd.f32 %v8434, %v8372
        %v8436 = vadd.f32 %v8435, %v8373
        %v8437 = vadd.f32 %v8436, %v8374
        %v8438 = vadd.f32 %v8437, %v8375
        %v8439 = vadd.f32 %v8438, %v8376
        %v8440 = vadd.f32 %v8439, %v8377
        %v8441 = vadd.f32 %v8440, %v8378
        %v8442 = vadd.f32 %v8441, %v8379
        %v8443 = vadd.f32 %v8442, %v8380
        %v8444 = vadd.f32 %v8443, %v8381
        %v8445 = vadd.f32 %v8444, %v8382
        %v8446 = vadd.f32 %v8445, %v8383
        %v8447 = vadd.f32 %v8446, %v8384
        %v8448 = vadd.f32 %v8447, %v8385
        %v8449 = vadd.f32 %v8448, %v8386
        %v8450 = vadd.f32 %v8449, %v8387
        %v8451 = vadd.f32 %v8450, %v8388
        %v8452 = vadd.f32 %v8451, %v8389
        %v8453 = vadd.f32 %v8452, %v8390
        %v8454 = vadd.f32 %v8453, %v8391
        %v8455 = vadd.f32 %v8454, %v8392
        %v8456 = vadd.f32 %v8455, %v8393
        %v8457 = vadd.f32 %v8456, %v8394
        %v8458 = vadd.f32 %v8457, %v8395
        %v8459 = vadd.f32 %v8458, %v8396
        %v8460 = vadd.f32 %v8459, %v8397
        %v8461 = vadd.f32 %v8460, %v8398
        %v8462 = vadd.f32 %v8461, %v8399
        %v8463 = vadd.f32 %v8462, %v8400
        %v8464 = vadd.f32 %v8463, %v8401
        %v8465 = vadd.f32 %v8464, %v8402
        %v8466 = vadd.f32 %v8465, %v8403
        %v8467 = vadd.f32 %v8466, %v8404
        %v8468 = vadd.f32 %v8467, %v8405
        %v8469 = vadd.f32 %v8468, %v8406
        %v8470 = vadd.f32 %v8469, %v8407
        %v8471 = vadd.f32 %v8470, %v8408
        %v8472 = vadd.f32 %v8471, %v8409
        %v8473 = vadd.f32 %v8472, %v8410
        %v8474 = vadd.f32 %v8473, %v8411
        %v8475 = vadd.f32 %v8474, %v8412
        %v8476 = vadd.f32 %v8475, %v8413
        %v8477 = vadd.f32 %v8476, %v8414
        %v8478 = vadd.f32 %v8477, %v8415
        %v8479 = vadd.f32 %v8478, %v8416
        %v8480 = vadd.f32 %v8479, %v8417
        %v8481 = vadd.f32 %v8480, %v8418
        %v8482 = vadd.f32 %v8481, %v8419
        %v8483 = vadd.f32 %v8482, %v8420
        %v8484 = vadd.f32 %v8483, %v8421
        %v8485 = vadd.f32 %v8484, %v8422
        %v8486 = vadd.f32 %v7654, %v8485
        %v8487 = vadd.f32 %v8104, %v8106
        %v8488 = vadd.f32 %v8487, %v8108
        %v8489 = vadd.f32 %v8488, %v8110
        %v8490 = vadd.f32 %v8489, %v8112
        %v8491 = vadd.f32 %v8490, %v8114
        %v8492 = vadd.f32 %v8491, %v8116
        %v8493 = vadd.f32 %v8492, %v8118
        %v8494 = vadd.f32 %v8493, %v8120
        %v8495 = vadd.f32 %v8494, %v8122
        %v8496 = vadd.f32 %v8495, %v8124
        %v8497 = vadd.f32 %v8496, %v8126
        %v8498 = vadd.f32 %v8497, %v8128
        %v8499 = vadd.f32 %v8498, %v8130
        %v8500 = vadd.f32 %v8499, %v8132
        %v8501 = vadd.f32 %v8500, %v8134
        %v8502 = vadd.f32 %v8501, %v8136
        %v8503 = vadd.f32 %v8502, %v8138
        %v8504 = vadd.f32 %v8503, %v8140
        %v8505 = vadd.f32 %v8504, %v8142
        %v8506 = vadd.f32 %v8505, %v8144
        %v8507 = vadd.f32 %v8506, %v8146
        %v8508 = vadd.f32 %v8507, %v8148
        %v8509 = vadd.f32 %v8508, %v8150
        %v8510 = vadd.f32 %v8509, %v8152
        %v8511 = vadd.f32 %v8510, %v8154
        %v8512 = vadd.f32 %v8511, %v8156
        %v8513 = vadd.f32 %v8512, %v8158
        %v8514 = vadd.f32 %v8513, %v8160
        %v8515 = vadd.f32 %v8514, %v8162
        %v8516 = vadd.f32 %v8515, %v8164
        %v8517 = vadd.f32 %v8516, %v8166
        %v8518 = vadd.f32 %v8517, %v8168
        %v8519 = vadd.f32 %v8518, %v8170
        %v8520 = vadd.f32 %v8519, %v8172
        %v8521 = vadd.f32 %v8520, %v8174
        %v8522 = vadd.f32 %v8521, %v8176
        %v8523 = vadd.f32 %v8522, %v8178
        %v8524 = vadd.f32 %v8523, %v8180
        %v8525 = vadd.f32 %v8524, %v8182
        %v8526 = vadd.f32 %v8525, %v8184
        %v8527 = vadd.f32 %v8526, %v8186
        %v8528 = vadd.f32 %v8527, %v8188
        %v8529 = vadd.f32 %v8528, %v8190
        %v8530 = vadd.f32 %v8529, %v8192
        %v8531 = vadd.f32 %v8530, %v8194
        %v8532 = vadd.f32 %v8531, %v8196
        %v8533 = vadd.f32 %v8532, %v8198
        %v8534 = vadd.f32 %v8533, %v8200
        %v8535 = vadd.f32 %v8534, %v8202
        %v8536 = vadd.f32 %v8535, %v8204
        %v8537 = vadd.f32 %v8536, %v8206
        %v8538 = vadd.f32 %v8537, %v8208
        %v8539 = vadd.f32 %v8538, %v8210
        %v8540 = vadd.f32 %v8539, %v8212
        %v8541 = vadd.f32 %v8540, %v8214
        %v8542 = vadd.f32 %v8541, %v8216
        %v8543 = vadd.f32 %v8542, %v8218
        %v8544 = vadd.f32 %v8543, %v8220
        %v8545 = vadd.f32 %v8544, %v8222
        %v8546 = vadd.f32 %v8545, %v8224
        %v8547 = vadd.f32 %v8546, %v8226
        %v8548 = vadd.f32 %v8547, %v8228
        %v8549 = vadd.f32 %v8548, %v8230
        %v8550 = vadd.f32 %v7718, %v8549
        %v8551 = vld [vmem:[%s219] sm:$0xff]
        %v8552 = vadd.f32 %v8551, %v8358
        %8553 = vst [vmem:[%s219] sm:$0xff] %v8552
        %s8554 = scalar_lea.vmem %s219, 8 [#allocation7]
        %v8555 = vld [vmem:[%s8554] sm:$0xff]
        %v8556 = vadd.f32 %v8555, %v8486
        %8557 = vst [vmem:[%s8554] sm:$0xff] %v8556
        %s8558 = scalar_lea.vmem %s219, 16 [#allocation7]
        %v8559 = vld [vmem:[%s8558] sm:$0xff]
        %v8560 = vadd.f32 %v8559, %v8550
        %8561 = vst [vmem:[%s8558] sm:$0xff] %v8560
        %s8562 = sand.u32 %s98, 1
        %s8563 = scalar_lea.sflag [#allocation4], %s8562
        %s8564 = sand.u32 %s98, 1
        %s8565 = smul.addr %s8564, 24
        %s8566 = scalar_lea.vmem [#allocation7], %s8565
        // Predicated region
        $region41: #{tpu_custom_call.1} parent=27 // pred_check
          %p8567 = pneg %p108
        $region42: #{tpu_custom_call.1} parent=27 // pred_check_branch
          %8569 = sbr.rel (%p8567) target = $region44
        $region43: #{tpu_custom_call.1} parent=27 // pred_region
          %s8571 = ssub.s32 384, 384
          %8572 = vsyncadd %s8563, %s8571
          %s8573 = smul.addr %s26, 3
          %s8574 = smul.addr %s8573, 128
          %s8575 = scalar_lea.hbm %s2, %s8574
          %s8576 = sshll.u32 %s8566, 4
          %s8577 = int_to_ptr.vmem [resolvable:$true] %s8576
          %8582 = dma.vmem_to_hbm [thread:$0]  %s8577, 384, %s8575, %s8563, 128, 128, 8
        $region44: #{tpu_custom_call.1} parent=27 // pred_fallthru
          _
      $region28: #{tpu_custom_call.1} parent=5 // pred_fallthru
        _
      %p8583 = scmp.le.s32.totalorder 2, %s17
      // Predicated region
      $region45: #{tpu_custom_call.1} parent=5 // pred_check
        %p8584 = pneg %p8583
      $region46: #{tpu_custom_call.1} parent=5 // pred_check_branch
        %8586 = sbr.rel (%p8584) target = $region48
      $region47: #{tpu_custom_call.1} parent=5 // pred_region
        %s8587 = ssub.s32 %s17, 2
        // Predicated region
        $region49: #{tpu_custom_call.1} parent=47 // pred_check
          %p8588 = pneg %p114
        $region50: #{tpu_custom_call.1} parent=47 // pred_check_branch
          %8590 = sbr.rel (%p8588) target = $region52
        $region51: #{tpu_custom_call.1} parent=47 // pred_region
          %s8591 = sand.u32 %s99, 1
          %s8592 = scalar_lea.sflag [#allocation4], %s8591
          %s8593 = sand.u32 %s99, 1
          %s8594 = smul.addr %s8593, 24
          %s8595 = scalar_lea.vmem [#allocation7], %s8594
          %8596 = dma.done %s8592, 384
        $region52: #{tpu_custom_call.1} parent=47 // pred_fallthru
          _
      $region48: #{tpu_custom_call.1} parent=5 // pred_fallthru
        _
    $region6: #{tpu_custom_call.1} parent=1 // loop_footer
      %s21 = sadd.s32 1, %s17
    $region7: #{tpu_custom_call.1} parent=1 // loop_footer_branch
      %16 = sbr.rel target = $region3
    $region8: #{tpu_custom_call.1} parent=1 // loop_exit
      _
    %8597 = vsyncpa [#allocation3], 1
    %s8598 = scalar_lea.sflag [#allocation3], 1
    %8599 = vsyncpa %s8598, 1
    %8600 = vsyncpa [#allocation6], 1
    %s8601 = scalar_lea.sflag [#allocation6], 1
    %8602 = vsyncpa %s8601, 1
    %8603 = vsyncpa [#allocation4], 1
    %s8604 = scalar_lea.sflag [#allocation4], 1
    %8605 = vsyncpa %s8604, 1

</llo_original>
